<compile_context>
chip_gen: v7x
topology: tpu7x:2x2x1
jax: 0.10.0
libtpu: 0.0.40
codegen_flags: <defaults>
</compile_context>

<pallas_src>
import functools
import math

import jax
import jax.numpy as jnp
from jax.experimental import pallas as pl
from jax.experimental.pallas import tpu as pltpu


def _round_up(x, m):
    return (x + m - 1) // m * m


# ---------------------------------------------------------------------------
# Pallas kernel 1: matmul + fused per-column affine + activation
#   bf16 operands on the MXU, f32 accumulation & epilogue.
# ---------------------------------------------------------------------------
def _mm_kernel(a_ref, b_ref, s_ref, c_ref, o_ref, *, act):
    acc = jnp.dot(a_ref[...], b_ref[...], preferred_element_type=jnp.float32)
    y = acc * s_ref[...] + c_ref[...]
    if act == "relu":
        y = jnp.maximum(y, 0.0)
    elif act == "relu6":
        y = jnp.clip(y, 0.0, 6.0)
    o_ref[...] = y


def matmul_affine(a, b, scale=None, bias=None, act="none", tm=512):
    """out = act((a @ b) * scale + bias); scale/bias broadcast over rows."""
    M, K = a.shape
    K2, N = b.shape
    assert K == K2
    if scale is None:
        scale = jnp.ones((N,), jnp.float32)
    if bias is None:
        bias = jnp.zeros((N,), jnp.float32)

    a = a.astype(jnp.bfloat16)
    b = b.astype(jnp.bfloat16)
    s2 = scale.astype(jnp.float32).reshape(1, N)
    c2 = bias.astype(jnp.float32).reshape(1, N)

    # Only M is tiled; K and N are full-extent blocks.
    tm_eff = min(tm, _round_up(M, 8))
    Mp = _round_up(M, tm_eff)
    if Mp != M:
        a = jnp.pad(a, ((0, Mp - M), (0, 0)))

    out = pl.pallas_call(
        functools.partial(_mm_kernel, act=act),
        out_shape=jax.ShapeDtypeStruct((Mp, N), jnp.float32),
        grid_spec=pltpu.PrefetchScalarGridSpec(
            num_scalar_prefetch=0,
            grid=(Mp // tm_eff,),
            in_specs=[
                pl.BlockSpec((tm_eff, K), lambda i: (i, 0)),
                pl.BlockSpec((K, N), lambda i: (0, 0)),
                pl.BlockSpec((1, N), lambda i: (0, 0)),
                pl.BlockSpec((1, N), lambda i: (0, 0)),
            ],
            out_specs=pl.BlockSpec((tm_eff, N), lambda i: (i, 0)),
        ),
        compiler_params=pltpu.CompilerParams(
            dimension_semantics=("parallel",)),
    )(a, b, s2, c2)
    if Mp != M:
        out = out[:M]
    return out


def linear(x, w, b, act="none"):
    shp = x.shape
    y = matmul_affine(x.reshape(-1, shp[-1]), w, None, b, act=act)
    return y.reshape(shp[:-1] + (w.shape[1],))


# ---------------------------------------------------------------------------
# Pallas kernel 2: attention core, one grid step per batch element, all heads
# processed inside the block.  Optional attention-weight output.
# ---------------------------------------------------------------------------
def _attn_kernel(q_ref, k_ref, v_ref, b_ref, o_ref, *rest, sm_scale):
    q = q_ref[0]          # (nh, Lq, dh) bf16
    k = k_ref[0]          # (nh, Lk, dh) bf16
    v = v_ref[0]          # (nh, Lk, dh) bf16
    bias = b_ref[0]       # (Lq, Lk)     f32 (shared across heads)

    s = jnp.einsum("hqd,hkd->hqk", q, k,
                   preferred_element_type=jnp.float32) * sm_scale
    s = s + bias[None]
    m = jnp.max(s, axis=-1, keepdims=True)
    e = jnp.exp(s - m)
    denom = jnp.sum(e, axis=-1, keepdims=True)
    p = e * pl.reciprocal(denom, approx=True)
    o_ref[0] = jnp.einsum("hqk,hkd->hqd", p.astype(v.dtype), v,
                          preferred_element_type=jnp.float32)
    if rest:                       # only materialize weights when requested
        rest[0][0] = p


def mha_core(q, k, v, bias, sm_scale, need_weights):
    """q,k,v: [B, nh, L, dh]; bias: [B, Lq, Lk] additive (-1e9 masks keys)."""
    B, nh, Lq, dh = q.shape
    Lk = k.shape[2]
    q = q.astype(jnp.bfloat16)
    k = k.astype(jnp.bfloat16)
    v = v.astype(jnp.bfloat16)
    bias = bias.astype(jnp.float32)

    out_shapes = [jax.ShapeDtypeStruct((B, nh, Lq, dh), jnp.float32)]
    out_specs = [pl.BlockSpec((1, nh, Lq, dh), lambda b: (b, 0, 0, 0))]
    if need_weights:
        out_shapes.append(jax.ShapeDtypeStruct((B, nh, Lq, Lk), jnp.float32))
        out_specs.append(pl.BlockSpec((1, nh, Lq, Lk), lambda b: (b, 0, 0, 0)))

    res = pl.pallas_call(
        functools.partial(_attn_kernel, sm_scale=sm_scale),
        out_shape=tuple(out_shapes),
        grid_spec=pltpu.PrefetchScalarGridSpec(
            num_scalar_prefetch=0,
            grid=(B,),
            in_specs=[
                pl.BlockSpec((1, nh, Lq, dh), lambda b: (b, 0, 0, 0)),
                pl.BlockSpec((1, nh, Lk, dh), lambda b: (b, 0, 0, 0)),
                pl.BlockSpec((1, nh, Lk, dh), lambda b: (b, 0, 0, 0)),
                pl.BlockSpec((1, Lq, Lk), lambda b: (b, 0, 0)),
            ],
            out_specs=tuple(out_specs),
        ),
        compiler_params=pltpu.CompilerParams(dimension_semantics=("parallel",)),
    )(q, k, v, bias)
    if need_weights:
        return res[0], res[1]
    return res[0], None


def mha(p, q_in, k_in, v_in, key_padding_mask, nheads, need_weights=False):
    """Multi-head attention, batch-first. Returns (out, weights avg over heads)."""
    B, Lq, H = q_in.shape
    Lk = k_in.shape[1]
    dh = H // nheads

    if q_in is k_in:   # self-attention: fuse Q & K projections into one matmul
        qk = linear(q_in,
                    jnp.concatenate([p["wq"], p["wk"]], axis=1),
                    jnp.concatenate([p["bq"], p["bk"]]))
        q, k = qk[..., :H], qk[..., H:]
    else:
        q = linear(q_in, p["wq"], p["bq"])
        k = linear(k_in, p["wk"], p["bk"])
    v = linear(v_in, p["wv"], p["bv"])

    def split(x, L):
        return x.reshape(B, L, nheads, dh).transpose(0, 2, 1, 3)

    qh, kh, vh = split(q, Lq), split(k, Lk), split(v, Lk)

    if key_padding_mask is None:
        bias = jnp.zeros((B, Lq, Lk), jnp.float32)
    else:
        bias = jnp.where(key_padding_mask[:, None, :], -1e9, 0.0)
        bias = jnp.broadcast_to(bias.astype(jnp.float32), (B, Lq, Lk))

    o, w = mha_core(qh, kh, vh, bias, 1.0 / math.sqrt(dh), need_weights)
    o = o.transpose(0, 2, 1, 3).reshape(B, Lq, H)
    o = linear(o, p["wo"], p["bo"])
    if need_weights and w is not None:
        w = w.mean(axis=1)
    return o, w


# ---------------------------------------------------------------------------
# Backbone pieces (conv via bf16 im2col -> Pallas matmul with fused BN + act)
# ---------------------------------------------------------------------------
def conv2d_bn_act(x, w, kh, kw, stride, pad, bn_scale, bn_bias, act):
    """x: [B,H,W,C] NHWC, w: [kh*kw*C, Cout]."""
    x = x.astype(jnp.bfloat16)     # halve im2col HBM traffic
    B, H, W, C = x.shape
    Hout = (H + 2 * pad - kh) // stride + 1
    Wout = (W + 2 * pad - kw) // stride + 1
    xp = jnp.pad(x, ((0, 0), (pad, pad), (pad, pad), (0, 0)))
    cols = []
    for i in range(kh):
        for j in range(kw):
            cols.append(xp[:, i:i + (Hout - 1) * stride + 1:stride,
                           j:j + (Wout - 1) * stride + 1:stride, :])
    patches = jnp.concatenate(cols, axis=-1)  # [B,Hout,Wout,kh*kw*C] bf16
    a = patches.reshape(B * Hout * Wout, kh * kw * C)
    y = matmul_affine(a, w, bn_scale, bn_bias, act=act)
    return y.reshape(B, Hout, Wout, w.shape[1])


def maxpool3x3_s2(x):
    B, H, W, C = x.shape
    pad, k, s = 1, 3, 2
    Hout = (H + 2 * pad - k) // s + 1
    Wout = (W + 2 * pad - k) // s + 1
    xp = jnp.pad(x, ((0, 0), (pad, pad), (pad, pad), (0, 0)),
                 constant_values=-jnp.inf)
    out = None
    for i in range(k):
        for j in range(k):
            sl = xp[:, i:i + (Hout - 1) * s + 1:s, j:j + (Wout - 1) * s + 1:s, :]
            out = sl if out is None else jnp.maximum(out, sl)
    return out


def basic_block(x, p):
    # Downsample branch: conv + BN + ReLU6, matching kp._make_layer.
    stride = p["stride"]
    out = conv2d_bn_act(x, p["conv1_w"], 3, 3, stride, 1,
                        p["bn1_s"], p["bn1_b"], "relu6")
    out = conv2d_bn_act(out, p["conv2_w"], 3, 3, 1, 1,
                        p["bn2_s"], p["bn2_b"], "none")
    if "down_w" in p:
        identity = conv2d_bn_act(x, p["down_w"], 1, 1, stride, 0,
                                 p["down_s"], p["down_b"], "relu6")
    else:
        identity = x
    return jnp.clip(out + identity, 0.0, 6.0)


# ---------------------------------------------------------------------------
# Position encoding, mask resize, layer norm (tiny; left to XLA)
# ---------------------------------------------------------------------------
def layer_norm(x, g, b, eps=1e-5):
    mu = x.mean(-1, keepdims=True)
    var = ((x - mu) ** 2).mean(-1, keepdims=True)
    return (x - mu) * jax.lax.rsqrt(var + eps) * g + b


def interpolate_nearest_mask(m, size):
    B, Hm, Wm = m.shape
    h, w = size
    ri = jnp.floor(jnp.arange(h) * (Hm / h)).astype(jnp.int32)
    ci = jnp.floor(jnp.arange(w) * (Wm / w)).astype(jnp.int32)
    out = m[:, ri][:, :, ci]
    return out != 0


def position_embedding_sine(mask, num_pos_feats, temperature=10000.0):
    not_mask = (~mask).astype(jnp.float32)
    y_embed = jnp.cumsum(not_mask, axis=1)
    x_embed = jnp.cumsum(not_mask, axis=2)
    eps = 1e-6
    scale = 2.0 * math.pi
    y_embed = y_embed / (y_embed[:, -1:, :] + eps) * scale
    x_embed = x_embed / (x_embed[:, :, -1:] + eps) * scale
    dim_t = jnp.arange(num_pos_feats, dtype=jnp.float32)
    dim_t = temperature ** (2.0 * jnp.floor(dim_t / 2.0) / num_pos_feats)
    pos_x = x_embed[:, :, :, None] / dim_t
    pos_y = y_embed[:, :, :, None] / dim_t
    px = jnp.stack([jnp.sin(pos_x[..., 0::2]), jnp.cos(pos_x[..., 1::2])],
                   axis=4).reshape(pos_x.shape[:3] + (-1,))
    py = jnp.stack([jnp.sin(pos_y[..., 0::2]), jnp.cos(pos_y[..., 1::2])],
                   axis=4).reshape(pos_y.shape[:3] + (-1,))
    return jnp.concatenate([py, px], axis=3)  # [B,h,w,hidden]


# ---------------------------------------------------------------------------
# Transformer (DETR post-norm, dropout disabled / eval mode)
# ---------------------------------------------------------------------------
def encoder_layer(p, src, pos, mask, nheads):
    q = src + pos
    src2, _ = mha(p["self"], q, q, src, mask, nheads, need_weights=False)
    src = layer_norm(src + src2, p["ln1_g"], p["ln1_b"])
    src2 = linear(linear(src, p["ff1_w"], p["ff1_b"], act="relu"),
                  p["ff2_w"], p["ff2_b"])
    src = layer_norm(src + src2, p["ln2_g"], p["ln2_b"])
    return src


def decoder_layer(p, tgt, memory, pos, query_pos, mask, nheads):
    q = tgt + query_pos
    tgt2, _ = mha(p["self"], q, q, tgt, None, nheads, need_weights=False)
    tgt = layer_norm(tgt + tgt2, p["ln1_g"], p["ln1_b"])
    tgt2, attn_w = mha(p["cross"], tgt + query_pos, memory + pos, memory,
                       mask, nheads, need_weights=True)
    tgt = layer_norm(tgt + tgt2, p["ln2_g"], p["ln2_b"])
    tgt2 = linear(linear(tgt, p["ff1_w"], p["ff1_b"], act="relu"),
                  p["ff2_w"], p["ff2_b"])
    tgt = layer_norm(tgt + tgt2, p["ln3_g"], p["ln3_b"])
    return tgt, attn_w


def transformer(p, src, mask, query_embed, pos, nheads):
    B = src.shape[0]
    memory = src
    for lp in p["enc"]:
        memory = encoder_layer(lp, memory, pos, mask, nheads)
    query_pos = jnp.broadcast_to(query_embed[None], (B,) + query_embed.shape)
    tgt = jnp.zeros_like(query_pos)
    intermediates = []
    attn_w = None
    for lp in p["dec"]:
        tgt, attn_w = decoder_layer(lp, tgt, memory, pos, query_pos, mask,
                                    nheads)
        intermediates.append(
            layer_norm(tgt, p["dec_norm_g"], p["dec_norm_b"]))
    hs = jnp.stack(intermediates, axis=0)  # [L, B, Q, H]
    return hs, memory, attn_w


# ---------------------------------------------------------------------------
# Prediction heads, fused: class head + first MLP layers in one matmul,
# subsequent specific/shared MLP layers via block-diagonal fused weights.
# ---------------------------------------------------------------------------
def _block_diag(a, b):
    r1, c1 = a.shape
    r2, c2 = b.shape
    top = jnp.concatenate([a, jnp.zeros((r1, c2), a.dtype)], axis=1)
    bot = jnp.concatenate([jnp.zeros((r2, c1), b.dtype), b], axis=1)
    return jnp.concatenate([top, bot], axis=0)


def fused_heads(params, cfg, hs):
    L, B, Q, H = hs.shape
    x2d = hs.reshape(L * B * Q, H)
    ncls = cfg["num_cls"]
    spec = params["specific"]
    shar = params["shared"]
    nl = len(spec)

    w0 = jnp.concatenate([params["class_w"], spec[0][0], shar[0][0]], axis=1)
    b0 = jnp.concatenate([params["class_b"], spec[0][1], shar[0][1]])
    y = matmul_affine(x2d, w0, None, b0, act="none")
    out_class = y[:, :ncls]
    t = y[:, ncls:]
    ds = spec[0][0].shape[1]
    if nl > 1:
        t = jnp.clip(t, 0.0, 6.0)            # relu6 on the MLP part only
    for i in range(1, nl):
        ws, bs = spec[i]
        wsh, bsh = shar[i]
        w = _block_diag(ws, wsh)
        b = jnp.concatenate([bs, bsh])
        act = "relu6" if i < nl - 1 else "none"
        t = matmul_affine(t, w, None, b, act=act)
        ds = ws.shape[1]

    out_class = out_class.reshape(L, B, Q, ncls)
    out_spec = t[:, :ds].reshape(L, B, Q, ds)
    out_shared = t[:, ds:].reshape(L, B, Q, -1)
    return out_class, out_spec, out_shared


# ---------------------------------------------------------------------------
# kp forward
# ---------------------------------------------------------------------------
def kp_forward(params, cfg, images_nchw, masks_nchw):
    x = jnp.transpose(images_nchw, (0, 2, 3, 1)).astype(jnp.float32)  # NHWC
    x = conv2d_bn_act(x, params["conv1_w"], 7, 7, 2, 3,
                      params["bn1_s"], params["bn1_b"], "relu6")
    x = maxpool3x3_s2(x)
    for blocks in params["layers"]:
        for blk in blocks:
            x = basic_block(x, blk)

    B, h, w, C = x.shape
    pmask = interpolate_nearest_mask(masks_nchw[:, 0, :, :], (h, w))
    pos = position_embedding_sine(pmask, cfg["hidden_dim"] // 2)

    src = linear(x.reshape(B, h * w, C),
                 params["input_proj_w"], params["input_proj_b"])
    pos_flat = pos.reshape(B, h * w, cfg["hidden_dim"])
    mask_flat = pmask.reshape(B, h * w)

    hs, _, weights = transformer(params["transformer"], src, mask_flat,
                                 params["query_embed"], pos_flat,
                                 cfg["nheads"])

    output_class, output_specific, output_shared = fused_heads(params, cfg, hs)
    output_shared = jnp.mean(output_shared, axis=-2, keepdims=True)
    output_shared = jnp.broadcast_to(
        output_shared,
        output_shared.shape[:2] + (output_specific.shape[2], 4))
    output_specific = jnp.concatenate(
        [output_specific[..., :2], output_shared, output_specific[..., 2:]],
        axis=-1)

    out = {"pred_logits": output_class[-1], "pred_curves": output_specific[-1]}
    if cfg["aux_loss"]:
        out["aux_outputs"] = [
            {"pred_logits": a, "pred_curves": b}
            for a, b in zip(output_class[:-1], output_specific[:-1])
        ]
    return out, weights


# ---------------------------------------------------------------------------
# Deterministic parameter initialization (synthetic — no checkpoint load)
# ---------------------------------------------------------------------------
def init_params(key, cfg):
    ks = iter(jax.random.split(key, 512))

    def W(shape, s=0.05):
        return (s * jax.random.normal(next(ks), shape)).astype(jnp.float32)

    def Z(shape):
        return jnp.zeros(shape, jnp.float32)

    def bn(c):
        s = 1.0 + 0.05 * jax.random.normal(next(ks), (c,))
        b = 0.05 * jax.random.normal(next(ks), (c,))
        return s.astype(jnp.float32), b.astype(jnp.float32)

    H = cfg["hidden_dim"]
    rd = cfg["res_dims"]
    params = {}
    params["conv1_w"] = W((7 * 7 * 3, rd[0]))
    params["bn1_s"], params["bn1_b"] = bn(rd[0])

    inplanes = rd[0]
    layers_params = []
    for planes, nblocks, stride in zip(rd, cfg["layers"], cfg["res_strides"]):
        blocks = []
        for bidx in range(nblocks):
            s = stride if bidx == 0 else 1
            blk = {"stride": s,
                   "conv1_w": W((3 * 3 * inplanes, planes)),
                   "conv2_w": W((3 * 3 * planes, planes))}
            blk["bn1_s"], blk["bn1_b"] = bn(planes)
            blk["bn2_s"], blk["bn2_b"] = bn(planes)
            if s != 1 or inplanes != planes:
                blk["down_w"] = W((inplanes, planes))
                blk["down_s"], blk["down_b"] = bn(planes)
            inplanes = planes
            blocks.append(blk)
        layers_params.append(blocks)
    params["layers"] = layers_params

    params["input_proj_w"] = W((rd[-1], H))
    params["input_proj_b"] = Z((H,))
    params["query_embed"] = W((cfg["num_queries"], H), s=0.5)

    def mha_p():
        return {"wq": W((H, H)), "bq": Z((H,)),
                "wk": W((H, H)), "bk": Z((H,)),
                "wv": W((H, H)), "bv": Z((H,)),
                "wo": W((H, H)), "bo": Z((H,))}

    def ln_p():
        return jnp.ones((H,), jnp.float32), Z((H,))

    dff = cfg["dim_feedforward"]
    t = {"enc": [], "dec": []}
    for _ in range(cfg["enc_layers"]):
        g1, b1 = ln_p(); g2, b2 = ln_p()
        t["enc"].append({"self": mha_p(),
                         "ln1_g": g1, "ln1_b": b1, "ln2_g": g2, "ln2_b": b2,
                         "ff1_w": W((H, dff)), "ff1_b": Z((dff,)),
                         "ff2_w": W((dff, H)), "ff2_b": Z((H,))})
    for _ in range(cfg["dec_layers"]):
        g1, b1 = ln_p(); g2, b2 = ln_p(); g3, b3 = ln_p()
        t["dec"].append({"self": mha_p(), "cross": mha_p(),
                         "ln1_g": g1, "ln1_b": b1, "ln2_g": g2, "ln2_b": b2,
                         "ln3_g": g3, "ln3_b": b3,
                         "ff1_w": W((H, dff)), "ff1_b": Z((dff,)),
                         "ff2_w": W((dff, H)), "ff2_b": Z((H,))})
    t["dec_norm_g"], t["dec_norm_b"] = ln_p()
    params["transformer"] = t

    params["class_w"] = W((H, cfg["num_cls"]))
    params["class_b"] = Z((cfg["num_cls"],))

    def mlp_p(in_d, hid, out_d, nl):
        dims = [in_d] + [hid] * (nl - 1) + [out_d]
        return [(W((dims[i], dims[i + 1])), Z((dims[i + 1],)))
                for i in range(nl)]

    params["specific"] = mlp_p(H, H, cfg["lsp_dim"] - 4, cfg["mlp_layers"])
    params["shared"] = mlp_p(H, H, 4, cfg["mlp_layers"])
    return params


# ---------------------------------------------------------------------------
if __name__ == "__main__":
    cfg = dict(
        res_dims=[8, 16, 32, 64],
        res_strides=[1, 2, 2, 2],
        layers=[1, 1, 1, 1],
        hidden_dim=32,
        nheads=2,
        dim_feedforward=64,
        enc_layers=1,
        dec_layers=2,
        num_queries=8,
        lsp_dim=8,
        mlp_layers=2,
        num_cls=3,
        aux_loss=True,
    )

    key = jax.random.PRNGKey(0)
    k_img, k_par = jax.random.split(key)
    images = jax.random.normal(k_img, (2, 3, 64, 64), dtype=jnp.float32)  # NCHW
    masks = jnp.zeros((2, 1, 64, 64), dtype=jnp.float32)                  # no padding

    params = init_params(k_par, cfg)

    fwd = jax.jit(lambda im, mk: kp_forward(params, cfg, im, mk))
    out, weights = fwd(images, masks)

    jax.block_until_ready(out["pred_logits"])
    jax.block_until_ready(out["pred_curves"])
    jax.block_until_ready(weights)

    assert out["pred_logits"].shape == (2, cfg["num_queries"], cfg["num_cls"])
    assert out["pred_curves"].shape == (2, cfg["num_queries"], cfg["lsp_dim"])
    assert len(out["aux_outputs"]) == cfg["dec_layers"] - 1
    assert bool(jnp.isfinite(out["pred_logits"]).all())
    assert bool(jnp.isfinite(out["pred_curves"]).all())
    assert bool(jnp.isfinite(weights).all())
    print("KERNEL_OK")
</pallas_src>

<mosaic_0001>
module attributes {stable_mosaic.version = 11 : i64} {
  func.func @_mm_kernel(%arg0: i32, %arg1: memref<512x147xbf16, #tpu.memory_space<vmem>>, %arg2: memref<147x8xbf16, #tpu.memory_space<vmem>>, %arg3: memref<1x8xf32, #tpu.memory_space<vmem>>, %arg4: memref<1x8xf32, #tpu.memory_space<vmem>>, %arg5: memref<512x8xf32, #tpu.memory_space<vmem>>) attributes {dimension_semantics = [#tpu.dimension_semantics<parallel>], iteration_bounds = array<i64: 4>, scalar_prefetch = 0 : i64, scratch_operands = 0 : i64, tpu.core_type = #tpu.core_type<tc>, window_params = [{transform_indices = @transform_0, window_bounds = array<i64: 512, 147>}, {pipeline_mode = #tpu.pipeline_mode<synchronous>, transform_indices = @transform_1, window_bounds = array<i64: 147, 8>}, {pipeline_mode = #tpu.pipeline_mode<synchronous>, transform_indices = @transform_2, window_bounds = array<i64: 1, 8>}, {pipeline_mode = #tpu.pipeline_mode<synchronous>, transform_indices = @transform_3, window_bounds = array<i64: 1, 8>}, {transform_indices = @transform_4, window_bounds = array<i64: 512, 8>}]} {
    %c0 = arith.constant 0 : index
    %c0_0 = arith.constant 0 : index
    %0 = vector.load %arg1[%c0, %c0_0] : memref<512x147xbf16, #tpu.memory_space<vmem>>, vector<512x147xbf16>
    %c0_1 = arith.constant 0 : index
    %c0_2 = arith.constant 0 : index
    %1 = vector.load %arg2[%c0_1, %c0_2] : memref<147x8xbf16, #tpu.memory_space<vmem>>, vector<147x8xbf16>
    %cst = arith.constant dense<0.000000e+00> : vector<512x8xf32>
    %2 = tpu.matmul %0, %1, %cst {dimension_numbers = #tpu.dot_dimension_numbers<[1], [0], [0], [1], [0, 0, 1, 1], [], []>} : vector<512x147xbf16>, vector<147x8xbf16>, vector<512x8xf32> -> vector<512x8xf32>
    %c0_3 = arith.constant 0 : index
    %c0_4 = arith.constant 0 : index
    %3 = vector.load %arg3[%c0_3, %c0_4] : memref<1x8xf32, #tpu.memory_space<vmem>>, vector<1x8xf32>
    %4 = vector.broadcast %3 : vector<1x8xf32> to vector<512x8xf32>
    %5 = arith.mulf %2, %4 : vector<512x8xf32>
    %c0_5 = arith.constant 0 : index
    %c0_6 = arith.constant 0 : index
    %6 = vector.load %arg4[%c0_5, %c0_6] : memref<1x8xf32, #tpu.memory_space<vmem>>, vector<1x8xf32>
    %7 = vector.broadcast %6 : vector<1x8xf32> to vector<512x8xf32>
    %8 = arith.addf %5, %7 : vector<512x8xf32>
    %cst_7 = arith.constant 0.000000e+00 : f32
    %cst_8 = arith.constant 6.000000e+00 : f32
    %9 = vector.broadcast %cst_7 : f32 to vector<512x8xf32>
    %10 = arith.maximumf %9, %8 : vector<512x8xf32>
    %11 = vector.broadcast %cst_8 : f32 to vector<512x8xf32>
    %12 = arith.minimumf %11, %10 : vector<512x8xf32>
    %c0_9 = arith.constant 0 : index
    %c0_10 = arith.constant 0 : index
    %13 = vector.load %arg5[%c0_9, %c0_10] : memref<512x8xf32, #tpu.memory_space<vmem>>, vector<512x8xf32>
    tpu.vector_store %arg5[%c0_9, %c0_10], %12 {strides = array<i32>} : memref<512x8xf32, #tpu.memory_space<vmem>>, vector<512x8xf32>,
    return
  }
  func.func @transform_0(%arg0: i32) -> (i32, i32) {
    %c0_i32 = arith.constant 0 : i32
    %c0_i32_0 = arith.constant 0 : i32
    return %arg0, %c0_i32 : i32, i32
  }
  func.func @transform_1(%arg0: i32) -> (i32, i32) {
    %c0_i32 = arith.constant 0 : i32
    %c0_i32_0 = arith.constant 0 : i32
    %c0_i32_1 = arith.constant 0 : i32
    return %c0_i32, %c0_i32_0 : i32, i32
  }
  func.func @transform_2(%arg0: i32) -> (i32, i32) {
    %c0_i32 = arith.constant 0 : i32
    %c0_i32_0 = arith.constant 0 : i32
    %c0_i32_1 = arith.constant 0 : i32
    return %c0_i32, %c0_i32_0 : i32, i32
  }
  func.func @transform_3(%arg0: i32) -> (i32, i32) {
    %c0_i32 = arith.constant 0 : i32
    %c0_i32_0 = arith.constant 0 : i32
    %c0_i32_1 = arith.constant 0 : i32
    return %c0_i32, %c0_i32_0 : i32, i32
  }
  func.func @transform_4(%arg0: i32) -> (i32, i32) {
    %c0_i32 = arith.constant 0 : i32
    %c0_i32_0 = arith.constant 0 : i32
    return %arg0, %c0_i32 : i32, i32
  }
}

module attributes {stable_mosaic.version = 11 : i64} {
  func.func @_mm_kernel(%arg0: i32, %arg1: memref<512x72xbf16, #tpu.memory_space<vmem>>, %arg2: memref<72x8xbf16, #tpu.memory_space<vmem>>, %arg3: memref<1x8xf32, #tpu.memory_space<vmem>>, %arg4: memref<1x8xf32, #tpu.memory_space<vmem>>, %arg5: memref<512x8xf32, #tpu.memory_space<vmem>>) attributes {dimension_semantics = [#tpu.dimension_semantics<parallel>], iteration_bounds = array<i64: 1>, scalar_prefetch = 0 : i64, scratch_operands = 0 : i64, tpu.core_type = #tpu.core_type<tc>, window_params = [{transform_indices = @transform_0, window_bounds = array<i64: 512, 72>}, {pipeline_mode = #tpu.pipeline_mode<synchronous>, transform_indices = @transform_1, window_bounds = array<i64: 72, 8>}, {pipeline_mode = #tpu.pipeline_mode<synchronous>, transform_indices = @transform_2, window_bounds = array<i64: 1, 8>}, {pipeline_mode = #tpu.pipeline_mode<synchronous>, transform_indices = @transform_3, window_bounds = array<i64: 1, 8>}, {transform_indices = @transform_4, window_bounds = array<i64: 512, 8>}]} {
    %c0 = arith.constant 0 : index
    %c0_0 = arith.constant 0 : index
    %0 = vector.load %arg1[%c0, %c0_0] : memref<512x72xbf16, #tpu.memory_space<vmem>>, vector<512x72xbf16>
    %c0_1 = arith.constant 0 : index
    %c0_2 = arith.constant 0 : index
    %1 = vector.load %arg2[%c0_1, %c0_2] : memref<72x8xbf16, #tpu.memory_space<vmem>>, vector<72x8xbf16>
    %cst = arith.constant dense<0.000000e+00> : vector<512x8xf32>
    %2 = tpu.matmul %0, %1, %cst {dimension_numbers = #tpu.dot_dimension_numbers<[1], [0], [0], [1], [0, 0, 1, 1], [], []>} : vector<512x72xbf16>, vector<72x8xbf16>, vector<512x8xf32> -> vector<512x8xf32>
    %c0_3 = arith.constant 0 : index
    %c0_4 = arith.constant 0 : index
    %3 = vector.load %arg3[%c0_3, %c0_4] : memref<1x8xf32, #tpu.memory_space<vmem>>, vector<1x8xf32>
    %4 = vector.broadcast %3 : vector<1x8xf32> to vector<512x8xf32>
    %5 = arith.mulf %2, %4 : vector<512x8xf32>
    %c0_5 = arith.constant 0 : index
    %c0_6 = arith.constant 0 : index
    %6 = vector.load %arg4[%c0_5, %c0_6] : memref<1x8xf32, #tpu.memory_space<vmem>>, vector<1x8xf32>
    %7 = vector.broadcast %6 : vector<1x8xf32> to vector<512x8xf32>
    %8 = arith.addf %5, %7 : vector<512x8xf32>
    %cst_7 = arith.constant 0.000000e+00 : f32
    %cst_8 = arith.constant 6.000000e+00 : f32
    %9 = vector.broadcast %cst_7 : f32 to vector<512x8xf32>
    %10 = arith.maximumf %9, %8 : vector<512x8xf32>
    %11 = vector.broadcast %cst_8 : f32 to vector<512x8xf32>
    %12 = arith.minimumf %11, %10 : vector<512x8xf32>
    %c0_9 = arith.constant 0 : index
    %c0_10 = arith.constant 0 : index
    %13 = vector.load %arg5[%c0_9, %c0_10] : memref<512x8xf32, #tpu.memory_space<vmem>>, vector<512x8xf32>
    tpu.vector_store %arg5[%c0_9, %c0_10], %12 {strides = array<i32>} : memref<512x8xf32, #tpu.memory_space<vmem>>, vector<512x8xf32>,
    return
  }
  func.func @transform_0(%arg0: i32) -> (i32, i32) {
    %c0_i32 = arith.constant 0 : i32
    %c0_i32_0 = arith.constant 0 : i32
    return %arg0, %c0_i32 : i32, i32
  }
  func.func @transform_1(%arg0: i32) -> (i32, i32) {
    %c0_i32 = arith.constant 0 : i32
    %c0_i32_0 = arith.constant 0 : i32
    %c0_i32_1 = arith.constant 0 : i32
    return %c0_i32, %c0_i32_0 : i32, i32
  }
  func.func @transform_2(%arg0: i32) -> (i32, i32) {
    %c0_i32 = arith.constant 0 : i32
    %c0_i32_0 = arith.constant 0 : i32
    %c0_i32_1 = arith.constant 0 : i32
    return %c0_i32, %c0_i32_0 : i32, i32
  }
  func.func @transform_3(%arg0: i32) -> (i32, i32) {
    %c0_i32 = arith.constant 0 : i32
    %c0_i32_0 = arith.constant 0 : i32
    %c0_i32_1 = arith.constant 0 : i32
    return %c0_i32, %c0_i32_0 : i32, i32
  }
  func.func @transform_4(%arg0: i32) -> (i32, i32) {
    %c0_i32 = arith.constant 0 : i32
    %c0_i32_0 = arith.constant 0 : i32
    return %arg0, %c0_i32 : i32, i32
  }
}

module attributes {stable_mosaic.version = 11 : i64} {
  func.func @_mm_kernel(%arg0: i32, %arg1: memref<512x72xbf16, #tpu.memory_space<vmem>>, %arg2: memref<72x8xbf16, #tpu.memory_space<vmem>>, %arg3: memref<1x8xf32, #tpu.memory_space<vmem>>, %arg4: memref<1x8xf32, #tpu.memory_space<vmem>>, %arg5: memref<512x8xf32, #tpu.memory_space<vmem>>) attributes {dimension_semantics = [#tpu.dimension_semantics<parallel>], iteration_bounds = array<i64: 1>, scalar_prefetch = 0 : i64, scratch_operands = 0 : i64, tpu.core_type = #tpu.core_type<tc>, window_params = [{transform_indices = @transform_0, window_bounds = array<i64: 512, 72>}, {pipeline_mode = #tpu.pipeline_mode<synchronous>, transform_indices = @transform_1, window_bounds = array<i64: 72, 8>}, {pipeline_mode = #tpu.pipeline_mode<synchronous>, transform_indices = @transform_2, window_bounds = array<i64: 1, 8>}, {pipeline_mode = #tpu.pipeline_mode<synchronous>, transform_indices = @transform_3, window_bounds = array<i64: 1, 8>}, {transform_indices = @transform_4, window_bounds = array<i64: 512, 8>}]} {
    %c0 = arith.constant 0 : index
    %c0_0 = arith.constant 0 : index
    %0 = vector.load %arg1[%c0, %c0_0] : memref<512x72xbf16, #tpu.memory_space<vmem>>, vector<512x72xbf16>
    %c0_1 = arith.constant 0 : index
    %c0_2 = arith.constant 0 : index
    %1 = vector.load %arg2[%c0_1, %c0_2] : memref<72x8xbf16, #tpu.memory_space<vmem>>, vector<72x8xbf16>
    %cst = arith.constant dense<0.000000e+00> : vector<512x8xf32>
    %2 = tpu.matmul %0, %1, %cst {dimension_numbers = #tpu.dot_dimension_numbers<[1], [0], [0], [1], [0, 0, 1, 1], [], []>} : vector<512x72xbf16>, vector<72x8xbf16>, vector<512x8xf32> -> vector<512x8xf32>
    %c0_3 = arith.constant 0 : index
    %c0_4 = arith.constant 0 : index
    %3 = vector.load %arg3[%c0_3, %c0_4] : memref<1x8xf32, #tpu.memory_space<vmem>>, vector<1x8xf32>
    %4 = vector.broadcast %3 : vector<1x8xf32> to vector<512x8xf32>
    %5 = arith.mulf %2, %4 : vector<512x8xf32>
    %c0_5 = arith.constant 0 : index
    %c0_6 = arith.constant 0 : index
    %6 = vector.load %arg4[%c0_5, %c0_6] : memref<1x8xf32, #tpu.memory_space<vmem>>, vector<1x8xf32>
    %7 = vector.broadcast %6 : vector<1x8xf32> to vector<512x8xf32>
    %8 = arith.addf %5, %7 : vector<512x8xf32>
    %c0_7 = arith.constant 0 : index
    %c0_8 = arith.constant 0 : index
    %9 = vector.load %arg5[%c0_7, %c0_8] : memref<512x8xf32, #tpu.memory_space<vmem>>, vector<512x8xf32>
    tpu.vector_store %arg5[%c0_7, %c0_8], %8 {strides = array<i32>} : memref<512x8xf32, #tpu.memory_space<vmem>>, vector<512x8xf32>,
    return
  }
  func.func @transform_0(%arg0: i32) -> (i32, i32) {
    %c0_i32 = arith.constant 0 : i32
    %c0_i32_0 = arith.constant 0 : i32
    return %arg0, %c0_i32 : i32, i32
  }
  func.func @transform_1(%arg0: i32) -> (i32, i32) {
    %c0_i32 = arith.constant 0 : i32
    %c0_i32_0 = arith.constant 0 : i32
    %c0_i32_1 = arith.constant 0 : i32
    return %c0_i32, %c0_i32_0 : i32, i32
  }
  func.func @transform_2(%arg0: i32) -> (i32, i32) {
    %c0_i32 = arith.constant 0 : i32
    %c0_i32_0 = arith.constant 0 : i32
    %c0_i32_1 = arith.constant 0 : i32
    return %c0_i32, %c0_i32_0 : i32, i32
  }
  func.func @transform_3(%arg0: i32) -> (i32, i32) {
    %c0_i32 = arith.constant 0 : i32
    %c0_i32_0 = arith.constant 0 : i32
    %c0_i32_1 = arith.constant 0 : i32
    return %c0_i32, %c0_i32_0 : i32, i32
  }
  func.func @transform_4(%arg0: i32) -> (i32, i32) {
    %c0_i32 = arith.constant 0 : i32
    %c0_i32_0 = arith.constant 0 : i32
    return %arg0, %c0_i32 : i32, i32
  }
}

module attributes {stable_mosaic.version = 11 : i64} {
  func.func @_mm_kernel(%arg0: i32, %arg1: memref<128x72xbf16, #tpu.memory_space<vmem>>, %arg2: memref<72x16xbf16, #tpu.memory_space<vmem>>, %arg3: memref<1x16xf32, #tpu.memory_space<vmem>>, %arg4: memref<1x16xf32, #tpu.memory_space<vmem>>, %arg5: memref<128x16xf32, #tpu.memory_space<vmem>>) attributes {dimension_semantics = [#tpu.dimension_semantics<parallel>], iteration_bounds = array<i64: 1>, scalar_prefetch = 0 : i64, scratch_operands = 0 : i64, tpu.core_type = #tpu.core_type<tc>, window_params = [{transform_indices = @transform_0, window_bounds = array<i64: 128, 72>}, {pipeline_mode = #tpu.pipeline_mode<synchronous>, transform_indices = @transform_1, window_bounds = array<i64: 72, 16>}, {pipeline_mode = #tpu.pipeline_mode<synchronous>, transform_indices = @transform_2, window_bounds = array<i64: 1, 16>}, {pipeline_mode = #tpu.pipeline_mode<synchronous>, transform_indices = @transform_3, window_bounds = array<i64: 1, 16>}, {transform_indices = @transform_4, window_bounds = array<i64: 128, 16>}]} {
    %c0 = arith.constant 0 : index
    %c0_0 = arith.constant 0 : index
    %0 = vector.load %arg1[%c0, %c0_0] : memref<128x72xbf16, #tpu.memory_space<vmem>>, vector<128x72xbf16>
    %c0_1 = arith.constant 0 : index
    %c0_2 = arith.constant 0 : index
    %1 = vector.load %arg2[%c0_1, %c0_2] : memref<72x16xbf16, #tpu.memory_space<vmem>>, vector<72x16xbf16>
    %cst = arith.constant dense<0.000000e+00> : vector<128x16xf32>
    %2 = tpu.matmul %0, %1, %cst {dimension_numbers = #tpu.dot_dimension_numbers<[1], [0], [0], [1], [0, 0, 1, 1], [], []>} : vector<128x72xbf16>, vector<72x16xbf16>, vector<128x16xf32> -> vector<128x16xf32>
    %c0_3 = arith.constant 0 : index
    %c0_4 = arith.constant 0 : index
    %3 = vector.load %arg3[%c0_3, %c0_4] : memref<1x16xf32, #tpu.memory_space<vmem>>, vector<1x16xf32>
    %4 = vector.broadcast %3 : vector<1x16xf32> to vector<128x16xf32>
    %5 = arith.mulf %2, %4 : vector<128x16xf32>
    %c0_5 = arith.constant 0 : index
    %c0_6 = arith.constant 0 : index
    %6 = vector.load %arg4[%c0_5, %c0_6] : memref<1x16xf32, #tpu.memory_space<vmem>>, vector<1x16xf32>
    %7 = vector.broadcast %6 : vector<1x16xf32> to vector<128x16xf32>
    %8 = arith.addf %5, %7 : vector<128x16xf32>
    %cst_7 = arith.constant 0.000000e+00 : f32
    %cst_8 = arith.constant 6.000000e+00 : f32
    %9 = vector.broadcast %cst_7 : f32 to vector<128x16xf32>
    %10 = arith.maximumf %9, %8 : vector<128x16xf32>
    %11 = vector.broadcast %cst_8 : f32 to vector<128x16xf32>
    %12 = arith.minimumf %11, %10 : vector<128x16xf32>
    %c0_9 = arith.constant 0 : index
    %c0_10 = arith.constant 0 : index
    %13 = vector.load %arg5[%c0_9, %c0_10] : memref<128x16xf32, #tpu.memory_space<vmem>>, vector<128x16xf32>
    tpu.vector_store %arg5[%c0_9, %c0_10], %12 {strides = array<i32>} : memref<128x16xf32, #tpu.memory_space<vmem>>, vector<128x16xf32>,
    return
  }
  func.func @transform_0(%arg0: i32) -> (i32, i32) {
    %c0_i32 = arith.constant 0 : i32
    %c0_i32_0 = arith.constant 0 : i32
    return %arg0, %c0_i32 : i32, i32
  }
  func.func @transform_1(%arg0: i32) -> (i32, i32) {
    %c0_i32 = arith.constant 0 : i32
    %c0_i32_0 = arith.constant 0 : i32
    %c0_i32_1 = arith.constant 0 : i32
    return %c0_i32, %c0_i32_0 : i32, i32
  }
  func.func @transform_2(%arg0: i32) -> (i32, i32) {
    %c0_i32 = arith.constant 0 : i32
    %c0_i32_0 = arith.constant 0 : i32
    %c0_i32_1 = arith.constant 0 : i32
    return %c0_i32, %c0_i32_0 : i32, i32
  }
  func.func @transform_3(%arg0: i32) -> (i32, i32) {
    %c0_i32 = arith.constant 0 : i32
    %c0_i32_0 = arith.constant 0 : i32
    %c0_i32_1 = arith.constant 0 : i32
    return %c0_i32, %c0_i32_0 : i32, i32
  }
  func.func @transform_4(%arg0: i32) -> (i32, i32) {
    %c0_i32 = arith.constant 0 : i32
    %c0_i32_0 = arith.constant 0 : i32
    return %arg0, %c0_i32 : i32, i32
  }
}

module attributes {stable_mosaic.version = 11 : i64} {
  func.func @_mm_kernel(%arg0: i32, %arg1: memref<128x144xbf16, #tpu.memory_space<vmem>>, %arg2: memref<144x16xbf16, #tpu.memory_space<vmem>>, %arg3: memref<1x16xf32, #tpu.memory_space<vmem>>, %arg4: memref<1x16xf32, #tpu.memory_space<vmem>>, %arg5: memref<128x16xf32, #tpu.memory_space<vmem>>) attributes {dimension_semantics = [#tpu.dimension_semantics<parallel>], iteration_bounds = array<i64: 1>, scalar_prefetch = 0 : i64, scratch_operands = 0 : i64, tpu.core_type = #tpu.core_type<tc>, window_params = [{transform_indices = @transform_0, window_bounds = array<i64: 128, 144>}, {pipeline_mode = #tpu.pipeline_mode<synchronous>, transform_indices = @transform_1, window_bounds = array<i64: 144, 16>}, {pipeline_mode = #tpu.pipeline_mode<synchronous>, transform_indices = @transform_2, window_bounds = array<i64: 1, 16>}, {pipeline_mode = #tpu.pipeline_mode<synchronous>, transform_indices = @transform_3, window_bounds = array<i64: 1, 16>}, {transform_indices = @transform_4, window_bounds = array<i64: 128, 16>}]} {
    %c0 = arith.constant 0 : index
    %c0_0 = arith.constant 0 : index
    %0 = vector.load %arg1[%c0, %c0_0] : memref<128x144xbf16, #tpu.memory_space<vmem>>, vector<128x144xbf16>
    %c0_1 = arith.constant 0 : index
    %c0_2 = arith.constant 0 : index
    %1 = vector.load %arg2[%c0_1, %c0_2] : memref<144x16xbf16, #tpu.memory_space<vmem>>, vector<144x16xbf16>
    %cst = arith.constant dense<0.000000e+00> : vector<128x16xf32>
    %2 = tpu.matmul %0, %1, %cst {dimension_numbers = #tpu.dot_dimension_numbers<[1], [0], [0], [1], [0, 0, 1, 1], [], []>} : vector<128x144xbf16>, vector<144x16xbf16>, vector<128x16xf32> -> vector<128x16xf32>
    %c0_3 = arith.constant 0 : index
    %c0_4 = arith.constant 0 : index
    %3 = vector.load %arg3[%c0_3, %c0_4] : memref<1x16xf32, #tpu.memory_space<vmem>>, vector<1x16xf32>
    %4 = vector.broadcast %3 : vector<1x16xf32> to vector<128x16xf32>
    %5 = arith.mulf %2, %4 : vector<128x16xf32>
    %c0_5 = arith.constant 0 : index
    %c0_6 = arith.constant 0 : index
    %6 = vector.load %arg4[%c0_5, %c0_6] : memref<1x16xf32, #tpu.memory_space<vmem>>, vector<1x16xf32>
    %7 = vector.broadcast %6 : vector<1x16xf32> to vector<128x16xf32>
    %8 = arith.addf %5, %7 : vector<128x16xf32>
    %c0_7 = arith.constant 0 : index
    %c0_8 = arith.constant 0 : index
    %9 = vector.load %arg5[%c0_7, %c0_8] : memref<128x16xf32, #tpu.memory_space<vmem>>, vector<128x16xf32>
    tpu.vector_store %arg5[%c0_7, %c0_8], %8 {strides = array<i32>} : memref<128x16xf32, #tpu.memory_space<vmem>>, vector<128x16xf32>,
    return
  }
  func.func @transform_0(%arg0: i32) -> (i32, i32) {
    %c0_i32 = arith.constant 0 : i32
    %c0_i32_0 = arith.constant 0 : i32
    return %arg0, %c0_i32 : i32, i32
  }
  func.func @transform_1(%arg0: i32) -> (i32, i32) {
    %c0_i32 = arith.constant 0 : i32
    %c0_i32_0 = arith.constant 0 : i32
    %c0_i32_1 = arith.constant 0 : i32
    return %c0_i32, %c0_i32_0 : i32, i32
  }
  func.func @transform_2(%arg0: i32) -> (i32, i32) {
    %c0_i32 = arith.constant 0 : i32
    %c0_i32_0 = arith.constant 0 : i32
    %c0_i32_1 = arith.constant 0 : i32
    return %c0_i32, %c0_i32_0 : i32, i32
  }
  func.func @transform_3(%arg0: i32) -> (i32, i32) {
    %c0_i32 = arith.constant 0 : i32
    %c0_i32_0 = arith.constant 0 : i32
    %c0_i32_1 = arith.constant 0 : i32
    return %c0_i32, %c0_i32_0 : i32, i32
  }
  func.func @transform_4(%arg0: i32) -> (i32, i32) {
    %c0_i32 = arith.constant 0 : i32
    %c0_i32_0 = arith.constant 0 : i32
    return %arg0, %c0_i32 : i32, i32
  }
}

module attributes {stable_mosaic.version = 11 : i64} {
  func.func @_mm_kernel(%arg0: i32, %arg1: memref<128x8xbf16, #tpu.memory_space<vmem>>, %arg2: memref<8x16xbf16, #tpu.memory_space<vmem>>, %arg3: memref<1x16xf32, #tpu.memory_space<vmem>>, %arg4: memref<1x16xf32, #tpu.memory_space<vmem>>, %arg5: memref<128x16xf32, #tpu.memory_space<vmem>>) attributes {dimension_semantics = [#tpu.dimension_semantics<parallel>], iteration_bounds = array<i64: 1>, scalar_prefetch = 0 : i64, scratch_operands = 0 : i64, tpu.core_type = #tpu.core_type<tc>, window_params = [{transform_indices = @transform_0, window_bounds = array<i64: 128, 8>}, {pipeline_mode = #tpu.pipeline_mode<synchronous>, transform_indices = @transform_1, window_bounds = array<i64: 8, 16>}, {pipeline_mode = #tpu.pipeline_mode<synchronous>, transform_indices = @transform_2, window_bounds = array<i64: 1, 16>}, {pipeline_mode = #tpu.pipeline_mode<synchronous>, transform_indices = @transform_3, window_bounds = array<i64: 1, 16>}, {transform_indices = @transform_4, window_bounds = array<i64: 128, 16>}]} {
    %c0 = arith.constant 0 : index
    %c0_0 = arith.constant 0 : index
    %0 = vector.load %arg1[%c0, %c0_0] : memref<128x8xbf16, #tpu.memory_space<vmem>>, vector<128x8xbf16>
    %c0_1 = arith.constant 0 : index
    %c0_2 = arith.constant 0 : index
    %1 = vector.load %arg2[%c0_1, %c0_2] : memref<8x16xbf16, #tpu.memory_space<vmem>>, vector<8x16xbf16>
    %cst = arith.constant dense<0.000000e+00> : vector<128x16xf32>
    %2 = tpu.matmul %0, %1, %cst {dimension_numbers = #tpu.dot_dimension_numbers<[1], [0], [0], [1], [0, 0, 1, 1], [], []>} : vector<128x8xbf16>, vector<8x16xbf16>, vector<128x16xf32> -> vector<128x16xf32>
    %c0_3 = arith.constant 0 : index
    %c0_4 = arith.constant 0 : index
    %3 = vector.load %arg3[%c0_3, %c0_4] : memref<1x16xf32, #tpu.memory_space<vmem>>, vector<1x16xf32>
    %4 = vector.broadcast %3 : vector<1x16xf32> to vector<128x16xf32>
    %5 = arith.mulf %2, %4 : vector<128x16xf32>
    %c0_5 = arith.constant 0 : index
    %c0_6 = arith.constant 0 : index
    %6 = vector.load %arg4[%c0_5, %c0_6] : memref<1x16xf32, #tpu.memory_space<vmem>>, vector<1x16xf32>
    %7 = vector.broadcast %6 : vector<1x16xf32> to vector<128x16xf32>
    %8 = arith.addf %5, %7 : vector<128x16xf32>
    %cst_7 = arith.constant 0.000000e+00 : f32
    %cst_8 = arith.constant 6.000000e+00 : f32
    %9 = vector.broadcast %cst_7 : f32 to vector<128x16xf32>
    %10 = arith.maximumf %9, %8 : vector<128x16xf32>
    %11 = vector.broadcast %cst_8 : f32 to vector<128x16xf32>
    %12 = arith.minimumf %11, %10 : vector<128x16xf32>
    %c0_9 = arith.constant 0 : index
    %c0_10 = arith.constant 0 : index
    %13 = vector.load %arg5[%c0_9, %c0_10] : memref<128x16xf32, #tpu.memory_space<vmem>>, vector<128x16xf32>
    tpu.vector_store %arg5[%c0_9, %c0_10], %12 {strides = array<i32>} : memref<128x16xf32, #tpu.memory_space<vmem>>, vector<128x16xf32>,
    return
  }
  func.func @transform_0(%arg0: i32) -> (i32, i32) {
    %c0_i32 = arith.constant 0 : i32
    %c0_i32_0 = arith.constant 0 : i32
    return %arg0, %c0_i32 : i32, i32
  }
  func.func @transform_1(%arg0: i32) -> (i32, i32) {
    %c0_i32 = arith.constant 0 : i32
    %c0_i32_0 = arith.constant 0 : i32
    %c0_i32_1 = arith.constant 0 : i32
    return %c0_i32, %c0_i32_0 : i32, i32
  }
  func.func @transform_2(%arg0: i32) -> (i32, i32) {
    %c0_i32 = arith.constant 0 : i32
    %c0_i32_0 = arith.constant 0 : i32
    %c0_i32_1 = arith.constant 0 : i32
    return %c0_i32, %c0_i32_0 : i32, i32
  }
  func.func @transform_3(%arg0: i32) -> (i32, i32) {
    %c0_i32 = arith.constant 0 : i32
    %c0_i32_0 = arith.constant 0 : i32
    %c0_i32_1 = arith.constant 0 : i32
    return %c0_i32, %c0_i32_0 : i32, i32
  }
  func.func @transform_4(%arg0: i32) -> (i32, i32) {
    %c0_i32 = arith.constant 0 : i32
    %c0_i32_0 = arith.constant 0 : i32
    return %arg0, %c0_i32 : i32, i32
  }
}

module attributes {stable_mosaic.version = 11 : i64} {
  func.func @_mm_kernel(%arg0: i32, %arg1: memref<32x144xbf16, #tpu.memory_space<vmem>>, %arg2: memref<144x32xbf16, #tpu.memory_space<vmem>>, %arg3: memref<1x32xf32, #tpu.memory_space<vmem>>, %arg4: memref<1x32xf32, #tpu.memory_space<vmem>>, %arg5: memref<32x32xf32, #tpu.memory_space<vmem>>) attributes {dimension_semantics = [#tpu.dimension_semantics<parallel>], iteration_bounds = array<i64: 1>, scalar_prefetch = 0 : i64, scratch_operands = 0 : i64, tpu.core_type = #tpu.core_type<tc>, window_params = [{transform_indices = @transform_0, window_bounds = array<i64: 32, 144>}, {pipeline_mode = #tpu.pipeline_mode<synchronous>, transform_indices = @transform_1, window_bounds = array<i64: 144, 32>}, {pipeline_mode = #tpu.pipeline_mode<synchronous>, transform_indices = @transform_2, window_bounds = array<i64: 1, 32>}, {pipeline_mode = #tpu.pipeline_mode<synchronous>, transform_indices = @transform_3, window_bounds = array<i64: 1, 32>}, {transform_indices = @transform_4, window_bounds = array<i64: 32, 32>}]} {
    %c0 = arith.constant 0 : index
    %c0_0 = arith.constant 0 : index
    %0 = vector.load %arg1[%c0, %c0_0] : memref<32x144xbf16, #tpu.memory_space<vmem>>, vector<32x144xbf16>
    %c0_1 = arith.constant 0 : index
    %c0_2 = arith.constant 0 : index
    %1 = vector.load %arg2[%c0_1, %c0_2] : memref<144x32xbf16, #tpu.memory_space<vmem>>, vector<144x32xbf16>
    %cst = arith.constant dense<0.000000e+00> : vector<32x32xf32>
    %2 = tpu.matmul %0, %1, %cst {dimension_numbers = #tpu.dot_dimension_numbers<[1], [0], [0], [1], [0, 0, 1, 1], [], []>} : vector<32x144xbf16>, vector<144x32xbf16>, vector<32x32xf32> -> vector<32x32xf32>
    %c0_3 = arith.constant 0 : index
    %c0_4 = arith.constant 0 : index
    %3 = vector.load %arg3[%c0_3, %c0_4] : memref<1x32xf32, #tpu.memory_space<vmem>>, vector<1x32xf32>
    %4 = vector.broadcast %3 : vector<1x32xf32> to vector<32x32xf32>
    %5 = arith.mulf %2, %4 : vector<32x32xf32>
    %c0_5 = arith.constant 0 : index
    %c0_6 = arith.constant 0 : index
    %6 = vector.load %arg4[%c0_5, %c0_6] : memref<1x32xf32, #tpu.memory_space<vmem>>, vector<1x32xf32>
    %7 = vector.broadcast %6 : vector<1x32xf32> to vector<32x32xf32>
    %8 = arith.addf %5, %7 : vector<32x32xf32>
    %cst_7 = arith.constant 0.000000e+00 : f32
    %cst_8 = arith.constant 6.000000e+00 : f32
    %9 = vector.broadcast %cst_7 : f32 to vector<32x32xf32>
    %10 = arith.maximumf %9, %8 : vector<32x32xf32>
    %11 = vector.broadcast %cst_8 : f32 to vector<32x32xf32>
    %12 = arith.minimumf %11, %10 : vector<32x32xf32>
    %c0_9 = arith.constant 0 : index
    %c0_10 = arith.constant 0 : index
    %13 = vector.load %arg5[%c0_9, %c0_10] : memref<32x32xf32, #tpu.memory_space<vmem>>, vector<32x32xf32>
    tpu.vector_store %arg5[%c0_9, %c0_10], %12 {strides = array<i32>} : memref<32x32xf32, #tpu.memory_space<vmem>>, vector<32x32xf32>,
    return
  }
  func.func @transform_0(%arg0: i32) -> (i32, i32) {
    %c0_i32 = arith.constant 0 : i32
    %c0_i32_0 = arith.constant 0 : i32
    return %arg0, %c0_i32 : i32, i32
  }
  func.func @transform_1(%arg0: i32) -> (i32, i32) {
    %c0_i32 = arith.constant 0 : i32
    %c0_i32_0 = arith.constant 0 : i32
    %c0_i32_1 = arith.constant 0 : i32
    return %c0_i32, %c0_i32_0 : i32, i32
  }
  func.func @transform_2(%arg0: i32) -> (i32, i32) {
    %c0_i32 = arith.constant 0 : i32
    %c0_i32_0 = arith.constant 0 : i32
    %c0_i32_1 = arith.constant 0 : i32
    return %c0_i32, %c0_i32_0 : i32, i32
  }
  func.func @transform_3(%arg0: i32) -> (i32, i32) {
    %c0_i32 = arith.constant 0 : i32
    %c0_i32_0 = arith.constant 0 : i32
    %c0_i32_1 = arith.constant 0 : i32
    return %c0_i32, %c0_i32_0 : i32, i32
  }
  func.func @transform_4(%arg0: i32) -> (i32, i32) {
    %c0_i32 = arith.constant 0 : i32
    %c0_i32_0 = arith.constant 0 : i32
    return %arg0, %c0_i32 : i32, i32
  }
}

module attributes {stable_mosaic.version = 11 : i64} {
  func.func @_mm_kernel(%arg0: i32, %arg1: memref<32x288xbf16, #tpu.memory_space<vmem>>, %arg2: memref<288x32xbf16, #tpu.memory_space<vmem>>, %arg3: memref<1x32xf32, #tpu.memory_space<vmem>>, %arg4: memref<1x32xf32, #tpu.memory_space<vmem>>, %arg5: memref<32x32xf32, #tpu.memory_space<vmem>>) attributes {dimension_semantics = [#tpu.dimension_semantics<parallel>], iteration_bounds = array<i64: 1>, scalar_prefetch = 0 : i64, scratch_operands = 0 : i64, tpu.core_type = #tpu.core_type<tc>, window_params = [{transform_indices = @transform_0, window_bounds = array<i64: 32, 288>}, {pipeline_mode = #tpu.pipeline_mode<synchronous>, transform_indices = @transform_1, window_bounds = array<i64: 288, 32>}, {pipeline_mode = #tpu.pipeline_mode<synchronous>, transform_indices = @transform_2, window_bounds = array<i64: 1, 32>}, {pipeline_mode = #tpu.pipeline_mode<synchronous>, transform_indices = @transform_3, window_bounds = array<i64: 1, 32>}, {transform_indices = @transform_4, window_bounds = array<i64: 32, 32>}]} {
    %c0 = arith.constant 0 : index
    %c0_0 = arith.constant 0 : index
    %0 = vector.load %arg1[%c0, %c0_0] : memref<32x288xbf16, #tpu.memory_space<vmem>>, vector<32x288xbf16>
    %c0_1 = arith.constant 0 : index
    %c0_2 = arith.constant 0 : index
    %1 = vector.load %arg2[%c0_1, %c0_2] : memref<288x32xbf16, #tpu.memory_space<vmem>>, vector<288x32xbf16>
    %cst = arith.constant dense<0.000000e+00> : vector<32x32xf32>
    %2 = tpu.matmul %0, %1, %cst {dimension_numbers = #tpu.dot_dimension_numbers<[1], [0], [0], [1], [0, 0, 1, 1], [], []>} : vector<32x288xbf16>, vector<288x32xbf16>, vector<32x32xf32> -> vector<32x32xf32>
    %c0_3 = arith.constant 0 : index
    %c0_4 = arith.constant 0 : index
    %3 = vector.load %arg3[%c0_3, %c0_4] : memref<1x32xf32, #tpu.memory_space<vmem>>, vector<1x32xf32>
    %4 = vector.broadcast %3 : vector<1x32xf32> to vector<32x32xf32>
    %5 = arith.mulf %2, %4 : vector<32x32xf32>
    %c0_5 = arith.constant 0 : index
    %c0_6 = arith.constant 0 : index
    %6 = vector.load %arg4[%c0_5, %c0_6] : memref<1x32xf32, #tpu.memory_space<vmem>>, vector<1x32xf32>
    %7 = vector.broadcast %6 : vector<1x32xf32> to vector<32x32xf32>
    %8 = arith.addf %5, %7 : vector<32x32xf32>
    %c0_7 = arith.constant 0 : index
    %c0_8 = arith.constant 0 : index
    %9 = vector.load %arg5[%c0_7, %c0_8] : memref<32x32xf32, #tpu.memory_space<vmem>>, vector<32x32xf32>
    tpu.vector_store %arg5[%c0_7, %c0_8], %8 {strides = array<i32>} : memref<32x32xf32, #tpu.memory_space<vmem>>, vector<32x32xf32>,
    return
  }
  func.func @transform_0(%arg0: i32) -> (i32, i32) {
    %c0_i32 = arith.constant 0 : i32
    %c0_i32_0 = arith.constant 0 : i32
    return %arg0, %c0_i32 : i32, i32
  }
  func.func @transform_1(%arg0: i32) -> (i32, i32) {
    %c0_i32 = arith.constant 0 : i32
    %c0_i32_0 = arith.constant 0 : i32
    %c0_i32_1 = arith.constant 0 : i32
    return %c0_i32, %c0_i32_0 : i32, i32
  }
  func.func @transform_2(%arg0: i32) -> (i32, i32) {
    %c0_i32 = arith.constant 0 : i32
    %c0_i32_0 = arith.constant 0 : i32
    %c0_i32_1 = arith.constant 0 : i32
    return %c0_i32, %c0_i32_0 : i32, i32
  }
  func.func @transform_3(%arg0: i32) -> (i32, i32) {
    %c0_i32 = arith.constant 0 : i32
    %c0_i32_0 = arith.constant 0 : i32
    %c0_i32_1 = arith.constant 0 : i32
    return %c0_i32, %c0_i32_0 : i32, i32
  }
  func.func @transform_4(%arg0: i32) -> (i32, i32) {
    %c0_i32 = arith.constant 0 : i32
    %c0_i32_0 = arith.constant 0 : i32
    return %arg0, %c0_i32 : i32, i32
  }
}

module attributes {stable_mosaic.version = 11 : i64} {
  func.func @_mm_kernel(%arg0: i32, %arg1: memref<32x16xbf16, #tpu.memory_space<vmem>>, %arg2: memref<16x32xbf16, #tpu.memory_space<vmem>>, %arg3: memref<1x32xf32, #tpu.memory_space<vmem>>, %arg4: memref<1x32xf32, #tpu.memory_space<vmem>>, %arg5: memref<32x32xf32, #tpu.memory_space<vmem>>) attributes {dimension_semantics = [#tpu.dimension_semantics<parallel>], iteration_bounds = array<i64: 1>, scalar_prefetch = 0 : i64, scratch_operands = 0 : i64, tpu.core_type = #tpu.core_type<tc>, window_params = [{transform_indices = @transform_0, window_bounds = array<i64: 32, 16>}, {pipeline_mode = #tpu.pipeline_mode<synchronous>, transform_indices = @transform_1, window_bounds = array<i64: 16, 32>}, {pipeline_mode = #tpu.pipeline_mode<synchronous>, transform_indices = @transform_2, window_bounds = array<i64: 1, 32>}, {pipeline_mode = #tpu.pipeline_mode<synchronous>, transform_indices = @transform_3, window_bounds = array<i64: 1, 32>}, {transform_indices = @transform_4, window_bounds = array<i64: 32, 32>}]} {
    %c0 = arith.constant 0 : index
    %c0_0 = arith.constant 0 : index
    %0 = vector.load %arg1[%c0, %c0_0] : memref<32x16xbf16, #tpu.memory_space<vmem>>, vector<32x16xbf16>
    %c0_1 = arith.constant 0 : index
    %c0_2 = arith.constant 0 : index
    %1 = vector.load %arg2[%c0_1, %c0_2] : memref<16x32xbf16, #tpu.memory_space<vmem>>, vector<16x32xbf16>
    %cst = arith.constant dense<0.000000e+00> : vector<32x32xf32>
    %2 = tpu.matmul %0, %1, %cst {dimension_numbers = #tpu.dot_dimension_numbers<[1], [0], [0], [1], [0, 0, 1, 1], [], []>} : vector<32x16xbf16>, vector<16x32xbf16>, vector<32x32xf32> -> vector<32x32xf32>
    %c0_3 = arith.constant 0 : index
    %c0_4 = arith.constant 0 : index
    %3 = vector.load %arg3[%c0_3, %c0_4] : memref<1x32xf32, #tpu.memory_space<vmem>>, vector<1x32xf32>
    %4 = vector.broadcast %3 : vector<1x32xf32> to vector<32x32xf32>
    %5 = arith.mulf %2, %4 : vector<32x32xf32>
    %c0_5 = arith.constant 0 : index
    %c0_6 = arith.constant 0 : index
    %6 = vector.load %arg4[%c0_5, %c0_6] : memref<1x32xf32, #tpu.memory_space<vmem>>, vector<1x32xf32>
    %7 = vector.broadcast %6 : vector<1x32xf32> to vector<32x32xf32>
    %8 = arith.addf %5, %7 : vector<32x32xf32>
    %cst_7 = arith.constant 0.000000e+00 : f32
    %cst_8 = arith.constant 6.000000e+00 : f32
    %9 = vector.broadcast %cst_7 : f32 to vector<32x32xf32>
    %10 = arith.maximumf %9, %8 : vector<32x32xf32>
    %11 = vector.broadcast %cst_8 : f32 to vector<32x32xf32>
    %12 = arith.minimumf %11, %10 : vector<32x32xf32>
    %c0_9 = arith.constant 0 : index
    %c0_10 = arith.constant 0 : index
    %13 = vector.load %arg5[%c0_9, %c0_10] : memref<32x32xf32, #tpu.memory_space<vmem>>, vector<32x32xf32>
    tpu.vector_store %arg5[%c0_9, %c0_10], %12 {strides = array<i32>} : memref<32x32xf32, #tpu.memory_space<vmem>>, vector<32x32xf32>,
    return
  }
  func.func @transform_0(%arg0: i32) -> (i32, i32) {
    %c0_i32 = arith.constant 0 : i32
    %c0_i32_0 = arith.constant 0 : i32
    return %arg0, %c0_i32 : i32, i32
  }
  func.func @transform_1(%arg0: i32) -> (i32, i32) {
    %c0_i32 = arith.constant 0 : i32
    %c0_i32_0 = arith.constant 0 : i32
    %c0_i32_1 = arith.constant 0 : i32
    return %c0_i32, %c0_i32_0 : i32, i32
  }
  func.func @transform_2(%arg0: i32) -> (i32, i32) {
    %c0_i32 = arith.constant 0 : i32
    %c0_i32_0 = arith.constant 0 : i32
    %c0_i32_1 = arith.constant 0 : i32
    return %c0_i32, %c0_i32_0 : i32, i32
  }
  func.func @transform_3(%arg0: i32) -> (i32, i32) {
    %c0_i32 = arith.constant 0 : i32
    %c0_i32_0 = arith.constant 0 : i32
    %c0_i32_1 = arith.constant 0 : i32
    return %c0_i32, %c0_i32_0 : i32, i32
  }
  func.func @transform_4(%arg0: i32) -> (i32, i32) {
    %c0_i32 = arith.constant 0 : i32
    %c0_i32_0 = arith.constant 0 : i32
    return %arg0, %c0_i32 : i32, i32
  }
}

module attributes {stable_mosaic.version = 11 : i64} {
  func.func @_mm_kernel(%arg0: i32, %arg1: memref<8x288xbf16, #tpu.memory_space<vmem>>, %arg2: memref<288x64xbf16, #tpu.memory_space<vmem>>, %arg3: memref<1x64xf32, #tpu.memory_space<vmem>>, %arg4: memref<1x64xf32, #tpu.memory_space<vmem>>, %arg5: memref<8x64xf32, #tpu.memory_space<vmem>>) attributes {dimension_semantics = [#tpu.dimension_semantics<parallel>], iteration_bounds = array<i64: 1>, scalar_prefetch = 0 : i64, scratch_operands = 0 : i64, tpu.core_type = #tpu.core_type<tc>, window_params = [{transform_indices = @transform_0, window_bounds = array<i64: 8, 288>}, {pipeline_mode = #tpu.pipeline_mode<synchronous>, transform_indices = @transform_1, window_bounds = array<i64: 288, 64>}, {pipeline_mode = #tpu.pipeline_mode<synchronous>, transform_indices = @transform_2, window_bounds = array<i64: 1, 64>}, {pipeline_mode = #tpu.pipeline_mode<synchronous>, transform_indices = @transform_3, window_bounds = array<i64: 1, 64>}, {transform_indices = @transform_4, window_bounds = array<i64: 8, 64>}]} {
    %c0 = arith.constant 0 : index
    %c0_0 = arith.constant 0 : index
    %0 = vector.load %arg1[%c0, %c0_0] : memref<8x288xbf16, #tpu.memory_space<vmem>>, vector<8x288xbf16>
    %c0_1 = arith.constant 0 : index
    %c0_2 = arith.constant 0 : index
    %1 = vector.load %arg2[%c0_1, %c0_2] : memref<288x64xbf16, #tpu.memory_space<vmem>>, vector<288x64xbf16>
    %cst = arith.constant dense<0.000000e+00> : vector<8x64xf32>
    %2 = tpu.matmul %0, %1, %cst {dimension_numbers = #tpu.dot_dimension_numbers<[1], [0], [0], [1], [0, 0, 1, 1], [], []>} : vector<8x288xbf16>, vector<288x64xbf16>, vector<8x64xf32> -> vector<8x64xf32>
    %c0_3 = arith.constant 0 : index
    %c0_4 = arith.constant 0 : index
    %3 = vector.load %arg3[%c0_3, %c0_4] : memref<1x64xf32, #tpu.memory_space<vmem>>, vector<1x64xf32>
    %4 = vector.broadcast %3 : vector<1x64xf32> to vector<8x64xf32>
    %5 = arith.mulf %2, %4 : vector<8x64xf32>
    %c0_5 = arith.constant 0 : index
    %c0_6 = arith.constant 0 : index
    %6 = vector.load %arg4[%c0_5, %c0_6] : memref<1x64xf32, #tpu.memory_space<vmem>>, vector<1x64xf32>
    %7 = vector.broadcast %6 : vector<1x64xf32> to vector<8x64xf32>
    %8 = arith.addf %5, %7 : vector<8x64xf32>
    %cst_7 = arith.constant 0.000000e+00 : f32
    %cst_8 = arith.constant 6.000000e+00 : f32
    %9 = vector.broadcast %cst_7 : f32 to vector<8x64xf32>
    %10 = arith.maximumf %9, %8 : vector<8x64xf32>
    %11 = vector.broadcast %cst_8 : f32 to vector<8x64xf32>
    %12 = arith.minimumf %11, %10 : vector<8x64xf32>
    %c0_9 = arith.constant 0 : index
    %c0_10 = arith.constant 0 : index
    %13 = vector.load %arg5[%c0_9, %c0_10] : memref<8x64xf32, #tpu.memory_space<vmem>>, vector<8x64xf32>
    tpu.vector_store %arg5[%c0_9, %c0_10], %12 {strides = array<i32>} : memref<8x64xf32, #tpu.memory_space<vmem>>, vector<8x64xf32>,
    return
  }
  func.func @transform_0(%arg0: i32) -> (i32, i32) {
    %c0_i32 = arith.constant 0 : i32
    %c0_i32_0 = arith.constant 0 : i32
    return %arg0, %c0_i32 : i32, i32
  }
  func.func @transform_1(%arg0: i32) -> (i32, i32) {
    %c0_i32 = arith.constant 0 : i32
    %c0_i32_0 = arith.constant 0 : i32
    %c0_i32_1 = arith.constant 0 : i32
    return %c0_i32, %c0_i32_0 : i32, i32
  }
  func.func @transform_2(%arg0: i32) -> (i32, i32) {
    %c0_i32 = arith.constant 0 : i32
    %c0_i32_0 = arith.constant 0 : i32
    %c0_i32_1 = arith.constant 0 : i32
    return %c0_i32, %c0_i32_0 : i32, i32
  }
  func.func @transform_3(%arg0: i32) -> (i32, i32) {
    %c0_i32 = arith.constant 0 : i32
    %c0_i32_0 = arith.constant 0 : i32
    %c0_i32_1 = arith.constant 0 : i32
    return %c0_i32, %c0_i32_0 : i32, i32
  }
  func.func @transform_4(%arg0: i32) -> (i32, i32) {
    %c0_i32 = arith.constant 0 : i32
    %c0_i32_0 = arith.constant 0 : i32
    return %arg0, %c0_i32 : i32, i32
  }
}

module attributes {stable_mosaic.version = 11 : i64} {
  func.func @_mm_kernel(%arg0: i32, %arg1: memref<8x576xbf16, #tpu.memory_space<vmem>>, %arg2: memref<576x64xbf16, #tpu.memory_space<vmem>>, %arg3: memref<1x64xf32, #tpu.memory_space<vmem>>, %arg4: memref<1x64xf32, #tpu.memory_space<vmem>>, %arg5: memref<8x64xf32, #tpu.memory_space<vmem>>) attributes {dimension_semantics = [#tpu.dimension_semantics<parallel>], iteration_bounds = array<i64: 1>, scalar_prefetch = 0 : i64, scratch_operands = 0 : i64, tpu.core_type = #tpu.core_type<tc>, window_params = [{transform_indices = @transform_0, window_bounds = array<i64: 8, 576>}, {pipeline_mode = #tpu.pipeline_mode<synchronous>, transform_indices = @transform_1, window_bounds = array<i64: 576, 64>}, {pipeline_mode = #tpu.pipeline_mode<synchronous>, transform_indices = @transform_2, window_bounds = array<i64: 1, 64>}, {pipeline_mode = #tpu.pipeline_mode<synchronous>, transform_indices = @transform_3, window_bounds = array<i64: 1, 64>}, {transform_indices = @transform_4, window_bounds = array<i64: 8, 64>}]} {
    %c0 = arith.constant 0 : index
    %c0_0 = arith.constant 0 : index
    %0 = vector.load %arg1[%c0, %c0_0] : memref<8x576xbf16, #tpu.memory_space<vmem>>, vector<8x576xbf16>
    %c0_1 = arith.constant 0 : index
    %c0_2 = arith.constant 0 : index
    %1 = vector.load %arg2[%c0_1, %c0_2] : memref<576x64xbf16, #tpu.memory_space<vmem>>, vector<576x64xbf16>
    %cst = arith.constant dense<0.000000e+00> : vector<8x64xf32>
    %2 = tpu.matmul %0, %1, %cst {dimension_numbers = #tpu.dot_dimension_numbers<[1], [0], [0], [1], [0, 0, 1, 1], [], []>} : vector<8x576xbf16>, vector<576x64xbf16>, vector<8x64xf32> -> vector<8x64xf32>
    %c0_3 = arith.constant 0 : index
    %c0_4 = arith.constant 0 : index
    %3 = vector.load %arg3[%c0_3, %c0_4] : memref<1x64xf32, #tpu.memory_space<vmem>>, vector<1x64xf32>
    %4 = vector.broadcast %3 : vector<1x64xf32> to vector<8x64xf32>
    %5 = arith.mulf %2, %4 : vector<8x64xf32>
    %c0_5 = arith.constant 0 : index
    %c0_6 = arith.constant 0 : index
    %6 = vector.load %arg4[%c0_5, %c0_6] : memref<1x64xf32, #tpu.memory_space<vmem>>, vector<1x64xf32>
    %7 = vector.broadcast %6 : vector<1x64xf32> to vector<8x64xf32>
    %8 = arith.addf %5, %7 : vector<8x64xf32>
    %c0_7 = arith.constant 0 : index
    %c0_8 = arith.constant 0 : index
    %9 = vector.load %arg5[%c0_7, %c0_8] : memref<8x64xf32, #tpu.memory_space<vmem>>, vector<8x64xf32>
    tpu.vector_store %arg5[%c0_7, %c0_8], %8 {strides = array<i32>} : memref<8x64xf32, #tpu.memory_space<vmem>>, vector<8x64xf32>,
    return
  }
  func.func @transform_0(%arg0: i32) -> (i32, i32) {
    %c0_i32 = arith.constant 0 : i32
    %c0_i32_0 = arith.constant 0 : i32
    return %arg0, %c0_i32 : i32, i32
  }
  func.func @transform_1(%arg0: i32) -> (i32, i32) {
    %c0_i32 = arith.constant 0 : i32
    %c0_i32_0 = arith.constant 0 : i32
    %c0_i32_1 = arith.constant 0 : i32
    return %c0_i32, %c0_i32_0 : i32, i32
  }
  func.func @transform_2(%arg0: i32) -> (i32, i32) {
    %c0_i32 = arith.constant 0 : i32
    %c0_i32_0 = arith.constant 0 : i32
    %c0_i32_1 = arith.constant 0 : i32
    return %c0_i32, %c0_i32_0 : i32, i32
  }
  func.func @transform_3(%arg0: i32) -> (i32, i32) {
    %c0_i32 = arith.constant 0 : i32
    %c0_i32_0 = arith.constant 0 : i32
    %c0_i32_1 = arith.constant 0 : i32
    return %c0_i32, %c0_i32_0 : i32, i32
  }
  func.func @transform_4(%arg0: i32) -> (i32, i32) {
    %c0_i32 = arith.constant 0 : i32
    %c0_i32_0 = arith.constant 0 : i32
    return %arg0, %c0_i32 : i32, i32
  }
}

module attributes {stable_mosaic.version = 11 : i64} {
  func.func @_mm_kernel(%arg0: i32, %arg1: memref<8x32xbf16, #tpu.memory_space<vmem>>, %arg2: memref<32x64xbf16, #tpu.memory_space<vmem>>, %arg3: memref<1x64xf32, #tpu.memory_space<vmem>>, %arg4: memref<1x64xf32, #tpu.memory_space<vmem>>, %arg5: memref<8x64xf32, #tpu.memory_space<vmem>>) attributes {dimension_semantics = [#tpu.dimension_semantics<parallel>], iteration_bounds = array<i64: 1>, scalar_prefetch = 0 : i64, scratch_operands = 0 : i64, tpu.core_type = #tpu.core_type<tc>, window_params = [{transform_indices = @transform_0, window_bounds = array<i64: 8, 32>}, {pipeline_mode = #tpu.pipeline_mode<synchronous>, transform_indices = @transform_1, window_bounds = array<i64: 32, 64>}, {pipeline_mode = #tpu.pipeline_mode<synchronous>, transform_indices = @transform_2, window_bounds = array<i64: 1, 64>}, {pipeline_mode = #tpu.pipeline_mode<synchronous>, transform_indices = @transform_3, window_bounds = array<i64: 1, 64>}, {transform_indices = @transform_4, window_bounds = array<i64: 8, 64>}]} {
    %c0 = arith.constant 0 : index
    %c0_0 = arith.constant 0 : index
    %0 = vector.load %arg1[%c0, %c0_0] : memref<8x32xbf16, #tpu.memory_space<vmem>>, vector<8x32xbf16>
    %c0_1 = arith.constant 0 : index
    %c0_2 = arith.constant 0 : index
    %1 = vector.load %arg2[%c0_1, %c0_2] : memref<32x64xbf16, #tpu.memory_space<vmem>>, vector<32x64xbf16>
    %cst = arith.constant dense<0.000000e+00> : vector<8x64xf32>
    %2 = tpu.matmul %0, %1, %cst {dimension_numbers = #tpu.dot_dimension_numbers<[1], [0], [0], [1], [0, 0, 1, 1], [], []>} : vector<8x32xbf16>, vector<32x64xbf16>, vector<8x64xf32> -> vector<8x64xf32>
    %c0_3 = arith.constant 0 : index
    %c0_4 = arith.constant 0 : index
    %3 = vector.load %arg3[%c0_3, %c0_4] : memref<1x64xf32, #tpu.memory_space<vmem>>, vector<1x64xf32>
    %4 = vector.broadcast %3 : vector<1x64xf32> to vector<8x64xf32>
    %5 = arith.mulf %2, %4 : vector<8x64xf32>
    %c0_5 = arith.constant 0 : index
    %c0_6 = arith.constant 0 : index
    %6 = vector.load %arg4[%c0_5, %c0_6] : memref<1x64xf32, #tpu.memory_space<vmem>>, vector<1x64xf32>
    %7 = vector.broadcast %6 : vector<1x64xf32> to vector<8x64xf32>
    %8 = arith.addf %5, %7 : vector<8x64xf32>
    %cst_7 = arith.constant 0.000000e+00 : f32
    %cst_8 = arith.constant 6.000000e+00 : f32
    %9 = vector.broadcast %cst_7 : f32 to vector<8x64xf32>
    %10 = arith.maximumf %9, %8 : vector<8x64xf32>
    %11 = vector.broadcast %cst_8 : f32 to vector<8x64xf32>
    %12 = arith.minimumf %11, %10 : vector<8x64xf32>
    %c0_9 = arith.constant 0 : index
    %c0_10 = arith.constant 0 : index
    %13 = vector.load %arg5[%c0_9, %c0_10] : memref<8x64xf32, #tpu.memory_space<vmem>>, vector<8x64xf32>
    tpu.vector_store %arg5[%c0_9, %c0_10], %12 {strides = array<i32>} : memref<8x64xf32, #tpu.memory_space<vmem>>, vector<8x64xf32>,
    return
  }
  func.func @transform_0(%arg0: i32) -> (i32, i32) {
    %c0_i32 = arith.constant 0 : i32
    %c0_i32_0 = arith.constant 0 : i32
    return %arg0, %c0_i32 : i32, i32
  }
  func.func @transform_1(%arg0: i32) -> (i32, i32) {
    %c0_i32 = arith.constant 0 : i32
    %c0_i32_0 = arith.constant 0 : i32
    %c0_i32_1 = arith.constant 0 : i32
    return %c0_i32, %c0_i32_0 : i32, i32
  }
  func.func @transform_2(%arg0: i32) -> (i32, i32) {
    %c0_i32 = arith.constant 0 : i32
    %c0_i32_0 = arith.constant 0 : i32
    %c0_i32_1 = arith.constant 0 : i32
    return %c0_i32, %c0_i32_0 : i32, i32
  }
  func.func @transform_3(%arg0: i32) -> (i32, i32) {
    %c0_i32 = arith.constant 0 : i32
    %c0_i32_0 = arith.constant 0 : i32
    %c0_i32_1 = arith.constant 0 : i32
    return %c0_i32, %c0_i32_0 : i32, i32
  }
  func.func @transform_4(%arg0: i32) -> (i32, i32) {
    %c0_i32 = arith.constant 0 : i32
    %c0_i32_0 = arith.constant 0 : i32
    return %arg0, %c0_i32 : i32, i32
  }
}

module attributes {stable_mosaic.version = 11 : i64} {
  func.func @_mm_kernel(%arg0: i32, %arg1: memref<8x64xbf16, #tpu.memory_space<vmem>>, %arg2: memref<64x32xbf16, #tpu.memory_space<vmem>>, %arg3: memref<1x32xf32, #tpu.memory_space<vmem>>, %arg4: memref<1x32xf32, #tpu.memory_space<vmem>>, %arg5: memref<8x32xf32, #tpu.memory_space<vmem>>) attributes {dimension_semantics = [#tpu.dimension_semantics<parallel>], iteration_bounds = array<i64: 1>, scalar_prefetch = 0 : i64, scratch_operands = 0 : i64, tpu.core_type = #tpu.core_type<tc>, window_params = [{transform_indices = @transform_0, window_bounds = array<i64: 8, 64>}, {pipeline_mode = #tpu.pipeline_mode<synchronous>, transform_indices = @transform_1, window_bounds = array<i64: 64, 32>}, {pipeline_mode = #tpu.pipeline_mode<synchronous>, transform_indices = @transform_2, window_bounds = array<i64: 1, 32>}, {pipeline_mode = #tpu.pipeline_mode<synchronous>, transform_indices = @transform_3, window_bounds = array<i64: 1, 32>}, {transform_indices = @transform_4, window_bounds = array<i64: 8, 32>}]} {
    %c0 = arith.constant 0 : index
    %c0_0 = arith.constant 0 : index
    %0 = vector.load %arg1[%c0, %c0_0] : memref<8x64xbf16, #tpu.memory_space<vmem>>, vector<8x64xbf16>
    %c0_1 = arith.constant 0 : index
    %c0_2 = arith.constant 0 : index
    %1 = vector.load %arg2[%c0_1, %c0_2] : memref<64x32xbf16, #tpu.memory_space<vmem>>, vector<64x32xbf16>
    %cst = arith.constant dense<0.000000e+00> : vector<8x32xf32>
    %2 = tpu.matmul %0, %1, %cst {dimension_numbers = #tpu.dot_dimension_numbers<[1], [0], [0], [1], [0, 0, 1, 1], [], []>} : vector<8x64xbf16>, vector<64x32xbf16>, vector<8x32xf32> -> vector<8x32xf32>
    %c0_3 = arith.constant 0 : index
    %c0_4 = arith.constant 0 : index
    %3 = vector.load %arg3[%c0_3, %c0_4] : memref<1x32xf32, #tpu.memory_space<vmem>>, vector<1x32xf32>
    %4 = vector.broadcast %3 : vector<1x32xf32> to vector<8x32xf32>
    %5 = arith.mulf %2, %4 : vector<8x32xf32>
    %c0_5 = arith.constant 0 : index
    %c0_6 = arith.constant 0 : index
    %6 = vector.load %arg4[%c0_5, %c0_6] : memref<1x32xf32, #tpu.memory_space<vmem>>, vector<1x32xf32>
    %7 = vector.broadcast %6 : vector<1x32xf32> to vector<8x32xf32>
    %8 = arith.addf %5, %7 : vector<8x32xf32>
    %c0_7 = arith.constant 0 : index
    %c0_8 = arith.constant 0 : index
    %9 = vector.load %arg5[%c0_7, %c0_8] : memref<8x32xf32, #tpu.memory_space<vmem>>, vector<8x32xf32>
    tpu.vector_store %arg5[%c0_7, %c0_8], %8 {strides = array<i32>} : memref<8x32xf32, #tpu.memory_space<vmem>>, vector<8x32xf32>,
    return
  }
  func.func @transform_0(%arg0: i32) -> (i32, i32) {
    %c0_i32 = arith.constant 0 : i32
    %c0_i32_0 = arith.constant 0 : i32
    return %arg0, %c0_i32 : i32, i32
  }
  func.func @transform_1(%arg0: i32) -> (i32, i32) {
    %c0_i32 = arith.constant 0 : i32
    %c0_i32_0 = arith.constant 0 : i32
    %c0_i32_1 = arith.constant 0 : i32
    return %c0_i32, %c0_i32_0 : i32, i32
  }
  func.func @transform_2(%arg0: i32) -> (i32, i32) {
    %c0_i32 = arith.constant 0 : i32
    %c0_i32_0 = arith.constant 0 : i32
    %c0_i32_1 = arith.constant 0 : i32
    return %c0_i32, %c0_i32_0 : i32, i32
  }
  func.func @transform_3(%arg0: i32) -> (i32, i32) {
    %c0_i32 = arith.constant 0 : i32
    %c0_i32_0 = arith.constant 0 : i32
    %c0_i32_1 = arith.constant 0 : i32
    return %c0_i32, %c0_i32_0 : i32, i32
  }
  func.func @transform_4(%arg0: i32) -> (i32, i32) {
    %c0_i32 = arith.constant 0 : i32
    %c0_i32_0 = arith.constant 0 : i32
    return %arg0, %c0_i32 : i32, i32
  }
}

module attributes {stable_mosaic.version = 11 : i64} {
  func.func @_mm_kernel(%arg0: i32, %arg1: memref<8x32xbf16, #tpu.memory_space<vmem>>, %arg2: memref<32x64xbf16, #tpu.memory_space<vmem>>, %arg3: memref<1x64xf32, #tpu.memory_space<vmem>>, %arg4: memref<1x64xf32, #tpu.memory_space<vmem>>, %arg5: memref<8x64xf32, #tpu.memory_space<vmem>>) attributes {dimension_semantics = [#tpu.dimension_semantics<parallel>], iteration_bounds = array<i64: 1>, scalar_prefetch = 0 : i64, scratch_operands = 0 : i64, tpu.core_type = #tpu.core_type<tc>, window_params = [{transform_indices = @transform_0, window_bounds = array<i64: 8, 32>}, {pipeline_mode = #tpu.pipeline_mode<synchronous>, transform_indices = @transform_1, window_bounds = array<i64: 32, 64>}, {pipeline_mode = #tpu.pipeline_mode<synchronous>, transform_indices = @transform_2, window_bounds = array<i64: 1, 64>}, {pipeline_mode = #tpu.pipeline_mode<synchronous>, transform_indices = @transform_3, window_bounds = array<i64: 1, 64>}, {transform_indices = @transform_4, window_bounds = array<i64: 8, 64>}]} {
    %c0 = arith.constant 0 : index
    %c0_0 = arith.constant 0 : index
    %0 = vector.load %arg1[%c0, %c0_0] : memref<8x32xbf16, #tpu.memory_space<vmem>>, vector<8x32xbf16>
    %c0_1 = arith.constant 0 : index
    %c0_2 = arith.constant 0 : index
    %1 = vector.load %arg2[%c0_1, %c0_2] : memref<32x64xbf16, #tpu.memory_space<vmem>>, vector<32x64xbf16>
    %cst = arith.constant dense<0.000000e+00> : vector<8x64xf32>
    %2 = tpu.matmul %0, %1, %cst {dimension_numbers = #tpu.dot_dimension_numbers<[1], [0], [0], [1], [0, 0, 1, 1], [], []>} : vector<8x32xbf16>, vector<32x64xbf16>, vector<8x64xf32> -> vector<8x64xf32>
    %c0_3 = arith.constant 0 : index
    %c0_4 = arith.constant 0 : index
    %3 = vector.load %arg3[%c0_3, %c0_4] : memref<1x64xf32, #tpu.memory_space<vmem>>, vector<1x64xf32>
    %4 = vector.broadcast %3 : vector<1x64xf32> to vector<8x64xf32>
    %5 = arith.mulf %2, %4 : vector<8x64xf32>
    %c0_5 = arith.constant 0 : index
    %c0_6 = arith.constant 0 : index
    %6 = vector.load %arg4[%c0_5, %c0_6] : memref<1x64xf32, #tpu.memory_space<vmem>>, vector<1x64xf32>
    %7 = vector.broadcast %6 : vector<1x64xf32> to vector<8x64xf32>
    %8 = arith.addf %5, %7 : vector<8x64xf32>
    %c0_7 = arith.constant 0 : index
    %c0_8 = arith.constant 0 : index
    %9 = vector.load %arg5[%c0_7, %c0_8] : memref<8x64xf32, #tpu.memory_space<vmem>>, vector<8x64xf32>
    tpu.vector_store %arg5[%c0_7, %c0_8], %8 {strides = array<i32>} : memref<8x64xf32, #tpu.memory_space<vmem>>, vector<8x64xf32>,
    return
  }
  func.func @transform_0(%arg0: i32) -> (i32, i32) {
    %c0_i32 = arith.constant 0 : i32
    %c0_i32_0 = arith.constant 0 : i32
    return %arg0, %c0_i32 : i32, i32
  }
  func.func @transform_1(%arg0: i32) -> (i32, i32) {
    %c0_i32 = arith.constant 0 : i32
    %c0_i32_0 = arith.constant 0 : i32
    %c0_i32_1 = arith.constant 0 : i32
    return %c0_i32, %c0_i32_0 : i32, i32
  }
  func.func @transform_2(%arg0: i32) -> (i32, i32) {
    %c0_i32 = arith.constant 0 : i32
    %c0_i32_0 = arith.constant 0 : i32
    %c0_i32_1 = arith.constant 0 : i32
    return %c0_i32, %c0_i32_0 : i32, i32
  }
  func.func @transform_3(%arg0: i32) -> (i32, i32) {
    %c0_i32 = arith.constant 0 : i32
    %c0_i32_0 = arith.constant 0 : i32
    %c0_i32_1 = arith.constant 0 : i32
    return %c0_i32, %c0_i32_0 : i32, i32
  }
  func.func @transform_4(%arg0: i32) -> (i32, i32) {
    %c0_i32 = arith.constant 0 : i32
    %c0_i32_0 = arith.constant 0 : i32
    return %arg0, %c0_i32 : i32, i32
  }
}

module attributes {stable_mosaic.version = 11 : i64} {
  func.func @_mm_kernel(%arg0: i32, %arg1: memref<8x32xbf16, #tpu.memory_space<vmem>>, %arg2: memref<32x32xbf16, #tpu.memory_space<vmem>>, %arg3: memref<1x32xf32, #tpu.memory_space<vmem>>, %arg4: memref<1x32xf32, #tpu.memory_space<vmem>>, %arg5: memref<8x32xf32, #tpu.memory_space<vmem>>) attributes {dimension_semantics = [#tpu.dimension_semantics<parallel>], iteration_bounds = array<i64: 1>, scalar_prefetch = 0 : i64, scratch_operands = 0 : i64, tpu.core_type = #tpu.core_type<tc>, window_params = [{transform_indices = @transform_0, window_bounds = array<i64: 8, 32>}, {pipeline_mode = #tpu.pipeline_mode<synchronous>, transform_indices = @transform_1, window_bounds = array<i64: 32, 32>}, {pipeline_mode = #tpu.pipeline_mode<synchronous>, transform_indices = @transform_2, window_bounds = array<i64: 1, 32>}, {pipeline_mode = #tpu.pipeline_mode<synchronous>, transform_indices = @transform_3, window_bounds = array<i64: 1, 32>}, {transform_indices = @transform_4, window_bounds = array<i64: 8, 32>}]} {
    %c0 = arith.constant 0 : index
    %c0_0 = arith.constant 0 : index
    %0 = vector.load %arg1[%c0, %c0_0] : memref<8x32xbf16, #tpu.memory_space<vmem>>, vector<8x32xbf16>
    %c0_1 = arith.constant 0 : index
    %c0_2 = arith.constant 0 : index
    %1 = vector.load %arg2[%c0_1, %c0_2] : memref<32x32xbf16, #tpu.memory_space<vmem>>, vector<32x32xbf16>
    %cst = arith.constant dense<0.000000e+00> : vector<8x32xf32>
    %2 = tpu.matmul %0, %1, %cst {dimension_numbers = #tpu.dot_dimension_numbers<[1], [0], [0], [1], [0, 0, 1, 1], [], []>} : vector<8x32xbf16>, vector<32x32xbf16>, vector<8x32xf32> -> vector<8x32xf32>
    %c0_3 = arith.constant 0 : index
    %c0_4 = arith.constant 0 : index
    %3 = vector.load %arg3[%c0_3, %c0_4] : memref<1x32xf32, #tpu.memory_space<vmem>>, vector<1x32xf32>
    %4 = vector.broadcast %3 : vector<1x32xf32> to vector<8x32xf32>
    %5 = arith.mulf %2, %4 : vector<8x32xf32>
    %c0_5 = arith.constant 0 : index
    %c0_6 = arith.constant 0 : index
    %6 = vector.load %arg4[%c0_5, %c0_6] : memref<1x32xf32, #tpu.memory_space<vmem>>, vector<1x32xf32>
    %7 = vector.broadcast %6 : vector<1x32xf32> to vector<8x32xf32>
    %8 = arith.addf %5, %7 : vector<8x32xf32>
    %c0_7 = arith.constant 0 : index
    %c0_8 = arith.constant 0 : index
    %9 = vector.load %arg5[%c0_7, %c0_8] : memref<8x32xf32, #tpu.memory_space<vmem>>, vector<8x32xf32>
    tpu.vector_store %arg5[%c0_7, %c0_8], %8 {strides = array<i32>} : memref<8x32xf32, #tpu.memory_space<vmem>>, vector<8x32xf32>,
    return
  }
  func.func @transform_0(%arg0: i32) -> (i32, i32) {
    %c0_i32 = arith.constant 0 : i32
    %c0_i32_0 = arith.constant 0 : i32
    return %arg0, %c0_i32 : i32, i32
  }
  func.func @transform_1(%arg0: i32) -> (i32, i32) {
    %c0_i32 = arith.constant 0 : i32
    %c0_i32_0 = arith.constant 0 : i32
    %c0_i32_1 = arith.constant 0 : i32
    return %c0_i32, %c0_i32_0 : i32, i32
  }
  func.func @transform_2(%arg0: i32) -> (i32, i32) {
    %c0_i32 = arith.constant 0 : i32
    %c0_i32_0 = arith.constant 0 : i32
    %c0_i32_1 = arith.constant 0 : i32
    return %c0_i32, %c0_i32_0 : i32, i32
  }
  func.func @transform_3(%arg0: i32) -> (i32, i32) {
    %c0_i32 = arith.constant 0 : i32
    %c0_i32_0 = arith.constant 0 : i32
    %c0_i32_1 = arith.constant 0 : i32
    return %c0_i32, %c0_i32_0 : i32, i32
  }
  func.func @transform_4(%arg0: i32) -> (i32, i32) {
    %c0_i32 = arith.constant 0 : i32
    %c0_i32_0 = arith.constant 0 : i32
    return %arg0, %c0_i32 : i32, i32
  }
}

module attributes {stable_mosaic.version = 11 : i64} {
  func.func @_attn_kernel(%arg0: i32, %arg1: memref<1x2x4x16xbf16, #tpu.memory_space<vmem>>, %arg2: memref<1x2x4x16xbf16, #tpu.memory_space<vmem>>, %arg3: memref<1x2x4x16xbf16, #tpu.memory_space<vmem>>, %arg4: memref<1x4x4xf32, #tpu.memory_space<vmem>>, %arg5: memref<1x2x4x16xf32, #tpu.memory_space<vmem>>) attributes {dimension_semantics = [#tpu.dimension_semantics<parallel>], iteration_bounds = array<i64: 2>, scalar_prefetch = 0 : i64, scratch_operands = 0 : i64, tpu.core_type = #tpu.core_type<tc>, window_params = [{transform_indices = @transform_0, window_bounds = array<i64: 1, 2, 4, 16>}, {transform_indices = @transform_1, window_bounds = array<i64: 1, 2, 4, 16>}, {transform_indices = @transform_2, window_bounds = array<i64: 1, 2, 4, 16>}, {transform_indices = @transform_3, window_bounds = array<i64: 1, 4, 4>}, {transform_indices = @transform_4, window_bounds = array<i64: 1, 2, 4, 16>}]} {
    %c0 = arith.constant 0 : index
    %c0_0 = arith.constant 0 : index
    %c0_1 = arith.constant 0 : index
    %c0_2 = arith.constant 0 : index
    %0 = vector.load %arg1[%c0, %c0_0, %c0_1, %c0_2] : memref<1x2x4x16xbf16, #tpu.memory_space<vmem>>, vector<1x2x4x16xbf16>
    %1 = vector.shape_cast %0 : vector<1x2x4x16xbf16> to vector<2x4x16xbf16>
    %c0_3 = arith.constant 0 : index
    %c0_4 = arith.constant 0 : index
    %c0_5 = arith.constant 0 : index
    %c0_6 = arith.constant 0 : index
    %2 = vector.load %arg2[%c0_3, %c0_4, %c0_5, %c0_6] : memref<1x2x4x16xbf16, #tpu.memory_space<vmem>>, vector<1x2x4x16xbf16>
    %3 = vector.shape_cast %2 : vector<1x2x4x16xbf16> to vector<2x4x16xbf16>
    %c0_7 = arith.constant 0 : index
    %c0_8 = arith.constant 0 : index
    %c0_9 = arith.constant 0 : index
    %c0_10 = arith.constant 0 : index
    %4 = vector.load %arg3[%c0_7, %c0_8, %c0_9, %c0_10] : memref<1x2x4x16xbf16, #tpu.memory_space<vmem>>, vector<1x2x4x16xbf16>
    %5 = vector.shape_cast %4 : vector<1x2x4x16xbf16> to vector<2x4x16xbf16>
    %c0_11 = arith.constant 0 : index
    %c0_12 = arith.constant 0 : index
    %c0_13 = arith.constant 0 : index
    %6 = vector.load %arg4[%c0_11, %c0_12, %c0_13] : memref<1x4x4xf32, #tpu.memory_space<vmem>>, vector<1x4x4xf32>
    %7 = vector.shape_cast %6 : vector<1x4x4xf32> to vector<4x4xf32>
    "tpu.trace_start"() <{level = 10 : i32, message = "hqd,hkd->hqk"}> : () -> ()
    %cst = arith.constant dense<0.000000e+00> : vector<2x4x4xf32>
    %8 = tpu.matmul %1, %3, %cst {dimension_numbers = #tpu.dot_dimension_numbers<[2], [2], [1], [1], [0, 0, 0, 1, 1, 1], [0], [0]>} : vector<2x4x16xbf16>, vector<2x4x16xbf16>, vector<2x4x4xf32> -> vector<2x4x4xf32>
    "tpu.trace_stop"() : () -> ()
    %cst_14 = arith.constant 2.500000e-01 : f32
    %9 = vector.broadcast %cst_14 : f32 to vector<2x4x4xf32>
    %10 = arith.mulf %8, %9 : vector<2x4x4xf32>
    %11 = vector.shape_cast %7 : vector<4x4xf32> to vector<1x4x4xf32>
    %12 = vector.broadcast %11 : vector<1x4x4xf32> to vector<2x4x4xf32>
    %13 = arith.addf %10, %12 : vector<2x4x4xf32>
    %cst_15 = arith.constant dense<0xFF800000> : vector<2x4xf32>
    %14 = vector.multi_reduction <maximumf>, %13, %cst_15 [2] : vector<2x4x4xf32> to vector<2x4xf32>
    %15 = vector.shape_cast %14 : vector<2x4xf32> to vector<2x4x1xf32>
    %16 = vector.broadcast %15 : vector<2x4x1xf32> to vector<2x4x4xf32>
    %17 = arith.subf %13, %16 : vector<2x4x4xf32>
    %18 = math.exp %17 : vector<2x4x4xf32>
    %cst_16 = arith.constant dense<0.000000e+00> : vector<2x4xf32>
    %19 = vector.multi_reduction <add>, %18, %cst_16 [2] : vector<2x4x4xf32> to vector<2x4xf32>
    %20 = vector.shape_cast %19 : vector<2x4xf32> to vector<2x4x1xf32>
    %21 = tpu.reciprocal %20 {approx = true} : vector<2x4x1xf32> -> vector<2x4x1xf32>
    %22 = vector.broadcast %21 : vector<2x4x1xf32> to vector<2x4x4xf32>
    %23 = arith.mulf %18, %22 : vector<2x4x4xf32>
    %24 = arith.truncf %23 : vector<2x4x4xf32> to vector<2x4x4xbf16>
    "tpu.trace_start"() <{level = 10 : i32, message = "hqk,hkd->hqd"}> : () -> ()
    %cst_17 = arith.constant dense<0.000000e+00> : vector<2x4x16xf32>
    %25 = tpu.matmul %24, %5, %cst_17 {dimension_numbers = #tpu.dot_dimension_numbers<[2], [1], [1], [2], [0, 0, 0, 1, 1, 2], [0], [0]>} : vector<2x4x4xbf16>, vector<2x4x16xbf16>, vector<2x4x16xf32> -> vector<2x4x16xf32>
    "tpu.trace_stop"() : () -> ()
    %c0_18 = arith.constant 0 : index
    %c0_19 = arith.constant 0 : index
    %c0_20 = arith.constant 0 : index
    %c0_21 = arith.constant 0 : index
    %26 = vector.load %arg5[%c0_18, %c0_19, %c0_20, %c0_21] : memref<1x2x4x16xf32, #tpu.memory_space<vmem>>, vector<1x2x4x16xf32>
    %27 = vector.shape_cast %26 : vector<1x2x4x16xf32> to vector<2x4x16xf32>
    %28 = vector.shape_cast %25 : vector<2x4x16xf32> to vector<1x2x4x16xf32>
    tpu.vector_store %arg5[%c0_18, %c0_19, %c0_20, %c0_21], %28 {strides = array<i32>} : memref<1x2x4x16xf32, #tpu.memory_space<vmem>>, vector<1x2x4x16xf32>,
    return
  }
  func.func @transform_0(%arg0: i32) -> (i32, i32, i32, i32) {
    %c0_i32 = arith.constant 0 : i32
    %c0_i32_0 = arith.constant 0 : i32
    %c0_i32_1 = arith.constant 0 : i32
    %c0_i32_2 = arith.constant 0 : i32
    return %arg0, %c0_i32, %c0_i32_0, %c0_i32_1 : i32, i32, i32, i32
  }
  func.func @transform_1(%arg0: i32) -> (i32, i32, i32, i32) {
    %c0_i32 = arith.constant 0 : i32
    %c0_i32_0 = arith.constant 0 : i32
    %c0_i32_1 = arith.constant 0 : i32
    %c0_i32_2 = arith.constant 0 : i32
    return %arg0, %c0_i32, %c0_i32_0, %c0_i32_1 : i32, i32, i32, i32
  }
  func.func @transform_2(%arg0: i32) -> (i32, i32, i32, i32) {
    %c0_i32 = arith.constant 0 : i32
    %c0_i32_0 = arith.constant 0 : i32
    %c0_i32_1 = arith.constant 0 : i32
    %c0_i32_2 = arith.constant 0 : i32
    return %arg0, %c0_i32, %c0_i32_0, %c0_i32_1 : i32, i32, i32, i32
  }
  func.func @transform_3(%arg0: i32) -> (i32, i32, i32) {
    %c0_i32 = arith.constant 0 : i32
    %c0_i32_0 = arith.constant 0 : i32
    %c0_i32_1 = arith.constant 0 : i32
    return %arg0, %c0_i32, %c0_i32_0 : i32, i32, i32
  }
  func.func @transform_4(%arg0: i32) -> (i32, i32, i32, i32) {
    %c0_i32 = arith.constant 0 : i32
    %c0_i32_0 = arith.constant 0 : i32
    %c0_i32_1 = arith.constant 0 : i32
    %c0_i32_2 = arith.constant 0 : i32
    return %arg0, %c0_i32, %c0_i32_0, %c0_i32_1 : i32, i32, i32, i32
  }
}

module attributes {stable_mosaic.version = 11 : i64} {
  func.func @_mm_kernel(%arg0: i32, %arg1: memref<8x32xbf16, #tpu.memory_space<vmem>>, %arg2: memref<32x64xbf16, #tpu.memory_space<vmem>>, %arg3: memref<1x64xf32, #tpu.memory_space<vmem>>, %arg4: memref<1x64xf32, #tpu.memory_space<vmem>>, %arg5: memref<8x64xf32, #tpu.memory_space<vmem>>) attributes {dimension_semantics = [#tpu.dimension_semantics<parallel>], iteration_bounds = array<i64: 1>, scalar_prefetch = 0 : i64, scratch_operands = 0 : i64, tpu.core_type = #tpu.core_type<tc>, window_params = [{transform_indices = @transform_0, window_bounds = array<i64: 8, 32>}, {pipeline_mode = #tpu.pipeline_mode<synchronous>, transform_indices = @transform_1, window_bounds = array<i64: 32, 64>}, {pipeline_mode = #tpu.pipeline_mode<synchronous>, transform_indices = @transform_2, window_bounds = array<i64: 1, 64>}, {pipeline_mode = #tpu.pipeline_mode<synchronous>, transform_indices = @transform_3, window_bounds = array<i64: 1, 64>}, {transform_indices = @transform_4, window_bounds = array<i64: 8, 64>}]} {
    %c0 = arith.constant 0 : index
    %c0_0 = arith.constant 0 : index
    %0 = vector.load %arg1[%c0, %c0_0] : memref<8x32xbf16, #tpu.memory_space<vmem>>, vector<8x32xbf16>
    %c0_1 = arith.constant 0 : index
    %c0_2 = arith.constant 0 : index
    %1 = vector.load %arg2[%c0_1, %c0_2] : memref<32x64xbf16, #tpu.memory_space<vmem>>, vector<32x64xbf16>
    %cst = arith.constant dense<0.000000e+00> : vector<8x64xf32>
    %2 = tpu.matmul %0, %1, %cst {dimension_numbers = #tpu.dot_dimension_numbers<[1], [0], [0], [1], [0, 0, 1, 1], [], []>} : vector<8x32xbf16>, vector<32x64xbf16>, vector<8x64xf32> -> vector<8x64xf32>
    %c0_3 = arith.constant 0 : index
    %c0_4 = arith.constant 0 : index
    %3 = vector.load %arg3[%c0_3, %c0_4] : memref<1x64xf32, #tpu.memory_space<vmem>>, vector<1x64xf32>
    %4 = vector.broadcast %3 : vector<1x64xf32> to vector<8x64xf32>
    %5 = arith.mulf %2, %4 : vector<8x64xf32>
    %c0_5 = arith.constant 0 : index
    %c0_6 = arith.constant 0 : index
    %6 = vector.load %arg4[%c0_5, %c0_6] : memref<1x64xf32, #tpu.memory_space<vmem>>, vector<1x64xf32>
    %7 = vector.broadcast %6 : vector<1x64xf32> to vector<8x64xf32>
    %8 = arith.addf %5, %7 : vector<8x64xf32>
    %cst_7 = arith.constant 0.000000e+00 : f32
    %9 = vector.broadcast %cst_7 : f32 to vector<8x64xf32>
    %10 = arith.maximumf %8, %9 : vector<8x64xf32>
    %c0_8 = arith.constant 0 : index
    %c0_9 = arith.constant 0 : index
    %11 = vector.load %arg5[%c0_8, %c0_9] : memref<8x64xf32, #tpu.memory_space<vmem>>, vector<8x64xf32>
    tpu.vector_store %arg5[%c0_8, %c0_9], %10 {strides = array<i32>} : memref<8x64xf32, #tpu.memory_space<vmem>>, vector<8x64xf32>,
    return
  }
  func.func @transform_0(%arg0: i32) -> (i32, i32) {
    %c0_i32 = arith.constant 0 : i32
    %c0_i32_0 = arith.constant 0 : i32
    return %arg0, %c0_i32 : i32, i32
  }
  func.func @transform_1(%arg0: i32) -> (i32, i32) {
    %c0_i32 = arith.constant 0 : i32
    %c0_i32_0 = arith.constant 0 : i32
    %c0_i32_1 = arith.constant 0 : i32
    return %c0_i32, %c0_i32_0 : i32, i32
  }
  func.func @transform_2(%arg0: i32) -> (i32, i32) {
    %c0_i32 = arith.constant 0 : i32
    %c0_i32_0 = arith.constant 0 : i32
    %c0_i32_1 = arith.constant 0 : i32
    return %c0_i32, %c0_i32_0 : i32, i32
  }
  func.func @transform_3(%arg0: i32) -> (i32, i32) {
    %c0_i32 = arith.constant 0 : i32
    %c0_i32_0 = arith.constant 0 : i32
    %c0_i32_1 = arith.constant 0 : i32
    return %c0_i32, %c0_i32_0 : i32, i32
  }
  func.func @transform_4(%arg0: i32) -> (i32, i32) {
    %c0_i32 = arith.constant 0 : i32
    %c0_i32_0 = arith.constant 0 : i32
    return %arg0, %c0_i32 : i32, i32
  }
}

module attributes {stable_mosaic.version = 11 : i64} {
  func.func @_mm_kernel(%arg0: i32, %arg1: memref<16x32xbf16, #tpu.memory_space<vmem>>, %arg2: memref<32x32xbf16, #tpu.memory_space<vmem>>, %arg3: memref<1x32xf32, #tpu.memory_space<vmem>>, %arg4: memref<1x32xf32, #tpu.memory_space<vmem>>, %arg5: memref<16x32xf32, #tpu.memory_space<vmem>>) attributes {dimension_semantics = [#tpu.dimension_semantics<parallel>], iteration_bounds = array<i64: 1>, scalar_prefetch = 0 : i64, scratch_operands = 0 : i64, tpu.core_type = #tpu.core_type<tc>, window_params = [{transform_indices = @transform_0, window_bounds = array<i64: 16, 32>}, {pipeline_mode = #tpu.pipeline_mode<synchronous>, transform_indices = @transform_1, window_bounds = array<i64: 32, 32>}, {pipeline_mode = #tpu.pipeline_mode<synchronous>, transform_indices = @transform_2, window_bounds = array<i64: 1, 32>}, {pipeline_mode = #tpu.pipeline_mode<synchronous>, transform_indices = @transform_3, window_bounds = array<i64: 1, 32>}, {transform_indices = @transform_4, window_bounds = array<i64: 16, 32>}]} {
    %c0 = arith.constant 0 : index
    %c0_0 = arith.constant 0 : index
    %0 = vector.load %arg1[%c0, %c0_0] : memref<16x32xbf16, #tpu.memory_space<vmem>>, vector<16x32xbf16>
    %c0_1 = arith.constant 0 : index
    %c0_2 = arith.constant 0 : index
    %1 = vector.load %arg2[%c0_1, %c0_2] : memref<32x32xbf16, #tpu.memory_space<vmem>>, vector<32x32xbf16>
    %cst = arith.constant dense<0.000000e+00> : vector<16x32xf32>
    %2 = tpu.matmul %0, %1, %cst {dimension_numbers = #tpu.dot_dimension_numbers<[1], [0], [0], [1], [0, 0, 1, 1], [], []>} : vector<16x32xbf16>, vector<32x32xbf16>, vector<16x32xf32> -> vector<16x32xf32>
    %c0_3 = arith.constant 0 : index
    %c0_4 = arith.constant 0 : index
    %3 = vector.load %arg3[%c0_3, %c0_4] : memref<1x32xf32, #tpu.memory_space<vmem>>, vector<1x32xf32>
    %4 = vector.broadcast %3 : vector<1x32xf32> to vector<16x32xf32>
    %5 = arith.mulf %2, %4 : vector<16x32xf32>
    %c0_5 = arith.constant 0 : index
    %c0_6 = arith.constant 0 : index
    %6 = vector.load %arg4[%c0_5, %c0_6] : memref<1x32xf32, #tpu.memory_space<vmem>>, vector<1x32xf32>
    %7 = vector.broadcast %6 : vector<1x32xf32> to vector<16x32xf32>
    %8 = arith.addf %5, %7 : vector<16x32xf32>
    %c0_7 = arith.constant 0 : index
    %c0_8 = arith.constant 0 : index
    %9 = vector.load %arg5[%c0_7, %c0_8] : memref<16x32xf32, #tpu.memory_space<vmem>>, vector<16x32xf32>
    tpu.vector_store %arg5[%c0_7, %c0_8], %8 {strides = array<i32>} : memref<16x32xf32, #tpu.memory_space<vmem>>, vector<16x32xf32>,
    return
  }
  func.func @transform_0(%arg0: i32) -> (i32, i32) {
    %c0_i32 = arith.constant 0 : i32
    %c0_i32_0 = arith.constant 0 : i32
    return %arg0, %c0_i32 : i32, i32
  }
  func.func @transform_1(%arg0: i32) -> (i32, i32) {
    %c0_i32 = arith.constant 0 : i32
    %c0_i32_0 = arith.constant 0 : i32
    %c0_i32_1 = arith.constant 0 : i32
    return %c0_i32, %c0_i32_0 : i32, i32
  }
  func.func @transform_2(%arg0: i32) -> (i32, i32) {
    %c0_i32 = arith.constant 0 : i32
    %c0_i32_0 = arith.constant 0 : i32
    %c0_i32_1 = arith.constant 0 : i32
    return %c0_i32, %c0_i32_0 : i32, i32
  }
  func.func @transform_3(%arg0: i32) -> (i32, i32) {
    %c0_i32 = arith.constant 0 : i32
    %c0_i32_0 = arith.constant 0 : i32
    %c0_i32_1 = arith.constant 0 : i32
    return %c0_i32, %c0_i32_0 : i32, i32
  }
  func.func @transform_4(%arg0: i32) -> (i32, i32) {
    %c0_i32 = arith.constant 0 : i32
    %c0_i32_0 = arith.constant 0 : i32
    return %arg0, %c0_i32 : i32, i32
  }
}

module attributes {stable_mosaic.version = 11 : i64} {
  func.func @_mm_kernel(%arg0: i32, %arg1: memref<16x32xbf16, #tpu.memory_space<vmem>>, %arg2: memref<32x64xbf16, #tpu.memory_space<vmem>>, %arg3: memref<1x64xf32, #tpu.memory_space<vmem>>, %arg4: memref<1x64xf32, #tpu.memory_space<vmem>>, %arg5: memref<16x64xf32, #tpu.memory_space<vmem>>) attributes {dimension_semantics = [#tpu.dimension_semantics<parallel>], iteration_bounds = array<i64: 1>, scalar_prefetch = 0 : i64, scratch_operands = 0 : i64, tpu.core_type = #tpu.core_type<tc>, window_params = [{transform_indices = @transform_0, window_bounds = array<i64: 16, 32>}, {pipeline_mode = #tpu.pipeline_mode<synchronous>, transform_indices = @transform_1, window_bounds = array<i64: 32, 64>}, {pipeline_mode = #tpu.pipeline_mode<synchronous>, transform_indices = @transform_2, window_bounds = array<i64: 1, 64>}, {pipeline_mode = #tpu.pipeline_mode<synchronous>, transform_indices = @transform_3, window_bounds = array<i64: 1, 64>}, {transform_indices = @transform_4, window_bounds = array<i64: 16, 64>}]} {
    %c0 = arith.constant 0 : index
    %c0_0 = arith.constant 0 : index
    %0 = vector.load %arg1[%c0, %c0_0] : memref<16x32xbf16, #tpu.memory_space<vmem>>, vector<16x32xbf16>
    %c0_1 = arith.constant 0 : index
    %c0_2 = arith.constant 0 : index
    %1 = vector.load %arg2[%c0_1, %c0_2] : memref<32x64xbf16, #tpu.memory_space<vmem>>, vector<32x64xbf16>
    %cst = arith.constant dense<0.000000e+00> : vector<16x64xf32>
    %2 = tpu.matmul %0, %1, %cst {dimension_numbers = #tpu.dot_dimension_numbers<[1], [0], [0], [1], [0, 0, 1, 1], [], []>} : vector<16x32xbf16>, vector<32x64xbf16>, vector<16x64xf32> -> vector<16x64xf32>
    %c0_3 = arith.constant 0 : index
    %c0_4 = arith.constant 0 : index
    %3 = vector.load %arg3[%c0_3, %c0_4] : memref<1x64xf32, #tpu.memory_space<vmem>>, vector<1x64xf32>
    %4 = vector.broadcast %3 : vector<1x64xf32> to vector<16x64xf32>
    %5 = arith.mulf %2, %4 : vector<16x64xf32>
    %c0_5 = arith.constant 0 : index
    %c0_6 = arith.constant 0 : index
    %6 = vector.load %arg4[%c0_5, %c0_6] : memref<1x64xf32, #tpu.memory_space<vmem>>, vector<1x64xf32>
    %7 = vector.broadcast %6 : vector<1x64xf32> to vector<16x64xf32>
    %8 = arith.addf %5, %7 : vector<16x64xf32>
    %c0_7 = arith.constant 0 : index
    %c0_8 = arith.constant 0 : index
    %9 = vector.load %arg5[%c0_7, %c0_8] : memref<16x64xf32, #tpu.memory_space<vmem>>, vector<16x64xf32>
    tpu.vector_store %arg5[%c0_7, %c0_8], %8 {strides = array<i32>} : memref<16x64xf32, #tpu.memory_space<vmem>>, vector<16x64xf32>,
    return
  }
  func.func @transform_0(%arg0: i32) -> (i32, i32) {
    %c0_i32 = arith.constant 0 : i32
    %c0_i32_0 = arith.constant 0 : i32
    return %arg0, %c0_i32 : i32, i32
  }
  func.func @transform_1(%arg0: i32) -> (i32, i32) {
    %c0_i32 = arith.constant 0 : i32
    %c0_i32_0 = arith.constant 0 : i32
    %c0_i32_1 = arith.constant 0 : i32
    return %c0_i32, %c0_i32_0 : i32, i32
  }
  func.func @transform_2(%arg0: i32) -> (i32, i32) {
    %c0_i32 = arith.constant 0 : i32
    %c0_i32_0 = arith.constant 0 : i32
    %c0_i32_1 = arith.constant 0 : i32
    return %c0_i32, %c0_i32_0 : i32, i32
  }
  func.func @transform_3(%arg0: i32) -> (i32, i32) {
    %c0_i32 = arith.constant 0 : i32
    %c0_i32_0 = arith.constant 0 : i32
    %c0_i32_1 = arith.constant 0 : i32
    return %c0_i32, %c0_i32_0 : i32, i32
  }
  func.func @transform_4(%arg0: i32) -> (i32, i32) {
    %c0_i32 = arith.constant 0 : i32
    %c0_i32_0 = arith.constant 0 : i32
    return %arg0, %c0_i32 : i32, i32
  }
}

module attributes {stable_mosaic.version = 11 : i64} {
  func.func @_attn_kernel(%arg0: i32, %arg1: memref<1x2x8x16xbf16, #tpu.memory_space<vmem>>, %arg2: memref<1x2x8x16xbf16, #tpu.memory_space<vmem>>, %arg3: memref<1x2x8x16xbf16, #tpu.memory_space<vmem>>, %arg4: memref<1x8x8xf32, #tpu.memory_space<vmem>>, %arg5: memref<1x2x8x16xf32, #tpu.memory_space<vmem>>) attributes {dimension_semantics = [#tpu.dimension_semantics<parallel>], iteration_bounds = array<i64: 2>, scalar_prefetch = 0 : i64, scratch_operands = 0 : i64, tpu.core_type = #tpu.core_type<tc>, window_params = [{transform_indices = @transform_0, window_bounds = array<i64: 1, 2, 8, 16>}, {transform_indices = @transform_1, window_bounds = array<i64: 1, 2, 8, 16>}, {transform_indices = @transform_2, window_bounds = array<i64: 1, 2, 8, 16>}, {transform_indices = @transform_3, window_bounds = array<i64: 1, 8, 8>}, {transform_indices = @transform_4, window_bounds = array<i64: 1, 2, 8, 16>}]} {
    %c0 = arith.constant 0 : index
    %c0_0 = arith.constant 0 : index
    %c0_1 = arith.constant 0 : index
    %c0_2 = arith.constant 0 : index
    %0 = vector.load %arg1[%c0, %c0_0, %c0_1, %c0_2] : memref<1x2x8x16xbf16, #tpu.memory_space<vmem>>, vector<1x2x8x16xbf16>
    %1 = vector.shape_cast %0 : vector<1x2x8x16xbf16> to vector<2x8x16xbf16>
    %c0_3 = arith.constant 0 : index
    %c0_4 = arith.constant 0 : index
    %c0_5 = arith.constant 0 : index
    %c0_6 = arith.constant 0 : index
    %2 = vector.load %arg2[%c0_3, %c0_4, %c0_5, %c0_6] : memref<1x2x8x16xbf16, #tpu.memory_space<vmem>>, vector<1x2x8x16xbf16>
    %3 = vector.shape_cast %2 : vector<1x2x8x16xbf16> to vector<2x8x16xbf16>
    %c0_7 = arith.constant 0 : index
    %c0_8 = arith.constant 0 : index
    %c0_9 = arith.constant 0 : index
    %c0_10 = arith.constant 0 : index
    %4 = vector.load %arg3[%c0_7, %c0_8, %c0_9, %c0_10] : memref<1x2x8x16xbf16, #tpu.memory_space<vmem>>, vector<1x2x8x16xbf16>
    %5 = vector.shape_cast %4 : vector<1x2x8x16xbf16> to vector<2x8x16xbf16>
    %c0_11 = arith.constant 0 : index
    %c0_12 = arith.constant 0 : index
    %c0_13 = arith.constant 0 : index
    %6 = vector.load %arg4[%c0_11, %c0_12, %c0_13] : memref<1x8x8xf32, #tpu.memory_space<vmem>>, vector<1x8x8xf32>
    %7 = vector.shape_cast %6 : vector<1x8x8xf32> to vector<8x8xf32>
    "tpu.trace_start"() <{level = 10 : i32, message = "hqd,hkd->hqk"}> : () -> ()
    %cst = arith.constant dense<0.000000e+00> : vector<2x8x8xf32>
    %8 = tpu.matmul %1, %3, %cst {dimension_numbers = #tpu.dot_dimension_numbers<[2], [2], [1], [1], [0, 0, 0, 1, 1, 1], [0], [0]>} : vector<2x8x16xbf16>, vector<2x8x16xbf16>, vector<2x8x8xf32> -> vector<2x8x8xf32>
    "tpu.trace_stop"() : () -> ()
    %cst_14 = arith.constant 2.500000e-01 : f32
    %9 = vector.broadcast %cst_14 : f32 to vector<2x8x8xf32>
    %10 = arith.mulf %8, %9 : vector<2x8x8xf32>
    %11 = vector.shape_cast %7 : vector<8x8xf32> to vector<1x8x8xf32>
    %12 = vector.broadcast %11 : vector<1x8x8xf32> to vector<2x8x8xf32>
    %13 = arith.addf %10, %12 : vector<2x8x8xf32>
    %cst_15 = arith.constant dense<0xFF800000> : vector<2x8xf32>
    %14 = vector.multi_reduction <maximumf>, %13, %cst_15 [2] : vector<2x8x8xf32> to vector<2x8xf32>
    %15 = vector.shape_cast %14 : vector<2x8xf32> to vector<2x8x1xf32>
    %16 = vector.broadcast %15 : vector<2x8x1xf32> to vector<2x8x8xf32>
    %17 = arith.subf %13, %16 : vector<2x8x8xf32>
    %18 = math.exp %17 : vector<2x8x8xf32>
    %cst_16 = arith.constant dense<0.000000e+00> : vector<2x8xf32>
    %19 = vector.multi_reduction <add>, %18, %cst_16 [2] : vector<2x8x8xf32> to vector<2x8xf32>
    %20 = vector.shape_cast %19 : vector<2x8xf32> to vector<2x8x1xf32>
    %21 = tpu.reciprocal %20 {approx = true} : vector<2x8x1xf32> -> vector<2x8x1xf32>
    %22 = vector.broadcast %21 : vector<2x8x1xf32> to vector<2x8x8xf32>
    %23 = arith.mulf %18, %22 : vector<2x8x8xf32>
    %24 = arith.truncf %23 : vector<2x8x8xf32> to vector<2x8x8xbf16>
    "tpu.trace_start"() <{level = 10 : i32, message = "hqk,hkd->hqd"}> : () -> ()
    %cst_17 = arith.constant dense<0.000000e+00> : vector<2x8x16xf32>
    %25 = tpu.matmul %24, %5, %cst_17 {dimension_numbers = #tpu.dot_dimension_numbers<[2], [1], [1], [2], [0, 0, 0, 1, 1, 2], [0], [0]>} : vector<2x8x8xbf16>, vector<2x8x16xbf16>, vector<2x8x16xf32> -> vector<2x8x16xf32>
    "tpu.trace_stop"() : () -> ()
    %c0_18 = arith.constant 0 : index
    %c0_19 = arith.constant 0 : index
    %c0_20 = arith.constant 0 : index
    %c0_21 = arith.constant 0 : index
    %26 = vector.load %arg5[%c0_18, %c0_19, %c0_20, %c0_21] : memref<1x2x8x16xf32, #tpu.memory_space<vmem>>, vector<1x2x8x16xf32>
    %27 = vector.shape_cast %26 : vector<1x2x8x16xf32> to vector<2x8x16xf32>
    %28 = vector.shape_cast %25 : vector<2x8x16xf32> to vector<1x2x8x16xf32>
    tpu.vector_store %arg5[%c0_18, %c0_19, %c0_20, %c0_21], %28 {strides = array<i32>} : memref<1x2x8x16xf32, #tpu.memory_space<vmem>>, vector<1x2x8x16xf32>,
    return
  }
  func.func @transform_0(%arg0: i32) -> (i32, i32, i32, i32) {
    %c0_i32 = arith.constant 0 : i32
    %c0_i32_0 = arith.constant 0 : i32
    %c0_i32_1 = arith.constant 0 : i32
    %c0_i32_2 = arith.constant 0 : i32
    return %arg0, %c0_i32, %c0_i32_0, %c0_i32_1 : i32, i32, i32, i32
  }
  func.func @transform_1(%arg0: i32) -> (i32, i32, i32, i32) {
    %c0_i32 = arith.constant 0 : i32
    %c0_i32_0 = arith.constant 0 : i32
    %c0_i32_1 = arith.constant 0 : i32
    %c0_i32_2 = arith.constant 0 : i32
    return %arg0, %c0_i32, %c0_i32_0, %c0_i32_1 : i32, i32, i32, i32
  }
  func.func @transform_2(%arg0: i32) -> (i32, i32, i32, i32) {
    %c0_i32 = arith.constant 0 : i32
    %c0_i32_0 = arith.constant 0 : i32
    %c0_i32_1 = arith.constant 0 : i32
    %c0_i32_2 = arith.constant 0 : i32
    return %arg0, %c0_i32, %c0_i32_0, %c0_i32_1 : i32, i32, i32, i32
  }
  func.func @transform_3(%arg0: i32) -> (i32, i32, i32) {
    %c0_i32 = arith.constant 0 : i32
    %c0_i32_0 = arith.constant 0 : i32
    %c0_i32_1 = arith.constant 0 : i32
    return %arg0, %c0_i32, %c0_i32_0 : i32, i32, i32
  }
  func.func @transform_4(%arg0: i32) -> (i32, i32, i32, i32) {
    %c0_i32 = arith.constant 0 : i32
    %c0_i32_0 = arith.constant 0 : i32
    %c0_i32_1 = arith.constant 0 : i32
    %c0_i32_2 = arith.constant 0 : i32
    return %arg0, %c0_i32, %c0_i32_0, %c0_i32_1 : i32, i32, i32, i32
  }
}

module attributes {stable_mosaic.version = 11 : i64} {
  func.func @_mm_kernel(%arg0: i32, %arg1: memref<16x64xbf16, #tpu.memory_space<vmem>>, %arg2: memref<64x32xbf16, #tpu.memory_space<vmem>>, %arg3: memref<1x32xf32, #tpu.memory_space<vmem>>, %arg4: memref<1x32xf32, #tpu.memory_space<vmem>>, %arg5: memref<16x32xf32, #tpu.memory_space<vmem>>) attributes {dimension_semantics = [#tpu.dimension_semantics<parallel>], iteration_bounds = array<i64: 1>, scalar_prefetch = 0 : i64, scratch_operands = 0 : i64, tpu.core_type = #tpu.core_type<tc>, window_params = [{transform_indices = @transform_0, window_bounds = array<i64: 16, 64>}, {pipeline_mode = #tpu.pipeline_mode<synchronous>, transform_indices = @transform_1, window_bounds = array<i64: 64, 32>}, {pipeline_mode = #tpu.pipeline_mode<synchronous>, transform_indices = @transform_2, window_bounds = array<i64: 1, 32>}, {pipeline_mode = #tpu.pipeline_mode<synchronous>, transform_indices = @transform_3, window_bounds = array<i64: 1, 32>}, {transform_indices = @transform_4, window_bounds = array<i64: 16, 32>}]} {
    %c0 = arith.constant 0 : index
    %c0_0 = arith.constant 0 : index
    %0 = vector.load %arg1[%c0, %c0_0] : memref<16x64xbf16, #tpu.memory_space<vmem>>, vector<16x64xbf16>
    %c0_1 = arith.constant 0 : index
    %c0_2 = arith.constant 0 : index
    %1 = vector.load %arg2[%c0_1, %c0_2] : memref<64x32xbf16, #tpu.memory_space<vmem>>, vector<64x32xbf16>
    %cst = arith.constant dense<0.000000e+00> : vector<16x32xf32>
    %2 = tpu.matmul %0, %1, %cst {dimension_numbers = #tpu.dot_dimension_numbers<[1], [0], [0], [1], [0, 0, 1, 1], [], []>} : vector<16x64xbf16>, vector<64x32xbf16>, vector<16x32xf32> -> vector<16x32xf32>
    %c0_3 = arith.constant 0 : index
    %c0_4 = arith.constant 0 : index
    %3 = vector.load %arg3[%c0_3, %c0_4] : memref<1x32xf32, #tpu.memory_space<vmem>>, vector<1x32xf32>
    %4 = vector.broadcast %3 : vector<1x32xf32> to vector<16x32xf32>
    %5 = arith.mulf %2, %4 : vector<16x32xf32>
    %c0_5 = arith.constant 0 : index
    %c0_6 = arith.constant 0 : index
    %6 = vector.load %arg4[%c0_5, %c0_6] : memref<1x32xf32, #tpu.memory_space<vmem>>, vector<1x32xf32>
    %7 = vector.broadcast %6 : vector<1x32xf32> to vector<16x32xf32>
    %8 = arith.addf %5, %7 : vector<16x32xf32>
    %c0_7 = arith.constant 0 : index
    %c0_8 = arith.constant 0 : index
    %9 = vector.load %arg5[%c0_7, %c0_8] : memref<16x32xf32, #tpu.memory_space<vmem>>, vector<16x32xf32>
    tpu.vector_store %arg5[%c0_7, %c0_8], %8 {strides = array<i32>} : memref<16x32xf32, #tpu.memory_space<vmem>>, vector<16x32xf32>,
    return
  }
  func.func @transform_0(%arg0: i32) -> (i32, i32) {
    %c0_i32 = arith.constant 0 : i32
    %c0_i32_0 = arith.constant 0 : i32
    return %arg0, %c0_i32 : i32, i32
  }
  func.func @transform_1(%arg0: i32) -> (i32, i32) {
    %c0_i32 = arith.constant 0 : i32
    %c0_i32_0 = arith.constant 0 : i32
    %c0_i32_1 = arith.constant 0 : i32
    return %c0_i32, %c0_i32_0 : i32, i32
  }
  func.func @transform_2(%arg0: i32) -> (i32, i32) {
    %c0_i32 = arith.constant 0 : i32
    %c0_i32_0 = arith.constant 0 : i32
    %c0_i32_1 = arith.constant 0 : i32
    return %c0_i32, %c0_i32_0 : i32, i32
  }
  func.func @transform_3(%arg0: i32) -> (i32, i32) {
    %c0_i32 = arith.constant 0 : i32
    %c0_i32_0 = arith.constant 0 : i32
    %c0_i32_1 = arith.constant 0 : i32
    return %c0_i32, %c0_i32_0 : i32, i32
  }
  func.func @transform_4(%arg0: i32) -> (i32, i32) {
    %c0_i32 = arith.constant 0 : i32
    %c0_i32_0 = arith.constant 0 : i32
    return %arg0, %c0_i32 : i32, i32
  }
}

module attributes {stable_mosaic.version = 11 : i64} {
  func.func @_attn_kernel(%arg0: i32, %arg1: memref<1x2x8x16xbf16, #tpu.memory_space<vmem>>, %arg2: memref<1x2x4x16xbf16, #tpu.memory_space<vmem>>, %arg3: memref<1x2x4x16xbf16, #tpu.memory_space<vmem>>, %arg4: memref<1x8x4xf32, #tpu.memory_space<vmem>>, %arg5: memref<1x2x8x16xf32, #tpu.memory_space<vmem>>, %arg6: memref<1x2x8x4xf32, #tpu.memory_space<vmem>>) attributes {dimension_semantics = [#tpu.dimension_semantics<parallel>], iteration_bounds = array<i64: 2>, scalar_prefetch = 0 : i64, scratch_operands = 0 : i64, tpu.core_type = #tpu.core_type<tc>, window_params = [{transform_indices = @transform_0, window_bounds = array<i64: 1, 2, 8, 16>}, {transform_indices = @transform_1, window_bounds = array<i64: 1, 2, 4, 16>}, {transform_indices = @transform_2, window_bounds = array<i64: 1, 2, 4, 16>}, {transform_indices = @transform_3, window_bounds = array<i64: 1, 8, 4>}, {transform_indices = @transform_4, window_bounds = array<i64: 1, 2, 8, 16>}, {transform_indices = @transform_5, window_bounds = array<i64: 1, 2, 8, 4>}]} {
    %c0 = arith.constant 0 : index
    %c0_0 = arith.constant 0 : index
    %c0_1 = arith.constant 0 : index
    %c0_2 = arith.constant 0 : index
    %0 = vector.load %arg1[%c0, %c0_0, %c0_1, %c0_2] : memref<1x2x8x16xbf16, #tpu.memory_space<vmem>>, vector<1x2x8x16xbf16>
    %1 = vector.shape_cast %0 : vector<1x2x8x16xbf16> to vector<2x8x16xbf16>
    %c0_3 = arith.constant 0 : index
    %c0_4 = arith.constant 0 : index
    %c0_5 = arith.constant 0 : index
    %c0_6 = arith.constant 0 : index
    %2 = vector.load %arg2[%c0_3, %c0_4, %c0_5, %c0_6] : memref<1x2x4x16xbf16, #tpu.memory_space<vmem>>, vector<1x2x4x16xbf16>
    %3 = vector.shape_cast %2 : vector<1x2x4x16xbf16> to vector<2x4x16xbf16>
    %c0_7 = arith.constant 0 : index
    %c0_8 = arith.constant 0 : index
    %c0_9 = arith.constant 0 : index
    %c0_10 = arith.constant 0 : index
    %4 = vector.load %arg3[%c0_7, %c0_8, %c0_9, %c0_10] : memref<1x2x4x16xbf16, #tpu.memory_space<vmem>>, vector<1x2x4x16xbf16>
    %5 = vector.shape_cast %4 : vector<1x2x4x16xbf16> to vector<2x4x16xbf16>
    %c0_11 = arith.constant 0 : index
    %c0_12 = arith.constant 0 : index
    %c0_13 = arith.constant 0 : index
    %6 = vector.load %arg4[%c0_11, %c0_12, %c0_13] : memref<1x8x4xf32, #tpu.memory_space<vmem>>, vector<1x8x4xf32>
    %7 = vector.shape_cast %6 : vector<1x8x4xf32> to vector<8x4xf32>
    "tpu.trace_start"() <{level = 10 : i32, message = "hqd,hkd->hqk"}> : () -> ()
    %cst = arith.constant dense<0.000000e+00> : vector<2x8x4xf32>
    %8 = tpu.matmul %1, %3, %cst {dimension_numbers = #tpu.dot_dimension_numbers<[2], [2], [1], [1], [0, 0, 0, 1, 1, 1], [0], [0]>} : vector<2x8x16xbf16>, vector<2x4x16xbf16>, vector<2x8x4xf32> -> vector<2x8x4xf32>
    "tpu.trace_stop"() : () -> ()
    %cst_14 = arith.constant 2.500000e-01 : f32
    %9 = vector.broadcast %cst_14 : f32 to vector<2x8x4xf32>
    %10 = arith.mulf %8, %9 : vector<2x8x4xf32>
    %11 = vector.shape_cast %7 : vector<8x4xf32> to vector<1x8x4xf32>
    %12 = vector.broadcast %11 : vector<1x8x4xf32> to vector<2x8x4xf32>
    %13 = arith.addf %10, %12 : vector<2x8x4xf32>
    %cst_15 = arith.constant dense<0xFF800000> : vector<2x8xf32>
    %14 = vector.multi_reduction <maximumf>, %13, %cst_15 [2] : vector<2x8x4xf32> to vector<2x8xf32>
    %15 = vector.shape_cast %14 : vector<2x8xf32> to vector<2x8x1xf32>
    %16 = vector.broadcast %15 : vector<2x8x1xf32> to vector<2x8x4xf32>
    %17 = arith.subf %13, %16 : vector<2x8x4xf32>
    %18 = math.exp %17 : vector<2x8x4xf32>
    %cst_16 = arith.constant dense<0.000000e+00> : vector<2x8xf32>
    %19 = vector.multi_reduction <add>, %18, %cst_16 [2] : vector<2x8x4xf32> to vector<2x8xf32>
    %20 = vector.shape_cast %19 : vector<2x8xf32> to vector<2x8x1xf32>
    %21 = tpu.reciprocal %20 {approx = true} : vector<2x8x1xf32> -> vector<2x8x1xf32>
    %22 = vector.broadcast %21 : vector<2x8x1xf32> to vector<2x8x4xf32>
    %23 = arith.mulf %18, %22 : vector<2x8x4xf32>
    %24 = arith.truncf %23 : vector<2x8x4xf32> to vector<2x8x4xbf16>
    "tpu.trace_start"() <{level = 10 : i32, message = "hqk,hkd->hqd"}> : () -> ()
    %cst_17 = arith.constant dense<0.000000e+00> : vector<2x8x16xf32>
    %25 = tpu.matmul %24, %5, %cst_17 {dimension_numbers = #tpu.dot_dimension_numbers<[2], [1], [1], [2], [0, 0, 0, 1, 1, 2], [0], [0]>} : vector<2x8x4xbf16>, vector<2x4x16xbf16>, vector<2x8x16xf32> -> vector<2x8x16xf32>
    "tpu.trace_stop"() : () -> ()
    %c0_18 = arith.constant 0 : index
    %c0_19 = arith.constant 0 : index
    %c0_20 = arith.constant 0 : index
    %c0_21 = arith.constant 0 : index
    %26 = vector.load %arg5[%c0_18, %c0_19, %c0_20, %c0_21] : memref<1x2x8x16xf32, #tpu.memory_space<vmem>>, vector<1x2x8x16xf32>
    %27 = vector.shape_cast %26 : vector<1x2x8x16xf32> to vector<2x8x16xf32>
    %28 = vector.shape_cast %25 : vector<2x8x16xf32> to vector<1x2x8x16xf32>
    tpu.vector_store %arg5[%c0_18, %c0_19, %c0_20, %c0_21], %28 {strides = array<i32>} : memref<1x2x8x16xf32, #tpu.memory_space<vmem>>, vector<1x2x8x16xf32>,
    %c0_22 = arith.constant 0 : index
    %c0_23 = arith.constant 0 : index
    %c0_24 = arith.constant 0 : index
    %c0_25 = arith.constant 0 : index
    %29 = vector.load %arg6[%c0_22, %c0_23, %c0_24, %c0_25] : memref<1x2x8x4xf32, #tpu.memory_space<vmem>>, vector<1x2x8x4xf32>
    %30 = vector.shape_cast %29 : vector<1x2x8x4xf32> to vector<2x8x4xf32>
    %31 = vector.shape_cast %23 : vector<2x8x4xf32> to vector<1x2x8x4xf32>
    tpu.vector_store %arg6[%c0_22, %c0_23, %c0_24, %c0_25], %31 {strides = array<i32>} : memref<1x2x8x4xf32, #tpu.memory_space<vmem>>, vector<1x2x8x4xf32>,
    return
  }
  func.func @transform_0(%arg0: i32) -> (i32, i32, i32, i32) {
    %c0_i32 = arith.constant 0 : i32
    %c0_i32_0 = arith.constant 0 : i32
    %c0_i32_1 = arith.constant 0 : i32
    %c0_i32_2 = arith.constant 0 : i32
    return %arg0, %c0_i32, %c0_i32_0, %c0_i32_1 : i32, i32, i32, i32
  }
  func.func @transform_1(%arg0: i32) -> (i32, i32, i32, i32) {
    %c0_i32 = arith.constant 0 : i32
    %c0_i32_0 = arith.constant 0 : i32
    %c0_i32_1 = arith.constant 0 : i32
    %c0_i32_2 = arith.constant 0 : i32
    return %arg0, %c0_i32, %c0_i32_0, %c0_i32_1 : i32, i32, i32, i32
  }
  func.func @transform_2(%arg0: i32) -> (i32, i32, i32, i32) {
    %c0_i32 = arith.constant 0 : i32
    %c0_i32_0 = arith.constant 0 : i32
    %c0_i32_1 = arith.constant 0 : i32
    %c0_i32_2 = arith.constant 0 : i32
    return %arg0, %c0_i32, %c0_i32_0, %c0_i32_1 : i32, i32, i32, i32
  }
  func.func @transform_3(%arg0: i32) -> (i32, i32, i32) {
    %c0_i32 = arith.constant 0 : i32
    %c0_i32_0 = arith.constant 0 : i32
    %c0_i32_1 = arith.constant 0 : i32
    return %arg0, %c0_i32, %c0_i32_0 : i32, i32, i32
  }
  func.func @transform_4(%arg0: i32) -> (i32, i32, i32, i32) {
    %c0_i32 = arith.constant 0 : i32
    %c0_i32_0 = arith.constant 0 : i32
    %c0_i32_1 = arith.constant 0 : i32
    %c0_i32_2 = arith.constant 0 : i32
    return %arg0, %c0_i32, %c0_i32_0, %c0_i32_1 : i32, i32, i32, i32
  }
  func.func @transform_5(%arg0: i32) -> (i32, i32, i32, i32) {
    %c0_i32 = arith.constant 0 : i32
    %c0_i32_0 = arith.constant 0 : i32
    %c0_i32_1 = arith.constant 0 : i32
    %c0_i32_2 = arith.constant 0 : i32
    return %arg0, %c0_i32, %c0_i32_0, %c0_i32_1 : i32, i32, i32, i32
  }
}

module attributes {stable_mosaic.version = 11 : i64} {
  func.func @_mm_kernel(%arg0: i32, %arg1: memref<16x32xbf16, #tpu.memory_space<vmem>>, %arg2: memref<32x64xbf16, #tpu.memory_space<vmem>>, %arg3: memref<1x64xf32, #tpu.memory_space<vmem>>, %arg4: memref<1x64xf32, #tpu.memory_space<vmem>>, %arg5: memref<16x64xf32, #tpu.memory_space<vmem>>) attributes {dimension_semantics = [#tpu.dimension_semantics<parallel>], iteration_bounds = array<i64: 1>, scalar_prefetch = 0 : i64, scratch_operands = 0 : i64, tpu.core_type = #tpu.core_type<tc>, window_params = [{transform_indices = @transform_0, window_bounds = array<i64: 16, 32>}, {pipeline_mode = #tpu.pipeline_mode<synchronous>, transform_indices = @transform_1, window_bounds = array<i64: 32, 64>}, {pipeline_mode = #tpu.pipeline_mode<synchronous>, transform_indices = @transform_2, window_bounds = array<i64: 1, 64>}, {pipeline_mode = #tpu.pipeline_mode<synchronous>, transform_indices = @transform_3, window_bounds = array<i64: 1, 64>}, {transform_indices = @transform_4, window_bounds = array<i64: 16, 64>}]} {
    %c0 = arith.constant 0 : index
    %c0_0 = arith.constant 0 : index
    %0 = vector.load %arg1[%c0, %c0_0] : memref<16x32xbf16, #tpu.memory_space<vmem>>, vector<16x32xbf16>
    %c0_1 = arith.constant 0 : index
    %c0_2 = arith.constant 0 : index
    %1 = vector.load %arg2[%c0_1, %c0_2] : memref<32x64xbf16, #tpu.memory_space<vmem>>, vector<32x64xbf16>
    %cst = arith.constant dense<0.000000e+00> : vector<16x64xf32>
    %2 = tpu.matmul %0, %1, %cst {dimension_numbers = #tpu.dot_dimension_numbers<[1], [0], [0], [1], [0, 0, 1, 1], [], []>} : vector<16x32xbf16>, vector<32x64xbf16>, vector<16x64xf32> -> vector<16x64xf32>
    %c0_3 = arith.constant 0 : index
    %c0_4 = arith.constant 0 : index
    %3 = vector.load %arg3[%c0_3, %c0_4] : memref<1x64xf32, #tpu.memory_space<vmem>>, vector<1x64xf32>
    %4 = vector.broadcast %3 : vector<1x64xf32> to vector<16x64xf32>
    %5 = arith.mulf %2, %4 : vector<16x64xf32>
    %c0_5 = arith.constant 0 : index
    %c0_6 = arith.constant 0 : index
    %6 = vector.load %arg4[%c0_5, %c0_6] : memref<1x64xf32, #tpu.memory_space<vmem>>, vector<1x64xf32>
    %7 = vector.broadcast %6 : vector<1x64xf32> to vector<16x64xf32>
    %8 = arith.addf %5, %7 : vector<16x64xf32>
    %cst_7 = arith.constant 0.000000e+00 : f32
    %9 = vector.broadcast %cst_7 : f32 to vector<16x64xf32>
    %10 = arith.maximumf %8, %9 : vector<16x64xf32>
    %c0_8 = arith.constant 0 : index
    %c0_9 = arith.constant 0 : index
    %11 = vector.load %arg5[%c0_8, %c0_9] : memref<16x64xf32, #tpu.memory_space<vmem>>, vector<16x64xf32>
    tpu.vector_store %arg5[%c0_8, %c0_9], %10 {strides = array<i32>} : memref<16x64xf32, #tpu.memory_space<vmem>>, vector<16x64xf32>,
    return
  }
  func.func @transform_0(%arg0: i32) -> (i32, i32) {
    %c0_i32 = arith.constant 0 : i32
    %c0_i32_0 = arith.constant 0 : i32
    return %arg0, %c0_i32 : i32, i32
  }
  func.func @transform_1(%arg0: i32) -> (i32, i32) {
    %c0_i32 = arith.constant 0 : i32
    %c0_i32_0 = arith.constant 0 : i32
    %c0_i32_1 = arith.constant 0 : i32
    return %c0_i32, %c0_i32_0 : i32, i32
  }
  func.func @transform_2(%arg0: i32) -> (i32, i32) {
    %c0_i32 = arith.constant 0 : i32
    %c0_i32_0 = arith.constant 0 : i32
    %c0_i32_1 = arith.constant 0 : i32
    return %c0_i32, %c0_i32_0 : i32, i32
  }
  func.func @transform_3(%arg0: i32) -> (i32, i32) {
    %c0_i32 = arith.constant 0 : i32
    %c0_i32_0 = arith.constant 0 : i32
    %c0_i32_1 = arith.constant 0 : i32
    return %c0_i32, %c0_i32_0 : i32, i32
  }
  func.func @transform_4(%arg0: i32) -> (i32, i32) {
    %c0_i32 = arith.constant 0 : i32
    %c0_i32_0 = arith.constant 0 : i32
    return %arg0, %c0_i32 : i32, i32
  }
}

module attributes {stable_mosaic.version = 11 : i64} {
  func.func @_attn_kernel(%arg0: i32, %arg1: memref<1x2x8x16xbf16, #tpu.memory_space<vmem>>, %arg2: memref<1x2x4x16xbf16, #tpu.memory_space<vmem>>, %arg3: memref<1x2x4x16xbf16, #tpu.memory_space<vmem>>, %arg4: memref<1x8x4xf32, #tpu.memory_space<vmem>>, %arg5: memref<1x2x8x16xf32, #tpu.memory_space<vmem>>, %arg6: memref<1x2x8x4xf32, #tpu.memory_space<vmem>>) attributes {dimension_semantics = [#tpu.dimension_semantics<parallel>], iteration_bounds = array<i64: 2>, scalar_prefetch = 0 : i64, scratch_operands = 0 : i64, tpu.core_type = #tpu.core_type<tc>, window_params = [{transform_indices = @transform_0, window_bounds = array<i64: 1, 2, 8, 16>}, {transform_indices = @transform_1, window_bounds = array<i64: 1, 2, 4, 16>}, {transform_indices = @transform_2, window_bounds = array<i64: 1, 2, 4, 16>}, {transform_indices = @transform_3, window_bounds = array<i64: 1, 8, 4>}, {transform_indices = @transform_4, window_bounds = array<i64: 1, 2, 8, 16>}, {transform_indices = @transform_5, window_bounds = array<i64: 1, 2, 8, 4>}]} {
    %c0 = arith.constant 0 : index
    %c0_0 = arith.constant 0 : index
    %c0_1 = arith.constant 0 : index
    %c0_2 = arith.constant 0 : index
    %0 = vector.load %arg1[%c0, %c0_0, %c0_1, %c0_2] : memref<1x2x8x16xbf16, #tpu.memory_space<vmem>>, vector<1x2x8x16xbf16>
    %1 = vector.shape_cast %0 : vector<1x2x8x16xbf16> to vector<2x8x16xbf16>
    %c0_3 = arith.constant 0 : index
    %c0_4 = arith.constant 0 : index
    %c0_5 = arith.constant 0 : index
    %c0_6 = arith.constant 0 : index
    %2 = vector.load %arg2[%c0_3, %c0_4, %c0_5, %c0_6] : memref<1x2x4x16xbf16, #tpu.memory_space<vmem>>, vector<1x2x4x16xbf16>
    %3 = vector.shape_cast %2 : vector<1x2x4x16xbf16> to vector<2x4x16xbf16>
    %c0_7 = arith.constant 0 : index
    %c0_8 = arith.constant 0 : index
    %c0_9 = arith.constant 0 : index
    %c0_10 = arith.constant 0 : index
    %4 = vector.load %arg3[%c0_7, %c0_8, %c0_9, %c0_10] : memref<1x2x4x16xbf16, #tpu.memory_space<vmem>>, vector<1x2x4x16xbf16>
    %5 = vector.shape_cast %4 : vector<1x2x4x16xbf16> to vector<2x4x16xbf16>
    %c0_11 = arith.constant 0 : index
    %c0_12 = arith.constant 0 : index
    %c0_13 = arith.constant 0 : index
    %6 = vector.load %arg4[%c0_11, %c0_12, %c0_13] : memref<1x8x4xf32, #tpu.memory_space<vmem>>, vector<1x8x4xf32>
    %7 = vector.shape_cast %6 : vector<1x8x4xf32> to vector<8x4xf32>
    "tpu.trace_start"() <{level = 10 : i32, message = "hqd,hkd->hqk"}> : () -> ()
    %cst = arith.constant dense<0.000000e+00> : vector<2x8x4xf32>
    %8 = tpu.matmul %1, %3, %cst {dimension_numbers = #tpu.dot_dimension_numbers<[2], [2], [1], [1], [0, 0, 0, 1, 1, 1], [0], [0]>} : vector<2x8x16xbf16>, vector<2x4x16xbf16>, vector<2x8x4xf32> -> vector<2x8x4xf32>
    "tpu.trace_stop"() : () -> ()
    %cst_14 = arith.constant 2.500000e-01 : f32
    %9 = vector.broadcast %cst_14 : f32 to vector<2x8x4xf32>
    %10 = arith.mulf %8, %9 : vector<2x8x4xf32>
    %11 = vector.shape_cast %7 : vector<8x4xf32> to vector<1x8x4xf32>
    %12 = vector.broadcast %11 : vector<1x8x4xf32> to vector<2x8x4xf32>
    %13 = arith.addf %10, %12 : vector<2x8x4xf32>
    %cst_15 = arith.constant dense<0xFF800000> : vector<2x8xf32>
    %14 = vector.multi_reduction <maximumf>, %13, %cst_15 [2] : vector<2x8x4xf32> to vector<2x8xf32>
    %15 = vector.shape_cast %14 : vector<2x8xf32> to vector<2x8x1xf32>
    %16 = vector.broadcast %15 : vector<2x8x1xf32> to vector<2x8x4xf32>
    %17 = arith.subf %13, %16 : vector<2x8x4xf32>
    %18 = math.exp %17 : vector<2x8x4xf32>
    %cst_16 = arith.constant dense<0.000000e+00> : vector<2x8xf32>
    %19 = vector.multi_reduction <add>, %18, %cst_16 [2] : vector<2x8x4xf32> to vector<2x8xf32>
    %20 = vector.shape_cast %19 : vector<2x8xf32> to vector<2x8x1xf32>
    %21 = tpu.reciprocal %20 {approx = true} : vector<2x8x1xf32> -> vector<2x8x1xf32>
    %22 = vector.broadcast %21 : vector<2x8x1xf32> to vector<2x8x4xf32>
    %23 = arith.mulf %18, %22 : vector<2x8x4xf32>
    %24 = arith.truncf %23 : vector<2x8x4xf32> to vector<2x8x4xbf16>
    "tpu.trace_start"() <{level = 10 : i32, message = "hqk,hkd->hqd"}> : () -> ()
    %cst_17 = arith.constant dense<0.000000e+00> : vector<2x8x16xf32>
    %25 = tpu.matmul %24, %5, %cst_17 {dimension_numbers = #tpu.dot_dimension_numbers<[2], [1], [1], [2], [0, 0, 0, 1, 1, 2], [0], [0]>} : vector<2x8x4xbf16>, vector<2x4x16xbf16>, vector<2x8x16xf32> -> vector<2x8x16xf32>
    "tpu.trace_stop"() : () -> ()
    %c0_18 = arith.constant 0 : index
    %c0_19 = arith.constant 0 : index
    %c0_20 = arith.constant 0 : index
    %c0_21 = arith.constant 0 : index
    %26 = vector.load %arg5[%c0_18, %c0_19, %c0_20, %c0_21] : memref<1x2x8x16xf32, #tpu.memory_space<vmem>>, vector<1x2x8x16xf32>
    %27 = vector.shape_cast %26 : vector<1x2x8x16xf32> to vector<2x8x16xf32>
    %28 = vector.shape_cast %25 : vector<2x8x16xf32> to vector<1x2x8x16xf32>
    tpu.vector_store %arg5[%c0_18, %c0_19, %c0_20, %c0_21], %28 {strides = array<i32>} : memref<1x2x8x16xf32, #tpu.memory_space<vmem>>, vector<1x2x8x16xf32>,
    %c0_22 = arith.constant 0 : index
    %c0_23 = arith.constant 0 : index
    %c0_24 = arith.constant 0 : index
    %c0_25 = arith.constant 0 : index
    %29 = vector.load %arg6[%c0_22, %c0_23, %c0_24, %c0_25] : memref<1x2x8x4xf32, #tpu.memory_space<vmem>>, vector<1x2x8x4xf32>
    %30 = vector.shape_cast %29 : vector<1x2x8x4xf32> to vector<2x8x4xf32>
    %31 = vector.shape_cast %23 : vector<2x8x4xf32> to vector<1x2x8x4xf32>
    tpu.vector_store %arg6[%c0_22, %c0_23, %c0_24, %c0_25], %31 {strides = array<i32>} : memref<1x2x8x4xf32, #tpu.memory_space<vmem>>, vector<1x2x8x4xf32>,
    return
  }
  func.func @transform_0(%arg0: i32) -> (i32, i32, i32, i32) {
    %c0_i32 = arith.constant 0 : i32
    %c0_i32_0 = arith.constant 0 : i32
    %c0_i32_1 = arith.constant 0 : i32
    %c0_i32_2 = arith.constant 0 : i32
    return %arg0, %c0_i32, %c0_i32_0, %c0_i32_1 : i32, i32, i32, i32
  }
  func.func @transform_1(%arg0: i32) -> (i32, i32, i32, i32) {
    %c0_i32 = arith.constant 0 : i32
    %c0_i32_0 = arith.constant 0 : i32
    %c0_i32_1 = arith.constant 0 : i32
    %c0_i32_2 = arith.constant 0 : i32
    return %arg0, %c0_i32, %c0_i32_0, %c0_i32_1 : i32, i32, i32, i32
  }
  func.func @transform_2(%arg0: i32) -> (i32, i32, i32, i32) {
    %c0_i32 = arith.constant 0 : i32
    %c0_i32_0 = arith.constant 0 : i32
    %c0_i32_1 = arith.constant 0 : i32
    %c0_i32_2 = arith.constant 0 : i32
    return %arg0, %c0_i32, %c0_i32_0, %c0_i32_1 : i32, i32, i32, i32
  }
  func.func @transform_3(%arg0: i32) -> (i32, i32, i32) {
    %c0_i32 = arith.constant 0 : i32
    %c0_i32_0 = arith.constant 0 : i32
    %c0_i32_1 = arith.constant 0 : i32
    return %arg0, %c0_i32, %c0_i32_0 : i32, i32, i32
  }
  func.func @transform_4(%arg0: i32) -> (i32, i32, i32, i32) {
    %c0_i32 = arith.constant 0 : i32
    %c0_i32_0 = arith.constant 0 : i32
    %c0_i32_1 = arith.constant 0 : i32
    %c0_i32_2 = arith.constant 0 : i32
    return %arg0, %c0_i32, %c0_i32_0, %c0_i32_1 : i32, i32, i32, i32
  }
  func.func @transform_5(%arg0: i32) -> (i32, i32, i32, i32) {
    %c0_i32 = arith.constant 0 : i32
    %c0_i32_0 = arith.constant 0 : i32
    %c0_i32_1 = arith.constant 0 : i32
    %c0_i32_2 = arith.constant 0 : i32
    return %arg0, %c0_i32, %c0_i32_0, %c0_i32_1 : i32, i32, i32, i32
  }
}

module attributes {stable_mosaic.version = 11 : i64} {
  func.func @_mm_kernel(%arg0: i32, %arg1: memref<32x32xbf16, #tpu.memory_space<vmem>>, %arg2: memref<32x67xbf16, #tpu.memory_space<vmem>>, %arg3: memref<1x67xf32, #tpu.memory_space<vmem>>, %arg4: memref<1x67xf32, #tpu.memory_space<vmem>>, %arg5: memref<32x67xf32, #tpu.memory_space<vmem>>) attributes {dimension_semantics = [#tpu.dimension_semantics<parallel>], iteration_bounds = array<i64: 1>, scalar_prefetch = 0 : i64, scratch_operands = 0 : i64, tpu.core_type = #tpu.core_type<tc>, window_params = [{transform_indices = @transform_0, window_bounds = array<i64: 32, 32>}, {pipeline_mode = #tpu.pipeline_mode<synchronous>, transform_indices = @transform_1, window_bounds = array<i64: 32, 67>}, {pipeline_mode = #tpu.pipeline_mode<synchronous>, transform_indices = @transform_2, window_bounds = array<i64: 1, 67>}, {pipeline_mode = #tpu.pipeline_mode<synchronous>, transform_indices = @transform_3, window_bounds = array<i64: 1, 67>}, {transform_indices = @transform_4, window_bounds = array<i64: 32, 67>}]} {
    %c0 = arith.constant 0 : index
    %c0_0 = arith.constant 0 : index
    %0 = vector.load %arg1[%c0, %c0_0] : memref<32x32xbf16, #tpu.memory_space<vmem>>, vector<32x32xbf16>
    %c0_1 = arith.constant 0 : index
    %c0_2 = arith.constant 0 : index
    %1 = vector.load %arg2[%c0_1, %c0_2] : memref<32x67xbf16, #tpu.memory_space<vmem>>, vector<32x67xbf16>
    %cst = arith.constant dense<0.000000e+00> : vector<32x67xf32>
    %2 = tpu.matmul %0, %1, %cst {dimension_numbers = #tpu.dot_dimension_numbers<[1], [0], [0], [1], [0, 0, 1, 1], [], []>} : vector<32x32xbf16>, vector<32x67xbf16>, vector<32x67xf32> -> vector<32x67xf32>
    %c0_3 = arith.constant 0 : index
    %c0_4 = arith.constant 0 : index
    %3 = vector.load %arg3[%c0_3, %c0_4] : memref<1x67xf32, #tpu.memory_space<vmem>>, vector<1x67xf32>
    %4 = vector.broadcast %3 : vector<1x67xf32> to vector<32x67xf32>
    %5 = arith.mulf %2, %4 : vector<32x67xf32>
    %c0_5 = arith.constant 0 : index
    %c0_6 = arith.constant 0 : index
    %6 = vector.load %arg4[%c0_5, %c0_6] : memref<1x67xf32, #tpu.memory_space<vmem>>, vector<1x67xf32>
    %7 = vector.broadcast %6 : vector<1x67xf32> to vector<32x67xf32>
    %8 = arith.addf %5, %7 : vector<32x67xf32>
    %c0_7 = arith.constant 0 : index
    %c0_8 = arith.constant 0 : index
    %9 = vector.load %arg5[%c0_7, %c0_8] : memref<32x67xf32, #tpu.memory_space<vmem>>, vector<32x67xf32>
    tpu.vector_store %arg5[%c0_7, %c0_8], %8 {strides = array<i32>} : memref<32x67xf32, #tpu.memory_space<vmem>>, vector<32x67xf32>,
    return
  }
  func.func @transform_0(%arg0: i32) -> (i32, i32) {
    %c0_i32 = arith.constant 0 : i32
    %c0_i32_0 = arith.constant 0 : i32
    return %arg0, %c0_i32 : i32, i32
  }
  func.func @transform_1(%arg0: i32) -> (i32, i32) {
    %c0_i32 = arith.constant 0 : i32
    %c0_i32_0 = arith.constant 0 : i32
    %c0_i32_1 = arith.constant 0 : i32
    return %c0_i32, %c0_i32_0 : i32, i32
  }
  func.func @transform_2(%arg0: i32) -> (i32, i32) {
    %c0_i32 = arith.constant 0 : i32
    %c0_i32_0 = arith.constant 0 : i32
    %c0_i32_1 = arith.constant 0 : i32
    return %c0_i32, %c0_i32_0 : i32, i32
  }
  func.func @transform_3(%arg0: i32) -> (i32, i32) {
    %c0_i32 = arith.constant 0 : i32
    %c0_i32_0 = arith.constant 0 : i32
    %c0_i32_1 = arith.constant 0 : i32
    return %c0_i32, %c0_i32_0 : i32, i32
  }
  func.func @transform_4(%arg0: i32) -> (i32, i32) {
    %c0_i32 = arith.constant 0 : i32
    %c0_i32_0 = arith.constant 0 : i32
    return %arg0, %c0_i32 : i32, i32
  }
}

module attributes {stable_mosaic.version = 11 : i64} {
  func.func @_mm_kernel(%arg0: i32, %arg1: memref<32x64xbf16, #tpu.memory_space<vmem>>, %arg2: memref<64x8xbf16, #tpu.memory_space<vmem>>, %arg3: memref<1x8xf32, #tpu.memory_space<vmem>>, %arg4: memref<1x8xf32, #tpu.memory_space<vmem>>, %arg5: memref<32x8xf32, #tpu.memory_space<vmem>>) attributes {dimension_semantics = [#tpu.dimension_semantics<parallel>], iteration_bounds = array<i64: 1>, scalar_prefetch = 0 : i64, scratch_operands = 0 : i64, tpu.core_type = #tpu.core_type<tc>, window_params = [{transform_indices = @transform_0, window_bounds = array<i64: 32, 64>}, {pipeline_mode = #tpu.pipeline_mode<synchronous>, transform_indices = @transform_1, window_bounds = array<i64: 64, 8>}, {pipeline_mode = #tpu.pipeline_mode<synchronous>, transform_indices = @transform_2, window_bounds = array<i64: 1, 8>}, {pipeline_mode = #tpu.pipeline_mode<synchronous>, transform_indices = @transform_3, window_bounds = array<i64: 1, 8>}, {transform_indices = @transform_4, window_bounds = array<i64: 32, 8>}]} {
    %c0 = arith.constant 0 : index
    %c0_0 = arith.constant 0 : index
    %0 = vector.load %arg1[%c0, %c0_0] : memref<32x64xbf16, #tpu.memory_space<vmem>>, vector<32x64xbf16>
    %c0_1 = arith.constant 0 : index
    %c0_2 = arith.constant 0 : index
    %1 = vector.load %arg2[%c0_1, %c0_2] : memref<64x8xbf16, #tpu.memory_space<vmem>>, vector<64x8xbf16>
    %cst = arith.constant dense<0.000000e+00> : vector<32x8xf32>
    %2 = tpu.matmul %0, %1, %cst {dimension_numbers = #tpu.dot_dimension_numbers<[1], [0], [0], [1], [0, 0, 1, 1], [], []>} : vector<32x64xbf16>, vector<64x8xbf16>, vector<32x8xf32> -> vector<32x8xf32>
    %c0_3 = arith.constant 0 : index
    %c0_4 = arith.constant 0 : index
    %3 = vector.load %arg3[%c0_3, %c0_4] : memref<1x8xf32, #tpu.memory_space<vmem>>, vector<1x8xf32>
    %4 = vector.broadcast %3 : vector<1x8xf32> to vector<32x8xf32>
    %5 = arith.mulf %2, %4 : vector<32x8xf32>
    %c0_5 = arith.constant 0 : index
    %c0_6 = arith.constant 0 : index
    %6 = vector.load %arg4[%c0_5, %c0_6] : memref<1x8xf32, #tpu.memory_space<vmem>>, vector<1x8xf32>
    %7 = vector.broadcast %6 : vector<1x8xf32> to vector<32x8xf32>
    %8 = arith.addf %5, %7 : vector<32x8xf32>
    %c0_7 = arith.constant 0 : index
    %c0_8 = arith.constant 0 : index
    %9 = vector.load %arg5[%c0_7, %c0_8] : memref<32x8xf32, #tpu.memory_space<vmem>>, vector<32x8xf32>
    tpu.vector_store %arg5[%c0_7, %c0_8], %8 {strides = array<i32>} : memref<32x8xf32, #tpu.memory_space<vmem>>, vector<32x8xf32>,
    return
  }
  func.func @transform_0(%arg0: i32) -> (i32, i32) {
    %c0_i32 = arith.constant 0 : i32
    %c0_i32_0 = arith.constant 0 : i32
    return %arg0, %c0_i32 : i32, i32
  }
  func.func @transform_1(%arg0: i32) -> (i32, i32) {
    %c0_i32 = arith.constant 0 : i32
    %c0_i32_0 = arith.constant 0 : i32
    %c0_i32_1 = arith.constant 0 : i32
    return %c0_i32, %c0_i32_0 : i32, i32
  }
  func.func @transform_2(%arg0: i32) -> (i32, i32) {
    %c0_i32 = arith.constant 0 : i32
    %c0_i32_0 = arith.constant 0 : i32
    %c0_i32_1 = arith.constant 0 : i32
    return %c0_i32, %c0_i32_0 : i32, i32
  }
  func.func @transform_3(%arg0: i32) -> (i32, i32) {
    %c0_i32 = arith.constant 0 : i32
    %c0_i32_0 = arith.constant 0 : i32
    %c0_i32_1 = arith.constant 0 : i32
    return %c0_i32, %c0_i32_0 : i32, i32
  }
  func.func @transform_4(%arg0: i32) -> (i32, i32) {
    %c0_i32 = arith.constant 0 : i32
    %c0_i32_0 = arith.constant 0 : i32
    return %arg0, %c0_i32 : i32, i32
  }
}

</mosaic_0001>

<llo_original>
// kernel: _lambda_.43
$region0: #{_lambda_.43}
  #allocation0 [shape = 'u32[]', space=smem, size = 0x4, offset = 0x4, fixed_abs, tag = 'smem constant byte address 0x4 - core index']
  #allocation1 [shape = 'u32[144,128]{1,0:T(1,128)}', space=vmem, size = 0x12000, scoped, tag = 'internal scratch']
  %s0 = inlined_call_operand.vmem [shape: bf16[2048,147], index: 0, kind: input, shape index: {}]
  %s1 = inlined_call_operand.vmem [shape: bf16[147,8], index: 1, kind: input, shape index: {}]
  %s2 = inlined_call_operand.vmem [shape: f32[1,8], index: 2, kind: input, shape index: {}]
  %s3 = inlined_call_operand.vmem [shape: f32[1,8], index: 3, kind: input, shape index: {}]
  %s4 = inlined_call_operand.vmem [shape: f32[2048,8], index: 4, kind: output, shape index: {}]
  %s5 = sld [smem:[#allocation0]]
  $region49: #{_lambda_.43} parent=0
    _
  %s7 = ssub.s32 1, %s5
  %s8 = scalar_select 0, %s7, %s5
  loop: start=0, step=1, limit=6
  $region2: #{_lambda_.43} parent=0 // loop_pre_header
    _
  $region3: #{_lambda_.43} parent=0 // loop_header
    %s10 = sphi 0, %s14
    %p11 = scmp.ge.s32.totalorder %s10, 6
    %s20 = sphi 0, %s22
    %s23 = sphi 0, %s20
    %s24 = sphi 0, %s23
    %s40 = sphi 0, %s24
    %s44 = sphi 0, %s44
    %s46 = sphi 0, %s44
    %s47 = sphi 0, %s46
    %s61 = sphi 0, %s47
    %s65 = sphi 0, %s65
    %s67 = sphi 0, %s65
    %s68 = sphi 0, %s67
    %s82 = sphi 0, %s68
    %s86 = sphi 0, %s86
    %s88 = sphi 0, %s86
    %s89 = sphi 0, %s88
    %s103 = sphi 0, %s89
    %s109 = sphi 0, %s111
    %s112 = sphi 0, %s109
    %s113 = sphi 0, %s112
    %s129 = sphi 0, %s113
  $region4: #{_lambda_.43} parent=0 // loop_header_branch
    %13 = sbr.rel (%p11) target = $region8
  $region5: #{_lambda_.43} parent=0 // loop_body
    %s15 = ssub.s32 %s10, 1
    %s16 = ssub.s32 %s10, 2
    %s17 = sadd.s32 %s10, 1
    %s18 = ssub.s32 %s10, %s17
    %p19 = scmp.eq.s32.totalorder %s18, 0
    %s21 = sadd.s32 %s20, 1
    %s22 = scalar_select %p19, %s20, %s21
    %p25 = pneg %p19
    %p26 = scmp.eq.s32.totalorder %s10, 3
    %p27 = por %p25, %p26
    %p28 = scmp.ne.s32.totalorder %s20, %s23
    %p29 = scmp.eq.s32.totalorder %s10, 0
    %p30 = por %p28, %p29
    %p31 = scmp.ne.s32.totalorder %s20, %s23
    %p32 = scmp.eq.s32.totalorder %s15, 3
    %p33 = por %p31, %p32
    %p34 = scmp.ne.s32.totalorder %s23, %s24
    %p35 = scmp.eq.s32.totalorder %s15, 0
    %p36 = por %p34, %p35
    %p37 = scmp.ne.s32.totalorder %s23, %s24
    %p38 = scmp.eq.s32.totalorder %s16, 3
    %p39 = por %p37, %p38
    %p41 = scmp.ne.s32.totalorder %s24, %s40
    %p42 = scmp.eq.s32.totalorder %s16, 0
    %p43 = por %p41, %p42
    %s45 = sadd.s32 %s44, 1
    %p48 = scmp.eq.s32.totalorder %s10, 3
    %p49 = scmp.ne.s32.totalorder %s44, %s46
    %p50 = scmp.eq.s32.totalorder %s10, 0
    %p51 = por %p49, %p50
    %p52 = scmp.ne.s32.totalorder %s44, %s46
    %p53 = scmp.eq.s32.totalorder %s15, 3
    %p54 = por %p52, %p53
    %p55 = scmp.ne.s32.totalorder %s46, %s47
    %p56 = scmp.eq.s32.totalorder %s15, 0
    %p57 = por %p55, %p56
    %p58 = scmp.ne.s32.totalorder %s46, %s47
    %p59 = scmp.eq.s32.totalorder %s16, 3
    %p60 = por %p58, %p59
    %p62 = scmp.ne.s32.totalorder %s47, %s61
    %p63 = scmp.eq.s32.totalorder %s16, 0
    %p64 = por %p62, %p63
    %s66 = sadd.s32 %s65, 1
    %p69 = scmp.eq.s32.totalorder %s10, 3
    %p70 = scmp.ne.s32.totalorder %s65, %s67
    %p71 = scmp.eq.s32.totalorder %s10, 0
    %p72 = por %p70, %p71
    %p73 = scmp.ne.s32.totalorder %s65, %s67
    %p74 = scmp.eq.s32.totalorder %s15, 3
    %p75 = por %p73, %p74
    %p76 = scmp.ne.s32.totalorder %s67, %s68
    %p77 = scmp.eq.s32.totalorder %s15, 0
    %p78 = por %p76, %p77
    %p79 = scmp.ne.s32.totalorder %s67, %s68
    %p80 = scmp.eq.s32.totalorder %s16, 3
    %p81 = por %p79, %p80
    %p83 = scmp.ne.s32.totalorder %s68, %s82
    %p84 = scmp.eq.s32.totalorder %s16, 0
    %p85 = por %p83, %p84
    %s87 = sadd.s32 %s86, 1
    %p90 = scmp.eq.s32.totalorder %s10, 3
    %p91 = scmp.ne.s32.totalorder %s86, %s88
    %p92 = scmp.eq.s32.totalorder %s10, 0
    %p93 = por %p91, %p92
    %p94 = scmp.ne.s32.totalorder %s86, %s88
    %p95 = scmp.eq.s32.totalorder %s15, 3
    %p96 = por %p94, %p95
    %p97 = scmp.ne.s32.totalorder %s88, %s89
    %p98 = scmp.eq.s32.totalorder %s15, 0
    %p99 = por %p97, %p98
    %p100 = scmp.ne.s32.totalorder %s88, %s89
    %p101 = scmp.eq.s32.totalorder %s16, 3
    %p102 = por %p100, %p101
    %p104 = scmp.ne.s32.totalorder %s89, %s103
    %p105 = scmp.eq.s32.totalorder %s16, 0
    %p106 = por %p104, %p105
    %s107 = ssub.s32 %s10, %s17
    %p108 = scmp.eq.s32.totalorder %s107, 0
    %s110 = sadd.s32 %s109, 1
    %s111 = scalar_select %p108, %s109, %s110
    %p114 = pneg %p108
    %p115 = scmp.eq.s32.totalorder %s10, 3
    %p116 = por %p114, %p115
    %p117 = scmp.ne.s32.totalorder %s109, %s112
    %p118 = scmp.eq.s32.totalorder %s10, 0
    %p119 = por %p117, %p118
    %p120 = scmp.ne.s32.totalorder %s109, %s112
    %p121 = scmp.eq.s32.totalorder %s15, 3
    %p122 = por %p120, %p121
    %p123 = scmp.ne.s32.totalorder %s112, %s113
    %p124 = scmp.eq.s32.totalorder %s15, 0
    %p125 = por %p123, %p124
    %p126 = scmp.ne.s32.totalorder %s112, %s113
    %p127 = scmp.eq.s32.totalorder %s16, 3
    %p128 = por %p126, %p127
    %p130 = scmp.ne.s32.totalorder %s113, %s129
    %p131 = scmp.eq.s32.totalorder %s16, 0
    %p132 = por %p130, %p131
    %p133 = scmp.le.s32.totalorder 1, %s10
    %p134 = scmp.lt.s32.totalorder %s10, 5
    %p135 = pnand %p133, %p134
    %p136 = pneg %p135
    // Predicated region
    $region9: #{_lambda_.43} parent=5 // pred_check
      _
    $region10: #{_lambda_.43} parent=5 // pred_check_branch
      %138 = sbr.rel (%p135) target = $region12
    $region11: #{_lambda_.43} parent=5 // pred_region
      %s139 = ssub.s32 %s10, 1
      // Predicated region
      $region13: #{_lambda_.43} parent=11 // pred_check
        %p140 = pneg %p57
      $region14: #{_lambda_.43} parent=11 // pred_check_branch
        %142 = sbr.rel (%p140) target = $region16
      $region15: #{_lambda_.43} parent=11 // pred_region
        _
      $region16: #{_lambda_.43} parent=11 // pred_fallthru
        _
      // Predicated region
      $region17: #{_lambda_.43} parent=11 // pred_check
        %p143 = pneg %p78
      $region18: #{_lambda_.43} parent=11 // pred_check_branch
        %145 = sbr.rel (%p143) target = $region20
      $region19: #{_lambda_.43} parent=11 // pred_region
        _
      $region20: #{_lambda_.43} parent=11 // pred_fallthru
        _
      // Predicated region
      $region21: #{_lambda_.43} parent=11 // pred_check
        %p146 = pneg %p99
      $region22: #{_lambda_.43} parent=11 // pred_check_branch
        %148 = sbr.rel (%p146) target = $region24
      $region23: #{_lambda_.43} parent=11 // pred_region
        _
      $region24: #{_lambda_.43} parent=11 // pred_fallthru
        _
    $region12: #{_lambda_.43} parent=5 // pred_fallthru
      _
    %p149 = scmp.lt.s32.totalorder %s10, 4
    // Predicated region
    $region25: #{_lambda_.43} parent=5 // pred_check
      %p150 = pneg %p149
    $region26: #{_lambda_.43} parent=5 // pred_check_branch
      %152 = sbr.rel (%p150) target = $region28
    $region27: #{_lambda_.43} parent=5 // pred_region
      // Predicated region
      $region29: #{_lambda_.43} parent=27 // pred_check
        %p153 = pneg %p30
      $region30: #{_lambda_.43} parent=27 // pred_check_branch
        %155 = sbr.rel (%p153) target = $region32
      $region31: #{_lambda_.43} parent=27 // pred_region
        %s156 = smul.u32 64, %s10
        %p157 = scmp.lt.s32.totalorder %s156, 255
        %s158 = scalar_select %p157, %s156, 255
        %s159 = smul.addr %s158, 2
        %s160 = smul.addr %s159, 4
        %s161 = scalar_lea.vmem %s0, %s160
        %s162 = smul.u32 64, %s10
      $region32: #{_lambda_.43} parent=27 // pred_fallthru
        _
    $region28: #{_lambda_.43} parent=5 // pred_fallthru
      _
    %p163 = scmp.le.s32.totalorder 1, %s10
    %p164 = scmp.lt.s32.totalorder %s10, 5
    %p165 = pnand %p163, %p164
    %p166 = pneg %p165
    // Predicated region
    $region33: #{_lambda_.43} parent=5 // pred_check
      _
    $region34: #{_lambda_.43} parent=5 // pred_check_branch
      %168 = sbr.rel (%p165) target = $region36
    $region35: #{_lambda_.43} parent=5 // pred_region
      %s169 = ssub.s32 %s10, 1
      %s170 = smul.u32 64, %s15
      %p171 = scmp.lt.s32.totalorder %s170, 255
      %s172 = scalar_select %p171, %s170, 255
      %s173 = smul.addr %s172, 2
      %s174 = smul.addr %s173, 4
      %s175 = scalar_lea.vmem %s0, %s174
      %p176 = pneg %p36
      %p177 = pneg %p33
      %p178 = pneg %p57
      %p179 = pneg %p54
      %p180 = pneg %p78
      %p181 = pneg %p75
      %p182 = pneg %p99
      %p183 = pneg %p96
      %p184 = pneg %p125
      %p185 = pneg %p122
      %s186 = smul.u32 64, %s15
      %p187 = scmp.lt.s32.totalorder %s186, 255
      %s188 = scalar_select %p187, %s186, 255
      %s189 = smul.addr %s188, 8
      %s190 = scalar_lea.vmem %s4, %s189
      %s191 = smul.u32 64, %s15
      %p192 = scmp.lt.s32.totalorder %s191, 255
      %s193 = scalar_select %p192, %s191, 255
      %s194 = smul.addr %s193, 2
      %s195 = smul.addr %s194, 4
      %s196 = scalar_lea.vmem %s0, %s195
      %s197 = smul.u32 64, %s15
      %s198 = smul.u32 64, %s15
      %p199 = scmp.lt.s32.totalorder %s198, 255
      %s200 = scalar_select %p199, %s198, 255
      %s201 = smul.addr %s200, 8
      %s202 = scalar_lea.vmem %s4, %s201
      %s203 = smul.u32 64, %s15
      %v205 = vld [vmem:[%s196] sm:$0xff]
      %v206 = vld [vmem:[%s196 + $0x8] sm:$0xff]
      %v207 = vld [vmem:[%s196 + $0x10] sm:$0xff]
      %v208 = vld [vmem:[%s196 + $0x18] sm:$0xff]
      %v209 = vld [vmem:[%s196 + $0x20] sm:$0xff]
      %v210 = vld [vmem:[%s196 + $0x28] sm:$0xff]
      %v211 = vld [vmem:[%s196 + $0x30] sm:$0xff]
      %v212 = vld [vmem:[%s196 + $0x38] sm:$0xff]
      %v213 = vld [vmem:[%s196 + $0x40] sm:$0xff]
      %v214 = vld [vmem:[%s196 + $0x48] sm:$0xff]
      %v215 = vld [vmem:[%s196 + $0x50] sm:$0xff]
      %v216 = vld [vmem:[%s196 + $0x58] sm:$0xff]
      %v217 = vld [vmem:[%s196 + $0x60] sm:$0xff]
      %v218 = vld [vmem:[%s196 + $0x68] sm:$0xff]
      %v219 = vld [vmem:[%s196 + $0x70] sm:$0xff]
      %v220 = vld [vmem:[%s196 + $0x78] sm:$0xff]
      %v221 = vld [vmem:[%s196 + $0x80] sm:$0xff]
      %v222 = vld [vmem:[%s196 + $0x88] sm:$0xff]
      %v223 = vld [vmem:[%s196 + $0x90] sm:$0xff]
      %v224 = vld [vmem:[%s196 + $0x98] sm:$0xff]
      %v225 = vld [vmem:[%s196 + $0xa0] sm:$0xff]
      %v226 = vld [vmem:[%s196 + $0xa8] sm:$0xff]
      %v227 = vld [vmem:[%s196 + $0xb0] sm:$0xff]
      %v228 = vld [vmem:[%s196 + $0xb8] sm:$0xff]
      %v229 = vld [vmem:[%s196 + $0xc0] sm:$0xff]
      %v230 = vld [vmem:[%s196 + $0xc8] sm:$0xff]
      %v231 = vld [vmem:[%s196 + $0xd0] sm:$0xff]
      %v232 = vld [vmem:[%s196 + $0xd8] sm:$0xff]
      %v233 = vld [vmem:[%s196 + $0xe0] sm:$0xff]
      %v234 = vld [vmem:[%s196 + $0xe8] sm:$0xff]
      %v235 = vld [vmem:[%s196 + $0xf0] sm:$0xff]
      %v236 = vld [vmem:[%s196 + $0xf8] sm:$0xff]
      %v237 = vld [vmem:[%s196 + $0x100] sm:$0xff]
      %v238 = vld [vmem:[%s196 + $0x108] sm:$0xff]
      %v239 = vld [vmem:[%s196 + $0x110] sm:$0xff]
      %v240 = vld [vmem:[%s196 + $0x118] sm:$0xff]
      %v241 = vld [vmem:[%s196 + $0x120] sm:$0xff]
      %v242 = vld [vmem:[%s196 + $0x128] sm:$0xff]
      %v243 = vld [vmem:[%s196 + $0x130] sm:$0xff]
      %v244 = vld [vmem:[%s196 + $0x138] sm:$0xff]
      %v245 = vld [vmem:[%s196 + $0x140] sm:$0xff]
      %v246 = vld [vmem:[%s196 + $0x148] sm:$0xff]
      %v247 = vld [vmem:[%s196 + $0x150] sm:$0xff]
      %v248 = vld [vmem:[%s196 + $0x158] sm:$0xff]
      %v249 = vld [vmem:[%s196 + $0x160] sm:$0xff]
      %v250 = vld [vmem:[%s196 + $0x168] sm:$0xff]
      %v251 = vld [vmem:[%s196 + $0x170] sm:$0xff]
      %v252 = vld [vmem:[%s196 + $0x178] sm:$0xff]
      %v253 = vld [vmem:[%s196 + $0x180] sm:$0xff]
      %v254 = vld [vmem:[%s196 + $0x188] sm:$0xff]
      %v255 = vld [vmem:[%s196 + $0x190] sm:$0xff]
      %v256 = vld [vmem:[%s196 + $0x198] sm:$0xff]
      %v257 = vld [vmem:[%s196 + $0x1a0] sm:$0xff]
      %v258 = vld [vmem:[%s196 + $0x1a8] sm:$0xff]
      %v259 = vld [vmem:[%s196 + $0x1b0] sm:$0xff]
      %v260 = vld [vmem:[%s196 + $0x1b8] sm:$0xff]
      %v261 = vld [vmem:[%s196 + $0x1c0] sm:$0xff]
      %v262 = vld [vmem:[%s196 + $0x1c8] sm:$0xff]
      %v263 = vld [vmem:[%s196 + $0x1d0] sm:$0xff]
      %v264 = vld [vmem:[%s196 + $0x1d8] sm:$0xff]
      %v265 = vld [vmem:[%s196 + $0x1e0] sm:$0xff]
      %v266 = vld [vmem:[%s196 + $0x1e8] sm:$0xff]
      %v267 = vld [vmem:[%s196 + $0x1f0] sm:$0xff]
      %v268 = vld [vmem:[%s196 + $0x1f8] sm:$0xff]
      %v269 = vld [vmem:[%s1] sm:$0xf]
      %v270 = vld [vmem:[%s1 + $0x4] sm:$0xf]
      %v271 = vld [vmem:[%s1 + $0x8] sm:$0xf]
      %v272 = vld [vmem:[%s1 + $0xc] sm:$0xf]
      %v273 = vld [vmem:[%s1 + $0x10] sm:$0xf]
      %v274 = vld [vmem:[%s1 + $0x14] sm:$0xf]
      %v275 = vld [vmem:[%s1 + $0x18] sm:$0xf]
      %v276 = vld [vmem:[%s1 + $0x1c] sm:$0xf]
      %v277 = vld [vmem:[%s1 + $0x20] sm:$0xf]
      %v278 = vld [vmem:[%s1 + $0x24] sm:$0xf]
      %v279 = vld [vmem:[%s1 + $0x28] sm:$0xf]
      %v280 = vld [vmem:[%s1 + $0x2c] sm:$0xf]
      %v281 = vld [vmem:[%s1 + $0x30] sm:$0xf]
      %v282 = vld [vmem:[%s1 + $0x34] sm:$0xf]
      %v283 = vld [vmem:[%s1 + $0x38] sm:$0xf]
      %v284 = vld [vmem:[%s1 + $0x3c] sm:$0xf]
      %v285 = vld [vmem:[%s1 + $0x40] sm:$0xf]
      %v286 = vld [vmem:[%s1 + $0x44] sm:$0xf]
      %v287 = vld [vmem:[%s1 + $0x48] sm:$0x3]
      %v352 = vunpack.c.l.b16 %v205
      %v353 = vunpack.c.h.b16 %v205
      %v354 = vunpack.c.l.b16 %v206
      %v355 = vunpack.c.h.b16 %v206
      %v356 = vunpack.c.l.b16 %v207
      %v357 = vunpack.c.h.b16 %v207
      %v358 = vunpack.c.l.b16 %v208
      %v359 = vunpack.c.h.b16 %v208
      %v360 = vunpack.c.l.b16 %v209
      %v361 = vunpack.c.h.b16 %v209
      %v362 = vunpack.c.l.b16 %v210
      %v363 = vunpack.c.h.b16 %v210
      %v364 = vunpack.c.l.b16 %v211
      %v365 = vunpack.c.h.b16 %v211
      %v366 = vunpack.c.l.b16 %v212
      %v367 = vunpack.c.h.b16 %v212
      %v368 = vunpack.c.l.b16 %v213
      %v369 = vunpack.c.h.b16 %v213
      %v370 = vunpack.c.l.b16 %v214
      %v371 = vunpack.c.h.b16 %v214
      %v372 = vunpack.c.l.b16 %v215
      %v373 = vunpack.c.h.b16 %v215
      %v374 = vunpack.c.l.b16 %v216
      %v375 = vunpack.c.h.b16 %v216
      %v376 = vunpack.c.l.b16 %v217
      %v377 = vunpack.c.h.b16 %v217
      %v378 = vunpack.c.l.b16 %v218
      %v379 = vunpack.c.h.b16 %v218
      %v380 = vunpack.c.l.b16 %v219
      %v381 = vunpack.c.h.b16 %v219
      %v382 = vunpack.c.l.b16 %v220
      %v383 = vunpack.c.h.b16 %v220
      %v384 = vunpack.c.l.b16 %v221
      %v385 = vunpack.c.h.b16 %v221
      %v386 = vunpack.c.l.b16 %v222
      %v387 = vunpack.c.h.b16 %v222
      %v388 = vunpack.c.l.b16 %v223
      %v389 = vunpack.c.h.b16 %v223
      %v390 = vunpack.c.l.b16 %v224
      %v391 = vunpack.c.h.b16 %v224
      %v392 = vunpack.c.l.b16 %v225
      %v393 = vunpack.c.h.b16 %v225
      %v394 = vunpack.c.l.b16 %v226
      %v395 = vunpack.c.h.b16 %v226
      %v396 = vunpack.c.l.b16 %v227
      %v397 = vunpack.c.h.b16 %v227
      %v398 = vunpack.c.l.b16 %v228
      %v399 = vunpack.c.h.b16 %v228
      %v400 = vunpack.c.l.b16 %v229
      %v401 = vunpack.c.h.b16 %v229
      %v402 = vunpack.c.l.b16 %v230
      %v403 = vunpack.c.h.b16 %v230
      %v404 = vunpack.c.l.b16 %v231
      %v405 = vunpack.c.h.b16 %v231
      %v406 = vunpack.c.l.b16 %v232
      %v407 = vunpack.c.h.b16 %v232
      %v408 = vunpack.c.l.b16 %v233
      %v409 = vunpack.c.h.b16 %v233
      %v410 = vunpack.c.l.b16 %v234
      %v411 = vunpack.c.h.b16 %v234
      %v412 = vunpack.c.l.b16 %v235
      %v413 = vunpack.c.h.b16 %v235
      %v414 = vunpack.c.l.b16 %v236
      %v415 = vunpack.c.h.b16 %v236
      %v416 = vunpack.c.l.b16 %v237
      %v417 = vunpack.c.h.b16 %v237
      %v418 = vunpack.c.l.b16 %v238
      %v419 = vunpack.c.h.b16 %v238
      %v420 = vunpack.c.l.b16 %v239
      %v421 = vunpack.c.h.b16 %v239
      %v422 = vunpack.c.l.b16 %v240
      %v423 = vunpack.c.h.b16 %v240
      %v424 = vunpack.c.l.b16 %v241
      %v425 = vunpack.c.h.b16 %v241
      %v426 = vunpack.c.l.b16 %v242
      %v427 = vunpack.c.h.b16 %v242
      %v428 = vunpack.c.l.b16 %v243
      %v429 = vunpack.c.h.b16 %v243
      %v430 = vunpack.c.l.b16 %v244
      %v431 = vunpack.c.h.b16 %v244
      %v432 = vunpack.c.l.b16 %v245
      %v433 = vunpack.c.h.b16 %v245
      %v434 = vunpack.c.l.b16 %v246
      %v435 = vunpack.c.h.b16 %v246
      %v436 = vunpack.c.l.b16 %v247
      %v437 = vunpack.c.h.b16 %v247
      %v438 = vunpack.c.l.b16 %v248
      %v439 = vunpack.c.h.b16 %v248
      %v440 = vunpack.c.l.b16 %v249
      %v441 = vunpack.c.h.b16 %v249
      %v442 = vunpack.c.l.b16 %v250
      %v443 = vunpack.c.h.b16 %v250
      %v444 = vunpack.c.l.b16 %v251
      %v445 = vunpack.c.h.b16 %v251
      %v446 = vunpack.c.l.b16 %v252
      %v447 = vunpack.c.h.b16 %v252
      %v448 = vunpack.c.l.b16 %v253
      %v449 = vunpack.c.h.b16 %v253
      %v450 = vunpack.c.l.b16 %v254
      %v451 = vunpack.c.h.b16 %v254
      %v452 = vunpack.c.l.b16 %v255
      %v453 = vunpack.c.h.b16 %v255
      %v454 = vunpack.c.l.b16 %v256
      %v455 = vunpack.c.h.b16 %v256
      %v456 = vunpack.c.l.b16 %v257
      %v457 = vunpack.c.h.b16 %v257
      %v458 = vunpack.c.l.b16 %v258
      %v459 = vunpack.c.h.b16 %v258
      %v460 = vunpack.c.l.b16 %v259
      %v461 = vunpack.c.h.b16 %v259
      %v462 = vunpack.c.l.b16 %v260
      %v463 = vunpack.c.h.b16 %v260
      %v464 = vunpack.c.l.b16 %v261
      %v465 = vunpack.c.h.b16 %v261
      %v466 = vunpack.c.l.b16 %v262
      %v467 = vunpack.c.h.b16 %v262
      %v468 = vunpack.c.l.b16 %v263
      %v469 = vunpack.c.h.b16 %v263
      %v470 = vunpack.c.l.b16 %v264
      %v471 = vunpack.c.h.b16 %v264
      %v472 = vunpack.c.l.b16 %v265
      %v473 = vunpack.c.h.b16 %v265
      %v474 = vunpack.c.l.b16 %v266
      %v475 = vunpack.c.h.b16 %v266
      %v476 = vunpack.c.l.b16 %v267
      %v477 = vunpack.c.h.b16 %v267
      %v478 = vunpack.c.l.b16 %v268
      %v479 = vunpack.c.h.b16 %v268
      %v480 = vpack.c.b16 %v354, %v352
      %v481 = vpack.c.b16 %v355, %v353
      %v482 = vpack.c.b16 %v358, %v356
      %v483 = vpack.c.b16 %v359, %v357
      %v484 = vpack.c.b16 %v362, %v360
      %v485 = vpack.c.b16 %v363, %v361
      %v486 = vpack.c.b16 %v366, %v364
      %v487 = vpack.c.b16 %v367, %v365
      %v488 = vpack.c.b16 %v370, %v368
      %v489 = vpack.c.b16 %v371, %v369
      %v490 = vpack.c.b16 %v374, %v372
      %v491 = vpack.c.b16 %v375, %v373
      %v492 = vpack.c.b16 %v378, %v376
      %v493 = vpack.c.b16 %v379, %v377
      %v494 = vpack.c.b16 %v382, %v380
      %v495 = vpack.c.b16 %v383, %v381
      %v496 = vpack.c.b16 %v386, %v384
      %v497 = vpack.c.b16 %v387, %v385
      %v498 = vpack.c.b16 %v390, %v388
      %v499 = vpack.c.b16 %v391, %v389
      %v500 = vpack.c.b16 %v394, %v392
      %v501 = vpack.c.b16 %v395, %v393
      %v502 = vpack.c.b16 %v398, %v396
      %v503 = vpack.c.b16 %v399, %v397
      %v504 = vpack.c.b16 %v402, %v400
      %v505 = vpack.c.b16 %v403, %v401
      %v506 = vpack.c.b16 %v406, %v404
      %v507 = vpack.c.b16 %v407, %v405
      %v508 = vpack.c.b16 %v410, %v408
      %v509 = vpack.c.b16 %v411, %v409
      %v510 = vpack.c.b16 %v414, %v412
      %v511 = vpack.c.b16 %v415, %v413
      %v512 = vpack.c.b16 %v418, %v416
      %v513 = vpack.c.b16 %v419, %v417
      %v514 = vpack.c.b16 %v422, %v420
      %v515 = vpack.c.b16 %v423, %v421
      %v516 = vpack.c.b16 %v426, %v424
      %v517 = vpack.c.b16 %v427, %v425
      %v518 = vpack.c.b16 %v430, %v428
      %v519 = vpack.c.b16 %v431, %v429
      %v520 = vpack.c.b16 %v434, %v432
      %v521 = vpack.c.b16 %v435, %v433
      %v522 = vpack.c.b16 %v438, %v436
      %v523 = vpack.c.b16 %v439, %v437
      %v524 = vpack.c.b16 %v442, %v440
      %v525 = vpack.c.b16 %v443, %v441
      %v526 = vpack.c.b16 %v446, %v444
      %v527 = vpack.c.b16 %v447, %v445
      %v528 = vpack.c.b16 %v450, %v448
      %v529 = vpack.c.b16 %v451, %v449
      %v530 = vpack.c.b16 %v454, %v452
      %v531 = vpack.c.b16 %v455, %v453
      %v532 = vpack.c.b16 %v458, %v456
      %v533 = vpack.c.b16 %v459, %v457
      %v534 = vpack.c.b16 %v462, %v460
      %v535 = vpack.c.b16 %v463, %v461
      %v536 = vpack.c.b16 %v466, %v464
      %v537 = vpack.c.b16 %v467, %v465
      %v538 = vpack.c.b16 %v470, %v468
      %v539 = vpack.c.b16 %v471, %v469
      %v540 = vpack.c.b16 %v474, %v472
      %v541 = vpack.c.b16 %v475, %v473
      %v542 = vpack.c.b16 %v478, %v476
      %v543 = vpack.c.b16 %v479, %v477
      %v595 = vunpack.c.l.b16 %v269
      %v596 = vunpack.c.l.b16 %v270
      %v597 = vunpack.c.l.b16 %v271
      %v598 = vunpack.c.l.b16 %v272
      %v599 = vunpack.c.l.b16 %v273
      %v600 = vunpack.c.l.b16 %v274
      %v601 = vunpack.c.l.b16 %v275
      %v602 = vunpack.c.l.b16 %v276
      %v603 = vunpack.c.l.b16 %v277
      %v604 = vunpack.c.l.b16 %v278
      %v605 = vunpack.c.l.b16 %v279
      %v606 = vunpack.c.l.b16 %v280
      %v607 = vunpack.c.l.b16 %v281
      %v608 = vunpack.c.l.b16 %v282
      %v609 = vunpack.c.l.b16 %v283
      %v610 = vunpack.c.l.b16 %v284
      %v611 = vunpack.c.l.b16 %v285
      %v612 = vunpack.c.l.b16 %v286
      %v613 = vunpack.c.l.b16 %v287
      %v614 = vpack.c.b16 %v596, %v595
      %v615 = vpack.c.b16 %v598, %v597
      %v616 = vpack.c.b16 %v600, %v599
      %v617 = vpack.c.b16 %v602, %v601
      %v618 = vpack.c.b16 %v604, %v603
      %v619 = vpack.c.b16 %v606, %v605
      %v620 = vpack.c.b16 %v608, %v607
      %v621 = vpack.c.b16 %v610, %v609
      %v622 = vpack.c.b16 %v612, %v611
      %v623 = vpack.c.b16 %v613, %v613
      %vm633 = vcmask 154624
      %v635 = vsel %vm633, %v481, 0
      %v638 = vsel %vm633, %v483, 0
      %v641 = vsel %vm633, %v485, 0
      %v644 = vsel %vm633, %v487, 0
      %v647 = vsel %vm633, %v489, 0
      %v650 = vsel %vm633, %v491, 0
      %v653 = vsel %vm633, %v493, 0
      %v656 = vsel %vm633, %v495, 0
      %v659 = vsel %vm633, %v497, 0
      %v662 = vsel %vm633, %v499, 0
      %v665 = vsel %vm633, %v501, 0
      %v668 = vsel %vm633, %v503, 0
      %v671 = vsel %vm633, %v505, 0
      %v674 = vsel %vm633, %v507, 0
      %v677 = vsel %vm633, %v509, 0
      %v680 = vsel %vm633, %v511, 0
      %v683 = vsel %vm633, %v513, 0
      %v686 = vsel %vm633, %v515, 0
      %v689 = vsel %vm633, %v517, 0
      %v692 = vsel %vm633, %v519, 0
      %v695 = vsel %vm633, %v521, 0
      %v698 = vsel %vm633, %v523, 0
      %v701 = vsel %vm633, %v525, 0
      %v704 = vsel %vm633, %v527, 0
      %v707 = vsel %vm633, %v529, 0
      %v710 = vsel %vm633, %v531, 0
      %v713 = vsel %vm633, %v533, 0
      %v716 = vsel %vm633, %v535, 0
      %v719 = vsel %vm633, %v537, 0
      %v722 = vsel %vm633, %v539, 0
      %v725 = vsel %vm633, %v541, 0
      %v728 = vsel %vm633, %v543, 0
      %vm730 = vcmask 1040384
      %vm731 = vcmask 1041408
      %v732 = vsel %vm730, 4294967295, 65535
      %v733 = vsel %vm731, %v732, 0
      %v735 = vand.u32 %v623, %v733
      %737 = vmatprep.subr.bf16.mxu0 0
      %738 = vmatpush1.bf16.msra.mxu0 %v614
      %739 = vmatprep.subr.bf16.mxu0 0
      %740 = vmatpush1.bf16.msra.mxu0 %v615
      %741 = vmatprep.subr.bf16.mxu0 0
      %742 = vmatpush1.bf16.msra.mxu0 %v616
      %743 = vmatprep.subr.bf16.mxu0 0
      %744 = vmatpush1.bf16.msra.mxu0 %v617
      %745 = vmatprep.subr.bf16.mxu0 0
      %746 = vmatpush1.bf16.msra.mxu0 %v618
      %747 = vmatprep.subr.bf16.mxu0 0
      %748 = vmatpush1.bf16.msra.mxu0 %v619
      %749 = vmatprep.subr.bf16.mxu0 0
      %750 = vmatpush1.bf16.msra.mxu0 %v620
      %751 = vmatprep.subr.bf16.mxu0 0
      %752 = vmatpush1.bf16.msra.mxu0 %v621
      %753 = vmatprep.subr.bf16.mxu0 0
      %754 = vmatpush1.bf16.msra.mxu0 %v622
      %755 = vmatprep.subr.bf16.mxu0 0
      %756 = vmatpush1.bf16.msra.mxu0 %v735
      %757 = vmatprep.subr.bf16.mxu0 0
      %758 = vmatpush1.bf16.msra.mxu0 0
      %759 = vmatprep.subr.bf16.mxu0 0
      %760 = vmatpush1.bf16.msra.mxu0 0
      %761 = vmatprep.subr.bf16.mxu0 0
      %762 = vmatpush1.bf16.msra.mxu0 0
      %763 = vmatprep.subr.bf16.mxu0 0
      %764 = vmatpush1.bf16.msra.mxu0 0
      %765 = vmatprep.subr.bf16.mxu0 0
      %766 = vmatpush1.bf16.msra.mxu0 0
      %767 = vmatprep.subr.bf16.mxu0 0
      %768 = vmatpush1.bf16.msra.mxu0 0
      %769 = vmatprep.mubr.bf16.mxu0 %v635
      %770 = vmatmul.mubr.bf16.gmra.mrb[0].mxu0 %v480
      %v771 = vpop.f32.mrb[0].mxu0
      %v772 = vadd.f32 0.0, %v771
      %v773 = vpop.f32.mrb[0].mxu0
      %v774 = vpop.f32.mrb[0].mxu0
      %v775 = vadd.f32 0.0, %v774
      %v776 = vpop.f32.mrb[0].mxu0
      %777 = vmatprep.mubr.bf16.mxu0 %v638
      %778 = vmatmul.mubr.bf16.gmra.mrb[0].mxu0 %v482
      %v779 = vpop.f32.mrb[0].mxu0
      %v780 = vadd.f32 0.0, %v779
      %v781 = vpop.f32.mrb[0].mxu0
      %v782 = vpop.f32.mrb[0].mxu0
      %v783 = vadd.f32 0.0, %v782
      %v784 = vpop.f32.mrb[0].mxu0
      %785 = vmatprep.mubr.bf16.mxu0 %v641
      %786 = vmatmul.mubr.bf16.gmra.mrb[0].mxu0 %v484
      %v787 = vpop.f32.mrb[0].mxu0
      %v788 = vadd.f32 0.0, %v787
      %v789 = vpop.f32.mrb[0].mxu0
      %v790 = vpop.f32.mrb[0].mxu0
      %v791 = vadd.f32 0.0, %v790
      %v792 = vpop.f32.mrb[0].mxu0
      %793 = vmatprep.mubr.bf16.mxu0 %v644
      %794 = vmatmul.mubr.bf16.gmra.mrb[0].mxu0 %v486
      %v795 = vpop.f32.mrb[0].mxu0
      %v796 = vadd.f32 0.0, %v795
      %v797 = vpop.f32.mrb[0].mxu0
      %v798 = vpop.f32.mrb[0].mxu0
      %v799 = vadd.f32 0.0, %v798
      %v800 = vpop.f32.mrb[0].mxu0
      %801 = vmatprep.mubr.bf16.mxu0 %v647
      %802 = vmatmul.mubr.bf16.gmra.mrb[0].mxu0 %v488
      %v803 = vpop.f32.mrb[0].mxu0
      %v804 = vadd.f32 0.0, %v803
      %v805 = vpop.f32.mrb[0].mxu0
      %v806 = vpop.f32.mrb[0].mxu0
      %v807 = vadd.f32 0.0, %v806
      %v808 = vpop.f32.mrb[0].mxu0
      %809 = vmatprep.mubr.bf16.mxu0 %v650
      %810 = vmatmul.mubr.bf16.gmra.mrb[0].mxu0 %v490
      %v811 = vpop.f32.mrb[0].mxu0
      %v812 = vadd.f32 0.0, %v811
      %v813 = vpop.f32.mrb[0].mxu0
      %v814 = vpop.f32.mrb[0].mxu0
      %v815 = vadd.f32 0.0, %v814
      %v816 = vpop.f32.mrb[0].mxu0
      %817 = vmatprep.mubr.bf16.mxu0 %v653
      %818 = vmatmul.mubr.bf16.gmra.mrb[0].mxu0 %v492
      %v819 = vpop.f32.mrb[0].mxu0
      %v820 = vadd.f32 0.0, %v819
      %v821 = vpop.f32.mrb[0].mxu0
      %v822 = vpop.f32.mrb[0].mxu0
      %v823 = vadd.f32 0.0, %v822
      %v824 = vpop.f32.mrb[0].mxu0
      %825 = vmatprep.mubr.bf16.mxu0 %v656
      %826 = vmatmul.mubr.bf16.gmra.mrb[0].mxu0 %v494
      %v827 = vpop.f32.mrb[0].mxu0
      %v828 = vadd.f32 0.0, %v827
      %v829 = vpop.f32.mrb[0].mxu0
      %v830 = vpop.f32.mrb[0].mxu0
      %v831 = vadd.f32 0.0, %v830
      %v832 = vpop.f32.mrb[0].mxu0
      %833 = vmatprep.mubr.bf16.mxu0 %v659
      %834 = vmatmul.mubr.bf16.gmra.mrb[0].mxu0 %v496
      %v835 = vpop.f32.mrb[0].mxu0
      %v836 = vadd.f32 0.0, %v835
      %v837 = vpop.f32.mrb[0].mxu0
      %v838 = vpop.f32.mrb[0].mxu0
      %v839 = vadd.f32 0.0, %v838
      %v840 = vpop.f32.mrb[0].mxu0
      %841 = vmatprep.mubr.bf16.mxu0 %v662
      %842 = vmatmul.mubr.bf16.gmra.mrb[0].mxu0 %v498
      %v843 = vpop.f32.mrb[0].mxu0
      %v844 = vadd.f32 0.0, %v843
      %v845 = vpop.f32.mrb[0].mxu0
      %v846 = vpop.f32.mrb[0].mxu0
      %v847 = vadd.f32 0.0, %v846
      %v848 = vpop.f32.mrb[0].mxu0
      %849 = vmatprep.mubr.bf16.mxu0 %v665
      %850 = vmatmul.mubr.bf16.gmra.mrb[0].mxu0 %v500
      %v851 = vpop.f32.mrb[0].mxu0
      %v852 = vadd.f32 0.0, %v851
      %v853 = vpop.f32.mrb[0].mxu0
      %v854 = vpop.f32.mrb[0].mxu0
      %v855 = vadd.f32 0.0, %v854
      %v856 = vpop.f32.mrb[0].mxu0
      %857 = vmatprep.mubr.bf16.mxu0 %v668
      %858 = vmatmul.mubr.bf16.gmra.mrb[0].mxu0 %v502
      %v859 = vpop.f32.mrb[0].mxu0
      %v860 = vadd.f32 0.0, %v859
      %v861 = vpop.f32.mrb[0].mxu0
      %v862 = vpop.f32.mrb[0].mxu0
      %v863 = vadd.f32 0.0, %v862
      %v864 = vpop.f32.mrb[0].mxu0
      %865 = vmatprep.mubr.bf16.mxu0 %v671
      %866 = vmatmul.mubr.bf16.gmra.mrb[0].mxu0 %v504
      %v867 = vpop.f32.mrb[0].mxu0
      %v868 = vadd.f32 0.0, %v867
      %v869 = vpop.f32.mrb[0].mxu0
      %v870 = vpop.f32.mrb[0].mxu0
      %v871 = vadd.f32 0.0, %v870
      %v872 = vpop.f32.mrb[0].mxu0
      %873 = vmatprep.mubr.bf16.mxu0 %v674
      %874 = vmatmul.mubr.bf16.gmra.mrb[0].mxu0 %v506
      %v875 = vpop.f32.mrb[0].mxu0
      %v876 = vadd.f32 0.0, %v875
      %v877 = vpop.f32.mrb[0].mxu0
      %v878 = vpop.f32.mrb[0].mxu0
      %v879 = vadd.f32 0.0, %v878
      %v880 = vpop.f32.mrb[0].mxu0
      %881 = vmatprep.mubr.bf16.mxu0 %v677
      %882 = vmatmul.mubr.bf16.gmra.mrb[0].mxu0 %v508
      %v883 = vpop.f32.mrb[0].mxu0
      %v884 = vadd.f32 0.0, %v883
      %v885 = vpop.f32.mrb[0].mxu0
      %v886 = vpop.f32.mrb[0].mxu0
      %v887 = vadd.f32 0.0, %v886
      %v888 = vpop.f32.mrb[0].mxu0
      %889 = vmatprep.mubr.bf16.mxu0 %v680
      %890 = vmatmul.mubr.bf16.gmra.mrb[0].mxu0 %v510
      %v891 = vpop.f32.mrb[0].mxu0
      %v892 = vadd.f32 0.0, %v891
      %v893 = vpop.f32.mrb[0].mxu0
      %v894 = vpop.f32.mrb[0].mxu0
      %v895 = vadd.f32 0.0, %v894
      %v896 = vpop.f32.mrb[0].mxu0
      %897 = vmatprep.mubr.bf16.mxu0 %v683
      %898 = vmatmul.mubr.bf16.gmra.mrb[0].mxu0 %v512
      %v899 = vpop.f32.mrb[0].mxu0
      %v900 = vadd.f32 0.0, %v899
      %v901 = vpop.f32.mrb[0].mxu0
      %v902 = vpop.f32.mrb[0].mxu0
      %v903 = vadd.f32 0.0, %v902
      %v904 = vpop.f32.mrb[0].mxu0
      %905 = vmatprep.mubr.bf16.mxu0 %v686
      %906 = vmatmul.mubr.bf16.gmra.mrb[0].mxu0 %v514
      %v907 = vpop.f32.mrb[0].mxu0
      %v908 = vadd.f32 0.0, %v907
      %v909 = vpop.f32.mrb[0].mxu0
      %v910 = vpop.f32.mrb[0].mxu0
      %v911 = vadd.f32 0.0, %v910
      %v912 = vpop.f32.mrb[0].mxu0
      %913 = vmatprep.mubr.bf16.mxu0 %v689
      %914 = vmatmul.mubr.bf16.gmra.mrb[0].mxu0 %v516
      %v915 = vpop.f32.mrb[0].mxu0
      %v916 = vadd.f32 0.0, %v915
      %v917 = vpop.f32.mrb[0].mxu0
      %v918 = vpop.f32.mrb[0].mxu0
      %v919 = vadd.f32 0.0, %v918
      %v920 = vpop.f32.mrb[0].mxu0
      %921 = vmatprep.mubr.bf16.mxu0 %v692
      %922 = vmatmul.mubr.bf16.gmra.mrb[0].mxu0 %v518
      %v923 = vpop.f32.mrb[0].mxu0
      %v924 = vadd.f32 0.0, %v923
      %v925 = vpop.f32.mrb[0].mxu0
      %v926 = vpop.f32.mrb[0].mxu0
      %v927 = vadd.f32 0.0, %v926
      %v928 = vpop.f32.mrb[0].mxu0
      %929 = vmatprep.mubr.bf16.mxu0 %v695
      %930 = vmatmul.mubr.bf16.gmra.mrb[0].mxu0 %v520
      %v931 = vpop.f32.mrb[0].mxu0
      %v932 = vadd.f32 0.0, %v931
      %v933 = vpop.f32.mrb[0].mxu0
      %v934 = vpop.f32.mrb[0].mxu0
      %v935 = vadd.f32 0.0, %v934
      %v936 = vpop.f32.mrb[0].mxu0
      %937 = vmatprep.mubr.bf16.mxu0 %v698
      %938 = vmatmul.mubr.bf16.gmra.mrb[0].mxu0 %v522
      %v939 = vpop.f32.mrb[0].mxu0
      %v940 = vadd.f32 0.0, %v939
      %v941 = vpop.f32.mrb[0].mxu0
      %v942 = vpop.f32.mrb[0].mxu0
      %v943 = vadd.f32 0.0, %v942
      %v944 = vpop.f32.mrb[0].mxu0
      %945 = vmatprep.mubr.bf16.mxu0 %v701
      %946 = vmatmul.mubr.bf16.gmra.mrb[0].mxu0 %v524
      %v947 = vpop.f32.mrb[0].mxu0
      %v948 = vadd.f32 0.0, %v947
      %v949 = vpop.f32.mrb[0].mxu0
      %v950 = vpop.f32.mrb[0].mxu0
      %v951 = vadd.f32 0.0, %v950
      %v952 = vpop.f32.mrb[0].mxu0
      %953 = vmatprep.mubr.bf16.mxu0 %v704
      %954 = vmatmul.mubr.bf16.gmra.mrb[0].mxu0 %v526
      %v955 = vpop.f32.mrb[0].mxu0
      %v956 = vadd.f32 0.0, %v955
      %v957 = vpop.f32.mrb[0].mxu0
      %v958 = vpop.f32.mrb[0].mxu0
      %v959 = vadd.f32 0.0, %v958
      %v960 = vpop.f32.mrb[0].mxu0
      %961 = vmatprep.mubr.bf16.mxu0 %v707
      %962 = vmatmul.mubr.bf16.gmra.mrb[0].mxu0 %v528
      %v963 = vpop.f32.mrb[0].mxu0
      %v964 = vadd.f32 0.0, %v963
      %v965 = vpop.f32.mrb[0].mxu0
      %v966 = vpop.f32.mrb[0].mxu0
      %v967 = vadd.f32 0.0, %v966
      %v968 = vpop.f32.mrb[0].mxu0
      %969 = vmatprep.mubr.bf16.mxu0 %v710
      %970 = vmatmul.mubr.bf16.gmra.mrb[0].mxu0 %v530
      %v971 = vpop.f32.mrb[0].mxu0
      %v972 = vadd.f32 0.0, %v971
      %v973 = vpop.f32.mrb[0].mxu0
      %v974 = vpop.f32.mrb[0].mxu0
      %v975 = vadd.f32 0.0, %v974
      %v976 = vpop.f32.mrb[0].mxu0
      %977 = vmatprep.mubr.bf16.mxu0 %v713
      %978 = vmatmul.mubr.bf16.gmra.mrb[0].mxu0 %v532
      %v979 = vpop.f32.mrb[0].mxu0
      %v980 = vadd.f32 0.0, %v979
      %v981 = vpop.f32.mrb[0].mxu0
      %v982 = vpop.f32.mrb[0].mxu0
      %v983 = vadd.f32 0.0, %v982
      %v984 = vpop.f32.mrb[0].mxu0
      %985 = vmatprep.mubr.bf16.mxu0 %v716
      %986 = vmatmul.mubr.bf16.gmra.mrb[0].mxu0 %v534
      %v987 = vpop.f32.mrb[0].mxu0
      %v988 = vadd.f32 0.0, %v987
      %v989 = vpop.f32.mrb[0].mxu0
      %v990 = vpop.f32.mrb[0].mxu0
      %v991 = vadd.f32 0.0, %v990
      %v992 = vpop.f32.mrb[0].mxu0
      %993 = vmatprep.mubr.bf16.mxu0 %v719
      %994 = vmatmul.mubr.bf16.gmra.mrb[0].mxu0 %v536
      %v995 = vpop.f32.mrb[0].mxu0
      %v996 = vadd.f32 0.0, %v995
      %v997 = vpop.f32.mrb[0].mxu0
      %v998 = vpop.f32.mrb[0].mxu0
      %v999 = vadd.f32 0.0, %v998
      %v1000 = vpop.f32.mrb[0].mxu0
      %1001 = vmatprep.mubr.bf16.mxu0 %v722
      %1002 = vmatmul.mubr.bf16.gmra.mrb[0].mxu0 %v538
      %v1003 = vpop.f32.mrb[0].mxu0
      %v1004 = vadd.f32 0.0, %v1003
      %v1005 = vpop.f32.mrb[0].mxu0
      %v1006 = vpop.f32.mrb[0].mxu0
      %v1007 = vadd.f32 0.0, %v1006
      %v1008 = vpop.f32.mrb[0].mxu0
      %1009 = vmatprep.mubr.bf16.mxu0 %v725
      %1010 = vmatmul.mubr.bf16.gmra.mrb[0].mxu0 %v540
      %v1011 = vpop.f32.mrb[0].mxu0
      %v1012 = vadd.f32 0.0, %v1011
      %v1013 = vpop.f32.mrb[0].mxu0
      %v1014 = vpop.f32.mrb[0].mxu0
      %v1015 = vadd.f32 0.0, %v1014
      %v1016 = vpop.f32.mrb[0].mxu0
      %1017 = vmatprep.mubr.bf16.mxu0 %v728
      %1018 = vmatmul.mubr.bf16.gmra.mrb[0].mxu0 %v542
      %v1019 = vpop.f32.mrb[0].mxu0
      %v1020 = vadd.f32 0.0, %v1019
      %v1021 = vpop.f32.mrb[0].mxu0
      %v1022 = vpop.f32.mrb[0].mxu0
      %v1023 = vadd.f32 0.0, %v1022
      %v1024 = vpop.f32.mrb[0].mxu0
      %1025 = vdwg.mxu0
      %v1026 = vld [vmem:[%s2] sm:$0x1]
      %v1028 = vlaneseq
      %v1029 = vshrl.u32 %v1028, 7
      %v1030 = vsub.s32 0, %v1029
      %v1031 = vrot.slane %v1026, %v1030
      %v1033 = vmul.f32 %v772, %v1031
      %v1034 = vmul.f32 %v775, %v1031
      %v1035 = vmul.f32 %v780, %v1031
      %v1036 = vmul.f32 %v783, %v1031
      %v1037 = vmul.f32 %v788, %v1031
      %v1038 = vmul.f32 %v791, %v1031
      %v1039 = vmul.f32 %v796, %v1031
      %v1040 = vmul.f32 %v799, %v1031
      %v1041 = vmul.f32 %v804, %v1031
      %v1042 = vmul.f32 %v807, %v1031
      %v1043 = vmul.f32 %v812, %v1031
      %v1044 = vmul.f32 %v815, %v1031
      %v1045 = vmul.f32 %v820, %v1031
      %v1046 = vmul.f32 %v823, %v1031
      %v1047 = vmul.f32 %v828, %v1031
      %v1048 = vmul.f32 %v831, %v1031
      %v1049 = vmul.f32 %v836, %v1031
      %v1050 = vmul.f32 %v839, %v1031
      %v1051 = vmul.f32 %v844, %v1031
      %v1052 = vmul.f32 %v847, %v1031
      %v1053 = vmul.f32 %v852, %v1031
      %v1054 = vmul.f32 %v855, %v1031
      %v1055 = vmul.f32 %v860, %v1031
      %v1056 = vmul.f32 %v863, %v1031
      %v1057 = vmul.f32 %v868, %v1031
      %v1058 = vmul.f32 %v871, %v1031
      %v1059 = vmul.f32 %v876, %v1031
      %v1060 = vmul.f32 %v879, %v1031
      %v1061 = vmul.f32 %v884, %v1031
      %v1062 = vmul.f32 %v887, %v1031
      %v1063 = vmul.f32 %v892, %v1031
      %v1064 = vmul.f32 %v895, %v1031
      %v1065 = vmul.f32 %v900, %v1031
      %v1066 = vmul.f32 %v903, %v1031
      %v1067 = vmul.f32 %v908, %v1031
      %v1068 = vmul.f32 %v911, %v1031
      %v1069 = vmul.f32 %v916, %v1031
      %v1070 = vmul.f32 %v919, %v1031
      %v1071 = vmul.f32 %v924, %v1031
      %v1072 = vmul.f32 %v927, %v1031
      %v1073 = vmul.f32 %v932, %v1031
      %v1074 = vmul.f32 %v935, %v1031
      %v1075 = vmul.f32 %v940, %v1031
      %v1076 = vmul.f32 %v943, %v1031
      %v1077 = vmul.f32 %v948, %v1031
      %v1078 = vmul.f32 %v951, %v1031
      %v1079 = vmul.f32 %v956, %v1031
      %v1080 = vmul.f32 %v959, %v1031
      %v1081 = vmul.f32 %v964, %v1031
      %v1082 = vmul.f32 %v967, %v1031
      %v1083 = vmul.f32 %v972, %v1031
      %v1084 = vmul.f32 %v975, %v1031
      %v1085 = vmul.f32 %v980, %v1031
      %v1086 = vmul.f32 %v983, %v1031
      %v1087 = vmul.f32 %v988, %v1031
      %v1088 = vmul.f32 %v991, %v1031
      %v1089 = vmul.f32 %v996, %v1031
      %v1090 = vmul.f32 %v999, %v1031
      %v1091 = vmul.f32 %v1004, %v1031
      %v1092 = vmul.f32 %v1007, %v1031
      %v1093 = vmul.f32 %v1012, %v1031
      %v1094 = vmul.f32 %v1015, %v1031
      %v1095 = vmul.f32 %v1020, %v1031
      %v1096 = vmul.f32 %v1023, %v1031
      %v1097 = vld [vmem:[%s3] sm:$0x1]
      %v1099 = vlaneseq
      %v1100 = vshrl.u32 %v1099, 7
      %v1101 = vsub.s32 0, %v1100
      %v1102 = vrot.slane %v1097, %v1101
      %v1104 = vadd.f32 %v1033, %v1102
      %v1105 = vadd.f32 %v1034, %v1102
      %v1106 = vadd.f32 %v1035, %v1102
      %v1107 = vadd.f32 %v1036, %v1102
      %v1108 = vadd.f32 %v1037, %v1102
      %v1109 = vadd.f32 %v1038, %v1102
      %v1110 = vadd.f32 %v1039, %v1102
      %v1111 = vadd.f32 %v1040, %v1102
      %v1112 = vadd.f32 %v1041, %v1102
      %v1113 = vadd.f32 %v1042, %v1102
      %v1114 = vadd.f32 %v1043, %v1102
      %v1115 = vadd.f32 %v1044, %v1102
      %v1116 = vadd.f32 %v1045, %v1102
      %v1117 = vadd.f32 %v1046, %v1102
      %v1118 = vadd.f32 %v1047, %v1102
      %v1119 = vadd.f32 %v1048, %v1102
      %v1120 = vadd.f32 %v1049, %v1102
      %v1121 = vadd.f32 %v1050, %v1102
      %v1122 = vadd.f32 %v1051, %v1102
      %v1123 = vadd.f32 %v1052, %v1102
      %v1124 = vadd.f32 %v1053, %v1102
      %v1125 = vadd.f32 %v1054, %v1102
      %v1126 = vadd.f32 %v1055, %v1102
      %v1127 = vadd.f32 %v1056, %v1102
      %v1128 = vadd.f32 %v1057, %v1102
      %v1129 = vadd.f32 %v1058, %v1102
      %v1130 = vadd.f32 %v1059, %v1102
      %v1131 = vadd.f32 %v1060, %v1102
      %v1132 = vadd.f32 %v1061, %v1102
      %v1133 = vadd.f32 %v1062, %v1102
      %v1134 = vadd.f32 %v1063, %v1102
      %v1135 = vadd.f32 %v1064, %v1102
      %v1136 = vadd.f32 %v1065, %v1102
      %v1137 = vadd.f32 %v1066, %v1102
      %v1138 = vadd.f32 %v1067, %v1102
      %v1139 = vadd.f32 %v1068, %v1102
      %v1140 = vadd.f32 %v1069, %v1102
      %v1141 = vadd.f32 %v1070, %v1102
      %v1142 = vadd.f32 %v1071, %v1102
      %v1143 = vadd.f32 %v1072, %v1102
      %v1144 = vadd.f32 %v1073, %v1102
      %v1145 = vadd.f32 %v1074, %v1102
      %v1146 = vadd.f32 %v1075, %v1102
      %v1147 = vadd.f32 %v1076, %v1102
      %v1148 = vadd.f32 %v1077, %v1102
      %v1149 = vadd.f32 %v1078, %v1102
      %v1150 = vadd.f32 %v1079, %v1102
      %v1151 = vadd.f32 %v1080, %v1102
      %v1152 = vadd.f32 %v1081, %v1102
      %v1153 = vadd.f32 %v1082, %v1102
      %v1154 = vadd.f32 %v1083, %v1102
      %v1155 = vadd.f32 %v1084, %v1102
      %v1156 = vadd.f32 %v1085, %v1102
      %v1157 = vadd.f32 %v1086, %v1102
      %v1158 = vadd.f32 %v1087, %v1102
      %v1159 = vadd.f32 %v1088, %v1102
      %v1160 = vadd.f32 %v1089, %v1102
      %v1161 = vadd.f32 %v1090, %v1102
      %v1162 = vadd.f32 %v1091, %v1102
      %v1163 = vadd.f32 %v1092, %v1102
      %v1164 = vadd.f32 %v1093, %v1102
      %v1165 = vadd.f32 %v1094, %v1102
      %v1166 = vadd.f32 %v1095, %v1102
      %v1167 = vadd.f32 %v1096, %v1102
      %v1168 = vmax.f32 %v1104, 0.0
      %v1169 = vmax.f32 %v1105, 0.0
      %v1170 = vmax.f32 %v1106, 0.0
      %v1171 = vmax.f32 %v1107, 0.0
      %v1172 = vmax.f32 %v1108, 0.0
      %v1173 = vmax.f32 %v1109, 0.0
      %v1174 = vmax.f32 %v1110, 0.0
      %v1175 = vmax.f32 %v1111, 0.0
      %v1176 = vmax.f32 %v1112, 0.0
      %v1177 = vmax.f32 %v1113, 0.0
      %v1178 = vmax.f32 %v1114, 0.0
      %v1179 = vmax.f32 %v1115, 0.0
      %v1180 = vmax.f32 %v1116, 0.0
      %v1181 = vmax.f32 %v1117, 0.0
      %v1182 = vmax.f32 %v1118, 0.0
      %v1183 = vmax.f32 %v1119, 0.0
      %v1184 = vmax.f32 %v1120, 0.0
      %v1185 = vmax.f32 %v1121, 0.0
      %v1186 = vmax.f32 %v1122, 0.0
      %v1187 = vmax.f32 %v1123, 0.0
      %v1188 = vmax.f32 %v1124, 0.0
      %v1189 = vmax.f32 %v1125, 0.0
      %v1190 = vmax.f32 %v1126, 0.0
      %v1191 = vmax.f32 %v1127, 0.0
      %v1192 = vmax.f32 %v1128, 0.0
      %v1193 = vmax.f32 %v1129, 0.0
      %v1194 = vmax.f32 %v1130, 0.0
      %v1195 = vmax.f32 %v1131, 0.0
      %v1196 = vmax.f32 %v1132, 0.0
      %v1197 = vmax.f32 %v1133, 0.0
      %v1198 = vmax.f32 %v1134, 0.0
      %v1199 = vmax.f32 %v1135, 0.0
      %v1200 = vmax.f32 %v1136, 0.0
      %v1201 = vmax.f32 %v1137, 0.0
      %v1202 = vmax.f32 %v1138, 0.0
      %v1203 = vmax.f32 %v1139, 0.0
      %v1204 = vmax.f32 %v1140, 0.0
      %v1205 = vmax.f32 %v1141, 0.0
      %v1206 = vmax.f32 %v1142, 0.0
      %v1207 = vmax.f32 %v1143, 0.0
      %v1208 = vmax.f32 %v1144, 0.0
      %v1209 = vmax.f32 %v1145, 0.0
      %v1210 = vmax.f32 %v1146, 0.0
      %v1211 = vmax.f32 %v1147, 0.0
      %v1212 = vmax.f32 %v1148, 0.0
      %v1213 = vmax.f32 %v1149, 0.0
      %v1214 = vmax.f32 %v1150, 0.0
      %v1215 = vmax.f32 %v1151, 0.0
      %v1216 = vmax.f32 %v1152, 0.0
      %v1217 = vmax.f32 %v1153, 0.0
      %v1218 = vmax.f32 %v1154, 0.0
      %v1219 = vmax.f32 %v1155, 0.0
      %v1220 = vmax.f32 %v1156, 0.0
      %v1221 = vmax.f32 %v1157, 0.0
      %v1222 = vmax.f32 %v1158, 0.0
      %v1223 = vmax.f32 %v1159, 0.0
      %v1224 = vmax.f32 %v1160, 0.0
      %v1225 = vmax.f32 %v1161, 0.0
      %v1226 = vmax.f32 %v1162, 0.0
      %v1227 = vmax.f32 %v1163, 0.0
      %v1228 = vmax.f32 %v1164, 0.0
      %v1229 = vmax.f32 %v1165, 0.0
      %v1230 = vmax.f32 %v1166, 0.0
      %v1231 = vmax.f32 %v1167, 0.0
      %v1232 = vmin.f32 %v1168, 6.0
      %v1233 = vmin.f32 %v1169, 6.0
      %v1234 = vmin.f32 %v1170, 6.0
      %v1235 = vmin.f32 %v1171, 6.0
      %v1236 = vmin.f32 %v1172, 6.0
      %v1237 = vmin.f32 %v1173, 6.0
      %v1238 = vmin.f32 %v1174, 6.0
      %v1239 = vmin.f32 %v1175, 6.0
      %v1240 = vmin.f32 %v1176, 6.0
      %v1241 = vmin.f32 %v1177, 6.0
      %v1242 = vmin.f32 %v1178, 6.0
      %v1243 = vmin.f32 %v1179, 6.0
      %v1244 = vmin.f32 %v1180, 6.0
      %v1245 = vmin.f32 %v1181, 6.0
      %v1246 = vmin.f32 %v1182, 6.0
      %v1247 = vmin.f32 %v1183, 6.0
      %v1248 = vmin.f32 %v1184, 6.0
      %v1249 = vmin.f32 %v1185, 6.0
      %v1250 = vmin.f32 %v1186, 6.0
      %v1251 = vmin.f32 %v1187, 6.0
      %v1252 = vmin.f32 %v1188, 6.0
      %v1253 = vmin.f32 %v1189, 6.0
      %v1254 = vmin.f32 %v1190, 6.0
      %v1255 = vmin.f32 %v1191, 6.0
      %v1256 = vmin.f32 %v1192, 6.0
      %v1257 = vmin.f32 %v1193, 6.0
      %v1258 = vmin.f32 %v1194, 6.0
      %v1259 = vmin.f32 %v1195, 6.0
      %v1260 = vmin.f32 %v1196, 6.0
      %v1261 = vmin.f32 %v1197, 6.0
      %v1262 = vmin.f32 %v1198, 6.0
      %v1263 = vmin.f32 %v1199, 6.0
      %v1264 = vmin.f32 %v1200, 6.0
      %v1265 = vmin.f32 %v1201, 6.0
      %v1266 = vmin.f32 %v1202, 6.0
      %v1267 = vmin.f32 %v1203, 6.0
      %v1268 = vmin.f32 %v1204, 6.0
      %v1269 = vmin.f32 %v1205, 6.0
      %v1270 = vmin.f32 %v1206, 6.0
      %v1271 = vmin.f32 %v1207, 6.0
      %v1272 = vmin.f32 %v1208, 6.0
      %v1273 = vmin.f32 %v1209, 6.0
      %v1274 = vmin.f32 %v1210, 6.0
      %v1275 = vmin.f32 %v1211, 6.0
      %v1276 = vmin.f32 %v1212, 6.0
      %v1277 = vmin.f32 %v1213, 6.0
      %v1278 = vmin.f32 %v1214, 6.0
      %v1279 = vmin.f32 %v1215, 6.0
      %v1280 = vmin.f32 %v1216, 6.0
      %v1281 = vmin.f32 %v1217, 6.0
      %v1282 = vmin.f32 %v1218, 6.0
      %v1283 = vmin.f32 %v1219, 6.0
      %v1284 = vmin.f32 %v1220, 6.0
      %v1285 = vmin.f32 %v1221, 6.0
      %v1286 = vmin.f32 %v1222, 6.0
      %v1287 = vmin.f32 %v1223, 6.0
      %v1288 = vmin.f32 %v1224, 6.0
      %v1289 = vmin.f32 %v1225, 6.0
      %v1290 = vmin.f32 %v1226, 6.0
      %v1291 = vmin.f32 %v1227, 6.0
      %v1292 = vmin.f32 %v1228, 6.0
      %v1293 = vmin.f32 %v1229, 6.0
      %v1294 = vmin.f32 %v1230, 6.0
      %v1295 = vmin.f32 %v1231, 6.0
      %vm1296 = vcmask 64512
      %1297 = vst.msk [vmem:[%s202] sm:$0xff] %vm1296, %v1232
      %1298 = vst.msk [vmem:[%s202 + $0x8] sm:$0xff] %vm1296, %v1233
      %1299 = vst.msk [vmem:[%s202 + $0x10] sm:$0xff] %vm1296, %v1234
      %1300 = vst.msk [vmem:[%s202 + $0x18] sm:$0xff] %vm1296, %v1235
      %1301 = vst.msk [vmem:[%s202 + $0x20] sm:$0xff] %vm1296, %v1236
      %1302 = vst.msk [vmem:[%s202 + $0x28] sm:$0xff] %vm1296, %v1237
      %1303 = vst.msk [vmem:[%s202 + $0x30] sm:$0xff] %vm1296, %v1238
      %1304 = vst.msk [vmem:[%s202 + $0x38] sm:$0xff] %vm1296, %v1239
      %1305 = vst.msk [vmem:[%s202 + $0x40] sm:$0xff] %vm1296, %v1240
      %1306 = vst.msk [vmem:[%s202 + $0x48] sm:$0xff] %vm1296, %v1241
      %1307 = vst.msk [vmem:[%s202 + $0x50] sm:$0xff] %vm1296, %v1242
      %1308 = vst.msk [vmem:[%s202 + $0x58] sm:$0xff] %vm1296, %v1243
      %1309 = vst.msk [vmem:[%s202 + $0x60] sm:$0xff] %vm1296, %v1244
      %1310 = vst.msk [vmem:[%s202 + $0x68] sm:$0xff] %vm1296, %v1245
      %1311 = vst.msk [vmem:[%s202 + $0x70] sm:$0xff] %vm1296, %v1246
      %1312 = vst.msk [vmem:[%s202 + $0x78] sm:$0xff] %vm1296, %v1247
      %1313 = vst.msk [vmem:[%s202 + $0x80] sm:$0xff] %vm1296, %v1248
      %1314 = vst.msk [vmem:[%s202 + $0x88] sm:$0xff] %vm1296, %v1249
      %1315 = vst.msk [vmem:[%s202 + $0x90] sm:$0xff] %vm1296, %v1250
      %1316 = vst.msk [vmem:[%s202 + $0x98] sm:$0xff] %vm1296, %v1251
      %1317 = vst.msk [vmem:[%s202 + $0xa0] sm:$0xff] %vm1296, %v1252
      %1318 = vst.msk [vmem:[%s202 + $0xa8] sm:$0xff] %vm1296, %v1253
      %1319 = vst.msk [vmem:[%s202 + $0xb0] sm:$0xff] %vm1296, %v1254
      %1320 = vst.msk [vmem:[%s202 + $0xb8] sm:$0xff] %vm1296, %v1255
      %1321 = vst.msk [vmem:[%s202 + $0xc0] sm:$0xff] %vm1296, %v1256
      %1322 = vst.msk [vmem:[%s202 + $0xc8] sm:$0xff] %vm1296, %v1257
      %1323 = vst.msk [vmem:[%s202 + $0xd0] sm:$0xff] %vm1296, %v1258
      %1324 = vst.msk [vmem:[%s202 + $0xd8] sm:$0xff] %vm1296, %v1259
      %1325 = vst.msk [vmem:[%s202 + $0xe0] sm:$0xff] %vm1296, %v1260
      %1326 = vst.msk [vmem:[%s202 + $0xe8] sm:$0xff] %vm1296, %v1261
      %1327 = vst.msk [vmem:[%s202 + $0xf0] sm:$0xff] %vm1296, %v1262
      %1328 = vst.msk [vmem:[%s202 + $0xf8] sm:$0xff] %vm1296, %v1263
      %1329 = vst.msk [vmem:[%s202 + $0x100] sm:$0xff] %vm1296, %v1264
      %1330 = vst.msk [vmem:[%s202 + $0x108] sm:$0xff] %vm1296, %v1265
      %1331 = vst.msk [vmem:[%s202 + $0x110] sm:$0xff] %vm1296, %v1266
      %1332 = vst.msk [vmem:[%s202 + $0x118] sm:$0xff] %vm1296, %v1267
      %1333 = vst.msk [vmem:[%s202 + $0x120] sm:$0xff] %vm1296, %v1268
      %1334 = vst.msk [vmem:[%s202 + $0x128] sm:$0xff] %vm1296, %v1269
      %1335 = vst.msk [vmem:[%s202 + $0x130] sm:$0xff] %vm1296, %v1270
      %1336 = vst.msk [vmem:[%s202 + $0x138] sm:$0xff] %vm1296, %v1271
      %1337 = vst.msk [vmem:[%s202 + $0x140] sm:$0xff] %vm1296, %v1272
      %1338 = vst.msk [vmem:[%s202 + $0x148] sm:$0xff] %vm1296, %v1273
      %1339 = vst.msk [vmem:[%s202 + $0x150] sm:$0xff] %vm1296, %v1274
      %1340 = vst.msk [vmem:[%s202 + $0x158] sm:$0xff] %vm1296, %v1275
      %1341 = vst.msk [vmem:[%s202 + $0x160] sm:$0xff] %vm1296, %v1276
      %1342 = vst.msk [vmem:[%s202 + $0x168] sm:$0xff] %vm1296, %v1277
      %1343 = vst.msk [vmem:[%s202 + $0x170] sm:$0xff] %vm1296, %v1278
      %1344 = vst.msk [vmem:[%s202 + $0x178] sm:$0xff] %vm1296, %v1279
      %1345 = vst.msk [vmem:[%s202 + $0x180] sm:$0xff] %vm1296, %v1280
      %1346 = vst.msk [vmem:[%s202 + $0x188] sm:$0xff] %vm1296, %v1281
      %1347 = vst.msk [vmem:[%s202 + $0x190] sm:$0xff] %vm1296, %v1282
      %1348 = vst.msk [vmem:[%s202 + $0x198] sm:$0xff] %vm1296, %v1283
      %1349 = vst.msk [vmem:[%s202 + $0x1a0] sm:$0xff] %vm1296, %v1284
      %1350 = vst.msk [vmem:[%s202 + $0x1a8] sm:$0xff] %vm1296, %v1285
      %1351 = vst.msk [vmem:[%s202 + $0x1b0] sm:$0xff] %vm1296, %v1286
      %1352 = vst.msk [vmem:[%s202 + $0x1b8] sm:$0xff] %vm1296, %v1287
      %1353 = vst.msk [vmem:[%s202 + $0x1c0] sm:$0xff] %vm1296, %v1288
      %1354 = vst.msk [vmem:[%s202 + $0x1c8] sm:$0xff] %vm1296, %v1289
      %1355 = vst.msk [vmem:[%s202 + $0x1d0] sm:$0xff] %vm1296, %v1290
      %1356 = vst.msk [vmem:[%s202 + $0x1d8] sm:$0xff] %vm1296, %v1291
      %1357 = vst.msk [vmem:[%s202 + $0x1e0] sm:$0xff] %vm1296, %v1292
      %1358 = vst.msk [vmem:[%s202 + $0x1e8] sm:$0xff] %vm1296, %v1293
      %1359 = vst.msk [vmem:[%s202 + $0x1f0] sm:$0xff] %vm1296, %v1294
      %1360 = vst.msk [vmem:[%s202 + $0x1f8] sm:$0xff] %vm1296, %v1295
      %s1361 = smul.u32 64, %s15
      %p1362 = scmp.lt.s32.totalorder %s1361, 255
      %s1363 = scalar_select %p1362, %s1361, 255
      %s1364 = smul.addr %s1363, 8
      %s1365 = scalar_lea.vmem %s4, %s1364
      // Predicated region
      $region37: #{_lambda_.43} parent=35 // pred_check
        %p1366 = pneg %p122
      $region38: #{_lambda_.43} parent=35 // pred_check_branch
        %1368 = sbr.rel (%p1366) target = $region40
      $region39: #{_lambda_.43} parent=35 // pred_region
        %s1369 = smul.u32 64, %s15
      $region40: #{_lambda_.43} parent=35 // pred_fallthru
        _
    $region36: #{_lambda_.43} parent=5 // pred_fallthru
      _
    %p1370 = scmp.le.s32.totalorder 2, %s10
    // Predicated region
    $region41: #{_lambda_.43} parent=5 // pred_check
      %p1371 = pneg %p1370
    $region42: #{_lambda_.43} parent=5 // pred_check_branch
      %1373 = sbr.rel (%p1371) target = $region44
    $region43: #{_lambda_.43} parent=5 // pred_region
      %s1374 = ssub.s32 %s10, 2
      // Predicated region
      $region45: #{_lambda_.43} parent=43 // pred_check
        %p1375 = pneg %p128
      $region46: #{_lambda_.43} parent=43 // pred_check_branch
        %1377 = sbr.rel (%p1375) target = $region48
      $region47: #{_lambda_.43} parent=43 // pred_region
        %s1378 = smul.u32 64, %s16
        %p1379 = scmp.lt.s32.totalorder %s1378, 255
        %s1380 = scalar_select %p1379, %s1378, 255
        %s1381 = smul.addr %s1380, 8
        %s1382 = scalar_lea.vmem %s4, %s1381
      $region48: #{_lambda_.43} parent=43 // pred_fallthru
        _
    $region44: #{_lambda_.43} parent=5 // pred_fallthru
      _
  $region6: #{_lambda_.43} parent=0 // loop_footer
    %s14 = sadd.s32 1, %s10
  $region7: #{_lambda_.43} parent=0 // loop_footer_branch
    %9 = sbr.rel target = $region3
  $region8: #{_lambda_.43} parent=0 // loop_exit
    _

// kernel: _lambda_.44
$region0: #{_lambda_.44}
  #allocation0 [shape = 'u32[]', space=smem, size = 0x4, offset = 0x4, fixed_abs, tag = 'smem constant byte address 0x4 - core index']
  #allocation1 [shape = 'u32[144,128]{1,0:T(1,128)}', space=vmem, size = 0x12000, scoped, tag = 'internal scratch']
  %s0 = inlined_call_operand.vmem [shape: bf16[512,72], index: 0, kind: input, shape index: {}]
  %s1 = inlined_call_operand.vmem [shape: bf16[72,8], index: 1, kind: input, shape index: {}]
  %s2 = inlined_call_operand.vmem [shape: f32[1,8], index: 2, kind: input, shape index: {}]
  %s3 = inlined_call_operand.vmem [shape: f32[1,8], index: 3, kind: input, shape index: {}]
  %s4 = inlined_call_operand.vmem [shape: f32[512,8], index: 4, kind: output, shape index: {}]
  %s5 = sld [smem:[#allocation0]]
  $region26: #{_lambda_.44} parent=0
    _
  %s7 = ssub.s32 1, %s5
  %s8 = scalar_select 0, %s7, %s5
  // Predicated region
  $region2: #{_lambda_.44} parent=0 // pred_check
    _
  $region3: #{_lambda_.44} parent=0 // pred_check_branch
    %10 = sbr.rel (0) target = $region5
  $region4: #{_lambda_.44} parent=0 // pred_region
    _
  $region5: #{_lambda_.44} parent=0 // pred_fallthru
    _
  // Predicated region
  $region6: #{_lambda_.44} parent=0 // pred_check
    _
  $region7: #{_lambda_.44} parent=0 // pred_check_branch
    %12 = sbr.rel (0) target = $region9
  $region8: #{_lambda_.44} parent=0 // pred_region
    _
  $region9: #{_lambda_.44} parent=0 // pred_fallthru
    _
  // Predicated region
  $region10: #{_lambda_.44} parent=0 // pred_check
    _
  $region11: #{_lambda_.44} parent=0 // pred_check_branch
    %14 = sbr.rel (0) target = $region13
  $region12: #{_lambda_.44} parent=0 // pred_region
    _
  $region13: #{_lambda_.44} parent=0 // pred_fallthru
    _
  // Predicated region
  $region14: #{_lambda_.44} parent=0 // pred_check
    _
  $region15: #{_lambda_.44} parent=0 // pred_check_branch
    %16 = sbr.rel (0) target = $region17
  $region16: #{_lambda_.44} parent=0 // pred_region
    _
  $region17: #{_lambda_.44} parent=0 // pred_fallthru
    _
  %v18 = vld [vmem:[%s0] sm:$0xf]
  %v19 = vld [vmem:[%s0 + $0x4] sm:$0xf]
  %v20 = vld [vmem:[%s0 + $0x8] sm:$0xf]
  %v21 = vld [vmem:[%s0 + $0xc] sm:$0xf]
  %v22 = vld [vmem:[%s0 + $0x10] sm:$0xf]
  %v23 = vld [vmem:[%s0 + $0x14] sm:$0xf]
  %v24 = vld [vmem:[%s0 + $0x18] sm:$0xf]
  %v25 = vld [vmem:[%s0 + $0x1c] sm:$0xf]
  %v26 = vld [vmem:[%s0 + $0x20] sm:$0xf]
  %v27 = vld [vmem:[%s0 + $0x24] sm:$0xf]
  %v28 = vld [vmem:[%s0 + $0x28] sm:$0xf]
  %v29 = vld [vmem:[%s0 + $0x2c] sm:$0xf]
  %v30 = vld [vmem:[%s0 + $0x30] sm:$0xf]
  %v31 = vld [vmem:[%s0 + $0x34] sm:$0xf]
  %v32 = vld [vmem:[%s0 + $0x38] sm:$0xf]
  %v33 = vld [vmem:[%s0 + $0x3c] sm:$0xf]
  %v34 = vld [vmem:[%s0 + $0x40] sm:$0xf]
  %v35 = vld [vmem:[%s0 + $0x44] sm:$0xf]
  %v36 = vld [vmem:[%s0 + $0x48] sm:$0xf]
  %v37 = vld [vmem:[%s0 + $0x4c] sm:$0xf]
  %v38 = vld [vmem:[%s0 + $0x50] sm:$0xf]
  %v39 = vld [vmem:[%s0 + $0x54] sm:$0xf]
  %v40 = vld [vmem:[%s0 + $0x58] sm:$0xf]
  %v41 = vld [vmem:[%s0 + $0x5c] sm:$0xf]
  %v42 = vld [vmem:[%s0 + $0x60] sm:$0xf]
  %v43 = vld [vmem:[%s0 + $0x64] sm:$0xf]
  %v44 = vld [vmem:[%s0 + $0x68] sm:$0xf]
  %v45 = vld [vmem:[%s0 + $0x6c] sm:$0xf]
  %v46 = vld [vmem:[%s0 + $0x70] sm:$0xf]
  %v47 = vld [vmem:[%s0 + $0x74] sm:$0xf]
  %v48 = vld [vmem:[%s0 + $0x78] sm:$0xf]
  %v49 = vld [vmem:[%s0 + $0x7c] sm:$0xf]
  %v50 = vld [vmem:[%s0 + $0x80] sm:$0xf]
  %v51 = vld [vmem:[%s0 + $0x84] sm:$0xf]
  %v52 = vld [vmem:[%s0 + $0x88] sm:$0xf]
  %v53 = vld [vmem:[%s0 + $0x8c] sm:$0xf]
  %v54 = vld [vmem:[%s0 + $0x90] sm:$0xf]
  %v55 = vld [vmem:[%s0 + $0x94] sm:$0xf]
  %v56 = vld [vmem:[%s0 + $0x98] sm:$0xf]
  %v57 = vld [vmem:[%s0 + $0x9c] sm:$0xf]
  %v58 = vld [vmem:[%s0 + $0xa0] sm:$0xf]
  %v59 = vld [vmem:[%s0 + $0xa4] sm:$0xf]
  %v60 = vld [vmem:[%s0 + $0xa8] sm:$0xf]
  %v61 = vld [vmem:[%s0 + $0xac] sm:$0xf]
  %v62 = vld [vmem:[%s0 + $0xb0] sm:$0xf]
  %v63 = vld [vmem:[%s0 + $0xb4] sm:$0xf]
  %v64 = vld [vmem:[%s0 + $0xb8] sm:$0xf]
  %v65 = vld [vmem:[%s0 + $0xbc] sm:$0xf]
  %v66 = vld [vmem:[%s0 + $0xc0] sm:$0xf]
  %v67 = vld [vmem:[%s0 + $0xc4] sm:$0xf]
  %v68 = vld [vmem:[%s0 + $0xc8] sm:$0xf]
  %v69 = vld [vmem:[%s0 + $0xcc] sm:$0xf]
  %v70 = vld [vmem:[%s0 + $0xd0] sm:$0xf]
  %v71 = vld [vmem:[%s0 + $0xd4] sm:$0xf]
  %v72 = vld [vmem:[%s0 + $0xd8] sm:$0xf]
  %v73 = vld [vmem:[%s0 + $0xdc] sm:$0xf]
  %v74 = vld [vmem:[%s0 + $0xe0] sm:$0xf]
  %v75 = vld [vmem:[%s0 + $0xe4] sm:$0xf]
  %v76 = vld [vmem:[%s0 + $0xe8] sm:$0xf]
  %v77 = vld [vmem:[%s0 + $0xec] sm:$0xf]
  %v78 = vld [vmem:[%s0 + $0xf0] sm:$0xf]
  %v79 = vld [vmem:[%s0 + $0xf4] sm:$0xf]
  %v80 = vld [vmem:[%s0 + $0xf8] sm:$0xf]
  %v81 = vld [vmem:[%s0 + $0xfc] sm:$0xf]
  %v82 = vld [vmem:[%s1] sm:$0xf]
  %v83 = vld [vmem:[%s1 + $0x4] sm:$0xf]
  %v84 = vld [vmem:[%s1 + $0x8] sm:$0xf]
  %v85 = vld [vmem:[%s1 + $0xc] sm:$0xf]
  %v86 = vld [vmem:[%s1 + $0x10] sm:$0xf]
  %v87 = vld [vmem:[%s1 + $0x14] sm:$0xf]
  %v88 = vld [vmem:[%s1 + $0x18] sm:$0xf]
  %v89 = vld [vmem:[%s1 + $0x1c] sm:$0xf]
  %v90 = vld [vmem:[%s1 + $0x20] sm:$0xf]
  %v155 = vunpack.c.l.b16 %v18
  %v156 = vunpack.c.l.b16 %v19
  %v157 = vunpack.c.l.b16 %v20
  %v158 = vunpack.c.l.b16 %v21
  %v159 = vunpack.c.l.b16 %v22
  %v160 = vunpack.c.l.b16 %v23
  %v161 = vunpack.c.l.b16 %v24
  %v162 = vunpack.c.l.b16 %v25
  %v163 = vunpack.c.l.b16 %v26
  %v164 = vunpack.c.l.b16 %v27
  %v165 = vunpack.c.l.b16 %v28
  %v166 = vunpack.c.l.b16 %v29
  %v167 = vunpack.c.l.b16 %v30
  %v168 = vunpack.c.l.b16 %v31
  %v169 = vunpack.c.l.b16 %v32
  %v170 = vunpack.c.l.b16 %v33
  %v171 = vunpack.c.l.b16 %v34
  %v172 = vunpack.c.l.b16 %v35
  %v173 = vunpack.c.l.b16 %v36
  %v174 = vunpack.c.l.b16 %v37
  %v175 = vunpack.c.l.b16 %v38
  %v176 = vunpack.c.l.b16 %v39
  %v177 = vunpack.c.l.b16 %v40
  %v178 = vunpack.c.l.b16 %v41
  %v179 = vunpack.c.l.b16 %v42
  %v180 = vunpack.c.l.b16 %v43
  %v181 = vunpack.c.l.b16 %v44
  %v182 = vunpack.c.l.b16 %v45
  %v183 = vunpack.c.l.b16 %v46
  %v184 = vunpack.c.l.b16 %v47
  %v185 = vunpack.c.l.b16 %v48
  %v186 = vunpack.c.l.b16 %v49
  %v187 = vunpack.c.l.b16 %v50
  %v188 = vunpack.c.l.b16 %v51
  %v189 = vunpack.c.l.b16 %v52
  %v190 = vunpack.c.l.b16 %v53
  %v191 = vunpack.c.l.b16 %v54
  %v192 = vunpack.c.l.b16 %v55
  %v193 = vunpack.c.l.b16 %v56
  %v194 = vunpack.c.l.b16 %v57
  %v195 = vunpack.c.l.b16 %v58
  %v196 = vunpack.c.l.b16 %v59
  %v197 = vunpack.c.l.b16 %v60
  %v198 = vunpack.c.l.b16 %v61
  %v199 = vunpack.c.l.b16 %v62
  %v200 = vunpack.c.l.b16 %v63
  %v201 = vunpack.c.l.b16 %v64
  %v202 = vunpack.c.l.b16 %v65
  %v203 = vunpack.c.l.b16 %v66
  %v204 = vunpack.c.l.b16 %v67
  %v205 = vunpack.c.l.b16 %v68
  %v206 = vunpack.c.l.b16 %v69
  %v207 = vunpack.c.l.b16 %v70
  %v208 = vunpack.c.l.b16 %v71
  %v209 = vunpack.c.l.b16 %v72
  %v210 = vunpack.c.l.b16 %v73
  %v211 = vunpack.c.l.b16 %v74
  %v212 = vunpack.c.l.b16 %v75
  %v213 = vunpack.c.l.b16 %v76
  %v214 = vunpack.c.l.b16 %v77
  %v215 = vunpack.c.l.b16 %v78
  %v216 = vunpack.c.l.b16 %v79
  %v217 = vunpack.c.l.b16 %v80
  %v218 = vunpack.c.l.b16 %v81
  %v219 = vpack.c.b16 %v156, %v155
  %v220 = vpack.c.b16 %v158, %v157
  %v221 = vpack.c.b16 %v160, %v159
  %v222 = vpack.c.b16 %v162, %v161
  %v223 = vpack.c.b16 %v164, %v163
  %v224 = vpack.c.b16 %v166, %v165
  %v225 = vpack.c.b16 %v168, %v167
  %v226 = vpack.c.b16 %v170, %v169
  %v227 = vpack.c.b16 %v172, %v171
  %v228 = vpack.c.b16 %v174, %v173
  %v229 = vpack.c.b16 %v176, %v175
  %v230 = vpack.c.b16 %v178, %v177
  %v231 = vpack.c.b16 %v180, %v179
  %v232 = vpack.c.b16 %v182, %v181
  %v233 = vpack.c.b16 %v184, %v183
  %v234 = vpack.c.b16 %v186, %v185
  %v235 = vpack.c.b16 %v188, %v187
  %v236 = vpack.c.b16 %v190, %v189
  %v237 = vpack.c.b16 %v192, %v191
  %v238 = vpack.c.b16 %v194, %v193
  %v239 = vpack.c.b16 %v196, %v195
  %v240 = vpack.c.b16 %v198, %v197
  %v241 = vpack.c.b16 %v200, %v199
  %v242 = vpack.c.b16 %v202, %v201
  %v243 = vpack.c.b16 %v204, %v203
  %v244 = vpack.c.b16 %v206, %v205
  %v245 = vpack.c.b16 %v208, %v207
  %v246 = vpack.c.b16 %v210, %v209
  %v247 = vpack.c.b16 %v212, %v211
  %v248 = vpack.c.b16 %v214, %v213
  %v249 = vpack.c.b16 %v216, %v215
  %v250 = vpack.c.b16 %v218, %v217
  %v260 = vunpack.c.l.b16 %v82
  %v261 = vunpack.c.l.b16 %v83
  %v262 = vunpack.c.l.b16 %v84
  %v263 = vunpack.c.l.b16 %v85
  %v264 = vunpack.c.l.b16 %v86
  %v265 = vunpack.c.l.b16 %v87
  %v266 = vunpack.c.l.b16 %v88
  %v267 = vunpack.c.l.b16 %v89
  %v268 = vunpack.c.l.b16 %v90
  %v269 = vpack.c.b16 %v261, %v260
  %v270 = vpack.c.b16 %v263, %v262
  %v271 = vpack.c.b16 %v265, %v264
  %v272 = vpack.c.b16 %v267, %v266
  %v273 = vpack.c.b16 %v268, %v268
  %vm278 = vcmask 588800
  %v280 = vsel %vm278, %v219, 0
  %v283 = vsel %vm278, %v220, 0
  %v286 = vsel %vm278, %v221, 0
  %v289 = vsel %vm278, %v222, 0
  %v292 = vsel %vm278, %v223, 0
  %v295 = vsel %vm278, %v224, 0
  %v298 = vsel %vm278, %v225, 0
  %v301 = vsel %vm278, %v226, 0
  %v304 = vsel %vm278, %v227, 0
  %v307 = vsel %vm278, %v228, 0
  %v310 = vsel %vm278, %v229, 0
  %v313 = vsel %vm278, %v230, 0
  %v316 = vsel %vm278, %v231, 0
  %v319 = vsel %vm278, %v232, 0
  %v322 = vsel %vm278, %v233, 0
  %v325 = vsel %vm278, %v234, 0
  %v328 = vsel %vm278, %v235, 0
  %v331 = vsel %vm278, %v236, 0
  %v334 = vsel %vm278, %v237, 0
  %v337 = vsel %vm278, %v238, 0
  %v340 = vsel %vm278, %v239, 0
  %v343 = vsel %vm278, %v240, 0
  %v346 = vsel %vm278, %v241, 0
  %v349 = vsel %vm278, %v242, 0
  %v352 = vsel %vm278, %v243, 0
  %v355 = vsel %vm278, %v244, 0
  %v358 = vsel %vm278, %v245, 0
  %v361 = vsel %vm278, %v246, 0
  %v364 = vsel %vm278, %v247, 0
  %v367 = vsel %vm278, %v248, 0
  %v370 = vsel %vm278, %v249, 0
  %v373 = vsel %vm278, %v250, 0
  %vm375 = vcmask 1043456
  %v377 = vsel %vm375, %v273, 0
  %379 = vmatprep.subr.bf16.mxu0 0
  %380 = vmatpush1.bf16.msra.mxu0 %v269
  %381 = vmatprep.subr.bf16.mxu0 0
  %382 = vmatpush1.bf16.msra.mxu0 %v270
  %383 = vmatprep.subr.bf16.mxu0 0
  %384 = vmatpush1.bf16.msra.mxu0 %v271
  %385 = vmatprep.subr.bf16.mxu0 0
  %386 = vmatpush1.bf16.msra.mxu0 %v272
  %387 = vmatprep.subr.bf16.mxu0 0
  %388 = vmatpush1.bf16.msra.mxu0 %v377
  %389 = vmatprep.subr.bf16.mxu0 0
  %390 = vmatpush1.bf16.msra.mxu0 0
  %391 = vmatprep.subr.bf16.mxu0 0
  %392 = vmatpush1.bf16.msra.mxu0 0
  %393 = vmatprep.subr.bf16.mxu0 0
  %394 = vmatpush1.bf16.msra.mxu0 0
  %395 = vmatprep.subr.bf16.mxu0 0
  %396 = vmatpush1.bf16.msra.mxu0 0
  %397 = vmatprep.subr.bf16.mxu0 0
  %398 = vmatpush1.bf16.msra.mxu0 0
  %399 = vmatprep.subr.bf16.mxu0 0
  %400 = vmatpush1.bf16.msra.mxu0 0
  %401 = vmatprep.subr.bf16.mxu0 0
  %402 = vmatpush1.bf16.msra.mxu0 0
  %403 = vmatprep.subr.bf16.mxu0 0
  %404 = vmatpush1.bf16.msra.mxu0 0
  %405 = vmatprep.subr.bf16.mxu0 0
  %406 = vmatpush1.bf16.msra.mxu0 0
  %407 = vmatprep.subr.bf16.mxu0 0
  %408 = vmatpush1.bf16.msra.mxu0 0
  %409 = vmatprep.subr.bf16.mxu0 0
  %410 = vmatpush1.bf16.msra.mxu0 0
  %411 = vmatprep.mubr.bf16.mxu0 0
  %412 = vmatmul.mubr.bf16.gmra.mrb[0].mxu0 %v280
  %v413 = vpop.f32.mrb[0].mxu0
  %v414 = vadd.f32 0.0, %v413
  %v415 = vpop.f32.mrb[0].mxu0
  %v416 = vpop.f32.mrb[0].mxu0
  %v417 = vadd.f32 0.0, %v416
  %v418 = vpop.f32.mrb[0].mxu0
  %419 = vmatprep.mubr.bf16.mxu0 0
  %420 = vmatmul.mubr.bf16.gmra.mrb[0].mxu0 %v283
  %v421 = vpop.f32.mrb[0].mxu0
  %v422 = vadd.f32 0.0, %v421
  %v423 = vpop.f32.mrb[0].mxu0
  %v424 = vpop.f32.mrb[0].mxu0
  %v425 = vadd.f32 0.0, %v424
  %v426 = vpop.f32.mrb[0].mxu0
  %427 = vmatprep.mubr.bf16.mxu0 0
  %428 = vmatmul.mubr.bf16.gmra.mrb[0].mxu0 %v286
  %v429 = vpop.f32.mrb[0].mxu0
  %v430 = vadd.f32 0.0, %v429
  %v431 = vpop.f32.mrb[0].mxu0
  %v432 = vpop.f32.mrb[0].mxu0
  %v433 = vadd.f32 0.0, %v432
  %v434 = vpop.f32.mrb[0].mxu0
  %435 = vmatprep.mubr.bf16.mxu0 0
  %436 = vmatmul.mubr.bf16.gmra.mrb[0].mxu0 %v289
  %v437 = vpop.f32.mrb[0].mxu0
  %v438 = vadd.f32 0.0, %v437
  %v439 = vpop.f32.mrb[0].mxu0
  %v440 = vpop.f32.mrb[0].mxu0
  %v441 = vadd.f32 0.0, %v440
  %v442 = vpop.f32.mrb[0].mxu0
  %443 = vmatprep.mubr.bf16.mxu0 0
  %444 = vmatmul.mubr.bf16.gmra.mrb[0].mxu0 %v292
  %v445 = vpop.f32.mrb[0].mxu0
  %v446 = vadd.f32 0.0, %v445
  %v447 = vpop.f32.mrb[0].mxu0
  %v448 = vpop.f32.mrb[0].mxu0
  %v449 = vadd.f32 0.0, %v448
  %v450 = vpop.f32.mrb[0].mxu0
  %451 = vmatprep.mubr.bf16.mxu0 0
  %452 = vmatmul.mubr.bf16.gmra.mrb[0].mxu0 %v295
  %v453 = vpop.f32.mrb[0].mxu0
  %v454 = vadd.f32 0.0, %v453
  %v455 = vpop.f32.mrb[0].mxu0
  %v456 = vpop.f32.mrb[0].mxu0
  %v457 = vadd.f32 0.0, %v456
  %v458 = vpop.f32.mrb[0].mxu0
  %459 = vmatprep.mubr.bf16.mxu0 0
  %460 = vmatmul.mubr.bf16.gmra.mrb[0].mxu0 %v298
  %v461 = vpop.f32.mrb[0].mxu0
  %v462 = vadd.f32 0.0, %v461
  %v463 = vpop.f32.mrb[0].mxu0
  %v464 = vpop.f32.mrb[0].mxu0
  %v465 = vadd.f32 0.0, %v464
  %v466 = vpop.f32.mrb[0].mxu0
  %467 = vmatprep.mubr.bf16.mxu0 0
  %468 = vmatmul.mubr.bf16.gmra.mrb[0].mxu0 %v301
  %v469 = vpop.f32.mrb[0].mxu0
  %v470 = vadd.f32 0.0, %v469
  %v471 = vpop.f32.mrb[0].mxu0
  %v472 = vpop.f32.mrb[0].mxu0
  %v473 = vadd.f32 0.0, %v472
  %v474 = vpop.f32.mrb[0].mxu0
  %475 = vmatprep.mubr.bf16.mxu0 0
  %476 = vmatmul.mubr.bf16.gmra.mrb[0].mxu0 %v304
  %v477 = vpop.f32.mrb[0].mxu0
  %v478 = vadd.f32 0.0, %v477
  %v479 = vpop.f32.mrb[0].mxu0
  %v480 = vpop.f32.mrb[0].mxu0
  %v481 = vadd.f32 0.0, %v480
  %v482 = vpop.f32.mrb[0].mxu0
  %483 = vmatprep.mubr.bf16.mxu0 0
  %484 = vmatmul.mubr.bf16.gmra.mrb[0].mxu0 %v307
  %v485 = vpop.f32.mrb[0].mxu0
  %v486 = vadd.f32 0.0, %v485
  %v487 = vpop.f32.mrb[0].mxu0
  %v488 = vpop.f32.mrb[0].mxu0
  %v489 = vadd.f32 0.0, %v488
  %v490 = vpop.f32.mrb[0].mxu0
  %491 = vmatprep.mubr.bf16.mxu0 0
  %492 = vmatmul.mubr.bf16.gmra.mrb[0].mxu0 %v310
  %v493 = vpop.f32.mrb[0].mxu0
  %v494 = vadd.f32 0.0, %v493
  %v495 = vpop.f32.mrb[0].mxu0
  %v496 = vpop.f32.mrb[0].mxu0
  %v497 = vadd.f32 0.0, %v496
  %v498 = vpop.f32.mrb[0].mxu0
  %499 = vmatprep.mubr.bf16.mxu0 0
  %500 = vmatmul.mubr.bf16.gmra.mrb[0].mxu0 %v313
  %v501 = vpop.f32.mrb[0].mxu0
  %v502 = vadd.f32 0.0, %v501
  %v503 = vpop.f32.mrb[0].mxu0
  %v504 = vpop.f32.mrb[0].mxu0
  %v505 = vadd.f32 0.0, %v504
  %v506 = vpop.f32.mrb[0].mxu0
  %507 = vmatprep.mubr.bf16.mxu0 0
  %508 = vmatmul.mubr.bf16.gmra.mrb[0].mxu0 %v316
  %v509 = vpop.f32.mrb[0].mxu0
  %v510 = vadd.f32 0.0, %v509
  %v511 = vpop.f32.mrb[0].mxu0
  %v512 = vpop.f32.mrb[0].mxu0
  %v513 = vadd.f32 0.0, %v512
  %v514 = vpop.f32.mrb[0].mxu0
  %515 = vmatprep.mubr.bf16.mxu0 0
  %516 = vmatmul.mubr.bf16.gmra.mrb[0].mxu0 %v319
  %v517 = vpop.f32.mrb[0].mxu0
  %v518 = vadd.f32 0.0, %v517
  %v519 = vpop.f32.mrb[0].mxu0
  %v520 = vpop.f32.mrb[0].mxu0
  %v521 = vadd.f32 0.0, %v520
  %v522 = vpop.f32.mrb[0].mxu0
  %523 = vmatprep.mubr.bf16.mxu0 0
  %524 = vmatmul.mubr.bf16.gmra.mrb[0].mxu0 %v322
  %v525 = vpop.f32.mrb[0].mxu0
  %v526 = vadd.f32 0.0, %v525
  %v527 = vpop.f32.mrb[0].mxu0
  %v528 = vpop.f32.mrb[0].mxu0
  %v529 = vadd.f32 0.0, %v528
  %v530 = vpop.f32.mrb[0].mxu0
  %531 = vmatprep.mubr.bf16.mxu0 0
  %532 = vmatmul.mubr.bf16.gmra.mrb[0].mxu0 %v325
  %v533 = vpop.f32.mrb[0].mxu0
  %v534 = vadd.f32 0.0, %v533
  %v535 = vpop.f32.mrb[0].mxu0
  %v536 = vpop.f32.mrb[0].mxu0
  %v537 = vadd.f32 0.0, %v536
  %v538 = vpop.f32.mrb[0].mxu0
  %539 = vmatprep.mubr.bf16.mxu0 0
  %540 = vmatmul.mubr.bf16.gmra.mrb[0].mxu0 %v328
  %v541 = vpop.f32.mrb[0].mxu0
  %v542 = vadd.f32 0.0, %v541
  %v543 = vpop.f32.mrb[0].mxu0
  %v544 = vpop.f32.mrb[0].mxu0
  %v545 = vadd.f32 0.0, %v544
  %v546 = vpop.f32.mrb[0].mxu0
  %547 = vmatprep.mubr.bf16.mxu0 0
  %548 = vmatmul.mubr.bf16.gmra.mrb[0].mxu0 %v331
  %v549 = vpop.f32.mrb[0].mxu0
  %v550 = vadd.f32 0.0, %v549
  %v551 = vpop.f32.mrb[0].mxu0
  %v552 = vpop.f32.mrb[0].mxu0
  %v553 = vadd.f32 0.0, %v552
  %v554 = vpop.f32.mrb[0].mxu0
  %555 = vmatprep.mubr.bf16.mxu0 0
  %556 = vmatmul.mubr.bf16.gmra.mrb[0].mxu0 %v334
  %v557 = vpop.f32.mrb[0].mxu0
  %v558 = vadd.f32 0.0, %v557
  %v559 = vpop.f32.mrb[0].mxu0
  %v560 = vpop.f32.mrb[0].mxu0
  %v561 = vadd.f32 0.0, %v560
  %v562 = vpop.f32.mrb[0].mxu0
  %563 = vmatprep.mubr.bf16.mxu0 0
  %564 = vmatmul.mubr.bf16.gmra.mrb[0].mxu0 %v337
  %v565 = vpop.f32.mrb[0].mxu0
  %v566 = vadd.f32 0.0, %v565
  %v567 = vpop.f32.mrb[0].mxu0
  %v568 = vpop.f32.mrb[0].mxu0
  %v569 = vadd.f32 0.0, %v568
  %v570 = vpop.f32.mrb[0].mxu0
  %571 = vmatprep.mubr.bf16.mxu0 0
  %572 = vmatmul.mubr.bf16.gmra.mrb[0].mxu0 %v340
  %v573 = vpop.f32.mrb[0].mxu0
  %v574 = vadd.f32 0.0, %v573
  %v575 = vpop.f32.mrb[0].mxu0
  %v576 = vpop.f32.mrb[0].mxu0
  %v577 = vadd.f32 0.0, %v576
  %v578 = vpop.f32.mrb[0].mxu0
  %579 = vmatprep.mubr.bf16.mxu0 0
  %580 = vmatmul.mubr.bf16.gmra.mrb[0].mxu0 %v343
  %v581 = vpop.f32.mrb[0].mxu0
  %v582 = vadd.f32 0.0, %v581
  %v583 = vpop.f32.mrb[0].mxu0
  %v584 = vpop.f32.mrb[0].mxu0
  %v585 = vadd.f32 0.0, %v584
  %v586 = vpop.f32.mrb[0].mxu0
  %587 = vmatprep.mubr.bf16.mxu0 0
  %588 = vmatmul.mubr.bf16.gmra.mrb[0].mxu0 %v346
  %v589 = vpop.f32.mrb[0].mxu0
  %v590 = vadd.f32 0.0, %v589
  %v591 = vpop.f32.mrb[0].mxu0
  %v592 = vpop.f32.mrb[0].mxu0
  %v593 = vadd.f32 0.0, %v592
  %v594 = vpop.f32.mrb[0].mxu0
  %595 = vmatprep.mubr.bf16.mxu0 0
  %596 = vmatmul.mubr.bf16.gmra.mrb[0].mxu0 %v349
  %v597 = vpop.f32.mrb[0].mxu0
  %v598 = vadd.f32 0.0, %v597
  %v599 = vpop.f32.mrb[0].mxu0
  %v600 = vpop.f32.mrb[0].mxu0
  %v601 = vadd.f32 0.0, %v600
  %v602 = vpop.f32.mrb[0].mxu0
  %603 = vmatprep.mubr.bf16.mxu0 0
  %604 = vmatmul.mubr.bf16.gmra.mrb[0].mxu0 %v352
  %v605 = vpop.f32.mrb[0].mxu0
  %v606 = vadd.f32 0.0, %v605
  %v607 = vpop.f32.mrb[0].mxu0
  %v608 = vpop.f32.mrb[0].mxu0
  %v609 = vadd.f32 0.0, %v608
  %v610 = vpop.f32.mrb[0].mxu0
  %611 = vmatprep.mubr.bf16.mxu0 0
  %612 = vmatmul.mubr.bf16.gmra.mrb[0].mxu0 %v355
  %v613 = vpop.f32.mrb[0].mxu0
  %v614 = vadd.f32 0.0, %v613
  %v615 = vpop.f32.mrb[0].mxu0
  %v616 = vpop.f32.mrb[0].mxu0
  %v617 = vadd.f32 0.0, %v616
  %v618 = vpop.f32.mrb[0].mxu0
  %619 = vmatprep.mubr.bf16.mxu0 0
  %620 = vmatmul.mubr.bf16.gmra.mrb[0].mxu0 %v358
  %v621 = vpop.f32.mrb[0].mxu0
  %v622 = vadd.f32 0.0, %v621
  %v623 = vpop.f32.mrb[0].mxu0
  %v624 = vpop.f32.mrb[0].mxu0
  %v625 = vadd.f32 0.0, %v624
  %v626 = vpop.f32.mrb[0].mxu0
  %627 = vmatprep.mubr.bf16.mxu0 0
  %628 = vmatmul.mubr.bf16.gmra.mrb[0].mxu0 %v361
  %v629 = vpop.f32.mrb[0].mxu0
  %v630 = vadd.f32 0.0, %v629
  %v631 = vpop.f32.mrb[0].mxu0
  %v632 = vpop.f32.mrb[0].mxu0
  %v633 = vadd.f32 0.0, %v632
  %v634 = vpop.f32.mrb[0].mxu0
  %635 = vmatprep.mubr.bf16.mxu0 0
  %636 = vmatmul.mubr.bf16.gmra.mrb[0].mxu0 %v364
  %v637 = vpop.f32.mrb[0].mxu0
  %v638 = vadd.f32 0.0, %v637
  %v639 = vpop.f32.mrb[0].mxu0
  %v640 = vpop.f32.mrb[0].mxu0
  %v641 = vadd.f32 0.0, %v640
  %v642 = vpop.f32.mrb[0].mxu0
  %643 = vmatprep.mubr.bf16.mxu0 0
  %644 = vmatmul.mubr.bf16.gmra.mrb[0].mxu0 %v367
  %v645 = vpop.f32.mrb[0].mxu0
  %v646 = vadd.f32 0.0, %v645
  %v647 = vpop.f32.mrb[0].mxu0
  %v648 = vpop.f32.mrb[0].mxu0
  %v649 = vadd.f32 0.0, %v648
  %v650 = vpop.f32.mrb[0].mxu0
  %651 = vmatprep.mubr.bf16.mxu0 0
  %652 = vmatmul.mubr.bf16.gmra.mrb[0].mxu0 %v370
  %v653 = vpop.f32.mrb[0].mxu0
  %v654 = vadd.f32 0.0, %v653
  %v655 = vpop.f32.mrb[0].mxu0
  %v656 = vpop.f32.mrb[0].mxu0
  %v657 = vadd.f32 0.0, %v656
  %v658 = vpop.f32.mrb[0].mxu0
  %659 = vmatprep.mubr.bf16.mxu0 0
  %660 = vmatmul.mubr.bf16.gmra.mrb[0].mxu0 %v373
  %v661 = vpop.f32.mrb[0].mxu0
  %v662 = vadd.f32 0.0, %v661
  %v663 = vpop.f32.mrb[0].mxu0
  %v664 = vpop.f32.mrb[0].mxu0
  %v665 = vadd.f32 0.0, %v664
  %v666 = vpop.f32.mrb[0].mxu0
  %667 = vdwg.mxu0
  %v668 = vld [vmem:[%s2] sm:$0x1]
  %v670 = vlaneseq
  %v671 = vshrl.u32 %v670, 7
  %v672 = vsub.s32 0, %v671
  %v673 = vrot.slane %v668, %v672
  %v675 = vmul.f32 %v414, %v673
  %v676 = vmul.f32 %v417, %v673
  %v677 = vmul.f32 %v422, %v673
  %v678 = vmul.f32 %v425, %v673
  %v679 = vmul.f32 %v430, %v673
  %v680 = vmul.f32 %v433, %v673
  %v681 = vmul.f32 %v438, %v673
  %v682 = vmul.f32 %v441, %v673
  %v683 = vmul.f32 %v446, %v673
  %v684 = vmul.f32 %v449, %v673
  %v685 = vmul.f32 %v454, %v673
  %v686 = vmul.f32 %v457, %v673
  %v687 = vmul.f32 %v462, %v673
  %v688 = vmul.f32 %v465, %v673
  %v689 = vmul.f32 %v470, %v673
  %v690 = vmul.f32 %v473, %v673
  %v691 = vmul.f32 %v478, %v673
  %v692 = vmul.f32 %v481, %v673
  %v693 = vmul.f32 %v486, %v673
  %v694 = vmul.f32 %v489, %v673
  %v695 = vmul.f32 %v494, %v673
  %v696 = vmul.f32 %v497, %v673
  %v697 = vmul.f32 %v502, %v673
  %v698 = vmul.f32 %v505, %v673
  %v699 = vmul.f32 %v510, %v673
  %v700 = vmul.f32 %v513, %v673
  %v701 = vmul.f32 %v518, %v673
  %v702 = vmul.f32 %v521, %v673
  %v703 = vmul.f32 %v526, %v673
  %v704 = vmul.f32 %v529, %v673
  %v705 = vmul.f32 %v534, %v673
  %v706 = vmul.f32 %v537, %v673
  %v707 = vmul.f32 %v542, %v673
  %v708 = vmul.f32 %v545, %v673
  %v709 = vmul.f32 %v550, %v673
  %v710 = vmul.f32 %v553, %v673
  %v711 = vmul.f32 %v558, %v673
  %v712 = vmul.f32 %v561, %v673
  %v713 = vmul.f32 %v566, %v673
  %v714 = vmul.f32 %v569, %v673
  %v715 = vmul.f32 %v574, %v673
  %v716 = vmul.f32 %v577, %v673
  %v717 = vmul.f32 %v582, %v673
  %v718 = vmul.f32 %v585, %v673
  %v719 = vmul.f32 %v590, %v673
  %v720 = vmul.f32 %v593, %v673
  %v721 = vmul.f32 %v598, %v673
  %v722 = vmul.f32 %v601, %v673
  %v723 = vmul.f32 %v606, %v673
  %v724 = vmul.f32 %v609, %v673
  %v725 = vmul.f32 %v614, %v673
  %v726 = vmul.f32 %v617, %v673
  %v727 = vmul.f32 %v622, %v673
  %v728 = vmul.f32 %v625, %v673
  %v729 = vmul.f32 %v630, %v673
  %v730 = vmul.f32 %v633, %v673
  %v731 = vmul.f32 %v638, %v673
  %v732 = vmul.f32 %v641, %v673
  %v733 = vmul.f32 %v646, %v673
  %v734 = vmul.f32 %v649, %v673
  %v735 = vmul.f32 %v654, %v673
  %v736 = vmul.f32 %v657, %v673
  %v737 = vmul.f32 %v662, %v673
  %v738 = vmul.f32 %v665, %v673
  %v739 = vld [vmem:[%s3] sm:$0x1]
  %v741 = vlaneseq
  %v742 = vshrl.u32 %v741, 7
  %v743 = vsub.s32 0, %v742
  %v744 = vrot.slane %v739, %v743
  %v746 = vadd.f32 %v675, %v744
  %v747 = vadd.f32 %v676, %v744
  %v748 = vadd.f32 %v677, %v744
  %v749 = vadd.f32 %v678, %v744
  %v750 = vadd.f32 %v679, %v744
  %v751 = vadd.f32 %v680, %v744
  %v752 = vadd.f32 %v681, %v744
  %v753 = vadd.f32 %v682, %v744
  %v754 = vadd.f32 %v683, %v744
  %v755 = vadd.f32 %v684, %v744
  %v756 = vadd.f32 %v685, %v744
  %v757 = vadd.f32 %v686, %v744
  %v758 = vadd.f32 %v687, %v744
  %v759 = vadd.f32 %v688, %v744
  %v760 = vadd.f32 %v689, %v744
  %v761 = vadd.f32 %v690, %v744
  %v762 = vadd.f32 %v691, %v744
  %v763 = vadd.f32 %v692, %v744
  %v764 = vadd.f32 %v693, %v744
  %v765 = vadd.f32 %v694, %v744
  %v766 = vadd.f32 %v695, %v744
  %v767 = vadd.f32 %v696, %v744
  %v768 = vadd.f32 %v697, %v744
  %v769 = vadd.f32 %v698, %v744
  %v770 = vadd.f32 %v699, %v744
  %v771 = vadd.f32 %v700, %v744
  %v772 = vadd.f32 %v701, %v744
  %v773 = vadd.f32 %v702, %v744
  %v774 = vadd.f32 %v703, %v744
  %v775 = vadd.f32 %v704, %v744
  %v776 = vadd.f32 %v705, %v744
  %v777 = vadd.f32 %v706, %v744
  %v778 = vadd.f32 %v707, %v744
  %v779 = vadd.f32 %v708, %v744
  %v780 = vadd.f32 %v709, %v744
  %v781 = vadd.f32 %v710, %v744
  %v782 = vadd.f32 %v711, %v744
  %v783 = vadd.f32 %v712, %v744
  %v784 = vadd.f32 %v713, %v744
  %v785 = vadd.f32 %v714, %v744
  %v786 = vadd.f32 %v715, %v744
  %v787 = vadd.f32 %v716, %v744
  %v788 = vadd.f32 %v717, %v744
  %v789 = vadd.f32 %v718, %v744
  %v790 = vadd.f32 %v719, %v744
  %v791 = vadd.f32 %v720, %v744
  %v792 = vadd.f32 %v721, %v744
  %v793 = vadd.f32 %v722, %v744
  %v794 = vadd.f32 %v723, %v744
  %v795 = vadd.f32 %v724, %v744
  %v796 = vadd.f32 %v725, %v744
  %v797 = vadd.f32 %v726, %v744
  %v798 = vadd.f32 %v727, %v744
  %v799 = vadd.f32 %v728, %v744
  %v800 = vadd.f32 %v729, %v744
  %v801 = vadd.f32 %v730, %v744
  %v802 = vadd.f32 %v731, %v744
  %v803 = vadd.f32 %v732, %v744
  %v804 = vadd.f32 %v733, %v744
  %v805 = vadd.f32 %v734, %v744
  %v806 = vadd.f32 %v735, %v744
  %v807 = vadd.f32 %v736, %v744
  %v808 = vadd.f32 %v737, %v744
  %v809 = vadd.f32 %v738, %v744
  %v810 = vmax.f32 %v746, 0.0
  %v811 = vmax.f32 %v747, 0.0
  %v812 = vmax.f32 %v748, 0.0
  %v813 = vmax.f32 %v749, 0.0
  %v814 = vmax.f32 %v750, 0.0
  %v815 = vmax.f32 %v751, 0.0
  %v816 = vmax.f32 %v752, 0.0
  %v817 = vmax.f32 %v753, 0.0
  %v818 = vmax.f32 %v754, 0.0
  %v819 = vmax.f32 %v755, 0.0
  %v820 = vmax.f32 %v756, 0.0
  %v821 = vmax.f32 %v757, 0.0
  %v822 = vmax.f32 %v758, 0.0
  %v823 = vmax.f32 %v759, 0.0
  %v824 = vmax.f32 %v760, 0.0
  %v825 = vmax.f32 %v761, 0.0
  %v826 = vmax.f32 %v762, 0.0
  %v827 = vmax.f32 %v763, 0.0
  %v828 = vmax.f32 %v764, 0.0
  %v829 = vmax.f32 %v765, 0.0
  %v830 = vmax.f32 %v766, 0.0
  %v831 = vmax.f32 %v767, 0.0
  %v832 = vmax.f32 %v768, 0.0
  %v833 = vmax.f32 %v769, 0.0
  %v834 = vmax.f32 %v770, 0.0
  %v835 = vmax.f32 %v771, 0.0
  %v836 = vmax.f32 %v772, 0.0
  %v837 = vmax.f32 %v773, 0.0
  %v838 = vmax.f32 %v774, 0.0
  %v839 = vmax.f32 %v775, 0.0
  %v840 = vmax.f32 %v776, 0.0
  %v841 = vmax.f32 %v777, 0.0
  %v842 = vmax.f32 %v778, 0.0
  %v843 = vmax.f32 %v779, 0.0
  %v844 = vmax.f32 %v780, 0.0
  %v845 = vmax.f32 %v781, 0.0
  %v846 = vmax.f32 %v782, 0.0
  %v847 = vmax.f32 %v783, 0.0
  %v848 = vmax.f32 %v784, 0.0
  %v849 = vmax.f32 %v785, 0.0
  %v850 = vmax.f32 %v786, 0.0
  %v851 = vmax.f32 %v787, 0.0
  %v852 = vmax.f32 %v788, 0.0
  %v853 = vmax.f32 %v789, 0.0
  %v854 = vmax.f32 %v790, 0.0
  %v855 = vmax.f32 %v791, 0.0
  %v856 = vmax.f32 %v792, 0.0
  %v857 = vmax.f32 %v793, 0.0
  %v858 = vmax.f32 %v794, 0.0
  %v859 = vmax.f32 %v795, 0.0
  %v860 = vmax.f32 %v796, 0.0
  %v861 = vmax.f32 %v797, 0.0
  %v862 = vmax.f32 %v798, 0.0
  %v863 = vmax.f32 %v799, 0.0
  %v864 = vmax.f32 %v800, 0.0
  %v865 = vmax.f32 %v801, 0.0
  %v866 = vmax.f32 %v802, 0.0
  %v867 = vmax.f32 %v803, 0.0
  %v868 = vmax.f32 %v804, 0.0
  %v869 = vmax.f32 %v805, 0.0
  %v870 = vmax.f32 %v806, 0.0
  %v871 = vmax.f32 %v807, 0.0
  %v872 = vmax.f32 %v808, 0.0
  %v873 = vmax.f32 %v809, 0.0
  %v874 = vmin.f32 %v810, 6.0
  %v875 = vmin.f32 %v811, 6.0
  %v876 = vmin.f32 %v812, 6.0
  %v877 = vmin.f32 %v813, 6.0
  %v878 = vmin.f32 %v814, 6.0
  %v879 = vmin.f32 %v815, 6.0
  %v880 = vmin.f32 %v816, 6.0
  %v881 = vmin.f32 %v817, 6.0
  %v882 = vmin.f32 %v818, 6.0
  %v883 = vmin.f32 %v819, 6.0
  %v884 = vmin.f32 %v820, 6.0
  %v885 = vmin.f32 %v821, 6.0
  %v886 = vmin.f32 %v822, 6.0
  %v887 = vmin.f32 %v823, 6.0
  %v888 = vmin.f32 %v824, 6.0
  %v889 = vmin.f32 %v825, 6.0
  %v890 = vmin.f32 %v826, 6.0
  %v891 = vmin.f32 %v827, 6.0
  %v892 = vmin.f32 %v828, 6.0
  %v893 = vmin.f32 %v829, 6.0
  %v894 = vmin.f32 %v830, 6.0
  %v895 = vmin.f32 %v831, 6.0
  %v896 = vmin.f32 %v832, 6.0
  %v897 = vmin.f32 %v833, 6.0
  %v898 = vmin.f32 %v834, 6.0
  %v899 = vmin.f32 %v835, 6.0
  %v900 = vmin.f32 %v836, 6.0
  %v901 = vmin.f32 %v837, 6.0
  %v902 = vmin.f32 %v838, 6.0
  %v903 = vmin.f32 %v839, 6.0
  %v904 = vmin.f32 %v840, 6.0
  %v905 = vmin.f32 %v841, 6.0
  %v906 = vmin.f32 %v842, 6.0
  %v907 = vmin.f32 %v843, 6.0
  %v908 = vmin.f32 %v844, 6.0
  %v909 = vmin.f32 %v845, 6.0
  %v910 = vmin.f32 %v846, 6.0
  %v911 = vmin.f32 %v847, 6.0
  %v912 = vmin.f32 %v848, 6.0
  %v913 = vmin.f32 %v849, 6.0
  %v914 = vmin.f32 %v850, 6.0
  %v915 = vmin.f32 %v851, 6.0
  %v916 = vmin.f32 %v852, 6.0
  %v917 = vmin.f32 %v853, 6.0
  %v918 = vmin.f32 %v854, 6.0
  %v919 = vmin.f32 %v855, 6.0
  %v920 = vmin.f32 %v856, 6.0
  %v921 = vmin.f32 %v857, 6.0
  %v922 = vmin.f32 %v858, 6.0
  %v923 = vmin.f32 %v859, 6.0
  %v924 = vmin.f32 %v860, 6.0
  %v925 = vmin.f32 %v861, 6.0
  %v926 = vmin.f32 %v862, 6.0
  %v927 = vmin.f32 %v863, 6.0
  %v928 = vmin.f32 %v864, 6.0
  %v929 = vmin.f32 %v865, 6.0
  %v930 = vmin.f32 %v866, 6.0
  %v931 = vmin.f32 %v867, 6.0
  %v932 = vmin.f32 %v868, 6.0
  %v933 = vmin.f32 %v869, 6.0
  %v934 = vmin.f32 %v870, 6.0
  %v935 = vmin.f32 %v871, 6.0
  %v936 = vmin.f32 %v872, 6.0
  %v937 = vmin.f32 %v873, 6.0
  %vm938 = vcmask 64512
  %939 = vst.msk [vmem:[%s4] sm:$0xff] %vm938, %v874
  %940 = vst.msk [vmem:[%s4 + $0x8] sm:$0xff] %vm938, %v875
  %941 = vst.msk [vmem:[%s4 + $0x10] sm:$0xff] %vm938, %v876
  %942 = vst.msk [vmem:[%s4 + $0x18] sm:$0xff] %vm938, %v877
  %943 = vst.msk [vmem:[%s4 + $0x20] sm:$0xff] %vm938, %v878
  %944 = vst.msk [vmem:[%s4 + $0x28] sm:$0xff] %vm938, %v879
  %945 = vst.msk [vmem:[%s4 + $0x30] sm:$0xff] %vm938, %v880
  %946 = vst.msk [vmem:[%s4 + $0x38] sm:$0xff] %vm938, %v881
  %947 = vst.msk [vmem:[%s4 + $0x40] sm:$0xff] %vm938, %v882
  %948 = vst.msk [vmem:[%s4 + $0x48] sm:$0xff] %vm938, %v883
  %949 = vst.msk [vmem:[%s4 + $0x50] sm:$0xff] %vm938, %v884
  %950 = vst.msk [vmem:[%s4 + $0x58] sm:$0xff] %vm938, %v885
  %951 = vst.msk [vmem:[%s4 + $0x60] sm:$0xff] %vm938, %v886
  %952 = vst.msk [vmem:[%s4 + $0x68] sm:$0xff] %vm938, %v887
  %953 = vst.msk [vmem:[%s4 + $0x70] sm:$0xff] %vm938, %v888
  %954 = vst.msk [vmem:[%s4 + $0x78] sm:$0xff] %vm938, %v889
  %955 = vst.msk [vmem:[%s4 + $0x80] sm:$0xff] %vm938, %v890
  %956 = vst.msk [vmem:[%s4 + $0x88] sm:$0xff] %vm938, %v891
  %957 = vst.msk [vmem:[%s4 + $0x90] sm:$0xff] %vm938, %v892
  %958 = vst.msk [vmem:[%s4 + $0x98] sm:$0xff] %vm938, %v893
  %959 = vst.msk [vmem:[%s4 + $0xa0] sm:$0xff] %vm938, %v894
  %960 = vst.msk [vmem:[%s4 + $0xa8] sm:$0xff] %vm938, %v895
  %961 = vst.msk [vmem:[%s4 + $0xb0] sm:$0xff] %vm938, %v896
  %962 = vst.msk [vmem:[%s4 + $0xb8] sm:$0xff] %vm938, %v897
  %963 = vst.msk [vmem:[%s4 + $0xc0] sm:$0xff] %vm938, %v898
  %964 = vst.msk [vmem:[%s4 + $0xc8] sm:$0xff] %vm938, %v899
  %965 = vst.msk [vmem:[%s4 + $0xd0] sm:$0xff] %vm938, %v900
  %966 = vst.msk [vmem:[%s4 + $0xd8] sm:$0xff] %vm938, %v901
  %967 = vst.msk [vmem:[%s4 + $0xe0] sm:$0xff] %vm938, %v902
  %968 = vst.msk [vmem:[%s4 + $0xe8] sm:$0xff] %vm938, %v903
  %969 = vst.msk [vmem:[%s4 + $0xf0] sm:$0xff] %vm938, %v904
  %970 = vst.msk [vmem:[%s4 + $0xf8] sm:$0xff] %vm938, %v905
  %971 = vst.msk [vmem:[%s4 + $0x100] sm:$0xff] %vm938, %v906
  %972 = vst.msk [vmem:[%s4 + $0x108] sm:$0xff] %vm938, %v907
  %973 = vst.msk [vmem:[%s4 + $0x110] sm:$0xff] %vm938, %v908
  %974 = vst.msk [vmem:[%s4 + $0x118] sm:$0xff] %vm938, %v909
  %975 = vst.msk [vmem:[%s4 + $0x120] sm:$0xff] %vm938, %v910
  %976 = vst.msk [vmem:[%s4 + $0x128] sm:$0xff] %vm938, %v911
  %977 = vst.msk [vmem:[%s4 + $0x130] sm:$0xff] %vm938, %v912
  %978 = vst.msk [vmem:[%s4 + $0x138] sm:$0xff] %vm938, %v913
  %979 = vst.msk [vmem:[%s4 + $0x140] sm:$0xff] %vm938, %v914
  %980 = vst.msk [vmem:[%s4 + $0x148] sm:$0xff] %vm938, %v915
  %981 = vst.msk [vmem:[%s4 + $0x150] sm:$0xff] %vm938, %v916
  %982 = vst.msk [vmem:[%s4 + $0x158] sm:$0xff] %vm938, %v917
  %983 = vst.msk [vmem:[%s4 + $0x160] sm:$0xff] %vm938, %v918
  %984 = vst.msk [vmem:[%s4 + $0x168] sm:$0xff] %vm938, %v919
  %985 = vst.msk [vmem:[%s4 + $0x170] sm:$0xff] %vm938, %v920
  %986 = vst.msk [vmem:[%s4 + $0x178] sm:$0xff] %vm938, %v921
  %987 = vst.msk [vmem:[%s4 + $0x180] sm:$0xff] %vm938, %v922
  %988 = vst.msk [vmem:[%s4 + $0x188] sm:$0xff] %vm938, %v923
  %989 = vst.msk [vmem:[%s4 + $0x190] sm:$0xff] %vm938, %v924
  %990 = vst.msk [vmem:[%s4 + $0x198] sm:$0xff] %vm938, %v925
  %991 = vst.msk [vmem:[%s4 + $0x1a0] sm:$0xff] %vm938, %v926
  %992 = vst.msk [vmem:[%s4 + $0x1a8] sm:$0xff] %vm938, %v927
  %993 = vst.msk [vmem:[%s4 + $0x1b0] sm:$0xff] %vm938, %v928
  %994 = vst.msk [vmem:[%s4 + $0x1b8] sm:$0xff] %vm938, %v929
  %995 = vst.msk [vmem:[%s4 + $0x1c0] sm:$0xff] %vm938, %v930
  %996 = vst.msk [vmem:[%s4 + $0x1c8] sm:$0xff] %vm938, %v931
  %997 = vst.msk [vmem:[%s4 + $0x1d0] sm:$0xff] %vm938, %v932
  %998 = vst.msk [vmem:[%s4 + $0x1d8] sm:$0xff] %vm938, %v933
  %999 = vst.msk [vmem:[%s4 + $0x1e0] sm:$0xff] %vm938, %v934
  %1000 = vst.msk [vmem:[%s4 + $0x1e8] sm:$0xff] %vm938, %v935
  %1001 = vst.msk [vmem:[%s4 + $0x1f0] sm:$0xff] %vm938, %v936
  %1002 = vst.msk [vmem:[%s4 + $0x1f8] sm:$0xff] %vm938, %v937
  // Predicated region
  $region18: #{_lambda_.44} parent=0 // pred_check
    _
  $region19: #{_lambda_.44} parent=0 // pred_check_branch
    %1004 = sbr.rel (0) target = $region21
  $region20: #{_lambda_.44} parent=0 // pred_region
    _
  $region21: #{_lambda_.44} parent=0 // pred_fallthru
    _
  // Predicated region
  $region22: #{_lambda_.44} parent=0 // pred_check
    _
  $region23: #{_lambda_.44} parent=0 // pred_check_branch
    %1006 = sbr.rel (0) target = $region25
  $region24: #{_lambda_.44} parent=0 // pred_region
    _
  $region25: #{_lambda_.44} parent=0 // pred_fallthru
    _

// kernel: _lambda_.45
$region0: #{_lambda_.45}
  #allocation0 [shape = 'u32[]', space=smem, size = 0x4, offset = 0x4, fixed_abs, tag = 'smem constant byte address 0x4 - core index']
  #allocation1 [shape = 'u32[144,128]{1,0:T(1,128)}', space=vmem, size = 0x12000, scoped, tag = 'internal scratch']
  %s0 = inlined_call_operand.vmem [shape: bf16[512,72], index: 0, kind: input, shape index: {}]
  %s1 = inlined_call_operand.vmem [shape: bf16[72,8], index: 1, kind: input, shape index: {}]
  %s2 = inlined_call_operand.vmem [shape: f32[1,8], index: 2, kind: input, shape index: {}]
  %s3 = inlined_call_operand.vmem [shape: f32[1,8], index: 3, kind: input, shape index: {}]
  %s4 = inlined_call_operand.vmem [shape: f32[512,8], index: 4, kind: output, shape index: {}]
  %s5 = sld [smem:[#allocation0]]
  $region26: #{_lambda_.45} parent=0
    _
  %s7 = ssub.s32 1, %s5
  %s8 = scalar_select 0, %s7, %s5
  // Predicated region
  $region2: #{_lambda_.45} parent=0 // pred_check
    _
  $region3: #{_lambda_.45} parent=0 // pred_check_branch
    %10 = sbr.rel (0) target = $region5
  $region4: #{_lambda_.45} parent=0 // pred_region
    _
  $region5: #{_lambda_.45} parent=0 // pred_fallthru
    _
  // Predicated region
  $region6: #{_lambda_.45} parent=0 // pred_check
    _
  $region7: #{_lambda_.45} parent=0 // pred_check_branch
    %12 = sbr.rel (0) target = $region9
  $region8: #{_lambda_.45} parent=0 // pred_region
    _
  $region9: #{_lambda_.45} parent=0 // pred_fallthru
    _
  // Predicated region
  $region10: #{_lambda_.45} parent=0 // pred_check
    _
  $region11: #{_lambda_.45} parent=0 // pred_check_branch
    %14 = sbr.rel (0) target = $region13
  $region12: #{_lambda_.45} parent=0 // pred_region
    _
  $region13: #{_lambda_.45} parent=0 // pred_fallthru
    _
  // Predicated region
  $region14: #{_lambda_.45} parent=0 // pred_check
    _
  $region15: #{_lambda_.45} parent=0 // pred_check_branch
    %16 = sbr.rel (0) target = $region17
  $region16: #{_lambda_.45} parent=0 // pred_region
    _
  $region17: #{_lambda_.45} parent=0 // pred_fallthru
    _
  %v18 = vld [vmem:[%s0] sm:$0xf]
  %v19 = vld [vmem:[%s0 + $0x4] sm:$0xf]
  %v20 = vld [vmem:[%s0 + $0x8] sm:$0xf]
  %v21 = vld [vmem:[%s0 + $0xc] sm:$0xf]
  %v22 = vld [vmem:[%s0 + $0x10] sm:$0xf]
  %v23 = vld [vmem:[%s0 + $0x14] sm:$0xf]
  %v24 = vld [vmem:[%s0 + $0x18] sm:$0xf]
  %v25 = vld [vmem:[%s0 + $0x1c] sm:$0xf]
  %v26 = vld [vmem:[%s0 + $0x20] sm:$0xf]
  %v27 = vld [vmem:[%s0 + $0x24] sm:$0xf]
  %v28 = vld [vmem:[%s0 + $0x28] sm:$0xf]
  %v29 = vld [vmem:[%s0 + $0x2c] sm:$0xf]
  %v30 = vld [vmem:[%s0 + $0x30] sm:$0xf]
  %v31 = vld [vmem:[%s0 + $0x34] sm:$0xf]
  %v32 = vld [vmem:[%s0 + $0x38] sm:$0xf]
  %v33 = vld [vmem:[%s0 + $0x3c] sm:$0xf]
  %v34 = vld [vmem:[%s0 + $0x40] sm:$0xf]
  %v35 = vld [vmem:[%s0 + $0x44] sm:$0xf]
  %v36 = vld [vmem:[%s0 + $0x48] sm:$0xf]
  %v37 = vld [vmem:[%s0 + $0x4c] sm:$0xf]
  %v38 = vld [vmem:[%s0 + $0x50] sm:$0xf]
  %v39 = vld [vmem:[%s0 + $0x54] sm:$0xf]
  %v40 = vld [vmem:[%s0 + $0x58] sm:$0xf]
  %v41 = vld [vmem:[%s0 + $0x5c] sm:$0xf]
  %v42 = vld [vmem:[%s0 + $0x60] sm:$0xf]
  %v43 = vld [vmem:[%s0 + $0x64] sm:$0xf]
  %v44 = vld [vmem:[%s0 + $0x68] sm:$0xf]
  %v45 = vld [vmem:[%s0 + $0x6c] sm:$0xf]
  %v46 = vld [vmem:[%s0 + $0x70] sm:$0xf]
  %v47 = vld [vmem:[%s0 + $0x74] sm:$0xf]
  %v48 = vld [vmem:[%s0 + $0x78] sm:$0xf]
  %v49 = vld [vmem:[%s0 + $0x7c] sm:$0xf]
  %v50 = vld [vmem:[%s0 + $0x80] sm:$0xf]
  %v51 = vld [vmem:[%s0 + $0x84] sm:$0xf]
  %v52 = vld [vmem:[%s0 + $0x88] sm:$0xf]
  %v53 = vld [vmem:[%s0 + $0x8c] sm:$0xf]
  %v54 = vld [vmem:[%s0 + $0x90] sm:$0xf]
  %v55 = vld [vmem:[%s0 + $0x94] sm:$0xf]
  %v56 = vld [vmem:[%s0 + $0x98] sm:$0xf]
  %v57 = vld [vmem:[%s0 + $0x9c] sm:$0xf]
  %v58 = vld [vmem:[%s0 + $0xa0] sm:$0xf]
  %v59 = vld [vmem:[%s0 + $0xa4] sm:$0xf]
  %v60 = vld [vmem:[%s0 + $0xa8] sm:$0xf]
  %v61 = vld [vmem:[%s0 + $0xac] sm:$0xf]
  %v62 = vld [vmem:[%s0 + $0xb0] sm:$0xf]
  %v63 = vld [vmem:[%s0 + $0xb4] sm:$0xf]
  %v64 = vld [vmem:[%s0 + $0xb8] sm:$0xf]
  %v65 = vld [vmem:[%s0 + $0xbc] sm:$0xf]
  %v66 = vld [vmem:[%s0 + $0xc0] sm:$0xf]
  %v67 = vld [vmem:[%s0 + $0xc4] sm:$0xf]
  %v68 = vld [vmem:[%s0 + $0xc8] sm:$0xf]
  %v69 = vld [vmem:[%s0 + $0xcc] sm:$0xf]
  %v70 = vld [vmem:[%s0 + $0xd0] sm:$0xf]
  %v71 = vld [vmem:[%s0 + $0xd4] sm:$0xf]
  %v72 = vld [vmem:[%s0 + $0xd8] sm:$0xf]
  %v73 = vld [vmem:[%s0 + $0xdc] sm:$0xf]
  %v74 = vld [vmem:[%s0 + $0xe0] sm:$0xf]
  %v75 = vld [vmem:[%s0 + $0xe4] sm:$0xf]
  %v76 = vld [vmem:[%s0 + $0xe8] sm:$0xf]
  %v77 = vld [vmem:[%s0 + $0xec] sm:$0xf]
  %v78 = vld [vmem:[%s0 + $0xf0] sm:$0xf]
  %v79 = vld [vmem:[%s0 + $0xf4] sm:$0xf]
  %v80 = vld [vmem:[%s0 + $0xf8] sm:$0xf]
  %v81 = vld [vmem:[%s0 + $0xfc] sm:$0xf]
  %v82 = vld [vmem:[%s1] sm:$0xf]
  %v83 = vld [vmem:[%s1 + $0x4] sm:$0xf]
  %v84 = vld [vmem:[%s1 + $0x8] sm:$0xf]
  %v85 = vld [vmem:[%s1 + $0xc] sm:$0xf]
  %v86 = vld [vmem:[%s1 + $0x10] sm:$0xf]
  %v87 = vld [vmem:[%s1 + $0x14] sm:$0xf]
  %v88 = vld [vmem:[%s1 + $0x18] sm:$0xf]
  %v89 = vld [vmem:[%s1 + $0x1c] sm:$0xf]
  %v90 = vld [vmem:[%s1 + $0x20] sm:$0xf]
  %v155 = vunpack.c.l.b16 %v18
  %v156 = vunpack.c.l.b16 %v19
  %v157 = vunpack.c.l.b16 %v20
  %v158 = vunpack.c.l.b16 %v21
  %v159 = vunpack.c.l.b16 %v22
  %v160 = vunpack.c.l.b16 %v23
  %v161 = vunpack.c.l.b16 %v24
  %v162 = vunpack.c.l.b16 %v25
  %v163 = vunpack.c.l.b16 %v26
  %v164 = vunpack.c.l.b16 %v27
  %v165 = vunpack.c.l.b16 %v28
  %v166 = vunpack.c.l.b16 %v29
  %v167 = vunpack.c.l.b16 %v30
  %v168 = vunpack.c.l.b16 %v31
  %v169 = vunpack.c.l.b16 %v32
  %v170 = vunpack.c.l.b16 %v33
  %v171 = vunpack.c.l.b16 %v34
  %v172 = vunpack.c.l.b16 %v35
  %v173 = vunpack.c.l.b16 %v36
  %v174 = vunpack.c.l.b16 %v37
  %v175 = vunpack.c.l.b16 %v38
  %v176 = vunpack.c.l.b16 %v39
  %v177 = vunpack.c.l.b16 %v40
  %v178 = vunpack.c.l.b16 %v41
  %v179 = vunpack.c.l.b16 %v42
  %v180 = vunpack.c.l.b16 %v43
  %v181 = vunpack.c.l.b16 %v44
  %v182 = vunpack.c.l.b16 %v45
  %v183 = vunpack.c.l.b16 %v46
  %v184 = vunpack.c.l.b16 %v47
  %v185 = vunpack.c.l.b16 %v48
  %v186 = vunpack.c.l.b16 %v49
  %v187 = vunpack.c.l.b16 %v50
  %v188 = vunpack.c.l.b16 %v51
  %v189 = vunpack.c.l.b16 %v52
  %v190 = vunpack.c.l.b16 %v53
  %v191 = vunpack.c.l.b16 %v54
  %v192 = vunpack.c.l.b16 %v55
  %v193 = vunpack.c.l.b16 %v56
  %v194 = vunpack.c.l.b16 %v57
  %v195 = vunpack.c.l.b16 %v58
  %v196 = vunpack.c.l.b16 %v59
  %v197 = vunpack.c.l.b16 %v60
  %v198 = vunpack.c.l.b16 %v61
  %v199 = vunpack.c.l.b16 %v62
  %v200 = vunpack.c.l.b16 %v63
  %v201 = vunpack.c.l.b16 %v64
  %v202 = vunpack.c.l.b16 %v65
  %v203 = vunpack.c.l.b16 %v66
  %v204 = vunpack.c.l.b16 %v67
  %v205 = vunpack.c.l.b16 %v68
  %v206 = vunpack.c.l.b16 %v69
  %v207 = vunpack.c.l.b16 %v70
  %v208 = vunpack.c.l.b16 %v71
  %v209 = vunpack.c.l.b16 %v72
  %v210 = vunpack.c.l.b16 %v73
  %v211 = vunpack.c.l.b16 %v74
  %v212 = vunpack.c.l.b16 %v75
  %v213 = vunpack.c.l.b16 %v76
  %v214 = vunpack.c.l.b16 %v77
  %v215 = vunpack.c.l.b16 %v78
  %v216 = vunpack.c.l.b16 %v79
  %v217 = vunpack.c.l.b16 %v80
  %v218 = vunpack.c.l.b16 %v81
  %v219 = vpack.c.b16 %v156, %v155
  %v220 = vpack.c.b16 %v158, %v157
  %v221 = vpack.c.b16 %v160, %v159
  %v222 = vpack.c.b16 %v162, %v161
  %v223 = vpack.c.b16 %v164, %v163
  %v224 = vpack.c.b16 %v166, %v165
  %v225 = vpack.c.b16 %v168, %v167
  %v226 = vpack.c.b16 %v170, %v169
  %v227 = vpack.c.b16 %v172, %v171
  %v228 = vpack.c.b16 %v174, %v173
  %v229 = vpack.c.b16 %v176, %v175
  %v230 = vpack.c.b16 %v178, %v177
  %v231 = vpack.c.b16 %v180, %v179
  %v232 = vpack.c.b16 %v182, %v181
  %v233 = vpack.c.b16 %v184, %v183
  %v234 = vpack.c.b16 %v186, %v185
  %v235 = vpack.c.b16 %v188, %v187
  %v236 = vpack.c.b16 %v190, %v189
  %v237 = vpack.c.b16 %v192, %v191
  %v238 = vpack.c.b16 %v194, %v193
  %v239 = vpack.c.b16 %v196, %v195
  %v240 = vpack.c.b16 %v198, %v197
  %v241 = vpack.c.b16 %v200, %v199
  %v242 = vpack.c.b16 %v202, %v201
  %v243 = vpack.c.b16 %v204, %v203
  %v244 = vpack.c.b16 %v206, %v205
  %v245 = vpack.c.b16 %v208, %v207
  %v246 = vpack.c.b16 %v210, %v209
  %v247 = vpack.c.b16 %v212, %v211
  %v248 = vpack.c.b16 %v214, %v213
  %v249 = vpack.c.b16 %v216, %v215
  %v250 = vpack.c.b16 %v218, %v217
  %v260 = vunpack.c.l.b16 %v82
  %v261 = vunpack.c.l.b16 %v83
  %v262 = vunpack.c.l.b16 %v84
  %v263 = vunpack.c.l.b16 %v85
  %v264 = vunpack.c.l.b16 %v86
  %v265 = vunpack.c.l.b16 %v87
  %v266 = vunpack.c.l.b16 %v88
  %v267 = vunpack.c.l.b16 %v89
  %v268 = vunpack.c.l.b16 %v90
  %v269 = vpack.c.b16 %v261, %v260
  %v270 = vpack.c.b16 %v263, %v262
  %v271 = vpack.c.b16 %v265, %v264
  %v272 = vpack.c.b16 %v267, %v266
  %v273 = vpack.c.b16 %v268, %v268
  %vm278 = vcmask 588800
  %v280 = vsel %vm278, %v219, 0
  %v283 = vsel %vm278, %v220, 0
  %v286 = vsel %vm278, %v221, 0
  %v289 = vsel %vm278, %v222, 0
  %v292 = vsel %vm278, %v223, 0
  %v295 = vsel %vm278, %v224, 0
  %v298 = vsel %vm278, %v225, 0
  %v301 = vsel %vm278, %v226, 0
  %v304 = vsel %vm278, %v227, 0
  %v307 = vsel %vm278, %v228, 0
  %v310 = vsel %vm278, %v229, 0
  %v313 = vsel %vm278, %v230, 0
  %v316 = vsel %vm278, %v231, 0
  %v319 = vsel %vm278, %v232, 0
  %v322 = vsel %vm278, %v233, 0
  %v325 = vsel %vm278, %v234, 0
  %v328 = vsel %vm278, %v235, 0
  %v331 = vsel %vm278, %v236, 0
  %v334 = vsel %vm278, %v237, 0
  %v337 = vsel %vm278, %v238, 0
  %v340 = vsel %vm278, %v239, 0
  %v343 = vsel %vm278, %v240, 0
  %v346 = vsel %vm278, %v241, 0
  %v349 = vsel %vm278, %v242, 0
  %v352 = vsel %vm278, %v243, 0
  %v355 = vsel %vm278, %v244, 0
  %v358 = vsel %vm278, %v245, 0
  %v361 = vsel %vm278, %v246, 0
  %v364 = vsel %vm278, %v247, 0
  %v367 = vsel %vm278, %v248, 0
  %v370 = vsel %vm278, %v249, 0
  %v373 = vsel %vm278, %v250, 0
  %vm375 = vcmask 1043456
  %v377 = vsel %vm375, %v273, 0
  %379 = vmatprep.subr.bf16.mxu0 0
  %380 = vmatpush1.bf16.msra.mxu0 %v269
  %381 = vmatprep.subr.bf16.mxu0 0
  %382 = vmatpush1.bf16.msra.mxu0 %v270
  %383 = vmatprep.subr.bf16.mxu0 0
  %384 = vmatpush1.bf16.msra.mxu0 %v271
  %385 = vmatprep.subr.bf16.mxu0 0
  %386 = vmatpush1.bf16.msra.mxu0 %v272
  %387 = vmatprep.subr.bf16.mxu0 0
  %388 = vmatpush1.bf16.msra.mxu0 %v377
  %389 = vmatprep.subr.bf16.mxu0 0
  %390 = vmatpush1.bf16.msra.mxu0 0
  %391 = vmatprep.subr.bf16.mxu0 0
  %392 = vmatpush1.bf16.msra.mxu0 0
  %393 = vmatprep.subr.bf16.mxu0 0
  %394 = vmatpush1.bf16.msra.mxu0 0
  %395 = vmatprep.subr.bf16.mxu0 0
  %396 = vmatpush1.bf16.msra.mxu0 0
  %397 = vmatprep.subr.bf16.mxu0 0
  %398 = vmatpush1.bf16.msra.mxu0 0
  %399 = vmatprep.subr.bf16.mxu0 0
  %400 = vmatpush1.bf16.msra.mxu0 0
  %401 = vmatprep.subr.bf16.mxu0 0
  %402 = vmatpush1.bf16.msra.mxu0 0
  %403 = vmatprep.subr.bf16.mxu0 0
  %404 = vmatpush1.bf16.msra.mxu0 0
  %405 = vmatprep.subr.bf16.mxu0 0
  %406 = vmatpush1.bf16.msra.mxu0 0
  %407 = vmatprep.subr.bf16.mxu0 0
  %408 = vmatpush1.bf16.msra.mxu0 0
  %409 = vmatprep.subr.bf16.mxu0 0
  %410 = vmatpush1.bf16.msra.mxu0 0
  %411 = vmatprep.mubr.bf16.mxu0 0
  %412 = vmatmul.mubr.bf16.gmra.mrb[0].mxu0 %v280
  %v413 = vpop.f32.mrb[0].mxu0
  %v414 = vadd.f32 0.0, %v413
  %v415 = vpop.f32.mrb[0].mxu0
  %v416 = vpop.f32.mrb[0].mxu0
  %v417 = vadd.f32 0.0, %v416
  %v418 = vpop.f32.mrb[0].mxu0
  %419 = vmatprep.mubr.bf16.mxu0 0
  %420 = vmatmul.mubr.bf16.gmra.mrb[0].mxu0 %v283
  %v421 = vpop.f32.mrb[0].mxu0
  %v422 = vadd.f32 0.0, %v421
  %v423 = vpop.f32.mrb[0].mxu0
  %v424 = vpop.f32.mrb[0].mxu0
  %v425 = vadd.f32 0.0, %v424
  %v426 = vpop.f32.mrb[0].mxu0
  %427 = vmatprep.mubr.bf16.mxu0 0
  %428 = vmatmul.mubr.bf16.gmra.mrb[0].mxu0 %v286
  %v429 = vpop.f32.mrb[0].mxu0
  %v430 = vadd.f32 0.0, %v429
  %v431 = vpop.f32.mrb[0].mxu0
  %v432 = vpop.f32.mrb[0].mxu0
  %v433 = vadd.f32 0.0, %v432
  %v434 = vpop.f32.mrb[0].mxu0
  %435 = vmatprep.mubr.bf16.mxu0 0
  %436 = vmatmul.mubr.bf16.gmra.mrb[0].mxu0 %v289
  %v437 = vpop.f32.mrb[0].mxu0
  %v438 = vadd.f32 0.0, %v437
  %v439 = vpop.f32.mrb[0].mxu0
  %v440 = vpop.f32.mrb[0].mxu0
  %v441 = vadd.f32 0.0, %v440
  %v442 = vpop.f32.mrb[0].mxu0
  %443 = vmatprep.mubr.bf16.mxu0 0
  %444 = vmatmul.mubr.bf16.gmra.mrb[0].mxu0 %v292
  %v445 = vpop.f32.mrb[0].mxu0
  %v446 = vadd.f32 0.0, %v445
  %v447 = vpop.f32.mrb[0].mxu0
  %v448 = vpop.f32.mrb[0].mxu0
  %v449 = vadd.f32 0.0, %v448
  %v450 = vpop.f32.mrb[0].mxu0
  %451 = vmatprep.mubr.bf16.mxu0 0
  %452 = vmatmul.mubr.bf16.gmra.mrb[0].mxu0 %v295
  %v453 = vpop.f32.mrb[0].mxu0
  %v454 = vadd.f32 0.0, %v453
  %v455 = vpop.f32.mrb[0].mxu0
  %v456 = vpop.f32.mrb[0].mxu0
  %v457 = vadd.f32 0.0, %v456
  %v458 = vpop.f32.mrb[0].mxu0
  %459 = vmatprep.mubr.bf16.mxu0 0
  %460 = vmatmul.mubr.bf16.gmra.mrb[0].mxu0 %v298
  %v461 = vpop.f32.mrb[0].mxu0
  %v462 = vadd.f32 0.0, %v461
  %v463 = vpop.f32.mrb[0].mxu0
  %v464 = vpop.f32.mrb[0].mxu0
  %v465 = vadd.f32 0.0, %v464
  %v466 = vpop.f32.mrb[0].mxu0
  %467 = vmatprep.mubr.bf16.mxu0 0
  %468 = vmatmul.mubr.bf16.gmra.mrb[0].mxu0 %v301
  %v469 = vpop.f32.mrb[0].mxu0
  %v470 = vadd.f32 0.0, %v469
  %v471 = vpop.f32.mrb[0].mxu0
  %v472 = vpop.f32.mrb[0].mxu0
  %v473 = vadd.f32 0.0, %v472
  %v474 = vpop.f32.mrb[0].mxu0
  %475 = vmatprep.mubr.bf16.mxu0 0
  %476 = vmatmul.mubr.bf16.gmra.mrb[0].mxu0 %v304
  %v477 = vpop.f32.mrb[0].mxu0
  %v478 = vadd.f32 0.0, %v477
  %v479 = vpop.f32.mrb[0].mxu0
  %v480 = vpop.f32.mrb[0].mxu0
  %v481 = vadd.f32 0.0, %v480
  %v482 = vpop.f32.mrb[0].mxu0
  %483 = vmatprep.mubr.bf16.mxu0 0
  %484 = vmatmul.mubr.bf16.gmra.mrb[0].mxu0 %v307
  %v485 = vpop.f32.mrb[0].mxu0
  %v486 = vadd.f32 0.0, %v485
  %v487 = vpop.f32.mrb[0].mxu0
  %v488 = vpop.f32.mrb[0].mxu0
  %v489 = vadd.f32 0.0, %v488
  %v490 = vpop.f32.mrb[0].mxu0
  %491 = vmatprep.mubr.bf16.mxu0 0
  %492 = vmatmul.mubr.bf16.gmra.mrb[0].mxu0 %v310
  %v493 = vpop.f32.mrb[0].mxu0
  %v494 = vadd.f32 0.0, %v493
  %v495 = vpop.f32.mrb[0].mxu0
  %v496 = vpop.f32.mrb[0].mxu0
  %v497 = vadd.f32 0.0, %v496
  %v498 = vpop.f32.mrb[0].mxu0
  %499 = vmatprep.mubr.bf16.mxu0 0
  %500 = vmatmul.mubr.bf16.gmra.mrb[0].mxu0 %v313
  %v501 = vpop.f32.mrb[0].mxu0
  %v502 = vadd.f32 0.0, %v501
  %v503 = vpop.f32.mrb[0].mxu0
  %v504 = vpop.f32.mrb[0].mxu0
  %v505 = vadd.f32 0.0, %v504
  %v506 = vpop.f32.mrb[0].mxu0
  %507 = vmatprep.mubr.bf16.mxu0 0
  %508 = vmatmul.mubr.bf16.gmra.mrb[0].mxu0 %v316
  %v509 = vpop.f32.mrb[0].mxu0
  %v510 = vadd.f32 0.0, %v509
  %v511 = vpop.f32.mrb[0].mxu0
  %v512 = vpop.f32.mrb[0].mxu0
  %v513 = vadd.f32 0.0, %v512
  %v514 = vpop.f32.mrb[0].mxu0
  %515 = vmatprep.mubr.bf16.mxu0 0
  %516 = vmatmul.mubr.bf16.gmra.mrb[0].mxu0 %v319
  %v517 = vpop.f32.mrb[0].mxu0
  %v518 = vadd.f32 0.0, %v517
  %v519 = vpop.f32.mrb[0].mxu0
  %v520 = vpop.f32.mrb[0].mxu0
  %v521 = vadd.f32 0.0, %v520
  %v522 = vpop.f32.mrb[0].mxu0
  %523 = vmatprep.mubr.bf16.mxu0 0
  %524 = vmatmul.mubr.bf16.gmra.mrb[0].mxu0 %v322
  %v525 = vpop.f32.mrb[0].mxu0
  %v526 = vadd.f32 0.0, %v525
  %v527 = vpop.f32.mrb[0].mxu0
  %v528 = vpop.f32.mrb[0].mxu0
  %v529 = vadd.f32 0.0, %v528
  %v530 = vpop.f32.mrb[0].mxu0
  %531 = vmatprep.mubr.bf16.mxu0 0
  %532 = vmatmul.mubr.bf16.gmra.mrb[0].mxu0 %v325
  %v533 = vpop.f32.mrb[0].mxu0
  %v534 = vadd.f32 0.0, %v533
  %v535 = vpop.f32.mrb[0].mxu0
  %v536 = vpop.f32.mrb[0].mxu0
  %v537 = vadd.f32 0.0, %v536
  %v538 = vpop.f32.mrb[0].mxu0
  %539 = vmatprep.mubr.bf16.mxu0 0
  %540 = vmatmul.mubr.bf16.gmra.mrb[0].mxu0 %v328
  %v541 = vpop.f32.mrb[0].mxu0
  %v542 = vadd.f32 0.0, %v541
  %v543 = vpop.f32.mrb[0].mxu0
  %v544 = vpop.f32.mrb[0].mxu0
  %v545 = vadd.f32 0.0, %v544
  %v546 = vpop.f32.mrb[0].mxu0
  %547 = vmatprep.mubr.bf16.mxu0 0
  %548 = vmatmul.mubr.bf16.gmra.mrb[0].mxu0 %v331
  %v549 = vpop.f32.mrb[0].mxu0
  %v550 = vadd.f32 0.0, %v549
  %v551 = vpop.f32.mrb[0].mxu0
  %v552 = vpop.f32.mrb[0].mxu0
  %v553 = vadd.f32 0.0, %v552
  %v554 = vpop.f32.mrb[0].mxu0
  %555 = vmatprep.mubr.bf16.mxu0 0
  %556 = vmatmul.mubr.bf16.gmra.mrb[0].mxu0 %v334
  %v557 = vpop.f32.mrb[0].mxu0
  %v558 = vadd.f32 0.0, %v557
  %v559 = vpop.f32.mrb[0].mxu0
  %v560 = vpop.f32.mrb[0].mxu0
  %v561 = vadd.f32 0.0, %v560
  %v562 = vpop.f32.mrb[0].mxu0
  %563 = vmatprep.mubr.bf16.mxu0 0
  %564 = vmatmul.mubr.bf16.gmra.mrb[0].mxu0 %v337
  %v565 = vpop.f32.mrb[0].mxu0
  %v566 = vadd.f32 0.0, %v565
  %v567 = vpop.f32.mrb[0].mxu0
  %v568 = vpop.f32.mrb[0].mxu0
  %v569 = vadd.f32 0.0, %v568
  %v570 = vpop.f32.mrb[0].mxu0
  %571 = vmatprep.mubr.bf16.mxu0 0
  %572 = vmatmul.mubr.bf16.gmra.mrb[0].mxu0 %v340
  %v573 = vpop.f32.mrb[0].mxu0
  %v574 = vadd.f32 0.0, %v573
  %v575 = vpop.f32.mrb[0].mxu0
  %v576 = vpop.f32.mrb[0].mxu0
  %v577 = vadd.f32 0.0, %v576
  %v578 = vpop.f32.mrb[0].mxu0
  %579 = vmatprep.mubr.bf16.mxu0 0
  %580 = vmatmul.mubr.bf16.gmra.mrb[0].mxu0 %v343
  %v581 = vpop.f32.mrb[0].mxu0
  %v582 = vadd.f32 0.0, %v581
  %v583 = vpop.f32.mrb[0].mxu0
  %v584 = vpop.f32.mrb[0].mxu0
  %v585 = vadd.f32 0.0, %v584
  %v586 = vpop.f32.mrb[0].mxu0
  %587 = vmatprep.mubr.bf16.mxu0 0
  %588 = vmatmul.mubr.bf16.gmra.mrb[0].mxu0 %v346
  %v589 = vpop.f32.mrb[0].mxu0
  %v590 = vadd.f32 0.0, %v589
  %v591 = vpop.f32.mrb[0].mxu0
  %v592 = vpop.f32.mrb[0].mxu0
  %v593 = vadd.f32 0.0, %v592
  %v594 = vpop.f32.mrb[0].mxu0
  %595 = vmatprep.mubr.bf16.mxu0 0
  %596 = vmatmul.mubr.bf16.gmra.mrb[0].mxu0 %v349
  %v597 = vpop.f32.mrb[0].mxu0
  %v598 = vadd.f32 0.0, %v597
  %v599 = vpop.f32.mrb[0].mxu0
  %v600 = vpop.f32.mrb[0].mxu0
  %v601 = vadd.f32 0.0, %v600
  %v602 = vpop.f32.mrb[0].mxu0
  %603 = vmatprep.mubr.bf16.mxu0 0
  %604 = vmatmul.mubr.bf16.gmra.mrb[0].mxu0 %v352
  %v605 = vpop.f32.mrb[0].mxu0
  %v606 = vadd.f32 0.0, %v605
  %v607 = vpop.f32.mrb[0].mxu0
  %v608 = vpop.f32.mrb[0].mxu0
  %v609 = vadd.f32 0.0, %v608
  %v610 = vpop.f32.mrb[0].mxu0
  %611 = vmatprep.mubr.bf16.mxu0 0
  %612 = vmatmul.mubr.bf16.gmra.mrb[0].mxu0 %v355
  %v613 = vpop.f32.mrb[0].mxu0
  %v614 = vadd.f32 0.0, %v613
  %v615 = vpop.f32.mrb[0].mxu0
  %v616 = vpop.f32.mrb[0].mxu0
  %v617 = vadd.f32 0.0, %v616
  %v618 = vpop.f32.mrb[0].mxu0
  %619 = vmatprep.mubr.bf16.mxu0 0
  %620 = vmatmul.mubr.bf16.gmra.mrb[0].mxu0 %v358
  %v621 = vpop.f32.mrb[0].mxu0
  %v622 = vadd.f32 0.0, %v621
  %v623 = vpop.f32.mrb[0].mxu0
  %v624 = vpop.f32.mrb[0].mxu0
  %v625 = vadd.f32 0.0, %v624
  %v626 = vpop.f32.mrb[0].mxu0
  %627 = vmatprep.mubr.bf16.mxu0 0
  %628 = vmatmul.mubr.bf16.gmra.mrb[0].mxu0 %v361
  %v629 = vpop.f32.mrb[0].mxu0
  %v630 = vadd.f32 0.0, %v629
  %v631 = vpop.f32.mrb[0].mxu0
  %v632 = vpop.f32.mrb[0].mxu0
  %v633 = vadd.f32 0.0, %v632
  %v634 = vpop.f32.mrb[0].mxu0
  %635 = vmatprep.mubr.bf16.mxu0 0
  %636 = vmatmul.mubr.bf16.gmra.mrb[0].mxu0 %v364
  %v637 = vpop.f32.mrb[0].mxu0
  %v638 = vadd.f32 0.0, %v637
  %v639 = vpop.f32.mrb[0].mxu0
  %v640 = vpop.f32.mrb[0].mxu0
  %v641 = vadd.f32 0.0, %v640
  %v642 = vpop.f32.mrb[0].mxu0
  %643 = vmatprep.mubr.bf16.mxu0 0
  %644 = vmatmul.mubr.bf16.gmra.mrb[0].mxu0 %v367
  %v645 = vpop.f32.mrb[0].mxu0
  %v646 = vadd.f32 0.0, %v645
  %v647 = vpop.f32.mrb[0].mxu0
  %v648 = vpop.f32.mrb[0].mxu0
  %v649 = vadd.f32 0.0, %v648
  %v650 = vpop.f32.mrb[0].mxu0
  %651 = vmatprep.mubr.bf16.mxu0 0
  %652 = vmatmul.mubr.bf16.gmra.mrb[0].mxu0 %v370
  %v653 = vpop.f32.mrb[0].mxu0
  %v654 = vadd.f32 0.0, %v653
  %v655 = vpop.f32.mrb[0].mxu0
  %v656 = vpop.f32.mrb[0].mxu0
  %v657 = vadd.f32 0.0, %v656
  %v658 = vpop.f32.mrb[0].mxu0
  %659 = vmatprep.mubr.bf16.mxu0 0
  %660 = vmatmul.mubr.bf16.gmra.mrb[0].mxu0 %v373
  %v661 = vpop.f32.mrb[0].mxu0
  %v662 = vadd.f32 0.0, %v661
  %v663 = vpop.f32.mrb[0].mxu0
  %v664 = vpop.f32.mrb[0].mxu0
  %v665 = vadd.f32 0.0, %v664
  %v666 = vpop.f32.mrb[0].mxu0
  %667 = vdwg.mxu0
  %v668 = vld [vmem:[%s2] sm:$0x1]
  %v670 = vlaneseq
  %v671 = vshrl.u32 %v670, 7
  %v672 = vsub.s32 0, %v671
  %v673 = vrot.slane %v668, %v672
  %v675 = vmul.f32 %v414, %v673
  %v676 = vmul.f32 %v417, %v673
  %v677 = vmul.f32 %v422, %v673
  %v678 = vmul.f32 %v425, %v673
  %v679 = vmul.f32 %v430, %v673
  %v680 = vmul.f32 %v433, %v673
  %v681 = vmul.f32 %v438, %v673
  %v682 = vmul.f32 %v441, %v673
  %v683 = vmul.f32 %v446, %v673
  %v684 = vmul.f32 %v449, %v673
  %v685 = vmul.f32 %v454, %v673
  %v686 = vmul.f32 %v457, %v673
  %v687 = vmul.f32 %v462, %v673
  %v688 = vmul.f32 %v465, %v673
  %v689 = vmul.f32 %v470, %v673
  %v690 = vmul.f32 %v473, %v673
  %v691 = vmul.f32 %v478, %v673
  %v692 = vmul.f32 %v481, %v673
  %v693 = vmul.f32 %v486, %v673
  %v694 = vmul.f32 %v489, %v673
  %v695 = vmul.f32 %v494, %v673
  %v696 = vmul.f32 %v497, %v673
  %v697 = vmul.f32 %v502, %v673
  %v698 = vmul.f32 %v505, %v673
  %v699 = vmul.f32 %v510, %v673
  %v700 = vmul.f32 %v513, %v673
  %v701 = vmul.f32 %v518, %v673
  %v702 = vmul.f32 %v521, %v673
  %v703 = vmul.f32 %v526, %v673
  %v704 = vmul.f32 %v529, %v673
  %v705 = vmul.f32 %v534, %v673
  %v706 = vmul.f32 %v537, %v673
  %v707 = vmul.f32 %v542, %v673
  %v708 = vmul.f32 %v545, %v673
  %v709 = vmul.f32 %v550, %v673
  %v710 = vmul.f32 %v553, %v673
  %v711 = vmul.f32 %v558, %v673
  %v712 = vmul.f32 %v561, %v673
  %v713 = vmul.f32 %v566, %v673
  %v714 = vmul.f32 %v569, %v673
  %v715 = vmul.f32 %v574, %v673
  %v716 = vmul.f32 %v577, %v673
  %v717 = vmul.f32 %v582, %v673
  %v718 = vmul.f32 %v585, %v673
  %v719 = vmul.f32 %v590, %v673
  %v720 = vmul.f32 %v593, %v673
  %v721 = vmul.f32 %v598, %v673
  %v722 = vmul.f32 %v601, %v673
  %v723 = vmul.f32 %v606, %v673
  %v724 = vmul.f32 %v609, %v673
  %v725 = vmul.f32 %v614, %v673
  %v726 = vmul.f32 %v617, %v673
  %v727 = vmul.f32 %v622, %v673
  %v728 = vmul.f32 %v625, %v673
  %v729 = vmul.f32 %v630, %v673
  %v730 = vmul.f32 %v633, %v673
  %v731 = vmul.f32 %v638, %v673
  %v732 = vmul.f32 %v641, %v673
  %v733 = vmul.f32 %v646, %v673
  %v734 = vmul.f32 %v649, %v673
  %v735 = vmul.f32 %v654, %v673
  %v736 = vmul.f32 %v657, %v673
  %v737 = vmul.f32 %v662, %v673
  %v738 = vmul.f32 %v665, %v673
  %v739 = vld [vmem:[%s3] sm:$0x1]
  %v741 = vlaneseq
  %v742 = vshrl.u32 %v741, 7
  %v743 = vsub.s32 0, %v742
  %v744 = vrot.slane %v739, %v743
  %v746 = vadd.f32 %v675, %v744
  %v747 = vadd.f32 %v676, %v744
  %v748 = vadd.f32 %v677, %v744
  %v749 = vadd.f32 %v678, %v744
  %v750 = vadd.f32 %v679, %v744
  %v751 = vadd.f32 %v680, %v744
  %v752 = vadd.f32 %v681, %v744
  %v753 = vadd.f32 %v682, %v744
  %v754 = vadd.f32 %v683, %v744
  %v755 = vadd.f32 %v684, %v744
  %v756 = vadd.f32 %v685, %v744
  %v757 = vadd.f32 %v686, %v744
  %v758 = vadd.f32 %v687, %v744
  %v759 = vadd.f32 %v688, %v744
  %v760 = vadd.f32 %v689, %v744
  %v761 = vadd.f32 %v690, %v744
  %v762 = vadd.f32 %v691, %v744
  %v763 = vadd.f32 %v692, %v744
  %v764 = vadd.f32 %v693, %v744
  %v765 = vadd.f32 %v694, %v744
  %v766 = vadd.f32 %v695, %v744
  %v767 = vadd.f32 %v696, %v744
  %v768 = vadd.f32 %v697, %v744
  %v769 = vadd.f32 %v698, %v744
  %v770 = vadd.f32 %v699, %v744
  %v771 = vadd.f32 %v700, %v744
  %v772 = vadd.f32 %v701, %v744
  %v773 = vadd.f32 %v702, %v744
  %v774 = vadd.f32 %v703, %v744
  %v775 = vadd.f32 %v704, %v744
  %v776 = vadd.f32 %v705, %v744
  %v777 = vadd.f32 %v706, %v744
  %v778 = vadd.f32 %v707, %v744
  %v779 = vadd.f32 %v708, %v744
  %v780 = vadd.f32 %v709, %v744
  %v781 = vadd.f32 %v710, %v744
  %v782 = vadd.f32 %v711, %v744
  %v783 = vadd.f32 %v712, %v744
  %v784 = vadd.f32 %v713, %v744
  %v785 = vadd.f32 %v714, %v744
  %v786 = vadd.f32 %v715, %v744
  %v787 = vadd.f32 %v716, %v744
  %v788 = vadd.f32 %v717, %v744
  %v789 = vadd.f32 %v718, %v744
  %v790 = vadd.f32 %v719, %v744
  %v791 = vadd.f32 %v720, %v744
  %v792 = vadd.f32 %v721, %v744
  %v793 = vadd.f32 %v722, %v744
  %v794 = vadd.f32 %v723, %v744
  %v795 = vadd.f32 %v724, %v744
  %v796 = vadd.f32 %v725, %v744
  %v797 = vadd.f32 %v726, %v744
  %v798 = vadd.f32 %v727, %v744
  %v799 = vadd.f32 %v728, %v744
  %v800 = vadd.f32 %v729, %v744
  %v801 = vadd.f32 %v730, %v744
  %v802 = vadd.f32 %v731, %v744
  %v803 = vadd.f32 %v732, %v744
  %v804 = vadd.f32 %v733, %v744
  %v805 = vadd.f32 %v734, %v744
  %v806 = vadd.f32 %v735, %v744
  %v807 = vadd.f32 %v736, %v744
  %v808 = vadd.f32 %v737, %v744
  %v809 = vadd.f32 %v738, %v744
  %vm810 = vcmask 64512
  %811 = vst.msk [vmem:[%s4] sm:$0xff] %vm810, %v746
  %812 = vst.msk [vmem:[%s4 + $0x8] sm:$0xff] %vm810, %v747
  %813 = vst.msk [vmem:[%s4 + $0x10] sm:$0xff] %vm810, %v748
  %814 = vst.msk [vmem:[%s4 + $0x18] sm:$0xff] %vm810, %v749
  %815 = vst.msk [vmem:[%s4 + $0x20] sm:$0xff] %vm810, %v750
  %816 = vst.msk [vmem:[%s4 + $0x28] sm:$0xff] %vm810, %v751
  %817 = vst.msk [vmem:[%s4 + $0x30] sm:$0xff] %vm810, %v752
  %818 = vst.msk [vmem:[%s4 + $0x38] sm:$0xff] %vm810, %v753
  %819 = vst.msk [vmem:[%s4 + $0x40] sm:$0xff] %vm810, %v754
  %820 = vst.msk [vmem:[%s4 + $0x48] sm:$0xff] %vm810, %v755
  %821 = vst.msk [vmem:[%s4 + $0x50] sm:$0xff] %vm810, %v756
  %822 = vst.msk [vmem:[%s4 + $0x58] sm:$0xff] %vm810, %v757
  %823 = vst.msk [vmem:[%s4 + $0x60] sm:$0xff] %vm810, %v758
  %824 = vst.msk [vmem:[%s4 + $0x68] sm:$0xff] %vm810, %v759
  %825 = vst.msk [vmem:[%s4 + $0x70] sm:$0xff] %vm810, %v760
  %826 = vst.msk [vmem:[%s4 + $0x78] sm:$0xff] %vm810, %v761
  %827 = vst.msk [vmem:[%s4 + $0x80] sm:$0xff] %vm810, %v762
  %828 = vst.msk [vmem:[%s4 + $0x88] sm:$0xff] %vm810, %v763
  %829 = vst.msk [vmem:[%s4 + $0x90] sm:$0xff] %vm810, %v764
  %830 = vst.msk [vmem:[%s4 + $0x98] sm:$0xff] %vm810, %v765
  %831 = vst.msk [vmem:[%s4 + $0xa0] sm:$0xff] %vm810, %v766
  %832 = vst.msk [vmem:[%s4 + $0xa8] sm:$0xff] %vm810, %v767
  %833 = vst.msk [vmem:[%s4 + $0xb0] sm:$0xff] %vm810, %v768
  %834 = vst.msk [vmem:[%s4 + $0xb8] sm:$0xff] %vm810, %v769
  %835 = vst.msk [vmem:[%s4 + $0xc0] sm:$0xff] %vm810, %v770
  %836 = vst.msk [vmem:[%s4 + $0xc8] sm:$0xff] %vm810, %v771
  %837 = vst.msk [vmem:[%s4 + $0xd0] sm:$0xff] %vm810, %v772
  %838 = vst.msk [vmem:[%s4 + $0xd8] sm:$0xff] %vm810, %v773
  %839 = vst.msk [vmem:[%s4 + $0xe0] sm:$0xff] %vm810, %v774
  %840 = vst.msk [vmem:[%s4 + $0xe8] sm:$0xff] %vm810, %v775
  %841 = vst.msk [vmem:[%s4 + $0xf0] sm:$0xff] %vm810, %v776
  %842 = vst.msk [vmem:[%s4 + $0xf8] sm:$0xff] %vm810, %v777
  %843 = vst.msk [vmem:[%s4 + $0x100] sm:$0xff] %vm810, %v778
  %844 = vst.msk [vmem:[%s4 + $0x108] sm:$0xff] %vm810, %v779
  %845 = vst.msk [vmem:[%s4 + $0x110] sm:$0xff] %vm810, %v780
  %846 = vst.msk [vmem:[%s4 + $0x118] sm:$0xff] %vm810, %v781
  %847 = vst.msk [vmem:[%s4 + $0x120] sm:$0xff] %vm810, %v782
  %848 = vst.msk [vmem:[%s4 + $0x128] sm:$0xff] %vm810, %v783
  %849 = vst.msk [vmem:[%s4 + $0x130] sm:$0xff] %vm810, %v784
  %850 = vst.msk [vmem:[%s4 + $0x138] sm:$0xff] %vm810, %v785
  %851 = vst.msk [vmem:[%s4 + $0x140] sm:$0xff] %vm810, %v786
  %852 = vst.msk [vmem:[%s4 + $0x148] sm:$0xff] %vm810, %v787
  %853 = vst.msk [vmem:[%s4 + $0x150] sm:$0xff] %vm810, %v788
  %854 = vst.msk [vmem:[%s4 + $0x158] sm:$0xff] %vm810, %v789
  %855 = vst.msk [vmem:[%s4 + $0x160] sm:$0xff] %vm810, %v790
  %856 = vst.msk [vmem:[%s4 + $0x168] sm:$0xff] %vm810, %v791
  %857 = vst.msk [vmem:[%s4 + $0x170] sm:$0xff] %vm810, %v792
  %858 = vst.msk [vmem:[%s4 + $0x178] sm:$0xff] %vm810, %v793
  %859 = vst.msk [vmem:[%s4 + $0x180] sm:$0xff] %vm810, %v794
  %860 = vst.msk [vmem:[%s4 + $0x188] sm:$0xff] %vm810, %v795
  %861 = vst.msk [vmem:[%s4 + $0x190] sm:$0xff] %vm810, %v796
  %862 = vst.msk [vmem:[%s4 + $0x198] sm:$0xff] %vm810, %v797
  %863 = vst.msk [vmem:[%s4 + $0x1a0] sm:$0xff] %vm810, %v798
  %864 = vst.msk [vmem:[%s4 + $0x1a8] sm:$0xff] %vm810, %v799
  %865 = vst.msk [vmem:[%s4 + $0x1b0] sm:$0xff] %vm810, %v800
  %866 = vst.msk [vmem:[%s4 + $0x1b8] sm:$0xff] %vm810, %v801
  %867 = vst.msk [vmem:[%s4 + $0x1c0] sm:$0xff] %vm810, %v802
  %868 = vst.msk [vmem:[%s4 + $0x1c8] sm:$0xff] %vm810, %v803
  %869 = vst.msk [vmem:[%s4 + $0x1d0] sm:$0xff] %vm810, %v804
  %870 = vst.msk [vmem:[%s4 + $0x1d8] sm:$0xff] %vm810, %v805
  %871 = vst.msk [vmem:[%s4 + $0x1e0] sm:$0xff] %vm810, %v806
  %872 = vst.msk [vmem:[%s4 + $0x1e8] sm:$0xff] %vm810, %v807
  %873 = vst.msk [vmem:[%s4 + $0x1f0] sm:$0xff] %vm810, %v808
  %874 = vst.msk [vmem:[%s4 + $0x1f8] sm:$0xff] %vm810, %v809
  // Predicated region
  $region18: #{_lambda_.45} parent=0 // pred_check
    _
  $region19: #{_lambda_.45} parent=0 // pred_check_branch
    %876 = sbr.rel (0) target = $region21
  $region20: #{_lambda_.45} parent=0 // pred_region
    _
  $region21: #{_lambda_.45} parent=0 // pred_fallthru
    _
  // Predicated region
  $region22: #{_lambda_.45} parent=0 // pred_check
    _
  $region23: #{_lambda_.45} parent=0 // pred_check_branch
    %878 = sbr.rel (0) target = $region25
  $region24: #{_lambda_.45} parent=0 // pred_region
    _
  $region25: #{_lambda_.45} parent=0 // pred_fallthru
    _

// kernel: _lambda_.46
$region0: #{_lambda_.46}
  #allocation0 [shape = 'u32[]', space=smem, size = 0x4, offset = 0x4, fixed_abs, tag = 'smem constant byte address 0x4 - core index']
  #allocation1 [shape = 'u32[144,128]{1,0:T(1,128)}', space=vmem, size = 0x12000, scoped, tag = 'internal scratch']
  %s0 = inlined_call_operand.vmem [shape: bf16[128,72], index: 0, kind: input, shape index: {}]
  %s1 = inlined_call_operand.vmem [shape: bf16[72,16], index: 1, kind: input, shape index: {}]
  %s2 = inlined_call_operand.vmem [shape: f32[1,16], index: 2, kind: input, shape index: {}]
  %s3 = inlined_call_operand.vmem [shape: f32[1,16], index: 3, kind: input, shape index: {}]
  %s4 = inlined_call_operand.vmem [shape: f32[128,16], index: 4, kind: output, shape index: {}]
  %s5 = sld [smem:[#allocation0]]
  $region26: #{_lambda_.46} parent=0
    _
  %s7 = ssub.s32 1, %s5
  %s8 = scalar_select 0, %s7, %s5
  // Predicated region
  $region2: #{_lambda_.46} parent=0 // pred_check
    _
  $region3: #{_lambda_.46} parent=0 // pred_check_branch
    %10 = sbr.rel (0) target = $region5
  $region4: #{_lambda_.46} parent=0 // pred_region
    _
  $region5: #{_lambda_.46} parent=0 // pred_fallthru
    _
  // Predicated region
  $region6: #{_lambda_.46} parent=0 // pred_check
    _
  $region7: #{_lambda_.46} parent=0 // pred_check_branch
    %12 = sbr.rel (0) target = $region9
  $region8: #{_lambda_.46} parent=0 // pred_region
    _
  $region9: #{_lambda_.46} parent=0 // pred_fallthru
    _
  // Predicated region
  $region10: #{_lambda_.46} parent=0 // pred_check
    _
  $region11: #{_lambda_.46} parent=0 // pred_check_branch
    %14 = sbr.rel (0) target = $region13
  $region12: #{_lambda_.46} parent=0 // pred_region
    _
  $region13: #{_lambda_.46} parent=0 // pred_fallthru
    _
  // Predicated region
  $region14: #{_lambda_.46} parent=0 // pred_check
    _
  $region15: #{_lambda_.46} parent=0 // pred_check_branch
    %16 = sbr.rel (0) target = $region17
  $region16: #{_lambda_.46} parent=0 // pred_region
    _
  $region17: #{_lambda_.46} parent=0 // pred_fallthru
    _
  %v18 = vld [vmem:[%s0] sm:$0xf]
  %v19 = vld [vmem:[%s0 + $0x4] sm:$0xf]
  %v20 = vld [vmem:[%s0 + $0x8] sm:$0xf]
  %v21 = vld [vmem:[%s0 + $0xc] sm:$0xf]
  %v22 = vld [vmem:[%s0 + $0x10] sm:$0xf]
  %v23 = vld [vmem:[%s0 + $0x14] sm:$0xf]
  %v24 = vld [vmem:[%s0 + $0x18] sm:$0xf]
  %v25 = vld [vmem:[%s0 + $0x1c] sm:$0xf]
  %v26 = vld [vmem:[%s0 + $0x20] sm:$0xf]
  %v27 = vld [vmem:[%s0 + $0x24] sm:$0xf]
  %v28 = vld [vmem:[%s0 + $0x28] sm:$0xf]
  %v29 = vld [vmem:[%s0 + $0x2c] sm:$0xf]
  %v30 = vld [vmem:[%s0 + $0x30] sm:$0xf]
  %v31 = vld [vmem:[%s0 + $0x34] sm:$0xf]
  %v32 = vld [vmem:[%s0 + $0x38] sm:$0xf]
  %v33 = vld [vmem:[%s0 + $0x3c] sm:$0xf]
  %v34 = vld [vmem:[%s1] sm:$0xf]
  %v35 = vld [vmem:[%s1 + $0x4] sm:$0xf]
  %v36 = vld [vmem:[%s1 + $0x8] sm:$0xf]
  %v37 = vld [vmem:[%s1 + $0xc] sm:$0xf]
  %v38 = vld [vmem:[%s1 + $0x10] sm:$0xf]
  %v39 = vld [vmem:[%s1 + $0x14] sm:$0xf]
  %v40 = vld [vmem:[%s1 + $0x18] sm:$0xf]
  %v41 = vld [vmem:[%s1 + $0x1c] sm:$0xf]
  %v42 = vld [vmem:[%s1 + $0x20] sm:$0xf]
  %v59 = vunpack.c.l.b16 %v18
  %v60 = vunpack.c.l.b16 %v19
  %v61 = vunpack.c.l.b16 %v20
  %v62 = vunpack.c.l.b16 %v21
  %v63 = vunpack.c.l.b16 %v22
  %v64 = vunpack.c.l.b16 %v23
  %v65 = vunpack.c.l.b16 %v24
  %v66 = vunpack.c.l.b16 %v25
  %v67 = vunpack.c.l.b16 %v26
  %v68 = vunpack.c.l.b16 %v27
  %v69 = vunpack.c.l.b16 %v28
  %v70 = vunpack.c.l.b16 %v29
  %v71 = vunpack.c.l.b16 %v30
  %v72 = vunpack.c.l.b16 %v31
  %v73 = vunpack.c.l.b16 %v32
  %v74 = vunpack.c.l.b16 %v33
  %v75 = vpack.c.b16 %v60, %v59
  %v76 = vpack.c.b16 %v62, %v61
  %v77 = vpack.c.b16 %v64, %v63
  %v78 = vpack.c.b16 %v66, %v65
  %v79 = vpack.c.b16 %v68, %v67
  %v80 = vpack.c.b16 %v70, %v69
  %v81 = vpack.c.b16 %v72, %v71
  %v82 = vpack.c.b16 %v74, %v73
  %v92 = vunpack.c.l.b16 %v34
  %v93 = vunpack.c.l.b16 %v35
  %v94 = vunpack.c.l.b16 %v36
  %v95 = vunpack.c.l.b16 %v37
  %v96 = vunpack.c.l.b16 %v38
  %v97 = vunpack.c.l.b16 %v39
  %v98 = vunpack.c.l.b16 %v40
  %v99 = vunpack.c.l.b16 %v41
  %v100 = vunpack.c.l.b16 %v42
  %v101 = vpack.c.b16 %v93, %v92
  %v102 = vpack.c.b16 %v95, %v94
  %v103 = vpack.c.b16 %v97, %v96
  %v104 = vpack.c.b16 %v99, %v98
  %v105 = vpack.c.b16 %v100, %v100
  %vm110 = vcmask 588800
  %v112 = vsel %vm110, %v75, 0
  %v115 = vsel %vm110, %v76, 0
  %v118 = vsel %vm110, %v77, 0
  %v121 = vsel %vm110, %v78, 0
  %v124 = vsel %vm110, %v79, 0
  %v127 = vsel %vm110, %v80, 0
  %v130 = vsel %vm110, %v81, 0
  %v133 = vsel %vm110, %v82, 0
  %vm135 = vcmask 1043456
  %v137 = vsel %vm135, %v105, 0
  %139 = vmatprep.subr.bf16.mxu0 0
  %140 = vmatpush1.bf16.msra.mxu0 %v101
  %141 = vmatprep.subr.bf16.mxu0 0
  %142 = vmatpush1.bf16.msra.mxu0 %v102
  %143 = vmatprep.subr.bf16.mxu0 0
  %144 = vmatpush1.bf16.msra.mxu0 %v103
  %145 = vmatprep.subr.bf16.mxu0 0
  %146 = vmatpush1.bf16.msra.mxu0 %v104
  %147 = vmatprep.subr.bf16.mxu0 0
  %148 = vmatpush1.bf16.msra.mxu0 %v137
  %149 = vmatprep.subr.bf16.mxu0 0
  %150 = vmatpush1.bf16.msra.mxu0 0
  %151 = vmatprep.subr.bf16.mxu0 0
  %152 = vmatpush1.bf16.msra.mxu0 0
  %153 = vmatprep.subr.bf16.mxu0 0
  %154 = vmatpush1.bf16.msra.mxu0 0
  %155 = vmatprep.subr.bf16.mxu0 0
  %156 = vmatpush1.bf16.msra.mxu0 0
  %157 = vmatprep.subr.bf16.mxu0 0
  %158 = vmatpush1.bf16.msra.mxu0 0
  %159 = vmatprep.subr.bf16.mxu0 0
  %160 = vmatpush1.bf16.msra.mxu0 0
  %161 = vmatprep.subr.bf16.mxu0 0
  %162 = vmatpush1.bf16.msra.mxu0 0
  %163 = vmatprep.subr.bf16.mxu0 0
  %164 = vmatpush1.bf16.msra.mxu0 0
  %165 = vmatprep.subr.bf16.mxu0 0
  %166 = vmatpush1.bf16.msra.mxu0 0
  %167 = vmatprep.subr.bf16.mxu0 0
  %168 = vmatpush1.bf16.msra.mxu0 0
  %169 = vmatprep.subr.bf16.mxu0 0
  %170 = vmatpush1.bf16.msra.mxu0 0
  %171 = vmatprep.mubr.bf16.mxu0 0
  %172 = vmatmul.mubr.bf16.gmra.mrb[0].mxu0 %v112
  %v173 = vpop.f32.mrb[0].mxu0
  %v174 = vadd.f32 0.0, %v173
  %v175 = vpop.f32.mrb[0].mxu0
  %v176 = vpop.f32.mrb[0].mxu0
  %v177 = vadd.f32 0.0, %v176
  %v178 = vpop.f32.mrb[0].mxu0
  %179 = vmatprep.mubr.bf16.mxu0 0
  %180 = vmatmul.mubr.bf16.gmra.mrb[0].mxu0 %v115
  %v181 = vpop.f32.mrb[0].mxu0
  %v182 = vadd.f32 0.0, %v181
  %v183 = vpop.f32.mrb[0].mxu0
  %v184 = vpop.f32.mrb[0].mxu0
  %v185 = vadd.f32 0.0, %v184
  %v186 = vpop.f32.mrb[0].mxu0
  %187 = vmatprep.mubr.bf16.mxu0 0
  %188 = vmatmul.mubr.bf16.gmra.mrb[0].mxu0 %v118
  %v189 = vpop.f32.mrb[0].mxu0
  %v190 = vadd.f32 0.0, %v189
  %v191 = vpop.f32.mrb[0].mxu0
  %v192 = vpop.f32.mrb[0].mxu0
  %v193 = vadd.f32 0.0, %v192
  %v194 = vpop.f32.mrb[0].mxu0
  %195 = vmatprep.mubr.bf16.mxu0 0
  %196 = vmatmul.mubr.bf16.gmra.mrb[0].mxu0 %v121
  %v197 = vpop.f32.mrb[0].mxu0
  %v198 = vadd.f32 0.0, %v197
  %v199 = vpop.f32.mrb[0].mxu0
  %v200 = vpop.f32.mrb[0].mxu0
  %v201 = vadd.f32 0.0, %v200
  %v202 = vpop.f32.mrb[0].mxu0
  %203 = vmatprep.mubr.bf16.mxu0 0
  %204 = vmatmul.mubr.bf16.gmra.mrb[0].mxu0 %v124
  %v205 = vpop.f32.mrb[0].mxu0
  %v206 = vadd.f32 0.0, %v205
  %v207 = vpop.f32.mrb[0].mxu0
  %v208 = vpop.f32.mrb[0].mxu0
  %v209 = vadd.f32 0.0, %v208
  %v210 = vpop.f32.mrb[0].mxu0
  %211 = vmatprep.mubr.bf16.mxu0 0
  %212 = vmatmul.mubr.bf16.gmra.mrb[0].mxu0 %v127
  %v213 = vpop.f32.mrb[0].mxu0
  %v214 = vadd.f32 0.0, %v213
  %v215 = vpop.f32.mrb[0].mxu0
  %v216 = vpop.f32.mrb[0].mxu0
  %v217 = vadd.f32 0.0, %v216
  %v218 = vpop.f32.mrb[0].mxu0
  %219 = vmatprep.mubr.bf16.mxu0 0
  %220 = vmatmul.mubr.bf16.gmra.mrb[0].mxu0 %v130
  %v221 = vpop.f32.mrb[0].mxu0
  %v222 = vadd.f32 0.0, %v221
  %v223 = vpop.f32.mrb[0].mxu0
  %v224 = vpop.f32.mrb[0].mxu0
  %v225 = vadd.f32 0.0, %v224
  %v226 = vpop.f32.mrb[0].mxu0
  %227 = vmatprep.mubr.bf16.mxu0 0
  %228 = vmatmul.mubr.bf16.gmra.mrb[0].mxu0 %v133
  %v229 = vpop.f32.mrb[0].mxu0
  %v230 = vadd.f32 0.0, %v229
  %v231 = vpop.f32.mrb[0].mxu0
  %v232 = vpop.f32.mrb[0].mxu0
  %v233 = vadd.f32 0.0, %v232
  %v234 = vpop.f32.mrb[0].mxu0
  %235 = vdwg.mxu0
  %v236 = vld [vmem:[%s2] sm:$0x1]
  %v238 = vlaneseq
  %v239 = vshrl.u32 %v238, 7
  %v240 = vsub.s32 0, %v239
  %v241 = vrot.slane %v236, %v240
  %v243 = vmul.f32 %v174, %v241
  %v244 = vmul.f32 %v177, %v241
  %v245 = vmul.f32 %v182, %v241
  %v246 = vmul.f32 %v185, %v241
  %v247 = vmul.f32 %v190, %v241
  %v248 = vmul.f32 %v193, %v241
  %v249 = vmul.f32 %v198, %v241
  %v250 = vmul.f32 %v201, %v241
  %v251 = vmul.f32 %v206, %v241
  %v252 = vmul.f32 %v209, %v241
  %v253 = vmul.f32 %v214, %v241
  %v254 = vmul.f32 %v217, %v241
  %v255 = vmul.f32 %v222, %v241
  %v256 = vmul.f32 %v225, %v241
  %v257 = vmul.f32 %v230, %v241
  %v258 = vmul.f32 %v233, %v241
  %v259 = vld [vmem:[%s3] sm:$0x1]
  %v261 = vlaneseq
  %v262 = vshrl.u32 %v261, 7
  %v263 = vsub.s32 0, %v262
  %v264 = vrot.slane %v259, %v263
  %v266 = vadd.f32 %v243, %v264
  %v267 = vadd.f32 %v244, %v264
  %v268 = vadd.f32 %v245, %v264
  %v269 = vadd.f32 %v246, %v264
  %v270 = vadd.f32 %v247, %v264
  %v271 = vadd.f32 %v248, %v264
  %v272 = vadd.f32 %v249, %v264
  %v273 = vadd.f32 %v250, %v264
  %v274 = vadd.f32 %v251, %v264
  %v275 = vadd.f32 %v252, %v264
  %v276 = vadd.f32 %v253, %v264
  %v277 = vadd.f32 %v254, %v264
  %v278 = vadd.f32 %v255, %v264
  %v279 = vadd.f32 %v256, %v264
  %v280 = vadd.f32 %v257, %v264
  %v281 = vadd.f32 %v258, %v264
  %v282 = vmax.f32 %v266, 0.0
  %v283 = vmax.f32 %v267, 0.0
  %v284 = vmax.f32 %v268, 0.0
  %v285 = vmax.f32 %v269, 0.0
  %v286 = vmax.f32 %v270, 0.0
  %v287 = vmax.f32 %v271, 0.0
  %v288 = vmax.f32 %v272, 0.0
  %v289 = vmax.f32 %v273, 0.0
  %v290 = vmax.f32 %v274, 0.0
  %v291 = vmax.f32 %v275, 0.0
  %v292 = vmax.f32 %v276, 0.0
  %v293 = vmax.f32 %v277, 0.0
  %v294 = vmax.f32 %v278, 0.0
  %v295 = vmax.f32 %v279, 0.0
  %v296 = vmax.f32 %v280, 0.0
  %v297 = vmax.f32 %v281, 0.0
  %v298 = vmin.f32 %v282, 6.0
  %v299 = vmin.f32 %v283, 6.0
  %v300 = vmin.f32 %v284, 6.0
  %v301 = vmin.f32 %v285, 6.0
  %v302 = vmin.f32 %v286, 6.0
  %v303 = vmin.f32 %v287, 6.0
  %v304 = vmin.f32 %v288, 6.0
  %v305 = vmin.f32 %v289, 6.0
  %v306 = vmin.f32 %v290, 6.0
  %v307 = vmin.f32 %v291, 6.0
  %v308 = vmin.f32 %v292, 6.0
  %v309 = vmin.f32 %v293, 6.0
  %v310 = vmin.f32 %v294, 6.0
  %v311 = vmin.f32 %v295, 6.0
  %v312 = vmin.f32 %v296, 6.0
  %v313 = vmin.f32 %v297, 6.0
  %vm314 = vcmask 130048
  %315 = vst.msk [vmem:[%s4] sm:$0xff] %vm314, %v298
  %316 = vst.msk [vmem:[%s4 + $0x8] sm:$0xff] %vm314, %v299
  %317 = vst.msk [vmem:[%s4 + $0x10] sm:$0xff] %vm314, %v300
  %318 = vst.msk [vmem:[%s4 + $0x18] sm:$0xff] %vm314, %v301
  %319 = vst.msk [vmem:[%s4 + $0x20] sm:$0xff] %vm314, %v302
  %320 = vst.msk [vmem:[%s4 + $0x28] sm:$0xff] %vm314, %v303
  %321 = vst.msk [vmem:[%s4 + $0x30] sm:$0xff] %vm314, %v304
  %322 = vst.msk [vmem:[%s4 + $0x38] sm:$0xff] %vm314, %v305
  %323 = vst.msk [vmem:[%s4 + $0x40] sm:$0xff] %vm314, %v306
  %324 = vst.msk [vmem:[%s4 + $0x48] sm:$0xff] %vm314, %v307
  %325 = vst.msk [vmem:[%s4 + $0x50] sm:$0xff] %vm314, %v308
  %326 = vst.msk [vmem:[%s4 + $0x58] sm:$0xff] %vm314, %v309
  %327 = vst.msk [vmem:[%s4 + $0x60] sm:$0xff] %vm314, %v310
  %328 = vst.msk [vmem:[%s4 + $0x68] sm:$0xff] %vm314, %v311
  %329 = vst.msk [vmem:[%s4 + $0x70] sm:$0xff] %vm314, %v312
  %330 = vst.msk [vmem:[%s4 + $0x78] sm:$0xff] %vm314, %v313
  // Predicated region
  $region18: #{_lambda_.46} parent=0 // pred_check
    _
  $region19: #{_lambda_.46} parent=0 // pred_check_branch
    %332 = sbr.rel (0) target = $region21
  $region20: #{_lambda_.46} parent=0 // pred_region
    _
  $region21: #{_lambda_.46} parent=0 // pred_fallthru
    _
  // Predicated region
  $region22: #{_lambda_.46} parent=0 // pred_check
    _
  $region23: #{_lambda_.46} parent=0 // pred_check_branch
    %334 = sbr.rel (0) target = $region25
  $region24: #{_lambda_.46} parent=0 // pred_region
    _
  $region25: #{_lambda_.46} parent=0 // pred_fallthru
    _

// kernel: _lambda_.47
$region0: #{_lambda_.47}
  #allocation0 [shape = 'u32[]', space=smem, size = 0x4, offset = 0x4, fixed_abs, tag = 'smem constant byte address 0x4 - core index']
  #allocation1 [shape = 'u32[144,128]{1,0:T(1,128)}', space=vmem, size = 0x12000, scoped, tag = 'internal scratch']
  %s0 = inlined_call_operand.vmem [shape: bf16[128,144], index: 0, kind: input, shape index: {}]
  %s1 = inlined_call_operand.vmem [shape: bf16[144,16], index: 1, kind: input, shape index: {}]
  %s2 = inlined_call_operand.vmem [shape: f32[1,16], index: 2, kind: input, shape index: {}]
  %s3 = inlined_call_operand.vmem [shape: f32[1,16], index: 3, kind: input, shape index: {}]
  %s4 = inlined_call_operand.vmem [shape: f32[128,16], index: 4, kind: output, shape index: {}]
  %s5 = sld [smem:[#allocation0]]
  $region26: #{_lambda_.47} parent=0
    _
  %s7 = ssub.s32 1, %s5
  %s8 = scalar_select 0, %s7, %s5
  // Predicated region
  $region2: #{_lambda_.47} parent=0 // pred_check
    _
  $region3: #{_lambda_.47} parent=0 // pred_check_branch
    %10 = sbr.rel (0) target = $region5
  $region4: #{_lambda_.47} parent=0 // pred_region
    _
  $region5: #{_lambda_.47} parent=0 // pred_fallthru
    _
  // Predicated region
  $region6: #{_lambda_.47} parent=0 // pred_check
    _
  $region7: #{_lambda_.47} parent=0 // pred_check_branch
    %12 = sbr.rel (0) target = $region9
  $region8: #{_lambda_.47} parent=0 // pred_region
    _
  $region9: #{_lambda_.47} parent=0 // pred_fallthru
    _
  // Predicated region
  $region10: #{_lambda_.47} parent=0 // pred_check
    _
  $region11: #{_lambda_.47} parent=0 // pred_check_branch
    %14 = sbr.rel (0) target = $region13
  $region12: #{_lambda_.47} parent=0 // pred_region
    _
  $region13: #{_lambda_.47} parent=0 // pred_fallthru
    _
  // Predicated region
  $region14: #{_lambda_.47} parent=0 // pred_check
    _
  $region15: #{_lambda_.47} parent=0 // pred_check_branch
    %16 = sbr.rel (0) target = $region17
  $region16: #{_lambda_.47} parent=0 // pred_region
    _
  $region17: #{_lambda_.47} parent=0 // pred_fallthru
    _
  %v18 = vld [vmem:[%s0] sm:$0xff]
  %v19 = vld [vmem:[%s0 + $0x8] sm:$0xff]
  %v20 = vld [vmem:[%s0 + $0x10] sm:$0xff]
  %v21 = vld [vmem:[%s0 + $0x18] sm:$0xff]
  %v22 = vld [vmem:[%s0 + $0x20] sm:$0xff]
  %v23 = vld [vmem:[%s0 + $0x28] sm:$0xff]
  %v24 = vld [vmem:[%s0 + $0x30] sm:$0xff]
  %v25 = vld [vmem:[%s0 + $0x38] sm:$0xff]
  %v26 = vld [vmem:[%s0 + $0x40] sm:$0xff]
  %v27 = vld [vmem:[%s0 + $0x48] sm:$0xff]
  %v28 = vld [vmem:[%s0 + $0x50] sm:$0xff]
  %v29 = vld [vmem:[%s0 + $0x58] sm:$0xff]
  %v30 = vld [vmem:[%s0 + $0x60] sm:$0xff]
  %v31 = vld [vmem:[%s0 + $0x68] sm:$0xff]
  %v32 = vld [vmem:[%s0 + $0x70] sm:$0xff]
  %v33 = vld [vmem:[%s0 + $0x78] sm:$0xff]
  %v34 = vld [vmem:[%s1] sm:$0xf]
  %v35 = vld [vmem:[%s1 + $0x4] sm:$0xf]
  %v36 = vld [vmem:[%s1 + $0x8] sm:$0xf]
  %v37 = vld [vmem:[%s1 + $0xc] sm:$0xf]
  %v38 = vld [vmem:[%s1 + $0x10] sm:$0xf]
  %v39 = vld [vmem:[%s1 + $0x14] sm:$0xf]
  %v40 = vld [vmem:[%s1 + $0x18] sm:$0xf]
  %v41 = vld [vmem:[%s1 + $0x1c] sm:$0xf]
  %v42 = vld [vmem:[%s1 + $0x20] sm:$0xf]
  %v43 = vld [vmem:[%s1 + $0x24] sm:$0xf]
  %v44 = vld [vmem:[%s1 + $0x28] sm:$0xf]
  %v45 = vld [vmem:[%s1 + $0x2c] sm:$0xf]
  %v46 = vld [vmem:[%s1 + $0x30] sm:$0xf]
  %v47 = vld [vmem:[%s1 + $0x34] sm:$0xf]
  %v48 = vld [vmem:[%s1 + $0x38] sm:$0xf]
  %v49 = vld [vmem:[%s1 + $0x3c] sm:$0xf]
  %v50 = vld [vmem:[%s1 + $0x40] sm:$0xf]
  %v51 = vld [vmem:[%s1 + $0x44] sm:$0xf]
  %v68 = vunpack.c.l.b16 %v18
  %v69 = vunpack.c.h.b16 %v18
  %v70 = vunpack.c.l.b16 %v19
  %v71 = vunpack.c.h.b16 %v19
  %v72 = vunpack.c.l.b16 %v20
  %v73 = vunpack.c.h.b16 %v20
  %v74 = vunpack.c.l.b16 %v21
  %v75 = vunpack.c.h.b16 %v21
  %v76 = vunpack.c.l.b16 %v22
  %v77 = vunpack.c.h.b16 %v22
  %v78 = vunpack.c.l.b16 %v23
  %v79 = vunpack.c.h.b16 %v23
  %v80 = vunpack.c.l.b16 %v24
  %v81 = vunpack.c.h.b16 %v24
  %v82 = vunpack.c.l.b16 %v25
  %v83 = vunpack.c.h.b16 %v25
  %v84 = vunpack.c.l.b16 %v26
  %v85 = vunpack.c.h.b16 %v26
  %v86 = vunpack.c.l.b16 %v27
  %v87 = vunpack.c.h.b16 %v27
  %v88 = vunpack.c.l.b16 %v28
  %v89 = vunpack.c.h.b16 %v28
  %v90 = vunpack.c.l.b16 %v29
  %v91 = vunpack.c.h.b16 %v29
  %v92 = vunpack.c.l.b16 %v30
  %v93 = vunpack.c.h.b16 %v30
  %v94 = vunpack.c.l.b16 %v31
  %v95 = vunpack.c.h.b16 %v31
  %v96 = vunpack.c.l.b16 %v32
  %v97 = vunpack.c.h.b16 %v32
  %v98 = vunpack.c.l.b16 %v33
  %v99 = vunpack.c.h.b16 %v33
  %v100 = vpack.c.b16 %v70, %v68
  %v101 = vpack.c.b16 %v71, %v69
  %v102 = vpack.c.b16 %v74, %v72
  %v103 = vpack.c.b16 %v75, %v73
  %v104 = vpack.c.b16 %v78, %v76
  %v105 = vpack.c.b16 %v79, %v77
  %v106 = vpack.c.b16 %v82, %v80
  %v107 = vpack.c.b16 %v83, %v81
  %v108 = vpack.c.b16 %v86, %v84
  %v109 = vpack.c.b16 %v87, %v85
  %v110 = vpack.c.b16 %v90, %v88
  %v111 = vpack.c.b16 %v91, %v89
  %v112 = vpack.c.b16 %v94, %v92
  %v113 = vpack.c.b16 %v95, %v93
  %v114 = vpack.c.b16 %v98, %v96
  %v115 = vpack.c.b16 %v99, %v97
  %v142 = vunpack.c.l.b16 %v34
  %v143 = vunpack.c.l.b16 %v35
  %v144 = vunpack.c.l.b16 %v36
  %v145 = vunpack.c.l.b16 %v37
  %v146 = vunpack.c.l.b16 %v38
  %v147 = vunpack.c.l.b16 %v39
  %v148 = vunpack.c.l.b16 %v40
  %v149 = vunpack.c.l.b16 %v41
  %v150 = vunpack.c.l.b16 %v42
  %v151 = vunpack.c.l.b16 %v43
  %v152 = vunpack.c.l.b16 %v44
  %v153 = vunpack.c.l.b16 %v45
  %v154 = vunpack.c.l.b16 %v46
  %v155 = vunpack.c.l.b16 %v47
  %v156 = vunpack.c.l.b16 %v48
  %v157 = vunpack.c.l.b16 %v49
  %v158 = vunpack.c.l.b16 %v50
  %v159 = vunpack.c.l.b16 %v51
  %v160 = vpack.c.b16 %v143, %v142
  %v161 = vpack.c.b16 %v145, %v144
  %v162 = vpack.c.b16 %v147, %v146
  %v163 = vpack.c.b16 %v149, %v148
  %v164 = vpack.c.b16 %v151, %v150
  %v165 = vpack.c.b16 %v153, %v152
  %v166 = vpack.c.b16 %v155, %v154
  %v167 = vpack.c.b16 %v157, %v156
  %v168 = vpack.c.b16 %v159, %v158
  %vm178 = vcmask 130048
  %v180 = vsel %vm178, %v101, 0
  %v183 = vsel %vm178, %v103, 0
  %v186 = vsel %vm178, %v105, 0
  %v189 = vsel %vm178, %v107, 0
  %v192 = vsel %vm178, %v109, 0
  %v195 = vsel %vm178, %v111, 0
  %v198 = vsel %vm178, %v113, 0
  %v201 = vsel %vm178, %v115, 0
  %203 = vmatprep.subr.bf16.mxu0 0
  %204 = vmatpush1.bf16.msra.mxu0 %v160
  %205 = vmatprep.subr.bf16.mxu0 0
  %206 = vmatpush1.bf16.msra.mxu0 %v161
  %207 = vmatprep.subr.bf16.mxu0 0
  %208 = vmatpush1.bf16.msra.mxu0 %v162
  %209 = vmatprep.subr.bf16.mxu0 0
  %210 = vmatpush1.bf16.msra.mxu0 %v163
  %211 = vmatprep.subr.bf16.mxu0 0
  %212 = vmatpush1.bf16.msra.mxu0 %v164
  %213 = vmatprep.subr.bf16.mxu0 0
  %214 = vmatpush1.bf16.msra.mxu0 %v165
  %215 = vmatprep.subr.bf16.mxu0 0
  %216 = vmatpush1.bf16.msra.mxu0 %v166
  %217 = vmatprep.subr.bf16.mxu0 0
  %218 = vmatpush1.bf16.msra.mxu0 %v167
  %219 = vmatprep.subr.bf16.mxu0 0
  %220 = vmatpush1.bf16.msra.mxu0 %v168
  %221 = vmatprep.subr.bf16.mxu0 0
  %222 = vmatpush1.bf16.msra.mxu0 0
  %223 = vmatprep.subr.bf16.mxu0 0
  %224 = vmatpush1.bf16.msra.mxu0 0
  %225 = vmatprep.subr.bf16.mxu0 0
  %226 = vmatpush1.bf16.msra.mxu0 0
  %227 = vmatprep.subr.bf16.mxu0 0
  %228 = vmatpush1.bf16.msra.mxu0 0
  %229 = vmatprep.subr.bf16.mxu0 0
  %230 = vmatpush1.bf16.msra.mxu0 0
  %231 = vmatprep.subr.bf16.mxu0 0
  %232 = vmatpush1.bf16.msra.mxu0 0
  %233 = vmatprep.subr.bf16.mxu0 0
  %234 = vmatpush1.bf16.msra.mxu0 0
  %235 = vmatprep.mubr.bf16.mxu0 %v180
  %236 = vmatmul.mubr.bf16.gmra.mrb[0].mxu0 %v100
  %v237 = vpop.f32.mrb[0].mxu0
  %v238 = vadd.f32 0.0, %v237
  %v239 = vpop.f32.mrb[0].mxu0
  %v240 = vpop.f32.mrb[0].mxu0
  %v241 = vadd.f32 0.0, %v240
  %v242 = vpop.f32.mrb[0].mxu0
  %243 = vmatprep.mubr.bf16.mxu0 %v183
  %244 = vmatmul.mubr.bf16.gmra.mrb[0].mxu0 %v102
  %v245 = vpop.f32.mrb[0].mxu0
  %v246 = vadd.f32 0.0, %v245
  %v247 = vpop.f32.mrb[0].mxu0
  %v248 = vpop.f32.mrb[0].mxu0
  %v249 = vadd.f32 0.0, %v248
  %v250 = vpop.f32.mrb[0].mxu0
  %251 = vmatprep.mubr.bf16.mxu0 %v186
  %252 = vmatmul.mubr.bf16.gmra.mrb[0].mxu0 %v104
  %v253 = vpop.f32.mrb[0].mxu0
  %v254 = vadd.f32 0.0, %v253
  %v255 = vpop.f32.mrb[0].mxu0
  %v256 = vpop.f32.mrb[0].mxu0
  %v257 = vadd.f32 0.0, %v256
  %v258 = vpop.f32.mrb[0].mxu0
  %259 = vmatprep.mubr.bf16.mxu0 %v189
  %260 = vmatmul.mubr.bf16.gmra.mrb[0].mxu0 %v106
  %v261 = vpop.f32.mrb[0].mxu0
  %v262 = vadd.f32 0.0, %v261
  %v263 = vpop.f32.mrb[0].mxu0
  %v264 = vpop.f32.mrb[0].mxu0
  %v265 = vadd.f32 0.0, %v264
  %v266 = vpop.f32.mrb[0].mxu0
  %267 = vmatprep.mubr.bf16.mxu0 %v192
  %268 = vmatmul.mubr.bf16.gmra.mrb[0].mxu0 %v108
  %v269 = vpop.f32.mrb[0].mxu0
  %v270 = vadd.f32 0.0, %v269
  %v271 = vpop.f32.mrb[0].mxu0
  %v272 = vpop.f32.mrb[0].mxu0
  %v273 = vadd.f32 0.0, %v272
  %v274 = vpop.f32.mrb[0].mxu0
  %275 = vmatprep.mubr.bf16.mxu0 %v195
  %276 = vmatmul.mubr.bf16.gmra.mrb[0].mxu0 %v110
  %v277 = vpop.f32.mrb[0].mxu0
  %v278 = vadd.f32 0.0, %v277
  %v279 = vpop.f32.mrb[0].mxu0
  %v280 = vpop.f32.mrb[0].mxu0
  %v281 = vadd.f32 0.0, %v280
  %v282 = vpop.f32.mrb[0].mxu0
  %283 = vmatprep.mubr.bf16.mxu0 %v198
  %284 = vmatmul.mubr.bf16.gmra.mrb[0].mxu0 %v112
  %v285 = vpop.f32.mrb[0].mxu0
  %v286 = vadd.f32 0.0, %v285
  %v287 = vpop.f32.mrb[0].mxu0
  %v288 = vpop.f32.mrb[0].mxu0
  %v289 = vadd.f32 0.0, %v288
  %v290 = vpop.f32.mrb[0].mxu0
  %291 = vmatprep.mubr.bf16.mxu0 %v201
  %292 = vmatmul.mubr.bf16.gmra.mrb[0].mxu0 %v114
  %v293 = vpop.f32.mrb[0].mxu0
  %v294 = vadd.f32 0.0, %v293
  %v295 = vpop.f32.mrb[0].mxu0
  %v296 = vpop.f32.mrb[0].mxu0
  %v297 = vadd.f32 0.0, %v296
  %v298 = vpop.f32.mrb[0].mxu0
  %299 = vdwg.mxu0
  %v300 = vld [vmem:[%s2] sm:$0x1]
  %v302 = vlaneseq
  %v303 = vshrl.u32 %v302, 7
  %v304 = vsub.s32 0, %v303
  %v305 = vrot.slane %v300, %v304
  %v307 = vmul.f32 %v238, %v305
  %v308 = vmul.f32 %v241, %v305
  %v309 = vmul.f32 %v246, %v305
  %v310 = vmul.f32 %v249, %v305
  %v311 = vmul.f32 %v254, %v305
  %v312 = vmul.f32 %v257, %v305
  %v313 = vmul.f32 %v262, %v305
  %v314 = vmul.f32 %v265, %v305
  %v315 = vmul.f32 %v270, %v305
  %v316 = vmul.f32 %v273, %v305
  %v317 = vmul.f32 %v278, %v305
  %v318 = vmul.f32 %v281, %v305
  %v319 = vmul.f32 %v286, %v305
  %v320 = vmul.f32 %v289, %v305
  %v321 = vmul.f32 %v294, %v305
  %v322 = vmul.f32 %v297, %v305
  %v323 = vld [vmem:[%s3] sm:$0x1]
  %v325 = vlaneseq
  %v326 = vshrl.u32 %v325, 7
  %v327 = vsub.s32 0, %v326
  %v328 = vrot.slane %v323, %v327
  %v330 = vadd.f32 %v307, %v328
  %v331 = vadd.f32 %v308, %v328
  %v332 = vadd.f32 %v309, %v328
  %v333 = vadd.f32 %v310, %v328
  %v334 = vadd.f32 %v311, %v328
  %v335 = vadd.f32 %v312, %v328
  %v336 = vadd.f32 %v313, %v328
  %v337 = vadd.f32 %v314, %v328
  %v338 = vadd.f32 %v315, %v328
  %v339 = vadd.f32 %v316, %v328
  %v340 = vadd.f32 %v317, %v328
  %v341 = vadd.f32 %v318, %v328
  %v342 = vadd.f32 %v319, %v328
  %v343 = vadd.f32 %v320, %v328
  %v344 = vadd.f32 %v321, %v328
  %v345 = vadd.f32 %v322, %v328
  %346 = vst.msk [vmem:[%s4] sm:$0xff] %vm178, %v330
  %347 = vst.msk [vmem:[%s4 + $0x8] sm:$0xff] %vm178, %v331
  %348 = vst.msk [vmem:[%s4 + $0x10] sm:$0xff] %vm178, %v332
  %349 = vst.msk [vmem:[%s4 + $0x18] sm:$0xff] %vm178, %v333
  %350 = vst.msk [vmem:[%s4 + $0x20] sm:$0xff] %vm178, %v334
  %351 = vst.msk [vmem:[%s4 + $0x28] sm:$0xff] %vm178, %v335
  %352 = vst.msk [vmem:[%s4 + $0x30] sm:$0xff] %vm178, %v336
  %353 = vst.msk [vmem:[%s4 + $0x38] sm:$0xff] %vm178, %v337
  %354 = vst.msk [vmem:[%s4 + $0x40] sm:$0xff] %vm178, %v338
  %355 = vst.msk [vmem:[%s4 + $0x48] sm:$0xff] %vm178, %v339
  %356 = vst.msk [vmem:[%s4 + $0x50] sm:$0xff] %vm178, %v340
  %357 = vst.msk [vmem:[%s4 + $0x58] sm:$0xff] %vm178, %v341
  %358 = vst.msk [vmem:[%s4 + $0x60] sm:$0xff] %vm178, %v342
  %359 = vst.msk [vmem:[%s4 + $0x68] sm:$0xff] %vm178, %v343
  %360 = vst.msk [vmem:[%s4 + $0x70] sm:$0xff] %vm178, %v344
  %361 = vst.msk [vmem:[%s4 + $0x78] sm:$0xff] %vm178, %v345
  // Predicated region
  $region18: #{_lambda_.47} parent=0 // pred_check
    _
  $region19: #{_lambda_.47} parent=0 // pred_check_branch
    %363 = sbr.rel (0) target = $region21
  $region20: #{_lambda_.47} parent=0 // pred_region
    _
  $region21: #{_lambda_.47} parent=0 // pred_fallthru
    _
  // Predicated region
  $region22: #{_lambda_.47} parent=0 // pred_check
    _
  $region23: #{_lambda_.47} parent=0 // pred_check_branch
    %365 = sbr.rel (0) target = $region25
  $region24: #{_lambda_.47} parent=0 // pred_region
    _
  $region25: #{_lambda_.47} parent=0 // pred_fallthru
    _

// kernel: _lambda_.48
$region0: #{_lambda_.48}
  #allocation0 [shape = 'u32[]', space=smem, size = 0x4, offset = 0x4, fixed_abs, tag = 'smem constant byte address 0x4 - core index']
  #allocation1 [shape = 'u32[144,128]{1,0:T(1,128)}', space=vmem, size = 0x12000, scoped, tag = 'internal scratch']
  %s0 = inlined_call_operand.vmem [shape: bf16[128,8], index: 0, kind: input, shape index: {}]
  %s1 = inlined_call_operand.vmem [shape: bf16[8,16], index: 1, kind: input, shape index: {}]
  %s2 = inlined_call_operand.hbm [shape: f32[1,16], index: 2, kind: input, shape index: {}]
  %s3 = inlined_call_operand.vmem [shape: f32[1,16], index: 3, kind: input, shape index: {}]
  %s4 = inlined_call_operand.vmem [shape: f32[128,16], index: 4, kind: output, shape index: {}]
  %s5 = sld [smem:[#allocation0]]
  $region30: #{_lambda_.48} parent=0
    _
  %s7 = ssub.s32 1, %s5
  %s8 = scalar_select 0, %s7, %s5
  $region1: #{_lambda_.48} parent=0
    #allocation2 [shape = 'u8[512]{0}', space=vmem, size = 0x400, scoped, tag = 'input window, operand 2, single buffered']
    #allocation3 [shape = 's32[1]{0}', space=sflag, size = 0x4, scoped, tag = 'scoped memory for _lambda_.48']
    %9 = vsyncpa [#allocation3], 0
    // Predicated region
    $region2: #{_lambda_.48} parent=1 // pred_check
      _
    $region3: #{_lambda_.48} parent=1 // pred_check_branch
      %11 = sbr.rel (0) target = $region5
    $region4: #{_lambda_.48} parent=1 // pred_region
      _
    $region5: #{_lambda_.48} parent=1 // pred_fallthru
      _
    // Predicated region
    $region6: #{_lambda_.48} parent=1 // pred_check
      _
    $region7: #{_lambda_.48} parent=1 // pred_check_branch
      %13 = sbr.rel (0) target = $region9
    $region8: #{_lambda_.48} parent=1 // pred_region
      _
    $region9: #{_lambda_.48} parent=1 // pred_fallthru
      _
    // Predicated region
    $region10: #{_lambda_.48} parent=1 // pred_check
      _
    $region11: #{_lambda_.48} parent=1 // pred_check_branch
      %15 = sbr.rel (0) target = $region13
    $region12: #{_lambda_.48} parent=1 // pred_region
      %s17 = ssub.s32 16, 16
      %18 = vsyncadd [#allocation3], %s17
      %s20 = sshll.u32 [#allocation2], 4
      %s21 = int_to_ptr.vmem [resolvable:$true] %s20
      %23 = dma.hbm_to_vmem [thread:$0]  %s2, 16, %s21, [#allocation3]
    $region13: #{_lambda_.48} parent=1 // pred_fallthru
      _
    // Predicated region
    $region14: #{_lambda_.48} parent=1 // pred_check
      _
    $region15: #{_lambda_.48} parent=1 // pred_check_branch
      %25 = sbr.rel (0) target = $region17
    $region16: #{_lambda_.48} parent=1 // pred_region
      _
    $region17: #{_lambda_.48} parent=1 // pred_fallthru
      _
    // Predicated region
    $region18: #{_lambda_.48} parent=1 // pred_check
      _
    $region19: #{_lambda_.48} parent=1 // pred_check_branch
      %27 = sbr.rel (0) target = $region21
    $region20: #{_lambda_.48} parent=1 // pred_region
      %28 = dma.done [#allocation3], 16
    $region21: #{_lambda_.48} parent=1 // pred_fallthru
      _
    %v30 = vld [vmem:[%s0] sm:$0xf]
    %v31 = vld [vmem:[%s0 + $0x4] sm:$0xf]
    %v32 = vld [vmem:[%s0 + $0x8] sm:$0xf]
    %v33 = vld [vmem:[%s0 + $0xc] sm:$0xf]
    %v34 = vld [vmem:[%s0 + $0x10] sm:$0xf]
    %v35 = vld [vmem:[%s0 + $0x14] sm:$0xf]
    %v36 = vld [vmem:[%s0 + $0x18] sm:$0xf]
    %v37 = vld [vmem:[%s0 + $0x1c] sm:$0xf]
    %v38 = vld [vmem:[%s0 + $0x20] sm:$0xf]
    %v39 = vld [vmem:[%s0 + $0x24] sm:$0xf]
    %v40 = vld [vmem:[%s0 + $0x28] sm:$0xf]
    %v41 = vld [vmem:[%s0 + $0x2c] sm:$0xf]
    %v42 = vld [vmem:[%s0 + $0x30] sm:$0xf]
    %v43 = vld [vmem:[%s0 + $0x34] sm:$0xf]
    %v44 = vld [vmem:[%s0 + $0x38] sm:$0xf]
    %v45 = vld [vmem:[%s0 + $0x3c] sm:$0xf]
    %v46 = vld [vmem:[%s1] sm:$0xf]
    %v63 = vunpack.c.l.b16 %v30
    %v64 = vunpack.c.l.b16 %v31
    %v65 = vunpack.c.l.b16 %v32
    %v66 = vunpack.c.l.b16 %v33
    %v67 = vunpack.c.l.b16 %v34
    %v68 = vunpack.c.l.b16 %v35
    %v69 = vunpack.c.l.b16 %v36
    %v70 = vunpack.c.l.b16 %v37
    %v71 = vunpack.c.l.b16 %v38
    %v72 = vunpack.c.l.b16 %v39
    %v73 = vunpack.c.l.b16 %v40
    %v74 = vunpack.c.l.b16 %v41
    %v75 = vunpack.c.l.b16 %v42
    %v76 = vunpack.c.l.b16 %v43
    %v77 = vunpack.c.l.b16 %v44
    %v78 = vunpack.c.l.b16 %v45
    %v79 = vpack.c.b16 %v64, %v63
    %v80 = vpack.c.b16 %v66, %v65
    %v81 = vpack.c.b16 %v68, %v67
    %v82 = vpack.c.b16 %v70, %v69
    %v83 = vpack.c.b16 %v72, %v71
    %v84 = vpack.c.b16 %v74, %v73
    %v85 = vpack.c.b16 %v76, %v75
    %v86 = vpack.c.b16 %v78, %v77
    %vm87 = vcmask 64512
    %v89 = vsel %vm87, %v79, 0
    %v92 = vsel %vm87, %v80, 0
    %v95 = vsel %vm87, %v81, 0
    %v98 = vsel %vm87, %v82, 0
    %v101 = vsel %vm87, %v83, 0
    %v104 = vsel %vm87, %v84, 0
    %v107 = vsel %vm87, %v85, 0
    %v110 = vsel %vm87, %v86, 0
    %vm112 = vcmask 1043456
    %v114 = vsel %vm112, %v46, 0
    %116 = vmatprep.subr.bf16.mxu0 0
    %117 = vmatpush1.bf16.msra.mxu0 %v114
    %118 = vmatprep.subr.bf16.mxu0 0
    %119 = vmatpush1.bf16.msra.mxu0 0
    %120 = vmatprep.subr.bf16.mxu0 0
    %121 = vmatpush1.bf16.msra.mxu0 0
    %122 = vmatprep.subr.bf16.mxu0 0
    %123 = vmatpush1.bf16.msra.mxu0 0
    %124 = vmatprep.subr.bf16.mxu0 0
    %125 = vmatpush1.bf16.msra.mxu0 0
    %126 = vmatprep.subr.bf16.mxu0 0
    %127 = vmatpush1.bf16.msra.mxu0 0
    %128 = vmatprep.subr.bf16.mxu0 0
    %129 = vmatpush1.bf16.msra.mxu0 0
    %130 = vmatprep.subr.bf16.mxu0 0
    %131 = vmatpush1.bf16.msra.mxu0 0
    %132 = vmatprep.subr.bf16.mxu0 0
    %133 = vmatpush1.bf16.msra.mxu0 0
    %134 = vmatprep.subr.bf16.mxu0 0
    %135 = vmatpush1.bf16.msra.mxu0 0
    %136 = vmatprep.subr.bf16.mxu0 0
    %137 = vmatpush1.bf16.msra.mxu0 0
    %138 = vmatprep.subr.bf16.mxu0 0
    %139 = vmatpush1.bf16.msra.mxu0 0
    %140 = vmatprep.subr.bf16.mxu0 0
    %141 = vmatpush1.bf16.msra.mxu0 0
    %142 = vmatprep.subr.bf16.mxu0 0
    %143 = vmatpush1.bf16.msra.mxu0 0
    %144 = vmatprep.subr.bf16.mxu0 0
    %145 = vmatpush1.bf16.msra.mxu0 0
    %146 = vmatprep.subr.bf16.mxu0 0
    %147 = vmatpush1.bf16.msra.mxu0 0
    %148 = vmatprep.mubr.bf16.mxu0 0
    %149 = vmatmul.mubr.bf16.gmra.mrb[0].mxu0 %v89
    %v150 = vpop.f32.mrb[0].mxu0
    %v151 = vadd.f32 0.0, %v150
    %v152 = vpop.f32.mrb[0].mxu0
    %v153 = vpop.f32.mrb[0].mxu0
    %v154 = vadd.f32 0.0, %v153
    %v155 = vpop.f32.mrb[0].mxu0
    %156 = vmatprep.mubr.bf16.mxu0 0
    %157 = vmatmul.mubr.bf16.gmra.mrb[0].mxu0 %v92
    %v158 = vpop.f32.mrb[0].mxu0
    %v159 = vadd.f32 0.0, %v158
    %v160 = vpop.f32.mrb[0].mxu0
    %v161 = vpop.f32.mrb[0].mxu0
    %v162 = vadd.f32 0.0, %v161
    %v163 = vpop.f32.mrb[0].mxu0
    %164 = vmatprep.mubr.bf16.mxu0 0
    %165 = vmatmul.mubr.bf16.gmra.mrb[0].mxu0 %v95
    %v166 = vpop.f32.mrb[0].mxu0
    %v167 = vadd.f32 0.0, %v166
    %v168 = vpop.f32.mrb[0].mxu0
    %v169 = vpop.f32.mrb[0].mxu0
    %v170 = vadd.f32 0.0, %v169
    %v171 = vpop.f32.mrb[0].mxu0
    %172 = vmatprep.mubr.bf16.mxu0 0
    %173 = vmatmul.mubr.bf16.gmra.mrb[0].mxu0 %v98
    %v174 = vpop.f32.mrb[0].mxu0
    %v175 = vadd.f32 0.0, %v174
    %v176 = vpop.f32.mrb[0].mxu0
    %v177 = vpop.f32.mrb[0].mxu0
    %v178 = vadd.f32 0.0, %v177
    %v179 = vpop.f32.mrb[0].mxu0
    %180 = vmatprep.mubr.bf16.mxu0 0
    %181 = vmatmul.mubr.bf16.gmra.mrb[0].mxu0 %v101
    %v182 = vpop.f32.mrb[0].mxu0
    %v183 = vadd.f32 0.0, %v182
    %v184 = vpop.f32.mrb[0].mxu0
    %v185 = vpop.f32.mrb[0].mxu0
    %v186 = vadd.f32 0.0, %v185
    %v187 = vpop.f32.mrb[0].mxu0
    %188 = vmatprep.mubr.bf16.mxu0 0
    %189 = vmatmul.mubr.bf16.gmra.mrb[0].mxu0 %v104
    %v190 = vpop.f32.mrb[0].mxu0
    %v191 = vadd.f32 0.0, %v190
    %v192 = vpop.f32.mrb[0].mxu0
    %v193 = vpop.f32.mrb[0].mxu0
    %v194 = vadd.f32 0.0, %v193
    %v195 = vpop.f32.mrb[0].mxu0
    %196 = vmatprep.mubr.bf16.mxu0 0
    %197 = vmatmul.mubr.bf16.gmra.mrb[0].mxu0 %v107
    %v198 = vpop.f32.mrb[0].mxu0
    %v199 = vadd.f32 0.0, %v198
    %v200 = vpop.f32.mrb[0].mxu0
    %v201 = vpop.f32.mrb[0].mxu0
    %v202 = vadd.f32 0.0, %v201
    %v203 = vpop.f32.mrb[0].mxu0
    %204 = vmatprep.mubr.bf16.mxu0 0
    %205 = vmatmul.mubr.bf16.gmra.mrb[0].mxu0 %v110
    %v206 = vpop.f32.mrb[0].mxu0
    %v207 = vadd.f32 0.0, %v206
    %v208 = vpop.f32.mrb[0].mxu0
    %v209 = vpop.f32.mrb[0].mxu0
    %v210 = vadd.f32 0.0, %v209
    %v211 = vpop.f32.mrb[0].mxu0
    %212 = vdwg.mxu0
    %v213 = vld [vmem:[#allocation2] sm:$0x1]
    %v215 = vlaneseq
    %v216 = vshrl.u32 %v215, 7
    %v217 = vsub.s32 0, %v216
    %v218 = vrot.slane %v213, %v217
    %v220 = vmul.f32 %v151, %v218
    %v221 = vmul.f32 %v154, %v218
    %v222 = vmul.f32 %v159, %v218
    %v223 = vmul.f32 %v162, %v218
    %v224 = vmul.f32 %v167, %v218
    %v225 = vmul.f32 %v170, %v218
    %v226 = vmul.f32 %v175, %v218
    %v227 = vmul.f32 %v178, %v218
    %v228 = vmul.f32 %v183, %v218
    %v229 = vmul.f32 %v186, %v218
    %v230 = vmul.f32 %v191, %v218
    %v231 = vmul.f32 %v194, %v218
    %v232 = vmul.f32 %v199, %v218
    %v233 = vmul.f32 %v202, %v218
    %v234 = vmul.f32 %v207, %v218
    %v235 = vmul.f32 %v210, %v218
    %v236 = vld [vmem:[%s3] sm:$0x1]
    %v238 = vlaneseq
    %v239 = vshrl.u32 %v238, 7
    %v240 = vsub.s32 0, %v239
    %v241 = vrot.slane %v236, %v240
    %v243 = vadd.f32 %v220, %v241
    %v244 = vadd.f32 %v221, %v241
    %v245 = vadd.f32 %v222, %v241
    %v246 = vadd.f32 %v223, %v241
    %v247 = vadd.f32 %v224, %v241
    %v248 = vadd.f32 %v225, %v241
    %v249 = vadd.f32 %v226, %v241
    %v250 = vadd.f32 %v227, %v241
    %v251 = vadd.f32 %v228, %v241
    %v252 = vadd.f32 %v229, %v241
    %v253 = vadd.f32 %v230, %v241
    %v254 = vadd.f32 %v231, %v241
    %v255 = vadd.f32 %v232, %v241
    %v256 = vadd.f32 %v233, %v241
    %v257 = vadd.f32 %v234, %v241
    %v258 = vadd.f32 %v235, %v241
    %v259 = vmax.f32 %v243, 0.0
    %v260 = vmax.f32 %v244, 0.0
    %v261 = vmax.f32 %v245, 0.0
    %v262 = vmax.f32 %v246, 0.0
    %v263 = vmax.f32 %v247, 0.0
    %v264 = vmax.f32 %v248, 0.0
    %v265 = vmax.f32 %v249, 0.0
    %v266 = vmax.f32 %v250, 0.0
    %v267 = vmax.f32 %v251, 0.0
    %v268 = vmax.f32 %v252, 0.0
    %v269 = vmax.f32 %v253, 0.0
    %v270 = vmax.f32 %v254, 0.0
    %v271 = vmax.f32 %v255, 0.0
    %v272 = vmax.f32 %v256, 0.0
    %v273 = vmax.f32 %v257, 0.0
    %v274 = vmax.f32 %v258, 0.0
    %v275 = vmin.f32 %v259, 6.0
    %v276 = vmin.f32 %v260, 6.0
    %v277 = vmin.f32 %v261, 6.0
    %v278 = vmin.f32 %v262, 6.0
    %v279 = vmin.f32 %v263, 6.0
    %v280 = vmin.f32 %v264, 6.0
    %v281 = vmin.f32 %v265, 6.0
    %v282 = vmin.f32 %v266, 6.0
    %v283 = vmin.f32 %v267, 6.0
    %v284 = vmin.f32 %v268, 6.0
    %v285 = vmin.f32 %v269, 6.0
    %v286 = vmin.f32 %v270, 6.0
    %v287 = vmin.f32 %v271, 6.0
    %v288 = vmin.f32 %v272, 6.0
    %v289 = vmin.f32 %v273, 6.0
    %v290 = vmin.f32 %v274, 6.0
    %vm291 = vcmask 130048
    %292 = vst.msk [vmem:[%s4] sm:$0xff] %vm291, %v275
    %293 = vst.msk [vmem:[%s4 + $0x8] sm:$0xff] %vm291, %v276
    %294 = vst.msk [vmem:[%s4 + $0x10] sm:$0xff] %vm291, %v277
    %295 = vst.msk [vmem:[%s4 + $0x18] sm:$0xff] %vm291, %v278
    %296 = vst.msk [vmem:[%s4 + $0x20] sm:$0xff] %vm291, %v279
    %297 = vst.msk [vmem:[%s4 + $0x28] sm:$0xff] %vm291, %v280
    %298 = vst.msk [vmem:[%s4 + $0x30] sm:$0xff] %vm291, %v281
    %299 = vst.msk [vmem:[%s4 + $0x38] sm:$0xff] %vm291, %v282
    %300 = vst.msk [vmem:[%s4 + $0x40] sm:$0xff] %vm291, %v283
    %301 = vst.msk [vmem:[%s4 + $0x48] sm:$0xff] %vm291, %v284
    %302 = vst.msk [vmem:[%s4 + $0x50] sm:$0xff] %vm291, %v285
    %303 = vst.msk [vmem:[%s4 + $0x58] sm:$0xff] %vm291, %v286
    %304 = vst.msk [vmem:[%s4 + $0x60] sm:$0xff] %vm291, %v287
    %305 = vst.msk [vmem:[%s4 + $0x68] sm:$0xff] %vm291, %v288
    %306 = vst.msk [vmem:[%s4 + $0x70] sm:$0xff] %vm291, %v289
    %307 = vst.msk [vmem:[%s4 + $0x78] sm:$0xff] %vm291, %v290
    // Predicated region
    $region22: #{_lambda_.48} parent=1 // pred_check
      _
    $region23: #{_lambda_.48} parent=1 // pred_check_branch
      %309 = sbr.rel (0) target = $region25
    $region24: #{_lambda_.48} parent=1 // pred_region
      _
    $region25: #{_lambda_.48} parent=1 // pred_fallthru
      _
    // Predicated region
    $region26: #{_lambda_.48} parent=1 // pred_check
      _
    $region27: #{_lambda_.48} parent=1 // pred_check_branch
      %311 = sbr.rel (0) target = $region29
    $region28: #{_lambda_.48} parent=1 // pred_region
      _
    $region29: #{_lambda_.48} parent=1 // pred_fallthru
      _
    %312 = vsyncpa [#allocation3], 1

// kernel: _lambda_.49
$region0: #{_lambda_.49}
  #allocation0 [shape = 'u32[]', space=smem, size = 0x4, offset = 0x4, fixed_abs, tag = 'smem constant byte address 0x4 - core index']
  #allocation1 [shape = 'u32[144,128]{1,0:T(1,128)}', space=vmem, size = 0x12000, scoped, tag = 'internal scratch']
  %s0 = inlined_call_operand.vmem [shape: bf16[32,144], index: 0, kind: input, shape index: {}]
  %s1 = inlined_call_operand.vmem [shape: bf16[144,32], index: 1, kind: input, shape index: {}]
  %s2 = inlined_call_operand.hbm [shape: f32[1,32], index: 2, kind: input, shape index: {}]
  %s3 = inlined_call_operand.hbm [shape: f32[1,32], index: 3, kind: input, shape index: {}]
  %s4 = inlined_call_operand.vmem [shape: f32[32,32], index: 4, kind: output, shape index: {}]
  %s5 = sld [smem:[#allocation0]]
  $region34: #{_lambda_.49} parent=0
    _
  %s7 = ssub.s32 1, %s5
  %s8 = scalar_select 0, %s7, %s5
  $region1: #{_lambda_.49} parent=0
    #allocation2 [shape = 'u8[512]{0}', space=vmem, size = 0x400, scoped, tag = 'input window, operand 2, single buffered']
    #allocation3 [shape = 's32[1]{0}', space=sflag, size = 0x4, scoped, tag = 'scoped memory for _lambda_.49']
    #allocation4 [shape = 'u8[512]{0}', space=vmem, size = 0x400, scoped, tag = 'input window, operand 3, single buffered']
    #allocation5 [shape = 's32[1]{0}', space=sflag, size = 0x4, scoped, tag = 'scoped memory for _lambda_.49']
    %9 = vsyncpa [#allocation3], 0
    %10 = vsyncpa [#allocation5], 0
    // Predicated region
    $region2: #{_lambda_.49} parent=1 // pred_check
      _
    $region3: #{_lambda_.49} parent=1 // pred_check_branch
      %12 = sbr.rel (0) target = $region5
    $region4: #{_lambda_.49} parent=1 // pred_region
      _
    $region5: #{_lambda_.49} parent=1 // pred_fallthru
      _
    // Predicated region
    $region6: #{_lambda_.49} parent=1 // pred_check
      _
    $region7: #{_lambda_.49} parent=1 // pred_check_branch
      %14 = sbr.rel (0) target = $region9
    $region8: #{_lambda_.49} parent=1 // pred_region
      _
    $region9: #{_lambda_.49} parent=1 // pred_fallthru
      _
    // Predicated region
    $region10: #{_lambda_.49} parent=1 // pred_check
      _
    $region11: #{_lambda_.49} parent=1 // pred_check_branch
      %16 = sbr.rel (0) target = $region13
    $region12: #{_lambda_.49} parent=1 // pred_region
      %s18 = ssub.s32 16, 16
      %19 = vsyncadd [#allocation3], %s18
      %s21 = sshll.u32 [#allocation2], 4
      %s22 = int_to_ptr.vmem [resolvable:$true] %s21
      %24 = dma.hbm_to_vmem [thread:$0]  %s2, 16, %s22, [#allocation3]
    $region13: #{_lambda_.49} parent=1 // pred_fallthru
      _
    // Predicated region
    $region14: #{_lambda_.49} parent=1 // pred_check
      _
    $region15: #{_lambda_.49} parent=1 // pred_check_branch
      %26 = sbr.rel (0) target = $region17
    $region16: #{_lambda_.49} parent=1 // pred_region
      %s28 = ssub.s32 16, 16
      %29 = vsyncadd [#allocation5], %s28
      %s31 = sshll.u32 [#allocation4], 4
      %s32 = int_to_ptr.vmem [resolvable:$true] %s31
      %34 = dma.hbm_to_vmem [thread:$0]  %s3, 16, %s32, [#allocation5]
    $region17: #{_lambda_.49} parent=1 // pred_fallthru
      _
    // Predicated region
    $region18: #{_lambda_.49} parent=1 // pred_check
      _
    $region19: #{_lambda_.49} parent=1 // pred_check_branch
      %36 = sbr.rel (0) target = $region21
    $region20: #{_lambda_.49} parent=1 // pred_region
      %37 = dma.done [#allocation3], 16
    $region21: #{_lambda_.49} parent=1 // pred_fallthru
      _
    // Predicated region
    $region22: #{_lambda_.49} parent=1 // pred_check
      _
    $region23: #{_lambda_.49} parent=1 // pred_check_branch
      %39 = sbr.rel (0) target = $region25
    $region24: #{_lambda_.49} parent=1 // pred_region
      %40 = dma.done [#allocation5], 16
    $region25: #{_lambda_.49} parent=1 // pred_fallthru
      _
    %v42 = vld [vmem:[%s0] sm:$0xff]
    %v43 = vld [vmem:[%s0 + $0x8] sm:$0xff]
    %v44 = vld [vmem:[%s0 + $0x10] sm:$0xff]
    %v45 = vld [vmem:[%s0 + $0x18] sm:$0xff]
    %v46 = vld [vmem:[%s1] sm:$0xf]
    %v47 = vld [vmem:[%s1 + $0x4] sm:$0xf]
    %v48 = vld [vmem:[%s1 + $0x8] sm:$0xf]
    %v49 = vld [vmem:[%s1 + $0xc] sm:$0xf]
    %v50 = vld [vmem:[%s1 + $0x10] sm:$0xf]
    %v51 = vld [vmem:[%s1 + $0x14] sm:$0xf]
    %v52 = vld [vmem:[%s1 + $0x18] sm:$0xf]
    %v53 = vld [vmem:[%s1 + $0x1c] sm:$0xf]
    %v54 = vld [vmem:[%s1 + $0x20] sm:$0xf]
    %v55 = vld [vmem:[%s1 + $0x24] sm:$0xf]
    %v56 = vld [vmem:[%s1 + $0x28] sm:$0xf]
    %v57 = vld [vmem:[%s1 + $0x2c] sm:$0xf]
    %v58 = vld [vmem:[%s1 + $0x30] sm:$0xf]
    %v59 = vld [vmem:[%s1 + $0x34] sm:$0xf]
    %v60 = vld [vmem:[%s1 + $0x38] sm:$0xf]
    %v61 = vld [vmem:[%s1 + $0x3c] sm:$0xf]
    %v62 = vld [vmem:[%s1 + $0x40] sm:$0xf]
    %v63 = vld [vmem:[%s1 + $0x44] sm:$0xf]
    %v68 = vunpack.c.l.b16 %v42
    %v69 = vunpack.c.h.b16 %v42
    %v70 = vunpack.c.l.b16 %v43
    %v71 = vunpack.c.h.b16 %v43
    %v72 = vunpack.c.l.b16 %v44
    %v73 = vunpack.c.h.b16 %v44
    %v74 = vunpack.c.l.b16 %v45
    %v75 = vunpack.c.h.b16 %v45
    %v76 = vpack.c.b16 %v70, %v68
    %v77 = vpack.c.b16 %v71, %v69
    %v78 = vpack.c.b16 %v74, %v72
    %v79 = vpack.c.b16 %v75, %v73
    %v100 = vunpack.c.l.b16 %v46
    %v101 = vunpack.c.l.b16 %v47
    %v102 = vunpack.c.l.b16 %v48
    %v103 = vunpack.c.l.b16 %v49
    %v104 = vunpack.c.l.b16 %v50
    %v105 = vunpack.c.l.b16 %v51
    %v106 = vunpack.c.l.b16 %v52
    %v107 = vunpack.c.l.b16 %v53
    %v108 = vunpack.c.l.b16 %v54
    %v109 = vunpack.c.l.b16 %v55
    %v110 = vunpack.c.l.b16 %v56
    %v111 = vunpack.c.l.b16 %v57
    %v112 = vunpack.c.l.b16 %v58
    %v113 = vunpack.c.l.b16 %v59
    %v114 = vunpack.c.l.b16 %v60
    %v115 = vunpack.c.l.b16 %v61
    %v116 = vunpack.c.l.b16 %v62
    %v117 = vunpack.c.l.b16 %v63
    %v118 = vpack.c.b16 %v101, %v100
    %v119 = vpack.c.b16 %v103, %v102
    %v120 = vpack.c.b16 %v105, %v104
    %v121 = vpack.c.b16 %v107, %v106
    %v122 = vpack.c.b16 %v109, %v108
    %v123 = vpack.c.b16 %v111, %v110
    %v124 = vpack.c.b16 %v113, %v112
    %v125 = vpack.c.b16 %v115, %v114
    %v126 = vpack.c.b16 %v117, %v116
    %vm136 = vcmask 130048
    %v138 = vsel %vm136, %v77, 0
    %v141 = vsel %vm136, %v79, 0
    %143 = vmatprep.subr.bf16.mxu0 0
    %144 = vmatpush1.bf16.msra.mxu0 %v118
    %145 = vmatprep.subr.bf16.mxu0 0
    %146 = vmatpush1.bf16.msra.mxu0 %v119
    %147 = vmatprep.subr.bf16.mxu0 0
    %148 = vmatpush1.bf16.msra.mxu0 %v120
    %149 = vmatprep.subr.bf16.mxu0 0
    %150 = vmatpush1.bf16.msra.mxu0 %v121
    %151 = vmatprep.subr.bf16.mxu0 0
    %152 = vmatpush1.bf16.msra.mxu0 %v122
    %153 = vmatprep.subr.bf16.mxu0 0
    %154 = vmatpush1.bf16.msra.mxu0 %v123
    %155 = vmatprep.subr.bf16.mxu0 0
    %156 = vmatpush1.bf16.msra.mxu0 %v124
    %157 = vmatprep.subr.bf16.mxu0 0
    %158 = vmatpush1.bf16.msra.mxu0 %v125
    %159 = vmatprep.subr.bf16.mxu0 0
    %160 = vmatpush1.bf16.msra.mxu0 %v126
    %161 = vmatprep.subr.bf16.mxu0 0
    %162 = vmatpush1.bf16.msra.mxu0 0
    %163 = vmatprep.subr.bf16.mxu0 0
    %164 = vmatpush1.bf16.msra.mxu0 0
    %165 = vmatprep.subr.bf16.mxu0 0
    %166 = vmatpush1.bf16.msra.mxu0 0
    %167 = vmatprep.subr.bf16.mxu0 0
    %168 = vmatpush1.bf16.msra.mxu0 0
    %169 = vmatprep.subr.bf16.mxu0 0
    %170 = vmatpush1.bf16.msra.mxu0 0
    %171 = vmatprep.subr.bf16.mxu0 0
    %172 = vmatpush1.bf16.msra.mxu0 0
    %173 = vmatprep.subr.bf16.mxu0 0
    %174 = vmatpush1.bf16.msra.mxu0 0
    %175 = vmatprep.mubr.bf16.mxu0 %v138
    %176 = vmatmul.mubr.bf16.gmra.mrb[0].mxu0 %v76
    %v177 = vpop.f32.mrb[0].mxu0
    %v178 = vadd.f32 0.0, %v177
    %v179 = vpop.f32.mrb[0].mxu0
    %v180 = vpop.f32.mrb[0].mxu0
    %v181 = vadd.f32 0.0, %v180
    %v182 = vpop.f32.mrb[0].mxu0
    %183 = vmatprep.mubr.bf16.mxu0 %v141
    %184 = vmatmul.mubr.bf16.gmra.mrb[0].mxu0 %v78
    %v185 = vpop.f32.mrb[0].mxu0
    %v186 = vadd.f32 0.0, %v185
    %v187 = vpop.f32.mrb[0].mxu0
    %v188 = vpop.f32.mrb[0].mxu0
    %v189 = vadd.f32 0.0, %v188
    %v190 = vpop.f32.mrb[0].mxu0
    %191 = vdwg.mxu0
    %v192 = vld [vmem:[#allocation2] sm:$0x1]
    %v194 = vlaneseq
    %v195 = vshrl.u32 %v194, 7
    %v196 = vsub.s32 0, %v195
    %v197 = vrot.slane %v192, %v196
    %v199 = vmul.f32 %v178, %v197
    %v200 = vmul.f32 %v181, %v197
    %v201 = vmul.f32 %v186, %v197
    %v202 = vmul.f32 %v189, %v197
    %v203 = vld [vmem:[#allocation4] sm:$0x1]
    %v205 = vlaneseq
    %v206 = vshrl.u32 %v205, 7
    %v207 = vsub.s32 0, %v206
    %v208 = vrot.slane %v203, %v207
    %v210 = vadd.f32 %v199, %v208
    %v211 = vadd.f32 %v200, %v208
    %v212 = vadd.f32 %v201, %v208
    %v213 = vadd.f32 %v202, %v208
    %v214 = vmax.f32 %v210, 0.0
    %v215 = vmax.f32 %v211, 0.0
    %v216 = vmax.f32 %v212, 0.0
    %v217 = vmax.f32 %v213, 0.0
    %v218 = vmin.f32 %v214, 6.0
    %v219 = vmin.f32 %v215, 6.0
    %v220 = vmin.f32 %v216, 6.0
    %v221 = vmin.f32 %v217, 6.0
    %vm222 = vcmask 261120
    %223 = vst.msk [vmem:[%s4] sm:$0xff] %vm222, %v218
    %224 = vst.msk [vmem:[%s4 + $0x8] sm:$0xff] %vm222, %v219
    %225 = vst.msk [vmem:[%s4 + $0x10] sm:$0xff] %vm222, %v220
    %226 = vst.msk [vmem:[%s4 + $0x18] sm:$0xff] %vm222, %v221
    // Predicated region
    $region26: #{_lambda_.49} parent=1 // pred_check
      _
    $region27: #{_lambda_.49} parent=1 // pred_check_branch
      %228 = sbr.rel (0) target = $region29
    $region28: #{_lambda_.49} parent=1 // pred_region
      _
    $region29: #{_lambda_.49} parent=1 // pred_fallthru
      _
    // Predicated region
    $region30: #{_lambda_.49} parent=1 // pred_check
      _
    $region31: #{_lambda_.49} parent=1 // pred_check_branch
      %230 = sbr.rel (0) target = $region33
    $region32: #{_lambda_.49} parent=1 // pred_region
      _
    $region33: #{_lambda_.49} parent=1 // pred_fallthru
      _
    %231 = vsyncpa [#allocation3], 1
    %232 = vsyncpa [#allocation5], 1

// kernel: _lambda_.50
$region0: #{_lambda_.50}
  #allocation0 [shape = 'u32[]', space=smem, size = 0x4, offset = 0x4, fixed_abs, tag = 'smem constant byte address 0x4 - core index']
  #allocation1 [shape = 'u32[144,128]{1,0:T(1,128)}', space=vmem, size = 0x12000, scoped, tag = 'internal scratch']
  %s0 = inlined_call_operand.vmem [shape: bf16[32,288], index: 0, kind: input, shape index: {}]
  %s1 = inlined_call_operand.vmem [shape: bf16[288,32], index: 1, kind: input, shape index: {}]
  %s2 = inlined_call_operand.hbm [shape: f32[1,32], index: 2, kind: input, shape index: {}]
  %s3 = inlined_call_operand.hbm [shape: f32[1,32], index: 3, kind: input, shape index: {}]
  %s4 = inlined_call_operand.vmem [shape: f32[32,32], index: 4, kind: output, shape index: {}]
  %s5 = sld [smem:[#allocation0]]
  $region34: #{_lambda_.50} parent=0
    _
  %s7 = ssub.s32 1, %s5
  %s8 = scalar_select 0, %s7, %s5
  $region1: #{_lambda_.50} parent=0
    #allocation2 [shape = 'u8[512]{0}', space=vmem, size = 0x400, scoped, tag = 'input window, operand 2, single buffered']
    #allocation3 [shape = 's32[1]{0}', space=sflag, size = 0x4, scoped, tag = 'scoped memory for _lambda_.50']
    #allocation4 [shape = 'u8[512]{0}', space=vmem, size = 0x400, scoped, tag = 'input window, operand 3, single buffered']
    #allocation5 [shape = 's32[1]{0}', space=sflag, size = 0x4, scoped, tag = 'scoped memory for _lambda_.50']
    %9 = vsyncpa [#allocation3], 0
    %10 = vsyncpa [#allocation5], 0
    // Predicated region
    $region2: #{_lambda_.50} parent=1 // pred_check
      _
    $region3: #{_lambda_.50} parent=1 // pred_check_branch
      %12 = sbr.rel (0) target = $region5
    $region4: #{_lambda_.50} parent=1 // pred_region
      _
    $region5: #{_lambda_.50} parent=1 // pred_fallthru
      _
    // Predicated region
    $region6: #{_lambda_.50} parent=1 // pred_check
      _
    $region7: #{_lambda_.50} parent=1 // pred_check_branch
      %14 = sbr.rel (0) target = $region9
    $region8: #{_lambda_.50} parent=1 // pred_region
      _
    $region9: #{_lambda_.50} parent=1 // pred_fallthru
      _
    // Predicated region
    $region10: #{_lambda_.50} parent=1 // pred_check
      _
    $region11: #{_lambda_.50} parent=1 // pred_check_branch
      %16 = sbr.rel (0) target = $region13
    $region12: #{_lambda_.50} parent=1 // pred_region
      %s18 = ssub.s32 16, 16
      %19 = vsyncadd [#allocation3], %s18
      %s21 = sshll.u32 [#allocation2], 4
      %s22 = int_to_ptr.vmem [resolvable:$true] %s21
      %24 = dma.hbm_to_vmem [thread:$0]  %s2, 16, %s22, [#allocation3]
    $region13: #{_lambda_.50} parent=1 // pred_fallthru
      _
    // Predicated region
    $region14: #{_lambda_.50} parent=1 // pred_check
      _
    $region15: #{_lambda_.50} parent=1 // pred_check_branch
      %26 = sbr.rel (0) target = $region17
    $region16: #{_lambda_.50} parent=1 // pred_region
      %s28 = ssub.s32 16, 16
      %29 = vsyncadd [#allocation5], %s28
      %s31 = sshll.u32 [#allocation4], 4
      %s32 = int_to_ptr.vmem [resolvable:$true] %s31
      %34 = dma.hbm_to_vmem [thread:$0]  %s3, 16, %s32, [#allocation5]
    $region17: #{_lambda_.50} parent=1 // pred_fallthru
      _
    // Predicated region
    $region18: #{_lambda_.50} parent=1 // pred_check
      _
    $region19: #{_lambda_.50} parent=1 // pred_check_branch
      %36 = sbr.rel (0) target = $region21
    $region20: #{_lambda_.50} parent=1 // pred_region
      %37 = dma.done [#allocation3], 16
    $region21: #{_lambda_.50} parent=1 // pred_fallthru
      _
    // Predicated region
    $region22: #{_lambda_.50} parent=1 // pred_check
      _
    $region23: #{_lambda_.50} parent=1 // pred_check_branch
      %39 = sbr.rel (0) target = $region25
    $region24: #{_lambda_.50} parent=1 // pred_region
      %40 = dma.done [#allocation5], 16
    $region25: #{_lambda_.50} parent=1 // pred_fallthru
      _
    %v42 = vld [vmem:[%s0] sm:$0xff]
    %v43 = vld [vmem:[%s0 + $0x8] sm:$0xf]
    %v44 = vld [vmem:[%s0 + $0xc] sm:$0xff]
    %v45 = vld [vmem:[%s0 + $0x14] sm:$0xf]
    %v46 = vld [vmem:[%s0 + $0x18] sm:$0xff]
    %v47 = vld [vmem:[%s0 + $0x20] sm:$0xf]
    %v48 = vld [vmem:[%s0 + $0x24] sm:$0xff]
    %v49 = vld [vmem:[%s0 + $0x2c] sm:$0xf]
    %v50 = vld [vmem:[%s1] sm:$0xf]
    %v51 = vld [vmem:[%s1 + $0x4] sm:$0xf]
    %v52 = vld [vmem:[%s1 + $0x8] sm:$0xf]
    %v53 = vld [vmem:[%s1 + $0xc] sm:$0xf]
    %v54 = vld [vmem:[%s1 + $0x10] sm:$0xf]
    %v55 = vld [vmem:[%s1 + $0x14] sm:$0xf]
    %v56 = vld [vmem:[%s1 + $0x18] sm:$0xf]
    %v57 = vld [vmem:[%s1 + $0x1c] sm:$0xf]
    %v58 = vld [vmem:[%s1 + $0x20] sm:$0xf]
    %v59 = vld [vmem:[%s1 + $0x24] sm:$0xf]
    %v60 = vld [vmem:[%s1 + $0x28] sm:$0xf]
    %v61 = vld [vmem:[%s1 + $0x2c] sm:$0xf]
    %v62 = vld [vmem:[%s1 + $0x30] sm:$0xf]
    %v63 = vld [vmem:[%s1 + $0x34] sm:$0xf]
    %v64 = vld [vmem:[%s1 + $0x38] sm:$0xf]
    %v65 = vld [vmem:[%s1 + $0x3c] sm:$0xf]
    %v66 = vld [vmem:[%s1 + $0x40] sm:$0xf]
    %v67 = vld [vmem:[%s1 + $0x44] sm:$0xf]
    %v68 = vld [vmem:[%s1 + $0x48] sm:$0xf]
    %v69 = vld [vmem:[%s1 + $0x4c] sm:$0xf]
    %v70 = vld [vmem:[%s1 + $0x50] sm:$0xf]
    %v71 = vld [vmem:[%s1 + $0x54] sm:$0xf]
    %v72 = vld [vmem:[%s1 + $0x58] sm:$0xf]
    %v73 = vld [vmem:[%s1 + $0x5c] sm:$0xf]
    %v74 = vld [vmem:[%s1 + $0x60] sm:$0xf]
    %v75 = vld [vmem:[%s1 + $0x64] sm:$0xf]
    %v76 = vld [vmem:[%s1 + $0x68] sm:$0xf]
    %v77 = vld [vmem:[%s1 + $0x6c] sm:$0xf]
    %v78 = vld [vmem:[%s1 + $0x70] sm:$0xf]
    %v79 = vld [vmem:[%s1 + $0x74] sm:$0xf]
    %v80 = vld [vmem:[%s1 + $0x78] sm:$0xf]
    %v81 = vld [vmem:[%s1 + $0x7c] sm:$0xf]
    %v82 = vld [vmem:[%s1 + $0x80] sm:$0xf]
    %v83 = vld [vmem:[%s1 + $0x84] sm:$0xf]
    %v84 = vld [vmem:[%s1 + $0x88] sm:$0xf]
    %v85 = vld [vmem:[%s1 + $0x8c] sm:$0xf]
    %v94 = vunpack.c.l.b16 %v42
    %v95 = vunpack.c.h.b16 %v42
    %v96 = vunpack.c.l.b16 %v43
    %v97 = vunpack.c.l.b16 %v44
    %v98 = vunpack.c.h.b16 %v44
    %v99 = vunpack.c.l.b16 %v45
    %v100 = vunpack.c.l.b16 %v46
    %v101 = vunpack.c.h.b16 %v46
    %v102 = vunpack.c.l.b16 %v47
    %v103 = vunpack.c.l.b16 %v48
    %v104 = vunpack.c.h.b16 %v48
    %v105 = vunpack.c.l.b16 %v49
    %v106 = vpack.c.b16 %v97, %v94
    %v107 = vpack.c.b16 %v98, %v95
    %v108 = vpack.c.b16 %v99, %v96
    %v109 = vpack.c.b16 %v103, %v100
    %v110 = vpack.c.b16 %v104, %v101
    %v111 = vpack.c.b16 %v105, %v102
    %v152 = vunpack.c.l.b16 %v50
    %v153 = vunpack.c.l.b16 %v51
    %v154 = vunpack.c.l.b16 %v52
    %v155 = vunpack.c.l.b16 %v53
    %v156 = vunpack.c.l.b16 %v54
    %v157 = vunpack.c.l.b16 %v55
    %v158 = vunpack.c.l.b16 %v56
    %v159 = vunpack.c.l.b16 %v57
    %v160 = vunpack.c.l.b16 %v58
    %v161 = vunpack.c.l.b16 %v59
    %v162 = vunpack.c.l.b16 %v60
    %v163 = vunpack.c.l.b16 %v61
    %v164 = vunpack.c.l.b16 %v62
    %v165 = vunpack.c.l.b16 %v63
    %v166 = vunpack.c.l.b16 %v64
    %v167 = vunpack.c.l.b16 %v65
    %v168 = vunpack.c.l.b16 %v66
    %v169 = vunpack.c.l.b16 %v67
    %v170 = vunpack.c.l.b16 %v68
    %v171 = vunpack.c.l.b16 %v69
    %v172 = vunpack.c.l.b16 %v70
    %v173 = vunpack.c.l.b16 %v71
    %v174 = vunpack.c.l.b16 %v72
    %v175 = vunpack.c.l.b16 %v73
    %v176 = vunpack.c.l.b16 %v74
    %v177 = vunpack.c.l.b16 %v75
    %v178 = vunpack.c.l.b16 %v76
    %v179 = vunpack.c.l.b16 %v77
    %v180 = vunpack.c.l.b16 %v78
    %v181 = vunpack.c.l.b16 %v79
    %v182 = vunpack.c.l.b16 %v80
    %v183 = vunpack.c.l.b16 %v81
    %v184 = vunpack.c.l.b16 %v82
    %v185 = vunpack.c.l.b16 %v83
    %v186 = vunpack.c.l.b16 %v84
    %v187 = vunpack.c.l.b16 %v85
    %v188 = vpack.c.b16 %v153, %v152
    %v189 = vpack.c.b16 %v155, %v154
    %v190 = vpack.c.b16 %v157, %v156
    %v191 = vpack.c.b16 %v159, %v158
    %v192 = vpack.c.b16 %v161, %v160
    %v193 = vpack.c.b16 %v163, %v162
    %v194 = vpack.c.b16 %v165, %v164
    %v195 = vpack.c.b16 %v167, %v166
    %v196 = vpack.c.b16 %v169, %v168
    %v197 = vpack.c.b16 %v171, %v170
    %v198 = vpack.c.b16 %v173, %v172
    %v199 = vpack.c.b16 %v175, %v174
    %v200 = vpack.c.b16 %v177, %v176
    %v201 = vpack.c.b16 %v179, %v178
    %v202 = vpack.c.b16 %v181, %v180
    %v203 = vpack.c.b16 %v183, %v182
    %v204 = vpack.c.b16 %v185, %v184
    %v205 = vpack.c.b16 %v187, %v186
    %vm224 = vcmask 261120
    %v226 = vsel %vm224, %v108, 0
    %v229 = vsel %vm224, %v111, 0
    %231 = vmatprep.subr.bf16.mxu0 0
    %232 = vmatpush1.bf16.msra.mxu0 %v188
    %233 = vmatprep.subr.bf16.mxu0 0
    %234 = vmatpush1.bf16.msra.mxu0 %v189
    %235 = vmatprep.subr.bf16.mxu0 0
    %236 = vmatpush1.bf16.msra.mxu0 %v190
    %237 = vmatprep.subr.bf16.mxu0 0
    %238 = vmatpush1.bf16.msra.mxu0 %v191
    %239 = vmatprep.subr.bf16.mxu0 0
    %240 = vmatpush1.bf16.msra.mxu0 %v192
    %241 = vmatprep.subr.bf16.mxu0 0
    %242 = vmatpush1.bf16.msra.mxu0 %v193
    %243 = vmatprep.subr.bf16.mxu0 0
    %244 = vmatpush1.bf16.msra.mxu0 %v194
    %245 = vmatprep.subr.bf16.mxu0 0
    %246 = vmatpush1.bf16.msra.mxu0 %v195
    %247 = vmatprep.subr.bf16.mxu0 0
    %248 = vmatpush1.bf16.msra.mxu0 %v196
    %249 = vmatprep.subr.bf16.mxu0 0
    %250 = vmatpush1.bf16.msra.mxu0 %v197
    %251 = vmatprep.subr.bf16.mxu0 0
    %252 = vmatpush1.bf16.msra.mxu0 %v198
    %253 = vmatprep.subr.bf16.mxu0 0
    %254 = vmatpush1.bf16.msra.mxu0 %v199
    %255 = vmatprep.subr.bf16.mxu0 0
    %256 = vmatpush1.bf16.msra.mxu0 %v200
    %257 = vmatprep.subr.bf16.mxu0 0
    %258 = vmatpush1.bf16.msra.mxu0 %v201
    %259 = vmatprep.subr.bf16.mxu0 0
    %260 = vmatpush1.bf16.msra.mxu0 %v202
    %261 = vmatprep.subr.bf16.mxu0 0
    %262 = vmatpush1.bf16.msra.mxu0 %v203
    %263 = vmatprep.mubr.bf16.mxu0 %v107
    %264 = vmatmul.mubr.bf16.gmra.mrb[0].mxu0 %v106
    %v265 = vpop.f32.mrb[0].mxu0
    %v266 = vadd.f32 0.0, %v265
    %v267 = vpop.f32.mrb[0].mxu0
    %v268 = vpop.f32.mrb[0].mxu0
    %v269 = vadd.f32 0.0, %v268
    %v270 = vpop.f32.mrb[0].mxu0
    %271 = vmatprep.mubr.bf16.mxu0 %v110
    %272 = vmatmul.mubr.bf16.gmra.mrb[0].mxu0 %v109
    %v273 = vpop.f32.mrb[0].mxu0
    %v274 = vadd.f32 0.0, %v273
    %v275 = vpop.f32.mrb[0].mxu0
    %v276 = vpop.f32.mrb[0].mxu0
    %v277 = vadd.f32 0.0, %v276
    %v278 = vpop.f32.mrb[0].mxu0
    %279 = vdwg.mxu0
    %280 = vmatprep.subr.bf16.mxu0 0
    %281 = vmatpush1.bf16.msra.mxu0 %v204
    %282 = vmatprep.subr.bf16.mxu0 0
    %283 = vmatpush1.bf16.msra.mxu0 %v205
    %284 = vmatprep.subr.bf16.mxu0 0
    %285 = vmatpush1.bf16.msra.mxu0 0
    %286 = vmatprep.subr.bf16.mxu0 0
    %287 = vmatpush1.bf16.msra.mxu0 0
    %288 = vmatprep.subr.bf16.mxu0 0
    %289 = vmatpush1.bf16.msra.mxu0 0
    %290 = vmatprep.subr.bf16.mxu0 0
    %291 = vmatpush1.bf16.msra.mxu0 0
    %292 = vmatprep.subr.bf16.mxu0 0
    %293 = vmatpush1.bf16.msra.mxu0 0
    %294 = vmatprep.subr.bf16.mxu0 0
    %295 = vmatpush1.bf16.msra.mxu0 0
    %296 = vmatprep.subr.bf16.mxu0 0
    %297 = vmatpush1.bf16.msra.mxu0 0
    %298 = vmatprep.subr.bf16.mxu0 0
    %299 = vmatpush1.bf16.msra.mxu0 0
    %300 = vmatprep.subr.bf16.mxu0 0
    %301 = vmatpush1.bf16.msra.mxu0 0
    %302 = vmatprep.subr.bf16.mxu0 0
    %303 = vmatpush1.bf16.msra.mxu0 0
    %304 = vmatprep.subr.bf16.mxu0 0
    %305 = vmatpush1.bf16.msra.mxu0 0
    %306 = vmatprep.subr.bf16.mxu0 0
    %307 = vmatpush1.bf16.msra.mxu0 0
    %308 = vmatprep.subr.bf16.mxu0 0
    %309 = vmatpush1.bf16.msra.mxu0 0
    %310 = vmatprep.subr.bf16.mxu0 0
    %311 = vmatpush1.bf16.msra.mxu0 0
    %312 = vmatprep.mubr.bf16.mxu0 0
    %313 = vmatmul.mubr.bf16.gmra.mrb[0].mxu0 %v226
    %v314 = vpop.f32.mrb[0].mxu0
    %v315 = vadd.f32 %v266, %v314
    %v316 = vpop.f32.mrb[0].mxu0
    %v317 = vpop.f32.mrb[0].mxu0
    %v318 = vadd.f32 %v269, %v317
    %v319 = vpop.f32.mrb[0].mxu0
    %320 = vmatprep.mubr.bf16.mxu0 0
    %321 = vmatmul.mubr.bf16.gmra.mrb[0].mxu0 %v229
    %v322 = vpop.f32.mrb[0].mxu0
    %v323 = vadd.f32 %v274, %v322
    %v324 = vpop.f32.mrb[0].mxu0
    %v325 = vpop.f32.mrb[0].mxu0
    %v326 = vadd.f32 %v277, %v325
    %v327 = vpop.f32.mrb[0].mxu0
    %328 = vdwg.mxu0
    %v329 = vld [vmem:[#allocation2] sm:$0x1]
    %v331 = vlaneseq
    %v332 = vshrl.u32 %v331, 7
    %v333 = vsub.s32 0, %v332
    %v334 = vrot.slane %v329, %v333
    %v336 = vmul.f32 %v315, %v334
    %v337 = vmul.f32 %v318, %v334
    %v338 = vmul.f32 %v323, %v334
    %v339 = vmul.f32 %v326, %v334
    %v340 = vld [vmem:[#allocation4] sm:$0x1]
    %v342 = vlaneseq
    %v343 = vshrl.u32 %v342, 7
    %v344 = vsub.s32 0, %v343
    %v345 = vrot.slane %v340, %v344
    %v347 = vadd.f32 %v336, %v345
    %v348 = vadd.f32 %v337, %v345
    %v349 = vadd.f32 %v338, %v345
    %v350 = vadd.f32 %v339, %v345
    %351 = vst.msk [vmem:[%s4] sm:$0xff] %vm224, %v347
    %352 = vst.msk [vmem:[%s4 + $0x8] sm:$0xff] %vm224, %v348
    %353 = vst.msk [vmem:[%s4 + $0x10] sm:$0xff] %vm224, %v349
    %354 = vst.msk [vmem:[%s4 + $0x18] sm:$0xff] %vm224, %v350
    // Predicated region
    $region26: #{_lambda_.50} parent=1 // pred_check
      _
    $region27: #{_lambda_.50} parent=1 // pred_check_branch
      %356 = sbr.rel (0) target = $region29
    $region28: #{_lambda_.50} parent=1 // pred_region
      _
    $region29: #{_lambda_.50} parent=1 // pred_fallthru
      _
    // Predicated region
    $region30: #{_lambda_.50} parent=1 // pred_check
      _
    $region31: #{_lambda_.50} parent=1 // pred_check_branch
      %358 = sbr.rel (0) target = $region33
    $region32: #{_lambda_.50} parent=1 // pred_region
      _
    $region33: #{_lambda_.50} parent=1 // pred_fallthru
      _
    %359 = vsyncpa [#allocation3], 1
    %360 = vsyncpa [#allocation5], 1

// kernel: _lambda_.51
$region0: #{_lambda_.51}
  #allocation0 [shape = 'u32[]', space=smem, size = 0x4, offset = 0x4, fixed_abs, tag = 'smem constant byte address 0x4 - core index']
  #allocation1 [shape = 'u32[144,128]{1,0:T(1,128)}', space=vmem, size = 0x12000, scoped, tag = 'internal scratch']
  %s0 = inlined_call_operand.vmem [shape: bf16[32,16], index: 0, kind: input, shape index: {}]
  %s1 = inlined_call_operand.vmem [shape: bf16[16,32], index: 1, kind: input, shape index: {}]
  %s2 = inlined_call_operand.hbm [shape: f32[1,32], index: 2, kind: input, shape index: {}]
  %s3 = inlined_call_operand.hbm [shape: f32[1,32], index: 3, kind: input, shape index: {}]
  %s4 = inlined_call_operand.vmem [shape: f32[32,32], index: 4, kind: output, shape index: {}]
  %s5 = sld [smem:[#allocation0]]
  $region34: #{_lambda_.51} parent=0
    _
  %s7 = ssub.s32 1, %s5
  %s8 = scalar_select 0, %s7, %s5
  $region1: #{_lambda_.51} parent=0
    #allocation2 [shape = 'u8[512]{0}', space=vmem, size = 0x400, scoped, tag = 'input window, operand 2, single buffered']
    #allocation3 [shape = 's32[1]{0}', space=sflag, size = 0x4, scoped, tag = 'scoped memory for _lambda_.51']
    #allocation4 [shape = 'u8[512]{0}', space=vmem, size = 0x400, scoped, tag = 'input window, operand 3, single buffered']
    #allocation5 [shape = 's32[1]{0}', space=sflag, size = 0x4, scoped, tag = 'scoped memory for _lambda_.51']
    %9 = vsyncpa [#allocation3], 0
    %10 = vsyncpa [#allocation5], 0
    // Predicated region
    $region2: #{_lambda_.51} parent=1 // pred_check
      _
    $region3: #{_lambda_.51} parent=1 // pred_check_branch
      %12 = sbr.rel (0) target = $region5
    $region4: #{_lambda_.51} parent=1 // pred_region
      _
    $region5: #{_lambda_.51} parent=1 // pred_fallthru
      _
    // Predicated region
    $region6: #{_lambda_.51} parent=1 // pred_check
      _
    $region7: #{_lambda_.51} parent=1 // pred_check_branch
      %14 = sbr.rel (0) target = $region9
    $region8: #{_lambda_.51} parent=1 // pred_region
      _
    $region9: #{_lambda_.51} parent=1 // pred_fallthru
      _
    // Predicated region
    $region10: #{_lambda_.51} parent=1 // pred_check
      _
    $region11: #{_lambda_.51} parent=1 // pred_check_branch
      %16 = sbr.rel (0) target = $region13
    $region12: #{_lambda_.51} parent=1 // pred_region
      %s18 = ssub.s32 16, 16
      %19 = vsyncadd [#allocation3], %s18
      %s21 = sshll.u32 [#allocation2], 4
      %s22 = int_to_ptr.vmem [resolvable:$true] %s21
      %24 = dma.hbm_to_vmem [thread:$0]  %s2, 16, %s22, [#allocation3]
    $region13: #{_lambda_.51} parent=1 // pred_fallthru
      _
    // Predicated region
    $region14: #{_lambda_.51} parent=1 // pred_check
      _
    $region15: #{_lambda_.51} parent=1 // pred_check_branch
      %26 = sbr.rel (0) target = $region17
    $region16: #{_lambda_.51} parent=1 // pred_region
      %s28 = ssub.s32 16, 16
      %29 = vsyncadd [#allocation5], %s28
      %s31 = sshll.u32 [#allocation4], 4
      %s32 = int_to_ptr.vmem [resolvable:$true] %s31
      %34 = dma.hbm_to_vmem [thread:$0]  %s3, 16, %s32, [#allocation5]
    $region17: #{_lambda_.51} parent=1 // pred_fallthru
      _
    // Predicated region
    $region18: #{_lambda_.51} parent=1 // pred_check
      _
    $region19: #{_lambda_.51} parent=1 // pred_check_branch
      %36 = sbr.rel (0) target = $region21
    $region20: #{_lambda_.51} parent=1 // pred_region
      %37 = dma.done [#allocation3], 16
    $region21: #{_lambda_.51} parent=1 // pred_fallthru
      _
    // Predicated region
    $region22: #{_lambda_.51} parent=1 // pred_check
      _
    $region23: #{_lambda_.51} parent=1 // pred_check_branch
      %39 = sbr.rel (0) target = $region25
    $region24: #{_lambda_.51} parent=1 // pred_region
      %40 = dma.done [#allocation5], 16
    $region25: #{_lambda_.51} parent=1 // pred_fallthru
      _
    %v42 = vld [vmem:[%s0] sm:$0xf]
    %v43 = vld [vmem:[%s0 + $0x4] sm:$0xf]
    %v44 = vld [vmem:[%s0 + $0x8] sm:$0xf]
    %v45 = vld [vmem:[%s0 + $0xc] sm:$0xf]
    %v46 = vld [vmem:[%s1] sm:$0xf]
    %v47 = vld [vmem:[%s1 + $0x4] sm:$0xf]
    %v52 = vunpack.c.l.b16 %v42
    %v53 = vunpack.c.l.b16 %v43
    %v54 = vunpack.c.l.b16 %v44
    %v55 = vunpack.c.l.b16 %v45
    %v56 = vpack.c.b16 %v53, %v52
    %v57 = vpack.c.b16 %v55, %v54
    %v60 = vunpack.c.l.b16 %v46
    %v61 = vunpack.c.l.b16 %v47
    %v62 = vpack.c.b16 %v61, %v60
    %vm64 = vcmask 130048
    %v66 = vsel %vm64, %v56, 0
    %v69 = vsel %vm64, %v57, 0
    %71 = vmatprep.subr.bf16.mxu0 0
    %72 = vmatpush1.bf16.msra.mxu0 %v62
    %73 = vmatprep.subr.bf16.mxu0 0
    %74 = vmatpush1.bf16.msra.mxu0 0
    %75 = vmatprep.subr.bf16.mxu0 0
    %76 = vmatpush1.bf16.msra.mxu0 0
    %77 = vmatprep.subr.bf16.mxu0 0
    %78 = vmatpush1.bf16.msra.mxu0 0
    %79 = vmatprep.subr.bf16.mxu0 0
    %80 = vmatpush1.bf16.msra.mxu0 0
    %81 = vmatprep.subr.bf16.mxu0 0
    %82 = vmatpush1.bf16.msra.mxu0 0
    %83 = vmatprep.subr.bf16.mxu0 0
    %84 = vmatpush1.bf16.msra.mxu0 0
    %85 = vmatprep.subr.bf16.mxu0 0
    %86 = vmatpush1.bf16.msra.mxu0 0
    %87 = vmatprep.subr.bf16.mxu0 0
    %88 = vmatpush1.bf16.msra.mxu0 0
    %89 = vmatprep.subr.bf16.mxu0 0
    %90 = vmatpush1.bf16.msra.mxu0 0
    %91 = vmatprep.subr.bf16.mxu0 0
    %92 = vmatpush1.bf16.msra.mxu0 0
    %93 = vmatprep.subr.bf16.mxu0 0
    %94 = vmatpush1.bf16.msra.mxu0 0
    %95 = vmatprep.subr.bf16.mxu0 0
    %96 = vmatpush1.bf16.msra.mxu0 0
    %97 = vmatprep.subr.bf16.mxu0 0
    %98 = vmatpush1.bf16.msra.mxu0 0
    %99 = vmatprep.subr.bf16.mxu0 0
    %100 = vmatpush1.bf16.msra.mxu0 0
    %101 = vmatprep.subr.bf16.mxu0 0
    %102 = vmatpush1.bf16.msra.mxu0 0
    %103 = vmatprep.mubr.bf16.mxu0 0
    %104 = vmatmul.mubr.bf16.gmra.mrb[0].mxu0 %v66
    %v105 = vpop.f32.mrb[0].mxu0
    %v106 = vadd.f32 0.0, %v105
    %v107 = vpop.f32.mrb[0].mxu0
    %v108 = vpop.f32.mrb[0].mxu0
    %v109 = vadd.f32 0.0, %v108
    %v110 = vpop.f32.mrb[0].mxu0
    %111 = vmatprep.mubr.bf16.mxu0 0
    %112 = vmatmul.mubr.bf16.gmra.mrb[0].mxu0 %v69
    %v113 = vpop.f32.mrb[0].mxu0
    %v114 = vadd.f32 0.0, %v113
    %v115 = vpop.f32.mrb[0].mxu0
    %v116 = vpop.f32.mrb[0].mxu0
    %v117 = vadd.f32 0.0, %v116
    %v118 = vpop.f32.mrb[0].mxu0
    %119 = vdwg.mxu0
    %v120 = vld [vmem:[#allocation2] sm:$0x1]
    %v122 = vlaneseq
    %v123 = vshrl.u32 %v122, 7
    %v124 = vsub.s32 0, %v123
    %v125 = vrot.slane %v120, %v124
    %v127 = vmul.f32 %v106, %v125
    %v128 = vmul.f32 %v109, %v125
    %v129 = vmul.f32 %v114, %v125
    %v130 = vmul.f32 %v117, %v125
    %v131 = vld [vmem:[#allocation4] sm:$0x1]
    %v133 = vlaneseq
    %v134 = vshrl.u32 %v133, 7
    %v135 = vsub.s32 0, %v134
    %v136 = vrot.slane %v131, %v135
    %v138 = vadd.f32 %v127, %v136
    %v139 = vadd.f32 %v128, %v136
    %v140 = vadd.f32 %v129, %v136
    %v141 = vadd.f32 %v130, %v136
    %v142 = vmax.f32 %v138, 0.0
    %v143 = vmax.f32 %v139, 0.0
    %v144 = vmax.f32 %v140, 0.0
    %v145 = vmax.f32 %v141, 0.0
    %v146 = vmin.f32 %v142, 6.0
    %v147 = vmin.f32 %v143, 6.0
    %v148 = vmin.f32 %v144, 6.0
    %v149 = vmin.f32 %v145, 6.0
    %vm150 = vcmask 261120
    %151 = vst.msk [vmem:[%s4] sm:$0xff] %vm150, %v146
    %152 = vst.msk [vmem:[%s4 + $0x8] sm:$0xff] %vm150, %v147
    %153 = vst.msk [vmem:[%s4 + $0x10] sm:$0xff] %vm150, %v148
    %154 = vst.msk [vmem:[%s4 + $0x18] sm:$0xff] %vm150, %v149
    // Predicated region
    $region26: #{_lambda_.51} parent=1 // pred_check
      _
    $region27: #{_lambda_.51} parent=1 // pred_check_branch
      %156 = sbr.rel (0) target = $region29
    $region28: #{_lambda_.51} parent=1 // pred_region
      _
    $region29: #{_lambda_.51} parent=1 // pred_fallthru
      _
    // Predicated region
    $region30: #{_lambda_.51} parent=1 // pred_check
      _
    $region31: #{_lambda_.51} parent=1 // pred_check_branch
      %158 = sbr.rel (0) target = $region33
    $region32: #{_lambda_.51} parent=1 // pred_region
      _
    $region33: #{_lambda_.51} parent=1 // pred_fallthru
      _
    %159 = vsyncpa [#allocation3], 1
    %160 = vsyncpa [#allocation5], 1

// kernel: _lambda_.52
$region0: #{_lambda_.52}
  #allocation0 [shape = 'u32[]', space=smem, size = 0x4, offset = 0x4, fixed_abs, tag = 'smem constant byte address 0x4 - core index']
  #allocation1 [shape = 'u32[144,128]{1,0:T(1,128)}', space=vmem, size = 0x12000, scoped, tag = 'internal scratch']
  %s0 = inlined_call_operand.vmem [shape: bf16[8,288], index: 0, kind: input, shape index: {}]
  %s1 = inlined_call_operand.vmem [shape: bf16[288,64], index: 1, kind: input, shape index: {}]
  %s2 = inlined_call_operand.vmem [shape: f32[1,64], index: 2, kind: input, shape index: {}]
  %s3 = inlined_call_operand.vmem [shape: f32[1,64], index: 3, kind: input, shape index: {}]
  %s4 = inlined_call_operand.vmem [shape: f32[8,64], index: 4, kind: output, shape index: {}]
  %s5 = sld [smem:[#allocation0]]
  $region26: #{_lambda_.52} parent=0
    _
  %s7 = ssub.s32 1, %s5
  %s8 = scalar_select 0, %s7, %s5
  // Predicated region
  $region2: #{_lambda_.52} parent=0 // pred_check
    _
  $region3: #{_lambda_.52} parent=0 // pred_check_branch
    %10 = sbr.rel (0) target = $region5
  $region4: #{_lambda_.52} parent=0 // pred_region
    _
  $region5: #{_lambda_.52} parent=0 // pred_fallthru
    _
  // Predicated region
  $region6: #{_lambda_.52} parent=0 // pred_check
    _
  $region7: #{_lambda_.52} parent=0 // pred_check_branch
    %12 = sbr.rel (0) target = $region9
  $region8: #{_lambda_.52} parent=0 // pred_region
    _
  $region9: #{_lambda_.52} parent=0 // pred_fallthru
    _
  // Predicated region
  $region10: #{_lambda_.52} parent=0 // pred_check
    _
  $region11: #{_lambda_.52} parent=0 // pred_check_branch
    %14 = sbr.rel (0) target = $region13
  $region12: #{_lambda_.52} parent=0 // pred_region
    _
  $region13: #{_lambda_.52} parent=0 // pred_fallthru
    _
  // Predicated region
  $region14: #{_lambda_.52} parent=0 // pred_check
    _
  $region15: #{_lambda_.52} parent=0 // pred_check_branch
    %16 = sbr.rel (0) target = $region17
  $region16: #{_lambda_.52} parent=0 // pred_region
    _
  $region17: #{_lambda_.52} parent=0 // pred_fallthru
    _
  %v18 = vld [vmem:[%s0] sm:$0xff]
  %v19 = vld [vmem:[%s0 + $0x8] sm:$0xf]
  %v20 = vld [vmem:[%s1] sm:$0xf]
  %v21 = vld [vmem:[%s1 + $0x4] sm:$0xf]
  %v22 = vld [vmem:[%s1 + $0x8] sm:$0xf]
  %v23 = vld [vmem:[%s1 + $0xc] sm:$0xf]
  %v24 = vld [vmem:[%s1 + $0x10] sm:$0xf]
  %v25 = vld [vmem:[%s1 + $0x14] sm:$0xf]
  %v26 = vld [vmem:[%s1 + $0x18] sm:$0xf]
  %v27 = vld [vmem:[%s1 + $0x1c] sm:$0xf]
  %v28 = vld [vmem:[%s1 + $0x20] sm:$0xf]
  %v29 = vld [vmem:[%s1 + $0x24] sm:$0xf]
  %v30 = vld [vmem:[%s1 + $0x28] sm:$0xf]
  %v31 = vld [vmem:[%s1 + $0x2c] sm:$0xf]
  %v32 = vld [vmem:[%s1 + $0x30] sm:$0xf]
  %v33 = vld [vmem:[%s1 + $0x34] sm:$0xf]
  %v34 = vld [vmem:[%s1 + $0x38] sm:$0xf]
  %v35 = vld [vmem:[%s1 + $0x3c] sm:$0xf]
  %v36 = vld [vmem:[%s1 + $0x40] sm:$0xf]
  %v37 = vld [vmem:[%s1 + $0x44] sm:$0xf]
  %v38 = vld [vmem:[%s1 + $0x48] sm:$0xf]
  %v39 = vld [vmem:[%s1 + $0x4c] sm:$0xf]
  %v40 = vld [vmem:[%s1 + $0x50] sm:$0xf]
  %v41 = vld [vmem:[%s1 + $0x54] sm:$0xf]
  %v42 = vld [vmem:[%s1 + $0x58] sm:$0xf]
  %v43 = vld [vmem:[%s1 + $0x5c] sm:$0xf]
  %v44 = vld [vmem:[%s1 + $0x60] sm:$0xf]
  %v45 = vld [vmem:[%s1 + $0x64] sm:$0xf]
  %v46 = vld [vmem:[%s1 + $0x68] sm:$0xf]
  %v47 = vld [vmem:[%s1 + $0x6c] sm:$0xf]
  %v48 = vld [vmem:[%s1 + $0x70] sm:$0xf]
  %v49 = vld [vmem:[%s1 + $0x74] sm:$0xf]
  %v50 = vld [vmem:[%s1 + $0x78] sm:$0xf]
  %v51 = vld [vmem:[%s1 + $0x7c] sm:$0xf]
  %v52 = vld [vmem:[%s1 + $0x80] sm:$0xf]
  %v53 = vld [vmem:[%s1 + $0x84] sm:$0xf]
  %v54 = vld [vmem:[%s1 + $0x88] sm:$0xf]
  %v55 = vld [vmem:[%s1 + $0x8c] sm:$0xf]
  %v58 = vunpack.c.l.b16 %v18
  %v59 = vunpack.c.h.b16 %v18
  %v60 = vunpack.c.l.b16 %v19
  %v61 = vpack.c.b16 %v58, %v58
  %v62 = vpack.c.b16 %v59, %v59
  %v63 = vpack.c.b16 %v60, %v60
  %v102 = vunpack.c.l.b16 %v20
  %v103 = vunpack.c.l.b16 %v21
  %v104 = vunpack.c.l.b16 %v22
  %v105 = vunpack.c.l.b16 %v23
  %v106 = vunpack.c.l.b16 %v24
  %v107 = vunpack.c.l.b16 %v25
  %v108 = vunpack.c.l.b16 %v26
  %v109 = vunpack.c.l.b16 %v27
  %v110 = vunpack.c.l.b16 %v28
  %v111 = vunpack.c.l.b16 %v29
  %v112 = vunpack.c.l.b16 %v30
  %v113 = vunpack.c.l.b16 %v31
  %v114 = vunpack.c.l.b16 %v32
  %v115 = vunpack.c.l.b16 %v33
  %v116 = vunpack.c.l.b16 %v34
  %v117 = vunpack.c.l.b16 %v35
  %v118 = vunpack.c.l.b16 %v36
  %v119 = vunpack.c.l.b16 %v37
  %v120 = vunpack.c.l.b16 %v38
  %v121 = vunpack.c.l.b16 %v39
  %v122 = vunpack.c.l.b16 %v40
  %v123 = vunpack.c.l.b16 %v41
  %v124 = vunpack.c.l.b16 %v42
  %v125 = vunpack.c.l.b16 %v43
  %v126 = vunpack.c.l.b16 %v44
  %v127 = vunpack.c.l.b16 %v45
  %v128 = vunpack.c.l.b16 %v46
  %v129 = vunpack.c.l.b16 %v47
  %v130 = vunpack.c.l.b16 %v48
  %v131 = vunpack.c.l.b16 %v49
  %v132 = vunpack.c.l.b16 %v50
  %v133 = vunpack.c.l.b16 %v51
  %v134 = vunpack.c.l.b16 %v52
  %v135 = vunpack.c.l.b16 %v53
  %v136 = vunpack.c.l.b16 %v54
  %v137 = vunpack.c.l.b16 %v55
  %v138 = vpack.c.b16 %v103, %v102
  %v139 = vpack.c.b16 %v105, %v104
  %v140 = vpack.c.b16 %v107, %v106
  %v141 = vpack.c.b16 %v109, %v108
  %v142 = vpack.c.b16 %v111, %v110
  %v143 = vpack.c.b16 %v113, %v112
  %v144 = vpack.c.b16 %v115, %v114
  %v145 = vpack.c.b16 %v117, %v116
  %v146 = vpack.c.b16 %v119, %v118
  %v147 = vpack.c.b16 %v121, %v120
  %v148 = vpack.c.b16 %v123, %v122
  %v149 = vpack.c.b16 %v125, %v124
  %v150 = vpack.c.b16 %v127, %v126
  %v151 = vpack.c.b16 %v129, %v128
  %v152 = vpack.c.b16 %v131, %v130
  %v153 = vpack.c.b16 %v133, %v132
  %v154 = vpack.c.b16 %v135, %v134
  %v155 = vpack.c.b16 %v137, %v136
  %vm174 = vcmask 261120
  %v176 = vsel %vm174, %v63, 0
  %178 = vmatprep.subr.bf16.mxu0 0
  %179 = vmatpush1.bf16.msra.mxu0 %v138
  %180 = vmatprep.subr.bf16.mxu0 0
  %181 = vmatpush1.bf16.msra.mxu0 %v139
  %182 = vmatprep.subr.bf16.mxu0 0
  %183 = vmatpush1.bf16.msra.mxu0 %v140
  %184 = vmatprep.subr.bf16.mxu0 0
  %185 = vmatpush1.bf16.msra.mxu0 %v141
  %186 = vmatprep.subr.bf16.mxu0 0
  %187 = vmatpush1.bf16.msra.mxu0 %v142
  %188 = vmatprep.subr.bf16.mxu0 0
  %189 = vmatpush1.bf16.msra.mxu0 %v143
  %190 = vmatprep.subr.bf16.mxu0 0
  %191 = vmatpush1.bf16.msra.mxu0 %v144
  %192 = vmatprep.subr.bf16.mxu0 0
  %193 = vmatpush1.bf16.msra.mxu0 %v145
  %194 = vmatprep.subr.bf16.mxu0 0
  %195 = vmatpush1.bf16.msra.mxu0 %v146
  %196 = vmatprep.subr.bf16.mxu0 0
  %197 = vmatpush1.bf16.msra.mxu0 %v147
  %198 = vmatprep.subr.bf16.mxu0 0
  %199 = vmatpush1.bf16.msra.mxu0 %v148
  %200 = vmatprep.subr.bf16.mxu0 0
  %201 = vmatpush1.bf16.msra.mxu0 %v149
  %202 = vmatprep.subr.bf16.mxu0 0
  %203 = vmatpush1.bf16.msra.mxu0 %v150
  %204 = vmatprep.subr.bf16.mxu0 0
  %205 = vmatpush1.bf16.msra.mxu0 %v151
  %206 = vmatprep.subr.bf16.mxu0 0
  %207 = vmatpush1.bf16.msra.mxu0 %v152
  %208 = vmatprep.subr.bf16.mxu0 0
  %209 = vmatpush1.bf16.msra.mxu0 %v153
  %210 = vmatprep.mubr.bf16.mxu0 %v62
  %211 = vmatmul.mubr.bf16.gmra.mrb[0].mxu0 %v61
  %v212 = vpop.f32.mrb[0].mxu0
  %v213 = vadd.f32 0.0, %v212
  %v214 = vpop.f32.mrb[0].mxu0
  %v215 = vpop.f32.mrb[0].mxu0
  %v216 = vpop.f32.mrb[0].mxu0
  %217 = vdwg.mxu0
  %218 = vmatprep.subr.bf16.mxu0 0
  %219 = vmatpush1.bf16.msra.mxu0 %v154
  %220 = vmatprep.subr.bf16.mxu0 0
  %221 = vmatpush1.bf16.msra.mxu0 %v155
  %222 = vmatprep.subr.bf16.mxu0 0
  %223 = vmatpush1.bf16.msra.mxu0 0
  %224 = vmatprep.subr.bf16.mxu0 0
  %225 = vmatpush1.bf16.msra.mxu0 0
  %226 = vmatprep.subr.bf16.mxu0 0
  %227 = vmatpush1.bf16.msra.mxu0 0
  %228 = vmatprep.subr.bf16.mxu0 0
  %229 = vmatpush1.bf16.msra.mxu0 0
  %230 = vmatprep.subr.bf16.mxu0 0
  %231 = vmatpush1.bf16.msra.mxu0 0
  %232 = vmatprep.subr.bf16.mxu0 0
  %233 = vmatpush1.bf16.msra.mxu0 0
  %234 = vmatprep.subr.bf16.mxu0 0
  %235 = vmatpush1.bf16.msra.mxu0 0
  %236 = vmatprep.subr.bf16.mxu0 0
  %237 = vmatpush1.bf16.msra.mxu0 0
  %238 = vmatprep.subr.bf16.mxu0 0
  %239 = vmatpush1.bf16.msra.mxu0 0
  %240 = vmatprep.subr.bf16.mxu0 0
  %241 = vmatpush1.bf16.msra.mxu0 0
  %242 = vmatprep.subr.bf16.mxu0 0
  %243 = vmatpush1.bf16.msra.mxu0 0
  %244 = vmatprep.subr.bf16.mxu0 0
  %245 = vmatpush1.bf16.msra.mxu0 0
  %246 = vmatprep.subr.bf16.mxu0 0
  %247 = vmatpush1.bf16.msra.mxu0 0
  %248 = vmatprep.subr.bf16.mxu0 0
  %249 = vmatpush1.bf16.msra.mxu0 0
  %250 = vmatprep.mubr.bf16.mxu0 0
  %251 = vmatmul.mubr.bf16.gmra.mrb[0].mxu0 %v176
  %v252 = vpop.f32.mrb[0].mxu0
  %v253 = vadd.f32 %v213, %v252
  %v254 = vpop.f32.mrb[0].mxu0
  %v255 = vpop.f32.mrb[0].mxu0
  %v256 = vpop.f32.mrb[0].mxu0
  %257 = vdwg.mxu0
  %v258 = vld [vmem:[%s2] sm:$0x1]
  %v260 = vlaneseq
  %v261 = vshrl.u32 %v260, 7
  %v262 = vsub.s32 0, %v261
  %v263 = vrot.slane %v258, %v262
  %v265 = vmul.f32 %v253, %v263
  %v266 = vld [vmem:[%s3] sm:$0x1]
  %v268 = vlaneseq
  %v269 = vshrl.u32 %v268, 7
  %v270 = vsub.s32 0, %v269
  %v271 = vrot.slane %v266, %v270
  %v273 = vadd.f32 %v265, %v271
  %v274 = vmax.f32 %v273, 0.0
  %v275 = vmin.f32 %v274, 6.0
  %vm276 = vcmask 523264
  %277 = vst.msk [vmem:[%s4] sm:$0xff] %vm276, %v275
  // Predicated region
  $region18: #{_lambda_.52} parent=0 // pred_check
    _
  $region19: #{_lambda_.52} parent=0 // pred_check_branch
    %279 = sbr.rel (0) target = $region21
  $region20: #{_lambda_.52} parent=0 // pred_region
    _
  $region21: #{_lambda_.52} parent=0 // pred_fallthru
    _
  // Predicated region
  $region22: #{_lambda_.52} parent=0 // pred_check
    _
  $region23: #{_lambda_.52} parent=0 // pred_check_branch
    %281 = sbr.rel (0) target = $region25
  $region24: #{_lambda_.52} parent=0 // pred_region
    _
  $region25: #{_lambda_.52} parent=0 // pred_fallthru
    _

// kernel: _lambda_.53
$region0: #{_lambda_.53}
  #allocation0 [shape = 'u32[]', space=smem, size = 0x4, offset = 0x4, fixed_abs, tag = 'smem constant byte address 0x4 - core index']
  #allocation1 [shape = 'u32[144,128]{1,0:T(1,128)}', space=vmem, size = 0x12000, scoped, tag = 'internal scratch']
  %s0 = inlined_call_operand.vmem [shape: bf16[8,576], index: 0, kind: input, shape index: {}]
  %s1 = inlined_call_operand.vmem [shape: bf16[576,64], index: 1, kind: input, shape index: {}]
  %s2 = inlined_call_operand.vmem [shape: f32[1,64], index: 2, kind: input, shape index: {}]
  %s3 = inlined_call_operand.vmem [shape: f32[1,64], index: 3, kind: input, shape index: {}]
  %s4 = inlined_call_operand.vmem [shape: f32[8,64], index: 4, kind: output, shape index: {}]
  %s5 = sld [smem:[#allocation0]]
  $region26: #{_lambda_.53} parent=0
    _
  %s7 = ssub.s32 1, %s5
  %s8 = scalar_select 0, %s7, %s5
  // Predicated region
  $region2: #{_lambda_.53} parent=0 // pred_check
    _
  $region3: #{_lambda_.53} parent=0 // pred_check_branch
    %10 = sbr.rel (0) target = $region5
  $region4: #{_lambda_.53} parent=0 // pred_region
    _
  $region5: #{_lambda_.53} parent=0 // pred_fallthru
    _
  // Predicated region
  $region6: #{_lambda_.53} parent=0 // pred_check
    _
  $region7: #{_lambda_.53} parent=0 // pred_check_branch
    %12 = sbr.rel (0) target = $region9
  $region8: #{_lambda_.53} parent=0 // pred_region
    _
  $region9: #{_lambda_.53} parent=0 // pred_fallthru
    _
  // Predicated region
  $region10: #{_lambda_.53} parent=0 // pred_check
    _
  $region11: #{_lambda_.53} parent=0 // pred_check_branch
    %14 = sbr.rel (0) target = $region13
  $region12: #{_lambda_.53} parent=0 // pred_region
    _
  $region13: #{_lambda_.53} parent=0 // pred_fallthru
    _
  // Predicated region
  $region14: #{_lambda_.53} parent=0 // pred_check
    _
  $region15: #{_lambda_.53} parent=0 // pred_check_branch
    %16 = sbr.rel (0) target = $region17
  $region16: #{_lambda_.53} parent=0 // pred_region
    _
  $region17: #{_lambda_.53} parent=0 // pred_fallthru
    _
  %v18 = vld [vmem:[%s0] sm:$0xff]
  %v19 = vld [vmem:[%s0 + $0x8] sm:$0xff]
  %v20 = vld [vmem:[%s0 + $0x10] sm:$0xf]
  %v21 = vld [vmem:[%s1] sm:$0xf]
  %v22 = vld [vmem:[%s1 + $0x4] sm:$0xf]
  %v23 = vld [vmem:[%s1 + $0x8] sm:$0xf]
  %v24 = vld [vmem:[%s1 + $0xc] sm:$0xf]
  %v25 = vld [vmem:[%s1 + $0x10] sm:$0xf]
  %v26 = vld [vmem:[%s1 + $0x14] sm:$0xf]
  %v27 = vld [vmem:[%s1 + $0x18] sm:$0xf]
  %v28 = vld [vmem:[%s1 + $0x1c] sm:$0xf]
  %v29 = vld [vmem:[%s1 + $0x20] sm:$0xf]
  %v30 = vld [vmem:[%s1 + $0x24] sm:$0xf]
  %v31 = vld [vmem:[%s1 + $0x28] sm:$0xf]
  %v32 = vld [vmem:[%s1 + $0x2c] sm:$0xf]
  %v33 = vld [vmem:[%s1 + $0x30] sm:$0xf]
  %v34 = vld [vmem:[%s1 + $0x34] sm:$0xf]
  %v35 = vld [vmem:[%s1 + $0x38] sm:$0xf]
  %v36 = vld [vmem:[%s1 + $0x3c] sm:$0xf]
  %v37 = vld [vmem:[%s1 + $0x40] sm:$0xf]
  %v38 = vld [vmem:[%s1 + $0x44] sm:$0xf]
  %v39 = vld [vmem:[%s1 + $0x48] sm:$0xf]
  %v40 = vld [vmem:[%s1 + $0x4c] sm:$0xf]
  %v41 = vld [vmem:[%s1 + $0x50] sm:$0xf]
  %v42 = vld [vmem:[%s1 + $0x54] sm:$0xf]
  %v43 = vld [vmem:[%s1 + $0x58] sm:$0xf]
  %v44 = vld [vmem:[%s1 + $0x5c] sm:$0xf]
  %v45 = vld [vmem:[%s1 + $0x60] sm:$0xf]
  %v46 = vld [vmem:[%s1 + $0x64] sm:$0xf]
  %v47 = vld [vmem:[%s1 + $0x68] sm:$0xf]
  %v48 = vld [vmem:[%s1 + $0x6c] sm:$0xf]
  %v49 = vld [vmem:[%s1 + $0x70] sm:$0xf]
  %v50 = vld [vmem:[%s1 + $0x74] sm:$0xf]
  %v51 = vld [vmem:[%s1 + $0x78] sm:$0xf]
  %v52 = vld [vmem:[%s1 + $0x7c] sm:$0xf]
  %v53 = vld [vmem:[%s1 + $0x80] sm:$0xf]
  %v54 = vld [vmem:[%s1 + $0x84] sm:$0xf]
  %v55 = vld [vmem:[%s1 + $0x88] sm:$0xf]
  %v56 = vld [vmem:[%s1 + $0x8c] sm:$0xf]
  %v57 = vld [vmem:[%s1 + $0x90] sm:$0xf]
  %v58 = vld [vmem:[%s1 + $0x94] sm:$0xf]
  %v59 = vld [vmem:[%s1 + $0x98] sm:$0xf]
  %v60 = vld [vmem:[%s1 + $0x9c] sm:$0xf]
  %v61 = vld [vmem:[%s1 + $0xa0] sm:$0xf]
  %v62 = vld [vmem:[%s1 + $0xa4] sm:$0xf]
  %v63 = vld [vmem:[%s1 + $0xa8] sm:$0xf]
  %v64 = vld [vmem:[%s1 + $0xac] sm:$0xf]
  %v65 = vld [vmem:[%s1 + $0xb0] sm:$0xf]
  %v66 = vld [vmem:[%s1 + $0xb4] sm:$0xf]
  %v67 = vld [vmem:[%s1 + $0xb8] sm:$0xf]
  %v68 = vld [vmem:[%s1 + $0xbc] sm:$0xf]
  %v69 = vld [vmem:[%s1 + $0xc0] sm:$0xf]
  %v70 = vld [vmem:[%s1 + $0xc4] sm:$0xf]
  %v71 = vld [vmem:[%s1 + $0xc8] sm:$0xf]
  %v72 = vld [vmem:[%s1 + $0xcc] sm:$0xf]
  %v73 = vld [vmem:[%s1 + $0xd0] sm:$0xf]
  %v74 = vld [vmem:[%s1 + $0xd4] sm:$0xf]
  %v75 = vld [vmem:[%s1 + $0xd8] sm:$0xf]
  %v76 = vld [vmem:[%s1 + $0xdc] sm:$0xf]
  %v77 = vld [vmem:[%s1 + $0xe0] sm:$0xf]
  %v78 = vld [vmem:[%s1 + $0xe4] sm:$0xf]
  %v79 = vld [vmem:[%s1 + $0xe8] sm:$0xf]
  %v80 = vld [vmem:[%s1 + $0xec] sm:$0xf]
  %v81 = vld [vmem:[%s1 + $0xf0] sm:$0xf]
  %v82 = vld [vmem:[%s1 + $0xf4] sm:$0xf]
  %v83 = vld [vmem:[%s1 + $0xf8] sm:$0xf]
  %v84 = vld [vmem:[%s1 + $0xfc] sm:$0xf]
  %v85 = vld [vmem:[%s1 + $0x100] sm:$0xf]
  %v86 = vld [vmem:[%s1 + $0x104] sm:$0xf]
  %v87 = vld [vmem:[%s1 + $0x108] sm:$0xf]
  %v88 = vld [vmem:[%s1 + $0x10c] sm:$0xf]
  %v89 = vld [vmem:[%s1 + $0x110] sm:$0xf]
  %v90 = vld [vmem:[%s1 + $0x114] sm:$0xf]
  %v91 = vld [vmem:[%s1 + $0x118] sm:$0xf]
  %v92 = vld [vmem:[%s1 + $0x11c] sm:$0xf]
  %v96 = vunpack.c.l.b16 %v18
  %v97 = vunpack.c.h.b16 %v18
  %v98 = vunpack.c.l.b16 %v19
  %v99 = vunpack.c.h.b16 %v19
  %v100 = vunpack.c.l.b16 %v20
  %v101 = vpack.c.b16 %v96, %v96
  %v102 = vpack.c.b16 %v97, %v97
  %v103 = vpack.c.b16 %v98, %v98
  %v104 = vpack.c.b16 %v99, %v99
  %v105 = vpack.c.b16 %v100, %v100
  %v182 = vunpack.c.l.b16 %v21
  %v183 = vunpack.c.l.b16 %v22
  %v184 = vunpack.c.l.b16 %v23
  %v185 = vunpack.c.l.b16 %v24
  %v186 = vunpack.c.l.b16 %v25
  %v187 = vunpack.c.l.b16 %v26
  %v188 = vunpack.c.l.b16 %v27
  %v189 = vunpack.c.l.b16 %v28
  %v190 = vunpack.c.l.b16 %v29
  %v191 = vunpack.c.l.b16 %v30
  %v192 = vunpack.c.l.b16 %v31
  %v193 = vunpack.c.l.b16 %v32
  %v194 = vunpack.c.l.b16 %v33
  %v195 = vunpack.c.l.b16 %v34
  %v196 = vunpack.c.l.b16 %v35
  %v197 = vunpack.c.l.b16 %v36
  %v198 = vunpack.c.l.b16 %v37
  %v199 = vunpack.c.l.b16 %v38
  %v200 = vunpack.c.l.b16 %v39
  %v201 = vunpack.c.l.b16 %v40
  %v202 = vunpack.c.l.b16 %v41
  %v203 = vunpack.c.l.b16 %v42
  %v204 = vunpack.c.l.b16 %v43
  %v205 = vunpack.c.l.b16 %v44
  %v206 = vunpack.c.l.b16 %v45
  %v207 = vunpack.c.l.b16 %v46
  %v208 = vunpack.c.l.b16 %v47
  %v209 = vunpack.c.l.b16 %v48
  %v210 = vunpack.c.l.b16 %v49
  %v211 = vunpack.c.l.b16 %v50
  %v212 = vunpack.c.l.b16 %v51
  %v213 = vunpack.c.l.b16 %v52
  %v214 = vunpack.c.l.b16 %v53
  %v215 = vunpack.c.l.b16 %v54
  %v216 = vunpack.c.l.b16 %v55
  %v217 = vunpack.c.l.b16 %v56
  %v218 = vunpack.c.l.b16 %v57
  %v219 = vunpack.c.l.b16 %v58
  %v220 = vunpack.c.l.b16 %v59
  %v221 = vunpack.c.l.b16 %v60
  %v222 = vunpack.c.l.b16 %v61
  %v223 = vunpack.c.l.b16 %v62
  %v224 = vunpack.c.l.b16 %v63
  %v225 = vunpack.c.l.b16 %v64
  %v226 = vunpack.c.l.b16 %v65
  %v227 = vunpack.c.l.b16 %v66
  %v228 = vunpack.c.l.b16 %v67
  %v229 = vunpack.c.l.b16 %v68
  %v230 = vunpack.c.l.b16 %v69
  %v231 = vunpack.c.l.b16 %v70
  %v232 = vunpack.c.l.b16 %v71
  %v233 = vunpack.c.l.b16 %v72
  %v234 = vunpack.c.l.b16 %v73
  %v235 = vunpack.c.l.b16 %v74
  %v236 = vunpack.c.l.b16 %v75
  %v237 = vunpack.c.l.b16 %v76
  %v238 = vunpack.c.l.b16 %v77
  %v239 = vunpack.c.l.b16 %v78
  %v240 = vunpack.c.l.b16 %v79
  %v241 = vunpack.c.l.b16 %v80
  %v242 = vunpack.c.l.b16 %v81
  %v243 = vunpack.c.l.b16 %v82
  %v244 = vunpack.c.l.b16 %v83
  %v245 = vunpack.c.l.b16 %v84
  %v246 = vunpack.c.l.b16 %v85
  %v247 = vunpack.c.l.b16 %v86
  %v248 = vunpack.c.l.b16 %v87
  %v249 = vunpack.c.l.b16 %v88
  %v250 = vunpack.c.l.b16 %v89
  %v251 = vunpack.c.l.b16 %v90
  %v252 = vunpack.c.l.b16 %v91
  %v253 = vunpack.c.l.b16 %v92
  %v254 = vpack.c.b16 %v183, %v182
  %v255 = vpack.c.b16 %v185, %v184
  %v256 = vpack.c.b16 %v187, %v186
  %v257 = vpack.c.b16 %v189, %v188
  %v258 = vpack.c.b16 %v191, %v190
  %v259 = vpack.c.b16 %v193, %v192
  %v260 = vpack.c.b16 %v195, %v194
  %v261 = vpack.c.b16 %v197, %v196
  %v262 = vpack.c.b16 %v199, %v198
  %v263 = vpack.c.b16 %v201, %v200
  %v264 = vpack.c.b16 %v203, %v202
  %v265 = vpack.c.b16 %v205, %v204
  %v266 = vpack.c.b16 %v207, %v206
  %v267 = vpack.c.b16 %v209, %v208
  %v268 = vpack.c.b16 %v211, %v210
  %v269 = vpack.c.b16 %v213, %v212
  %v270 = vpack.c.b16 %v215, %v214
  %v271 = vpack.c.b16 %v217, %v216
  %v272 = vpack.c.b16 %v219, %v218
  %v273 = vpack.c.b16 %v221, %v220
  %v274 = vpack.c.b16 %v223, %v222
  %v275 = vpack.c.b16 %v225, %v224
  %v276 = vpack.c.b16 %v227, %v226
  %v277 = vpack.c.b16 %v229, %v228
  %v278 = vpack.c.b16 %v231, %v230
  %v279 = vpack.c.b16 %v233, %v232
  %v280 = vpack.c.b16 %v235, %v234
  %v281 = vpack.c.b16 %v237, %v236
  %v282 = vpack.c.b16 %v239, %v238
  %v283 = vpack.c.b16 %v241, %v240
  %v284 = vpack.c.b16 %v243, %v242
  %v285 = vpack.c.b16 %v245, %v244
  %v286 = vpack.c.b16 %v247, %v246
  %v287 = vpack.c.b16 %v249, %v248
  %v288 = vpack.c.b16 %v251, %v250
  %v289 = vpack.c.b16 %v253, %v252
  %vm326 = vcmask 523264
  %v328 = vsel %vm326, %v105, 0
  %330 = vmatprep.subr.bf16.mxu0 0
  %331 = vmatpush1.bf16.msra.mxu0 %v254
  %332 = vmatprep.subr.bf16.mxu0 0
  %333 = vmatpush1.bf16.msra.mxu0 %v255
  %334 = vmatprep.subr.bf16.mxu0 0
  %335 = vmatpush1.bf16.msra.mxu0 %v256
  %336 = vmatprep.subr.bf16.mxu0 0
  %337 = vmatpush1.bf16.msra.mxu0 %v257
  %338 = vmatprep.subr.bf16.mxu0 0
  %339 = vmatpush1.bf16.msra.mxu0 %v258
  %340 = vmatprep.subr.bf16.mxu0 0
  %341 = vmatpush1.bf16.msra.mxu0 %v259
  %342 = vmatprep.subr.bf16.mxu0 0
  %343 = vmatpush1.bf16.msra.mxu0 %v260
  %344 = vmatprep.subr.bf16.mxu0 0
  %345 = vmatpush1.bf16.msra.mxu0 %v261
  %346 = vmatprep.subr.bf16.mxu0 0
  %347 = vmatpush1.bf16.msra.mxu0 %v262
  %348 = vmatprep.subr.bf16.mxu0 0
  %349 = vmatpush1.bf16.msra.mxu0 %v263
  %350 = vmatprep.subr.bf16.mxu0 0
  %351 = vmatpush1.bf16.msra.mxu0 %v264
  %352 = vmatprep.subr.bf16.mxu0 0
  %353 = vmatpush1.bf16.msra.mxu0 %v265
  %354 = vmatprep.subr.bf16.mxu0 0
  %355 = vmatpush1.bf16.msra.mxu0 %v266
  %356 = vmatprep.subr.bf16.mxu0 0
  %357 = vmatpush1.bf16.msra.mxu0 %v267
  %358 = vmatprep.subr.bf16.mxu0 0
  %359 = vmatpush1.bf16.msra.mxu0 %v268
  %360 = vmatprep.subr.bf16.mxu0 0
  %361 = vmatpush1.bf16.msra.mxu0 %v269
  %362 = vmatprep.mubr.bf16.mxu0 %v102
  %363 = vmatmul.mubr.bf16.gmra.mrb[0].mxu0 %v101
  %v364 = vpop.f32.mrb[0].mxu0
  %v365 = vadd.f32 0.0, %v364
  %v366 = vpop.f32.mrb[0].mxu0
  %v367 = vpop.f32.mrb[0].mxu0
  %v368 = vpop.f32.mrb[0].mxu0
  %369 = vdwg.mxu0
  %370 = vmatprep.subr.bf16.mxu0 0
  %371 = vmatpush1.bf16.msra.mxu0 %v270
  %372 = vmatprep.subr.bf16.mxu0 0
  %373 = vmatpush1.bf16.msra.mxu0 %v271
  %374 = vmatprep.subr.bf16.mxu0 0
  %375 = vmatpush1.bf16.msra.mxu0 %v272
  %376 = vmatprep.subr.bf16.mxu0 0
  %377 = vmatpush1.bf16.msra.mxu0 %v273
  %378 = vmatprep.subr.bf16.mxu0 0
  %379 = vmatpush1.bf16.msra.mxu0 %v274
  %380 = vmatprep.subr.bf16.mxu0 0
  %381 = vmatpush1.bf16.msra.mxu0 %v275
  %382 = vmatprep.subr.bf16.mxu0 0
  %383 = vmatpush1.bf16.msra.mxu0 %v276
  %384 = vmatprep.subr.bf16.mxu0 0
  %385 = vmatpush1.bf16.msra.mxu0 %v277
  %386 = vmatprep.subr.bf16.mxu0 0
  %387 = vmatpush1.bf16.msra.mxu0 %v278
  %388 = vmatprep.subr.bf16.mxu0 0
  %389 = vmatpush1.bf16.msra.mxu0 %v279
  %390 = vmatprep.subr.bf16.mxu0 0
  %391 = vmatpush1.bf16.msra.mxu0 %v280
  %392 = vmatprep.subr.bf16.mxu0 0
  %393 = vmatpush1.bf16.msra.mxu0 %v281
  %394 = vmatprep.subr.bf16.mxu0 0
  %395 = vmatpush1.bf16.msra.mxu0 %v282
  %396 = vmatprep.subr.bf16.mxu0 0
  %397 = vmatpush1.bf16.msra.mxu0 %v283
  %398 = vmatprep.subr.bf16.mxu0 0
  %399 = vmatpush1.bf16.msra.mxu0 %v284
  %400 = vmatprep.subr.bf16.mxu0 0
  %401 = vmatpush1.bf16.msra.mxu0 %v285
  %402 = vmatprep.mubr.bf16.mxu0 %v104
  %403 = vmatmul.mubr.bf16.gmra.mrb[0].mxu0 %v103
  %v404 = vpop.f32.mrb[0].mxu0
  %v405 = vadd.f32 %v365, %v404
  %v406 = vpop.f32.mrb[0].mxu0
  %v407 = vpop.f32.mrb[0].mxu0
  %v408 = vpop.f32.mrb[0].mxu0
  %409 = vdwg.mxu0
  %410 = vmatprep.subr.bf16.mxu0 0
  %411 = vmatpush1.bf16.msra.mxu0 %v286
  %412 = vmatprep.subr.bf16.mxu0 0
  %413 = vmatpush1.bf16.msra.mxu0 %v287
  %414 = vmatprep.subr.bf16.mxu0 0
  %415 = vmatpush1.bf16.msra.mxu0 %v288
  %416 = vmatprep.subr.bf16.mxu0 0
  %417 = vmatpush1.bf16.msra.mxu0 %v289
  %418 = vmatprep.subr.bf16.mxu0 0
  %419 = vmatpush1.bf16.msra.mxu0 0
  %420 = vmatprep.subr.bf16.mxu0 0
  %421 = vmatpush1.bf16.msra.mxu0 0
  %422 = vmatprep.subr.bf16.mxu0 0
  %423 = vmatpush1.bf16.msra.mxu0 0
  %424 = vmatprep.subr.bf16.mxu0 0
  %425 = vmatpush1.bf16.msra.mxu0 0
  %426 = vmatprep.subr.bf16.mxu0 0
  %427 = vmatpush1.bf16.msra.mxu0 0
  %428 = vmatprep.subr.bf16.mxu0 0
  %429 = vmatpush1.bf16.msra.mxu0 0
  %430 = vmatprep.subr.bf16.mxu0 0
  %431 = vmatpush1.bf16.msra.mxu0 0
  %432 = vmatprep.subr.bf16.mxu0 0
  %433 = vmatpush1.bf16.msra.mxu0 0
  %434 = vmatprep.subr.bf16.mxu0 0
  %435 = vmatpush1.bf16.msra.mxu0 0
  %436 = vmatprep.subr.bf16.mxu0 0
  %437 = vmatpush1.bf16.msra.mxu0 0
  %438 = vmatprep.subr.bf16.mxu0 0
  %439 = vmatpush1.bf16.msra.mxu0 0
  %440 = vmatprep.subr.bf16.mxu0 0
  %441 = vmatpush1.bf16.msra.mxu0 0
  %442 = vmatprep.mubr.bf16.mxu0 0
  %443 = vmatmul.mubr.bf16.gmra.mrb[0].mxu0 %v328
  %v444 = vpop.f32.mrb[0].mxu0
  %v445 = vadd.f32 %v405, %v444
  %v446 = vpop.f32.mrb[0].mxu0
  %v447 = vpop.f32.mrb[0].mxu0
  %v448 = vpop.f32.mrb[0].mxu0
  %449 = vdwg.mxu0
  %v450 = vld [vmem:[%s2] sm:$0x1]
  %v452 = vlaneseq
  %v453 = vshrl.u32 %v452, 7
  %v454 = vsub.s32 0, %v453
  %v455 = vrot.slane %v450, %v454
  %v457 = vmul.f32 %v445, %v455
  %v458 = vld [vmem:[%s3] sm:$0x1]
  %v460 = vlaneseq
  %v461 = vshrl.u32 %v460, 7
  %v462 = vsub.s32 0, %v461
  %v463 = vrot.slane %v458, %v462
  %v465 = vadd.f32 %v457, %v463
  %466 = vst.msk [vmem:[%s4] sm:$0xff] %vm326, %v465
  // Predicated region
  $region18: #{_lambda_.53} parent=0 // pred_check
    _
  $region19: #{_lambda_.53} parent=0 // pred_check_branch
    %468 = sbr.rel (0) target = $region21
  $region20: #{_lambda_.53} parent=0 // pred_region
    _
  $region21: #{_lambda_.53} parent=0 // pred_fallthru
    _
  // Predicated region
  $region22: #{_lambda_.53} parent=0 // pred_check
    _
  $region23: #{_lambda_.53} parent=0 // pred_check_branch
    %470 = sbr.rel (0) target = $region25
  $region24: #{_lambda_.53} parent=0 // pred_region
    _
  $region25: #{_lambda_.53} parent=0 // pred_fallthru
    _

// kernel: _lambda_.54
$region0: #{_lambda_.54}
  #allocation0 [shape = 'u32[]', space=smem, size = 0x4, offset = 0x4, fixed_abs, tag = 'smem constant byte address 0x4 - core index']
  #allocation1 [shape = 'u32[144,128]{1,0:T(1,128)}', space=vmem, size = 0x12000, scoped, tag = 'internal scratch']
  %s0 = inlined_call_operand.vmem [shape: bf16[8,32], index: 0, kind: input, shape index: {}]
  %s1 = inlined_call_operand.vmem [shape: bf16[32,64], index: 1, kind: input, shape index: {}]
  %s2 = inlined_call_operand.hbm [shape: f32[1,64], index: 2, kind: input, shape index: {}]
  %s3 = inlined_call_operand.hbm [shape: f32[1,64], index: 3, kind: input, shape index: {}]
  %s4 = inlined_call_operand.vmem [shape: f32[8,64], index: 4, kind: output, shape index: {}]
  %s5 = sld [smem:[#allocation0]]
  $region34: #{_lambda_.54} parent=0
    _
  %s7 = ssub.s32 1, %s5
  %s8 = scalar_select 0, %s7, %s5
  $region1: #{_lambda_.54} parent=0
    #allocation2 [shape = 'u8[512]{0}', space=vmem, size = 0x400, scoped, tag = 'input window, operand 2, single buffered']
    #allocation3 [shape = 's32[1]{0}', space=sflag, size = 0x4, scoped, tag = 'scoped memory for _lambda_.54']
    #allocation4 [shape = 'u8[512]{0}', space=vmem, size = 0x400, scoped, tag = 'input window, operand 3, single buffered']
    #allocation5 [shape = 's32[1]{0}', space=sflag, size = 0x4, scoped, tag = 'scoped memory for _lambda_.54']
    %9 = vsyncpa [#allocation3], 0
    %10 = vsyncpa [#allocation5], 0
    // Predicated region
    $region2: #{_lambda_.54} parent=1 // pred_check
      _
    $region3: #{_lambda_.54} parent=1 // pred_check_branch
      %12 = sbr.rel (0) target = $region5
    $region4: #{_lambda_.54} parent=1 // pred_region
      _
    $region5: #{_lambda_.54} parent=1 // pred_fallthru
      _
    // Predicated region
    $region6: #{_lambda_.54} parent=1 // pred_check
      _
    $region7: #{_lambda_.54} parent=1 // pred_check_branch
      %14 = sbr.rel (0) target = $region9
    $region8: #{_lambda_.54} parent=1 // pred_region
      _
    $region9: #{_lambda_.54} parent=1 // pred_fallthru
      _
    // Predicated region
    $region10: #{_lambda_.54} parent=1 // pred_check
      _
    $region11: #{_lambda_.54} parent=1 // pred_check_branch
      %16 = sbr.rel (0) target = $region13
    $region12: #{_lambda_.54} parent=1 // pred_region
      %s18 = ssub.s32 16, 16
      %19 = vsyncadd [#allocation3], %s18
      %s21 = sshll.u32 [#allocation2], 4
      %s22 = int_to_ptr.vmem [resolvable:$true] %s21
      %24 = dma.hbm_to_vmem [thread:$0]  %s2, 16, %s22, [#allocation3]
    $region13: #{_lambda_.54} parent=1 // pred_fallthru
      _
    // Predicated region
    $region14: #{_lambda_.54} parent=1 // pred_check
      _
    $region15: #{_lambda_.54} parent=1 // pred_check_branch
      %26 = sbr.rel (0) target = $region17
    $region16: #{_lambda_.54} parent=1 // pred_region
      %s28 = ssub.s32 16, 16
      %29 = vsyncadd [#allocation5], %s28
      %s31 = sshll.u32 [#allocation4], 4
      %s32 = int_to_ptr.vmem [resolvable:$true] %s31
      %34 = dma.hbm_to_vmem [thread:$0]  %s3, 16, %s32, [#allocation5]
    $region17: #{_lambda_.54} parent=1 // pred_fallthru
      _
    // Predicated region
    $region18: #{_lambda_.54} parent=1 // pred_check
      _
    $region19: #{_lambda_.54} parent=1 // pred_check_branch
      %36 = sbr.rel (0) target = $region21
    $region20: #{_lambda_.54} parent=1 // pred_region
      %37 = dma.done [#allocation3], 16
    $region21: #{_lambda_.54} parent=1 // pred_fallthru
      _
    // Predicated region
    $region22: #{_lambda_.54} parent=1 // pred_check
      _
    $region23: #{_lambda_.54} parent=1 // pred_check_branch
      %39 = sbr.rel (0) target = $region25
    $region24: #{_lambda_.54} parent=1 // pred_region
      %40 = dma.done [#allocation5], 16
    $region25: #{_lambda_.54} parent=1 // pred_fallthru
      _
    %v42 = vld [vmem:[%s0] sm:$0xf]
    %v43 = vld [vmem:[%s1] sm:$0xf]
    %v44 = vld [vmem:[%s1 + $0x4] sm:$0xf]
    %v45 = vld [vmem:[%s1 + $0x8] sm:$0xf]
    %v46 = vld [vmem:[%s1 + $0xc] sm:$0xf]
    %v51 = vunpack.c.l.b16 %v43
    %v52 = vunpack.c.l.b16 %v44
    %v53 = vunpack.c.l.b16 %v45
    %v54 = vunpack.c.l.b16 %v46
    %v55 = vpack.c.b16 %v52, %v51
    %v56 = vpack.c.b16 %v54, %v53
    %vm59 = vcmask 261120
    %v61 = vsel %vm59, %v42, 0
    %63 = vmatprep.subr.bf16.mxu0 0
    %64 = vmatpush1.bf16.msra.mxu0 %v55
    %65 = vmatprep.subr.bf16.mxu0 0
    %66 = vmatpush1.bf16.msra.mxu0 %v56
    %67 = vmatprep.subr.bf16.mxu0 0
    %68 = vmatpush1.bf16.msra.mxu0 0
    %69 = vmatprep.subr.bf16.mxu0 0
    %70 = vmatpush1.bf16.msra.mxu0 0
    %71 = vmatprep.subr.bf16.mxu0 0
    %72 = vmatpush1.bf16.msra.mxu0 0
    %73 = vmatprep.subr.bf16.mxu0 0
    %74 = vmatpush1.bf16.msra.mxu0 0
    %75 = vmatprep.subr.bf16.mxu0 0
    %76 = vmatpush1.bf16.msra.mxu0 0
    %77 = vmatprep.subr.bf16.mxu0 0
    %78 = vmatpush1.bf16.msra.mxu0 0
    %79 = vmatprep.subr.bf16.mxu0 0
    %80 = vmatpush1.bf16.msra.mxu0 0
    %81 = vmatprep.subr.bf16.mxu0 0
    %82 = vmatpush1.bf16.msra.mxu0 0
    %83 = vmatprep.subr.bf16.mxu0 0
    %84 = vmatpush1.bf16.msra.mxu0 0
    %85 = vmatprep.subr.bf16.mxu0 0
    %86 = vmatpush1.bf16.msra.mxu0 0
    %87 = vmatprep.subr.bf16.mxu0 0
    %88 = vmatpush1.bf16.msra.mxu0 0
    %89 = vmatprep.subr.bf16.mxu0 0
    %90 = vmatpush1.bf16.msra.mxu0 0
    %91 = vmatprep.subr.bf16.mxu0 0
    %92 = vmatpush1.bf16.msra.mxu0 0
    %93 = vmatprep.subr.bf16.mxu0 0
    %94 = vmatpush1.bf16.msra.mxu0 0
    %95 = vmatprep.mubr.bf16.mxu0 0
    %96 = vmatmul.mubr.bf16.gmra.mrb[0].mxu0 %v61
    %v97 = vpop.f32.mrb[0].mxu0
    %v98 = vadd.f32 0.0, %v97
    %v99 = vpop.f32.mrb[0].mxu0
    %v100 = vpop.f32.mrb[0].mxu0
    %v101 = vpop.f32.mrb[0].mxu0
    %102 = vdwg.mxu0
    %v103 = vld [vmem:[#allocation2] sm:$0x1]
    %v105 = vlaneseq
    %v106 = vshrl.u32 %v105, 7
    %v107 = vsub.s32 0, %v106
    %v108 = vrot.slane %v103, %v107
    %v110 = vmul.f32 %v98, %v108
    %v111 = vld [vmem:[#allocation4] sm:$0x1]
    %v113 = vlaneseq
    %v114 = vshrl.u32 %v113, 7
    %v115 = vsub.s32 0, %v114
    %v116 = vrot.slane %v111, %v115
    %v118 = vadd.f32 %v110, %v116
    %v119 = vmax.f32 %v118, 0.0
    %v120 = vmin.f32 %v119, 6.0
    %vm121 = vcmask 523264
    %122 = vst.msk [vmem:[%s4] sm:$0xff] %vm121, %v120
    // Predicated region
    $region26: #{_lambda_.54} parent=1 // pred_check
      _
    $region27: #{_lambda_.54} parent=1 // pred_check_branch
      %124 = sbr.rel (0) target = $region29
    $region28: #{_lambda_.54} parent=1 // pred_region
      _
    $region29: #{_lambda_.54} parent=1 // pred_fallthru
      _
    // Predicated region
    $region30: #{_lambda_.54} parent=1 // pred_check
      _
    $region31: #{_lambda_.54} parent=1 // pred_check_branch
      %126 = sbr.rel (0) target = $region33
    $region32: #{_lambda_.54} parent=1 // pred_region
      _
    $region33: #{_lambda_.54} parent=1 // pred_fallthru
      _
    %127 = vsyncpa [#allocation3], 1
    %128 = vsyncpa [#allocation5], 1

// kernel: _lambda_.55
$region0: #{_lambda_.55}
  #allocation0 [shape = 'u32[]', space=smem, size = 0x4, offset = 0x4, fixed_abs, tag = 'smem constant byte address 0x4 - core index']
  #allocation1 [shape = 'u32[144,128]{1,0:T(1,128)}', space=vmem, size = 0x12000, scoped, tag = 'internal scratch']
  %s0 = inlined_call_operand.vmem [shape: bf16[8,64], index: 0, kind: input, shape index: {}]
  %s1 = inlined_call_operand.vmem [shape: bf16[64,32], index: 1, kind: input, shape index: {}]
  %s2 = inlined_call_operand.vmem [shape: f32[1,32], index: 2, kind: input, shape index: {}]
  %s3 = inlined_call_operand.vmem [shape: f32[1,32], index: 3, kind: input, shape index: {}]
  %s4 = inlined_call_operand.vmem [shape: f32[8,32], index: 4, kind: output, shape index: {}]
  %s5 = sld [smem:[#allocation0]]
  $region26: #{_lambda_.55} parent=0
    _
  %s7 = ssub.s32 1, %s5
  %s8 = scalar_select 0, %s7, %s5
  // Predicated region
  $region2: #{_lambda_.55} parent=0 // pred_check
    _
  $region3: #{_lambda_.55} parent=0 // pred_check_branch
    %10 = sbr.rel (0) target = $region5
  $region4: #{_lambda_.55} parent=0 // pred_region
    _
  $region5: #{_lambda_.55} parent=0 // pred_fallthru
    _
  // Predicated region
  $region6: #{_lambda_.55} parent=0 // pred_check
    _
  $region7: #{_lambda_.55} parent=0 // pred_check_branch
    %12 = sbr.rel (0) target = $region9
  $region8: #{_lambda_.55} parent=0 // pred_region
    _
  $region9: #{_lambda_.55} parent=0 // pred_fallthru
    _
  // Predicated region
  $region10: #{_lambda_.55} parent=0 // pred_check
    _
  $region11: #{_lambda_.55} parent=0 // pred_check_branch
    %14 = sbr.rel (0) target = $region13
  $region12: #{_lambda_.55} parent=0 // pred_region
    _
  $region13: #{_lambda_.55} parent=0 // pred_fallthru
    _
  // Predicated region
  $region14: #{_lambda_.55} parent=0 // pred_check
    _
  $region15: #{_lambda_.55} parent=0 // pred_check_branch
    %16 = sbr.rel (0) target = $region17
  $region16: #{_lambda_.55} parent=0 // pred_region
    _
  $region17: #{_lambda_.55} parent=0 // pred_fallthru
    _
  %v18 = vld [vmem:[%s0] sm:$0xf]
  %v19 = vld [vmem:[%s1] sm:$0xf]
  %v20 = vld [vmem:[%s1 + $0x4] sm:$0xf]
  %v21 = vld [vmem:[%s1 + $0x8] sm:$0xf]
  %v22 = vld [vmem:[%s1 + $0xc] sm:$0xf]
  %v23 = vld [vmem:[%s1 + $0x10] sm:$0xf]
  %v24 = vld [vmem:[%s1 + $0x14] sm:$0xf]
  %v25 = vld [vmem:[%s1 + $0x18] sm:$0xf]
  %v26 = vld [vmem:[%s1 + $0x1c] sm:$0xf]
  %v35 = vunpack.c.l.b16 %v19
  %v36 = vunpack.c.l.b16 %v20
  %v37 = vunpack.c.l.b16 %v21
  %v38 = vunpack.c.l.b16 %v22
  %v39 = vunpack.c.l.b16 %v23
  %v40 = vunpack.c.l.b16 %v24
  %v41 = vunpack.c.l.b16 %v25
  %v42 = vunpack.c.l.b16 %v26
  %v43 = vpack.c.b16 %v36, %v35
  %v44 = vpack.c.b16 %v38, %v37
  %v45 = vpack.c.b16 %v40, %v39
  %v46 = vpack.c.b16 %v42, %v41
  %vm51 = vcmask 523264
  %v53 = vsel %vm51, %v18, 0
  %55 = vmatprep.subr.bf16.mxu0 0
  %56 = vmatpush1.bf16.msra.mxu0 %v43
  %57 = vmatprep.subr.bf16.mxu0 0
  %58 = vmatpush1.bf16.msra.mxu0 %v44
  %59 = vmatprep.subr.bf16.mxu0 0
  %60 = vmatpush1.bf16.msra.mxu0 %v45
  %61 = vmatprep.subr.bf16.mxu0 0
  %62 = vmatpush1.bf16.msra.mxu0 %v46
  %63 = vmatprep.subr.bf16.mxu0 0
  %64 = vmatpush1.bf16.msra.mxu0 0
  %65 = vmatprep.subr.bf16.mxu0 0
  %66 = vmatpush1.bf16.msra.mxu0 0
  %67 = vmatprep.subr.bf16.mxu0 0
  %68 = vmatpush1.bf16.msra.mxu0 0
  %69 = vmatprep.subr.bf16.mxu0 0
  %70 = vmatpush1.bf16.msra.mxu0 0
  %71 = vmatprep.subr.bf16.mxu0 0
  %72 = vmatpush1.bf16.msra.mxu0 0
  %73 = vmatprep.subr.bf16.mxu0 0
  %74 = vmatpush1.bf16.msra.mxu0 0
  %75 = vmatprep.subr.bf16.mxu0 0
  %76 = vmatpush1.bf16.msra.mxu0 0
  %77 = vmatprep.subr.bf16.mxu0 0
  %78 = vmatpush1.bf16.msra.mxu0 0
  %79 = vmatprep.subr.bf16.mxu0 0
  %80 = vmatpush1.bf16.msra.mxu0 0
  %81 = vmatprep.subr.bf16.mxu0 0
  %82 = vmatpush1.bf16.msra.mxu0 0
  %83 = vmatprep.subr.bf16.mxu0 0
  %84 = vmatpush1.bf16.msra.mxu0 0
  %85 = vmatprep.subr.bf16.mxu0 0
  %86 = vmatpush1.bf16.msra.mxu0 0
  %87 = vmatprep.mubr.bf16.mxu0 0
  %88 = vmatmul.mubr.bf16.gmra.mrb[0].mxu0 %v53
  %v89 = vpop.f32.mrb[0].mxu0
  %v90 = vadd.f32 0.0, %v89
  %v91 = vpop.f32.mrb[0].mxu0
  %v92 = vpop.f32.mrb[0].mxu0
  %v93 = vpop.f32.mrb[0].mxu0
  %94 = vdwg.mxu0
  %v95 = vld [vmem:[%s2] sm:$0x1]
  %v97 = vlaneseq
  %v98 = vshrl.u32 %v97, 7
  %v99 = vsub.s32 0, %v98
  %v100 = vrot.slane %v95, %v99
  %v102 = vmul.f32 %v90, %v100
  %v103 = vld [vmem:[%s3] sm:$0x1]
  %v105 = vlaneseq
  %v106 = vshrl.u32 %v105, 7
  %v107 = vsub.s32 0, %v106
  %v108 = vrot.slane %v103, %v107
  %v110 = vadd.f32 %v102, %v108
  %vm111 = vcmask 261120
  %112 = vst.msk [vmem:[%s4] sm:$0xff] %vm111, %v110
  // Predicated region
  $region18: #{_lambda_.55} parent=0 // pred_check
    _
  $region19: #{_lambda_.55} parent=0 // pred_check_branch
    %114 = sbr.rel (0) target = $region21
  $region20: #{_lambda_.55} parent=0 // pred_region
    _
  $region21: #{_lambda_.55} parent=0 // pred_fallthru
    _
  // Predicated region
  $region22: #{_lambda_.55} parent=0 // pred_check
    _
  $region23: #{_lambda_.55} parent=0 // pred_check_branch
    %116 = sbr.rel (0) target = $region25
  $region24: #{_lambda_.55} parent=0 // pred_region
    _
  $region25: #{_lambda_.55} parent=0 // pred_fallthru
    _

// kernel: _lambda_.56
$region0: #{_lambda_.56}
  #allocation0 [shape = 'u32[]', space=smem, size = 0x4, offset = 0x4, fixed_abs, tag = 'smem constant byte address 0x4 - core index']
  #allocation1 [shape = 'u32[144,128]{1,0:T(1,128)}', space=vmem, size = 0x12000, scoped, tag = 'internal scratch']
  %s0 = inlined_call_operand.vmem [shape: bf16[8,32], index: 0, kind: input, shape index: {}]
  %s1 = inlined_call_operand.vmem [shape: bf16[32,64], index: 1, kind: input, shape index: {}]
  %s2 = inlined_call_operand.vmem [shape: f32[1,64], index: 2, kind: input, shape index: {}]
  %s3 = inlined_call_operand.vmem [shape: f32[1,64], index: 3, kind: input, shape index: {}]
  %s4 = inlined_call_operand.vmem [shape: f32[8,64], index: 4, kind: output, shape index: {}]
  %s5 = sld [smem:[#allocation0]]
  $region26: #{_lambda_.56} parent=0
    _
  %s7 = ssub.s32 1, %s5
  %s8 = scalar_select 0, %s7, %s5
  // Predicated region
  $region2: #{_lambda_.56} parent=0 // pred_check
    _
  $region3: #{_lambda_.56} parent=0 // pred_check_branch
    %10 = sbr.rel (0) target = $region5
  $region4: #{_lambda_.56} parent=0 // pred_region
    _
  $region5: #{_lambda_.56} parent=0 // pred_fallthru
    _
  // Predicated region
  $region6: #{_lambda_.56} parent=0 // pred_check
    _
  $region7: #{_lambda_.56} parent=0 // pred_check_branch
    %12 = sbr.rel (0) target = $region9
  $region8: #{_lambda_.56} parent=0 // pred_region
    _
  $region9: #{_lambda_.56} parent=0 // pred_fallthru
    _
  // Predicated region
  $region10: #{_lambda_.56} parent=0 // pred_check
    _
  $region11: #{_lambda_.56} parent=0 // pred_check_branch
    %14 = sbr.rel (0) target = $region13
  $region12: #{_lambda_.56} parent=0 // pred_region
    _
  $region13: #{_lambda_.56} parent=0 // pred_fallthru
    _
  // Predicated region
  $region14: #{_lambda_.56} parent=0 // pred_check
    _
  $region15: #{_lambda_.56} parent=0 // pred_check_branch
    %16 = sbr.rel (0) target = $region17
  $region16: #{_lambda_.56} parent=0 // pred_region
    _
  $region17: #{_lambda_.56} parent=0 // pred_fallthru
    _
  %v18 = vld [vmem:[%s0] sm:$0xf]
  %v19 = vld [vmem:[%s1] sm:$0xf]
  %v20 = vld [vmem:[%s1 + $0x4] sm:$0xf]
  %v21 = vld [vmem:[%s1 + $0x8] sm:$0xf]
  %v22 = vld [vmem:[%s1 + $0xc] sm:$0xf]
  %v27 = vunpack.c.l.b16 %v19
  %v28 = vunpack.c.l.b16 %v20
  %v29 = vunpack.c.l.b16 %v21
  %v30 = vunpack.c.l.b16 %v22
  %v31 = vpack.c.b16 %v28, %v27
  %v32 = vpack.c.b16 %v30, %v29
  %vm35 = vcmask 261120
  %v37 = vsel %vm35, %v18, 0
  %39 = vmatprep.subr.bf16.mxu0 0
  %40 = vmatpush1.bf16.msra.mxu0 %v31
  %41 = vmatprep.subr.bf16.mxu0 0
  %42 = vmatpush1.bf16.msra.mxu0 %v32
  %43 = vmatprep.subr.bf16.mxu0 0
  %44 = vmatpush1.bf16.msra.mxu0 0
  %45 = vmatprep.subr.bf16.mxu0 0
  %46 = vmatpush1.bf16.msra.mxu0 0
  %47 = vmatprep.subr.bf16.mxu0 0
  %48 = vmatpush1.bf16.msra.mxu0 0
  %49 = vmatprep.subr.bf16.mxu0 0
  %50 = vmatpush1.bf16.msra.mxu0 0
  %51 = vmatprep.subr.bf16.mxu0 0
  %52 = vmatpush1.bf16.msra.mxu0 0
  %53 = vmatprep.subr.bf16.mxu0 0
  %54 = vmatpush1.bf16.msra.mxu0 0
  %55 = vmatprep.subr.bf16.mxu0 0
  %56 = vmatpush1.bf16.msra.mxu0 0
  %57 = vmatprep.subr.bf16.mxu0 0
  %58 = vmatpush1.bf16.msra.mxu0 0
  %59 = vmatprep.subr.bf16.mxu0 0
  %60 = vmatpush1.bf16.msra.mxu0 0
  %61 = vmatprep.subr.bf16.mxu0 0
  %62 = vmatpush1.bf16.msra.mxu0 0
  %63 = vmatprep.subr.bf16.mxu0 0
  %64 = vmatpush1.bf16.msra.mxu0 0
  %65 = vmatprep.subr.bf16.mxu0 0
  %66 = vmatpush1.bf16.msra.mxu0 0
  %67 = vmatprep.subr.bf16.mxu0 0
  %68 = vmatpush1.bf16.msra.mxu0 0
  %69 = vmatprep.subr.bf16.mxu0 0
  %70 = vmatpush1.bf16.msra.mxu0 0
  %71 = vmatprep.mubr.bf16.mxu0 0
  %72 = vmatmul.mubr.bf16.gmra.mrb[0].mxu0 %v37
  %v73 = vpop.f32.mrb[0].mxu0
  %v74 = vadd.f32 0.0, %v73
  %v75 = vpop.f32.mrb[0].mxu0
  %v76 = vpop.f32.mrb[0].mxu0
  %v77 = vpop.f32.mrb[0].mxu0
  %78 = vdwg.mxu0
  %v79 = vld [vmem:[%s2] sm:$0x1]
  %v81 = vlaneseq
  %v82 = vshrl.u32 %v81, 7
  %v83 = vsub.s32 0, %v82
  %v84 = vrot.slane %v79, %v83
  %v86 = vmul.f32 %v74, %v84
  %v87 = vld [vmem:[%s3] sm:$0x1]
  %v89 = vlaneseq
  %v90 = vshrl.u32 %v89, 7
  %v91 = vsub.s32 0, %v90
  %v92 = vrot.slane %v87, %v91
  %v94 = vadd.f32 %v86, %v92
  %vm95 = vcmask 523264
  %96 = vst.msk [vmem:[%s4] sm:$0xff] %vm95, %v94
  // Predicated region
  $region18: #{_lambda_.56} parent=0 // pred_check
    _
  $region19: #{_lambda_.56} parent=0 // pred_check_branch
    %98 = sbr.rel (0) target = $region21
  $region20: #{_lambda_.56} parent=0 // pred_region
    _
  $region21: #{_lambda_.56} parent=0 // pred_fallthru
    _
  // Predicated region
  $region22: #{_lambda_.56} parent=0 // pred_check
    _
  $region23: #{_lambda_.56} parent=0 // pred_check_branch
    %100 = sbr.rel (0) target = $region25
  $region24: #{_lambda_.56} parent=0 // pred_region
    _
  $region25: #{_lambda_.56} parent=0 // pred_fallthru
    _

// kernel: _lambda_.57
$region0: #{_lambda_.57}
  #allocation0 [shape = 'u32[]', space=smem, size = 0x4, offset = 0x4, fixed_abs, tag = 'smem constant byte address 0x4 - core index']
  #allocation1 [shape = 'u32[144,128]{1,0:T(1,128)}', space=vmem, size = 0x12000, scoped, tag = 'internal scratch']
  %s0 = inlined_call_operand.vmem [shape: bf16[8,32], index: 0, kind: input, shape index: {}]
  %s1 = inlined_call_operand.vmem [shape: bf16[32,32], index: 1, kind: input, shape index: {}]
  %s2 = inlined_call_operand.vmem [shape: f32[1,32], index: 2, kind: input, shape index: {}]
  %s3 = inlined_call_operand.vmem [shape: f32[1,32], index: 3, kind: input, shape index: {}]
  %s4 = inlined_call_operand.vmem [shape: f32[8,32], index: 4, kind: output, shape index: {}]
  %s5 = sld [smem:[#allocation0]]
  $region26: #{_lambda_.57} parent=0
    _
  %s7 = ssub.s32 1, %s5
  %s8 = scalar_select 0, %s7, %s5
  // Predicated region
  $region2: #{_lambda_.57} parent=0 // pred_check
    _
  $region3: #{_lambda_.57} parent=0 // pred_check_branch
    %10 = sbr.rel (0) target = $region5
  $region4: #{_lambda_.57} parent=0 // pred_region
    _
  $region5: #{_lambda_.57} parent=0 // pred_fallthru
    _
  // Predicated region
  $region6: #{_lambda_.57} parent=0 // pred_check
    _
  $region7: #{_lambda_.57} parent=0 // pred_check_branch
    %12 = sbr.rel (0) target = $region9
  $region8: #{_lambda_.57} parent=0 // pred_region
    _
  $region9: #{_lambda_.57} parent=0 // pred_fallthru
    _
  // Predicated region
  $region10: #{_lambda_.57} parent=0 // pred_check
    _
  $region11: #{_lambda_.57} parent=0 // pred_check_branch
    %14 = sbr.rel (0) target = $region13
  $region12: #{_lambda_.57} parent=0 // pred_region
    _
  $region13: #{_lambda_.57} parent=0 // pred_fallthru
    _
  // Predicated region
  $region14: #{_lambda_.57} parent=0 // pred_check
    _
  $region15: #{_lambda_.57} parent=0 // pred_check_branch
    %16 = sbr.rel (0) target = $region17
  $region16: #{_lambda_.57} parent=0 // pred_region
    _
  $region17: #{_lambda_.57} parent=0 // pred_fallthru
    _
  %v18 = vld [vmem:[%s0] sm:$0xf]
  %v19 = vld [vmem:[%s1] sm:$0xf]
  %v20 = vld [vmem:[%s1 + $0x4] sm:$0xf]
  %v21 = vld [vmem:[%s1 + $0x8] sm:$0xf]
  %v22 = vld [vmem:[%s1 + $0xc] sm:$0xf]
  %v27 = vunpack.c.l.b16 %v19
  %v28 = vunpack.c.l.b16 %v20
  %v29 = vunpack.c.l.b16 %v21
  %v30 = vunpack.c.l.b16 %v22
  %v31 = vpack.c.b16 %v28, %v27
  %v32 = vpack.c.b16 %v30, %v29
  %vm35 = vcmask 261120
  %v37 = vsel %vm35, %v18, 0
  %39 = vmatprep.subr.bf16.mxu0 0
  %40 = vmatpush1.bf16.msra.mxu0 %v31
  %41 = vmatprep.subr.bf16.mxu0 0
  %42 = vmatpush1.bf16.msra.mxu0 %v32
  %43 = vmatprep.subr.bf16.mxu0 0
  %44 = vmatpush1.bf16.msra.mxu0 0
  %45 = vmatprep.subr.bf16.mxu0 0
  %46 = vmatpush1.bf16.msra.mxu0 0
  %47 = vmatprep.subr.bf16.mxu0 0
  %48 = vmatpush1.bf16.msra.mxu0 0
  %49 = vmatprep.subr.bf16.mxu0 0
  %50 = vmatpush1.bf16.msra.mxu0 0
  %51 = vmatprep.subr.bf16.mxu0 0
  %52 = vmatpush1.bf16.msra.mxu0 0
  %53 = vmatprep.subr.bf16.mxu0 0
  %54 = vmatpush1.bf16.msra.mxu0 0
  %55 = vmatprep.subr.bf16.mxu0 0
  %56 = vmatpush1.bf16.msra.mxu0 0
  %57 = vmatprep.subr.bf16.mxu0 0
  %58 = vmatpush1.bf16.msra.mxu0 0
  %59 = vmatprep.subr.bf16.mxu0 0
  %60 = vmatpush1.bf16.msra.mxu0 0
  %61 = vmatprep.subr.bf16.mxu0 0
  %62 = vmatpush1.bf16.msra.mxu0 0
  %63 = vmatprep.subr.bf16.mxu0 0
  %64 = vmatpush1.bf16.msra.mxu0 0
  %65 = vmatprep.subr.bf16.mxu0 0
  %66 = vmatpush1.bf16.msra.mxu0 0
  %67 = vmatprep.subr.bf16.mxu0 0
  %68 = vmatpush1.bf16.msra.mxu0 0
  %69 = vmatprep.subr.bf16.mxu0 0
  %70 = vmatpush1.bf16.msra.mxu0 0
  %71 = vmatprep.mubr.bf16.mxu0 0
  %72 = vmatmul.mubr.bf16.gmra.mrb[0].mxu0 %v37
  %v73 = vpop.f32.mrb[0].mxu0
  %v74 = vadd.f32 0.0, %v73
  %v75 = vpop.f32.mrb[0].mxu0
  %v76 = vpop.f32.mrb[0].mxu0
  %v77 = vpop.f32.mrb[0].mxu0
  %78 = vdwg.mxu0
  %v79 = vld [vmem:[%s2] sm:$0x1]
  %v81 = vlaneseq
  %v82 = vshrl.u32 %v81, 7
  %v83 = vsub.s32 0, %v82
  %v84 = vrot.slane %v79, %v83
  %v86 = vmul.f32 %v74, %v84
  %v87 = vld [vmem:[%s3] sm:$0x1]
  %v89 = vlaneseq
  %v90 = vshrl.u32 %v89, 7
  %v91 = vsub.s32 0, %v90
  %v92 = vrot.slane %v87, %v91
  %v94 = vadd.f32 %v86, %v92
  %95 = vst.msk [vmem:[%s4] sm:$0xff] %vm35, %v94
  // Predicated region
  $region18: #{_lambda_.57} parent=0 // pred_check
    _
  $region19: #{_lambda_.57} parent=0 // pred_check_branch
    %97 = sbr.rel (0) target = $region21
  $region20: #{_lambda_.57} parent=0 // pred_region
    _
  $region21: #{_lambda_.57} parent=0 // pred_fallthru
    _
  // Predicated region
  $region22: #{_lambda_.57} parent=0 // pred_check
    _
  $region23: #{_lambda_.57} parent=0 // pred_check_branch
    %99 = sbr.rel (0) target = $region25
  $region24: #{_lambda_.57} parent=0 // pred_region
    _
  $region25: #{_lambda_.57} parent=0 // pred_fallthru
    _

// kernel: _lambda_.58
$region0: #{_lambda_.58}
  #allocation0 [shape = 'u32[]', space=smem, size = 0x4, offset = 0x4, fixed_abs, tag = 'smem constant byte address 0x4 - core index']
  #allocation1 [shape = 'u32[144,128]{1,0:T(1,128)}', space=vmem, size = 0x12000, scoped, tag = 'internal scratch']
  %s0 = inlined_call_operand.vmem [shape: bf16[2,2,4,16], index: 0, kind: input, shape index: {}]
  %s1 = inlined_call_operand.vmem [shape: bf16[2,2,4,16], index: 1, kind: input, shape index: {}]
  %s2 = inlined_call_operand.vmem [shape: bf16[2,2,4,16], index: 2, kind: input, shape index: {}]
  %s3 = inlined_call_operand.vmem [shape: f32[2,4,4], index: 3, kind: input, shape index: {}]
  %s4 = inlined_call_operand.vmem [shape: f32[2,2,4,16], index: 4, kind: output, shape index: {}]
  %s5 = sld [smem:[#allocation0]]
  $region49: #{_lambda_.58} parent=0
    _
  %s7 = ssub.s32 1, %s5
  %s8 = scalar_select 0, %s7, %s5
  loop: start=0, step=1, limit=4
  $region2: #{_lambda_.58} parent=0 // loop_pre_header
    _
  $region3: #{_lambda_.58} parent=0 // loop_header
    %s10 = sphi 0, %s14
    %p11 = scmp.ge.s32.totalorder %s10, 4
    %s20 = sphi 0, %s22
    %s23 = sphi 0, %s20
    %s24 = sphi 0, %s23
    %s40 = sphi 0, %s24
    %s46 = sphi 0, %s48
    %s49 = sphi 0, %s46
    %s50 = sphi 0, %s49
    %s66 = sphi 0, %s50
    %s72 = sphi 0, %s74
    %s75 = sphi 0, %s72
    %s76 = sphi 0, %s75
    %s92 = sphi 0, %s76
    %s98 = sphi 0, %s100
    %s101 = sphi 0, %s98
    %s102 = sphi 0, %s101
    %s118 = sphi 0, %s102
    %s124 = sphi 0, %s126
    %s127 = sphi 0, %s124
    %s128 = sphi 0, %s127
    %s144 = sphi 0, %s128
  $region4: #{_lambda_.58} parent=0 // loop_header_branch
    %13 = sbr.rel (%p11) target = $region8
  $region5: #{_lambda_.58} parent=0 // loop_body
    %s15 = ssub.s32 %s10, 1
    %s16 = ssub.s32 %s10, 2
    %s17 = sadd.s32 %s10, 1
    %s18 = ssub.s32 %s10, %s17
    %p19 = scmp.eq.s32.totalorder %s18, 0
    %s21 = sadd.s32 %s20, 1
    %s22 = scalar_select %p19, %s20, %s21
    %p25 = pneg %p19
    %p26 = scmp.eq.s32.totalorder %s10, 1
    %p27 = por %p25, %p26
    %p28 = scmp.ne.s32.totalorder %s20, %s23
    %p29 = scmp.eq.s32.totalorder %s10, 0
    %p30 = por %p28, %p29
    %p31 = scmp.ne.s32.totalorder %s20, %s23
    %p32 = scmp.eq.s32.totalorder %s15, 1
    %p33 = por %p31, %p32
    %p34 = scmp.ne.s32.totalorder %s23, %s24
    %p35 = scmp.eq.s32.totalorder %s15, 0
    %p36 = por %p34, %p35
    %p37 = scmp.ne.s32.totalorder %s23, %s24
    %p38 = scmp.eq.s32.totalorder %s16, 1
    %p39 = por %p37, %p38
    %p41 = scmp.ne.s32.totalorder %s24, %s40
    %p42 = scmp.eq.s32.totalorder %s16, 0
    %p43 = por %p41, %p42
    %s44 = ssub.s32 %s10, %s17
    %p45 = scmp.eq.s32.totalorder %s44, 0
    %s47 = sadd.s32 %s46, 1
    %s48 = scalar_select %p45, %s46, %s47
    %p51 = pneg %p45
    %p52 = scmp.eq.s32.totalorder %s10, 1
    %p53 = por %p51, %p52
    %p54 = scmp.ne.s32.totalorder %s46, %s49
    %p55 = scmp.eq.s32.totalorder %s10, 0
    %p56 = por %p54, %p55
    %p57 = scmp.ne.s32.totalorder %s46, %s49
    %p58 = scmp.eq.s32.totalorder %s15, 1
    %p59 = por %p57, %p58
    %p60 = scmp.ne.s32.totalorder %s49, %s50
    %p61 = scmp.eq.s32.totalorder %s15, 0
    %p62 = por %p60, %p61
    %p63 = scmp.ne.s32.totalorder %s49, %s50
    %p64 = scmp.eq.s32.totalorder %s16, 1
    %p65 = por %p63, %p64
    %p67 = scmp.ne.s32.totalorder %s50, %s66
    %p68 = scmp.eq.s32.totalorder %s16, 0
    %p69 = por %p67, %p68
    %s70 = ssub.s32 %s10, %s17
    %p71 = scmp.eq.s32.totalorder %s70, 0
    %s73 = sadd.s32 %s72, 1
    %s74 = scalar_select %p71, %s72, %s73
    %p77 = pneg %p71
    %p78 = scmp.eq.s32.totalorder %s10, 1
    %p79 = por %p77, %p78
    %p80 = scmp.ne.s32.totalorder %s72, %s75
    %p81 = scmp.eq.s32.totalorder %s10, 0
    %p82 = por %p80, %p81
    %p83 = scmp.ne.s32.totalorder %s72, %s75
    %p84 = scmp.eq.s32.totalorder %s15, 1
    %p85 = por %p83, %p84
    %p86 = scmp.ne.s32.totalorder %s75, %s76
    %p87 = scmp.eq.s32.totalorder %s15, 0
    %p88 = por %p86, %p87
    %p89 = scmp.ne.s32.totalorder %s75, %s76
    %p90 = scmp.eq.s32.totalorder %s16, 1
    %p91 = por %p89, %p90
    %p93 = scmp.ne.s32.totalorder %s76, %s92
    %p94 = scmp.eq.s32.totalorder %s16, 0
    %p95 = por %p93, %p94
    %s96 = ssub.s32 %s10, %s17
    %p97 = scmp.eq.s32.totalorder %s96, 0
    %s99 = sadd.s32 %s98, 1
    %s100 = scalar_select %p97, %s98, %s99
    %p103 = pneg %p97
    %p104 = scmp.eq.s32.totalorder %s10, 1
    %p105 = por %p103, %p104
    %p106 = scmp.ne.s32.totalorder %s98, %s101
    %p107 = scmp.eq.s32.totalorder %s10, 0
    %p108 = por %p106, %p107
    %p109 = scmp.ne.s32.totalorder %s98, %s101
    %p110 = scmp.eq.s32.totalorder %s15, 1
    %p111 = por %p109, %p110
    %p112 = scmp.ne.s32.totalorder %s101, %s102
    %p113 = scmp.eq.s32.totalorder %s15, 0
    %p114 = por %p112, %p113
    %p115 = scmp.ne.s32.totalorder %s101, %s102
    %p116 = scmp.eq.s32.totalorder %s16, 1
    %p117 = por %p115, %p116
    %p119 = scmp.ne.s32.totalorder %s102, %s118
    %p120 = scmp.eq.s32.totalorder %s16, 0
    %p121 = por %p119, %p120
    %s122 = ssub.s32 %s10, %s17
    %p123 = scmp.eq.s32.totalorder %s122, 0
    %s125 = sadd.s32 %s124, 1
    %s126 = scalar_select %p123, %s124, %s125
    %p129 = pneg %p123
    %p130 = scmp.eq.s32.totalorder %s10, 1
    %p131 = por %p129, %p130
    %p132 = scmp.ne.s32.totalorder %s124, %s127
    %p133 = scmp.eq.s32.totalorder %s10, 0
    %p134 = por %p132, %p133
    %p135 = scmp.ne.s32.totalorder %s124, %s127
    %p136 = scmp.eq.s32.totalorder %s15, 1
    %p137 = por %p135, %p136
    %p138 = scmp.ne.s32.totalorder %s127, %s128
    %p139 = scmp.eq.s32.totalorder %s15, 0
    %p140 = por %p138, %p139
    %p141 = scmp.ne.s32.totalorder %s127, %s128
    %p142 = scmp.eq.s32.totalorder %s16, 1
    %p143 = por %p141, %p142
    %p145 = scmp.ne.s32.totalorder %s128, %s144
    %p146 = scmp.eq.s32.totalorder %s16, 0
    %p147 = por %p145, %p146
    %p148 = scmp.le.s32.totalorder 1, %s10
    %p149 = scmp.lt.s32.totalorder %s10, 3
    %p150 = pnand %p148, %p149
    %p151 = pneg %p150
    // Predicated region
    $region9: #{_lambda_.58} parent=5 // pred_check
      _
    $region10: #{_lambda_.58} parent=5 // pred_check_branch
      %153 = sbr.rel (%p150) target = $region12
    $region11: #{_lambda_.58} parent=5 // pred_region
      %s154 = ssub.s32 %s10, 1
    $region12: #{_lambda_.58} parent=5 // pred_fallthru
      _
    %p155 = scmp.lt.s32.totalorder %s10, 2
    // Predicated region
    $region13: #{_lambda_.58} parent=5 // pred_check
      %p156 = pneg %p155
    $region14: #{_lambda_.58} parent=5 // pred_check_branch
      %158 = sbr.rel (%p156) target = $region16
    $region15: #{_lambda_.58} parent=5 // pred_region
      // Predicated region
      $region17: #{_lambda_.58} parent=15 // pred_check
        %p159 = pneg %p30
      $region18: #{_lambda_.58} parent=15 // pred_check_branch
        %161 = sbr.rel (%p159) target = $region20
      $region19: #{_lambda_.58} parent=15 // pred_region
        %p162 = scmp.lt.s32.totalorder %s10, 1
        %s163 = scalar_select %p162, %s10, 1
        %s164 = smul.addr %s163, 2
        %s165 = smul.addr %s164, 2
        %s166 = scalar_lea.vmem %s0, %s165
      $region20: #{_lambda_.58} parent=15 // pred_fallthru
        _
      // Predicated region
      $region21: #{_lambda_.58} parent=15 // pred_check
        %p167 = pneg %p56
      $region22: #{_lambda_.58} parent=15 // pred_check_branch
        %169 = sbr.rel (%p167) target = $region24
      $region23: #{_lambda_.58} parent=15 // pred_region
        %p170 = scmp.lt.s32.totalorder %s10, 1
        %s171 = scalar_select %p170, %s10, 1
        %s172 = smul.addr %s171, 2
        %s173 = smul.addr %s172, 2
        %s174 = scalar_lea.vmem %s1, %s173
      $region24: #{_lambda_.58} parent=15 // pred_fallthru
        _
      // Predicated region
      $region25: #{_lambda_.58} parent=15 // pred_check
        %p175 = pneg %p82
      $region26: #{_lambda_.58} parent=15 // pred_check_branch
        %177 = sbr.rel (%p175) target = $region28
      $region27: #{_lambda_.58} parent=15 // pred_region
        %p178 = scmp.lt.s32.totalorder %s10, 1
        %s179 = scalar_select %p178, %s10, 1
        %s180 = smul.addr %s179, 2
        %s181 = smul.addr %s180, 2
        %s182 = scalar_lea.vmem %s2, %s181
      $region28: #{_lambda_.58} parent=15 // pred_fallthru
        _
      // Predicated region
      $region29: #{_lambda_.58} parent=15 // pred_check
        %p183 = pneg %p108
      $region30: #{_lambda_.58} parent=15 // pred_check_branch
        %185 = sbr.rel (%p183) target = $region32
      $region31: #{_lambda_.58} parent=15 // pred_region
        %p186 = scmp.lt.s32.totalorder %s10, 1
        %s187 = scalar_select %p186, %s10, 1
        %s188 = smul.addr %s187, 4
        %s189 = scalar_lea.vmem %s3, %s188
      $region32: #{_lambda_.58} parent=15 // pred_fallthru
        _
    $region16: #{_lambda_.58} parent=5 // pred_fallthru
      _
    %p190 = scmp.le.s32.totalorder 1, %s10
    %p191 = scmp.lt.s32.totalorder %s10, 3
    %p192 = pnand %p190, %p191
    %p193 = pneg %p192
    // Predicated region
    $region33: #{_lambda_.58} parent=5 // pred_check
      _
    $region34: #{_lambda_.58} parent=5 // pred_check_branch
      %195 = sbr.rel (%p192) target = $region36
    $region35: #{_lambda_.58} parent=5 // pred_region
      %s196 = ssub.s32 %s10, 1
      %p197 = scmp.lt.s32.totalorder %s15, 1
      %s198 = scalar_select %p197, %s15, 1
      %s199 = smul.addr %s198, 2
      %s200 = smul.addr %s199, 2
      %s201 = scalar_lea.vmem %s0, %s200
      %p202 = pneg %p36
      %p203 = pneg %p33
      %p204 = scmp.lt.s32.totalorder %s15, 1
      %s205 = scalar_select %p204, %s15, 1
      %s206 = smul.addr %s205, 2
      %s207 = smul.addr %s206, 2
      %s208 = scalar_lea.vmem %s1, %s207
      %p209 = pneg %p62
      %p210 = pneg %p59
      %p211 = scmp.lt.s32.totalorder %s15, 1
      %s212 = scalar_select %p211, %s15, 1
      %s213 = smul.addr %s212, 2
      %s214 = smul.addr %s213, 2
      %s215 = scalar_lea.vmem %s2, %s214
      %p216 = pneg %p88
      %p217 = pneg %p85
      %p218 = scmp.lt.s32.totalorder %s15, 1
      %s219 = scalar_select %p218, %s15, 1
      %s220 = smul.addr %s219, 4
      %s221 = scalar_lea.vmem %s3, %s220
      %p222 = pneg %p114
      %p223 = pneg %p111
      %p224 = pneg %p140
      %p225 = pneg %p137
      %p226 = scmp.lt.s32.totalorder %s15, 1
      %s227 = scalar_select %p226, %s15, 1
      %s228 = smul.addr %s227, 2
      %s229 = smul.addr %s228, 4
      %s230 = scalar_lea.vmem %s4, %s229
      %p231 = scmp.lt.s32.totalorder %s15, 1
      %s232 = scalar_select %p231, %s15, 1
      %s233 = smul.addr %s232, 2
      %s234 = smul.addr %s233, 2
      %s235 = scalar_lea.vmem %s0, %s234
      %p236 = scmp.lt.s32.totalorder %s15, 1
      %s237 = scalar_select %p236, %s15, 1
      %s238 = smul.addr %s237, 2
      %s239 = smul.addr %s238, 2
      %s240 = scalar_lea.vmem %s1, %s239
      %p241 = scmp.lt.s32.totalorder %s15, 1
      %s242 = scalar_select %p241, %s15, 1
      %s243 = smul.addr %s242, 2
      %s244 = smul.addr %s243, 2
      %s245 = scalar_lea.vmem %s2, %s244
      %p246 = scmp.lt.s32.totalorder %s15, 1
      %s247 = scalar_select %p246, %s15, 1
      %s248 = smul.addr %s247, 4
      %s249 = scalar_lea.vmem %s3, %s248
      %p250 = scmp.lt.s32.totalorder %s15, 1
      %s251 = scalar_select %p250, %s15, 1
      %s252 = smul.addr %s251, 2
      %s253 = smul.addr %s252, 4
      %s254 = scalar_lea.vmem %s4, %s253
      %v256 = vld [vmem:[%s235] sm:$0x3]
      %v257 = vld [vmem:[%s235 + $0x2] sm:$0x3]
      %v258 = vld [vmem:[%s240] sm:$0x3]
      %v259 = vld [vmem:[%s240 + $0x2] sm:$0x3]
      %v260 = vld [vmem:[%s245] sm:$0x3]
      %v261 = vld [vmem:[%s245 + $0x2] sm:$0x3]
      %v262 = vld [vmem:[%s249] sm:$0xf]
      %vm263 = vcmask 130048
      %v265 = vsel %vm263, %v256, 0
      %v268 = vsel %vm263, %v258, 0
      %270 = vmatprep.subr.bf16.mxu0 0
      %271 = vmatpush1.bf16.xpose.msra.mxu0 %v268
      %272 = vmatprep.subr.bf16.mxu0 0
      %273 = vmatpush1.bf16.xpose.msra.mxu0 0
      %274 = vmatprep.subr.bf16.mxu0 0
      %275 = vmatpush1.bf16.xpose.msra.mxu0 0
      %276 = vmatprep.subr.bf16.mxu0 0
      %277 = vmatpush1.bf16.xpose.msra.mxu0 0
      %278 = vmatprep.subr.bf16.mxu0 0
      %279 = vmatpush1.bf16.xpose.msra.mxu0 0
      %280 = vmatprep.subr.bf16.mxu0 0
      %281 = vmatpush1.bf16.xpose.msra.mxu0 0
      %282 = vmatprep.subr.bf16.mxu0 0
      %283 = vmatpush1.bf16.xpose.msra.mxu0 0
      %284 = vmatprep.subr.bf16.mxu0 0
      %285 = vmatpush1.bf16.xpose.msra.mxu0 0
      %286 = vmatprep.subr.bf16.mxu0 0
      %287 = vmatpush1.bf16.xpose.msra.mxu0 0
      %288 = vmatprep.subr.bf16.mxu0 0
      %289 = vmatpush1.bf16.xpose.msra.mxu0 0
      %290 = vmatprep.subr.bf16.mxu0 0
      %291 = vmatpush1.bf16.xpose.msra.mxu0 0
      %292 = vmatprep.subr.bf16.mxu0 0
      %293 = vmatpush1.bf16.xpose.msra.mxu0 0
      %294 = vmatprep.subr.bf16.mxu0 0
      %295 = vmatpush1.bf16.xpose.msra.mxu0 0
      %296 = vmatprep.subr.bf16.mxu0 0
      %297 = vmatpush1.bf16.xpose.msra.mxu0 0
      %298 = vmatprep.subr.bf16.mxu0 0
      %299 = vmatpush1.bf16.xpose.msra.mxu0 0
      %300 = vmatprep.subr.bf16.mxu0 0
      %301 = vmatpush1.bf16.xpose.msra.mxu0 0
      %302 = vmatprep.mubr.bf16.mxu0 0
      %303 = vmatmul.mubr.bf16.gmra.mrb[0].mxu0 %v265
      %v304 = vpop.f32.mrb[0].mxu0
      %v305 = vadd.f32 0.0, %v304
      %v306 = vpop.f32.mrb[0].mxu0
      %v307 = vpop.f32.mrb[0].mxu0
      %v308 = vpop.f32.mrb[0].mxu0
      %309 = vdwg.mxu0
      %v311 = vsel %vm263, %v257, 0
      %v314 = vsel %vm263, %v259, 0
      %316 = vmatprep.subr.bf16.mxu0 0
      %317 = vmatpush1.bf16.xpose.msra.mxu0 %v314
      %318 = vmatprep.subr.bf16.mxu0 0
      %319 = vmatpush1.bf16.xpose.msra.mxu0 0
      %320 = vmatprep.subr.bf16.mxu0 0
      %321 = vmatpush1.bf16.xpose.msra.mxu0 0
      %322 = vmatprep.subr.bf16.mxu0 0
      %323 = vmatpush1.bf16.xpose.msra.mxu0 0
      %324 = vmatprep.subr.bf16.mxu0 0
      %325 = vmatpush1.bf16.xpose.msra.mxu0 0
      %326 = vmatprep.subr.bf16.mxu0 0
      %327 = vmatpush1.bf16.xpose.msra.mxu0 0
      %328 = vmatprep.subr.bf16.mxu0 0
      %329 = vmatpush1.bf16.xpose.msra.mxu0 0
      %330 = vmatprep.subr.bf16.mxu0 0
      %331 = vmatpush1.bf16.xpose.msra.mxu0 0
      %332 = vmatprep.subr.bf16.mxu0 0
      %333 = vmatpush1.bf16.xpose.msra.mxu0 0
      %334 = vmatprep.subr.bf16.mxu0 0
      %335 = vmatpush1.bf16.xpose.msra.mxu0 0
      %336 = vmatprep.subr.bf16.mxu0 0
      %337 = vmatpush1.bf16.xpose.msra.mxu0 0
      %338 = vmatprep.subr.bf16.mxu0 0
      %339 = vmatpush1.bf16.xpose.msra.mxu0 0
      %340 = vmatprep.subr.bf16.mxu0 0
      %341 = vmatpush1.bf16.xpose.msra.mxu0 0
      %342 = vmatprep.subr.bf16.mxu0 0
      %343 = vmatpush1.bf16.xpose.msra.mxu0 0
      %344 = vmatprep.subr.bf16.mxu0 0
      %345 = vmatpush1.bf16.xpose.msra.mxu0 0
      %346 = vmatprep.subr.bf16.mxu0 0
      %347 = vmatpush1.bf16.xpose.msra.mxu0 0
      %348 = vmatprep.mubr.bf16.mxu0 0
      %349 = vmatmul.mubr.bf16.gmra.mrb[0].mxu0 %v311
      %v350 = vpop.f32.mrb[0].mxu0
      %v351 = vadd.f32 0.0, %v350
      %v352 = vpop.f32.mrb[0].mxu0
      %v353 = vpop.f32.mrb[0].mxu0
      %v354 = vpop.f32.mrb[0].mxu0
      %355 = vdwg.mxu0
      %v356 = vmul.f32 %v305, 0.25
      %v357 = vmul.f32 %v351, 0.25
      %v358 = vadd.f32 %v356, %v262
      %v359 = vadd.f32 %v357, %v262
      %vm360 = vcmask 27648
      %v361 = vsel %vm360, %v358, -inf
      %362 = vmax.xlane.f32.xlu0 %v361
      %v363 = vpop.xlane.xlu0 %362
      %v364 = vsel %vm360, %v359, -inf
      %365 = vmax.xlane.f32.xlu0 %v364
      %v366 = vpop.xlane.xlu0 %365
      %v367 = vsub.f32 %v358, %v363
      %v368 = vsub.f32 %v359, %v366
      %v369 = vmul.f32 %v367, 1.442695
      %v370 = vpow.pop %v369
      %v371 = vmul.f32 %v368, 1.442695
      %v372 = vpow.pop %v371
      %v373 = vsel %vm360, %v370, 0.0
      %374 = vadd.xlane.f32.xlu0 %v373
      %v375 = vpop.xlane.xlu0 %374
      %v376 = vsel %vm360, %v372, 0.0
      %377 = vadd.xlane.f32.xlu0 %v376
      %v378 = vpop.xlane.xlu0 %377
      %v379 = vrcp.pop %v375
      %v380 = vrcp.pop %v378
      %v381 = vmul.f32 %v370, %v379
      %v382 = vmul.f32 %v372, %v380
      %v383 = vpack.c.bf16 %v381, %v381
      %v384 = vpack.c.bf16 %v382, %v382
      %vm385 = vcmask 31744
      %v387 = vsel %vm385, %v383, 0
      %vm389 = vcmask 1041408
      %v391 = vsel %vm389, %v260, 0
      %393 = vmatprep.subr.bf16.mxu0 0
      %394 = vmatpush1.bf16.msra.mxu0 %v391
      %395 = vmatprep.subr.bf16.mxu0 0
      %396 = vmatpush1.bf16.msra.mxu0 0
      %397 = vmatprep.subr.bf16.mxu0 0
      %398 = vmatpush1.bf16.msra.mxu0 0
      %399 = vmatprep.subr.bf16.mxu0 0
      %400 = vmatpush1.bf16.msra.mxu0 0
      %401 = vmatprep.subr.bf16.mxu0 0
      %402 = vmatpush1.bf16.msra.mxu0 0
      %403 = vmatprep.subr.bf16.mxu0 0
      %404 = vmatpush1.bf16.msra.mxu0 0
      %405 = vmatprep.subr.bf16.mxu0 0
      %406 = vmatpush1.bf16.msra.mxu0 0
      %407 = vmatprep.subr.bf16.mxu0 0
      %408 = vmatpush1.bf16.msra.mxu0 0
      %409 = vmatprep.subr.bf16.mxu0 0
      %410 = vmatpush1.bf16.msra.mxu0 0
      %411 = vmatprep.subr.bf16.mxu0 0
      %412 = vmatpush1.bf16.msra.mxu0 0
      %413 = vmatprep.subr.bf16.mxu0 0
      %414 = vmatpush1.bf16.msra.mxu0 0
      %415 = vmatprep.subr.bf16.mxu0 0
      %416 = vmatpush1.bf16.msra.mxu0 0
      %417 = vmatprep.subr.bf16.mxu0 0
      %418 = vmatpush1.bf16.msra.mxu0 0
      %419 = vmatprep.subr.bf16.mxu0 0
      %420 = vmatpush1.bf16.msra.mxu0 0
      %421 = vmatprep.subr.bf16.mxu0 0
      %422 = vmatpush1.bf16.msra.mxu0 0
      %423 = vmatprep.subr.bf16.mxu0 0
      %424 = vmatpush1.bf16.msra.mxu0 0
      %425 = vmatprep.mubr.bf16.mxu0 0
      %426 = vmatmul.mubr.bf16.gmra.mrb[0].mxu0 %v387
      %v427 = vpop.f32.mrb[0].mxu0
      %v428 = vadd.f32 0.0, %v427
      %v429 = vpop.f32.mrb[0].mxu0
      %v430 = vpop.f32.mrb[0].mxu0
      %v431 = vpop.f32.mrb[0].mxu0
      %432 = vdwg.mxu0
      %v434 = vsel %vm385, %v384, 0
      %v437 = vsel %vm389, %v261, 0
      %439 = vmatprep.subr.bf16.mxu0 0
      %440 = vmatpush1.bf16.msra.mxu0 %v437
      %441 = vmatprep.subr.bf16.mxu0 0
      %442 = vmatpush1.bf16.msra.mxu0 0
      %443 = vmatprep.subr.bf16.mxu0 0
      %444 = vmatpush1.bf16.msra.mxu0 0
      %445 = vmatprep.subr.bf16.mxu0 0
      %446 = vmatpush1.bf16.msra.mxu0 0
      %447 = vmatprep.subr.bf16.mxu0 0
      %448 = vmatpush1.bf16.msra.mxu0 0
      %449 = vmatprep.subr.bf16.mxu0 0
      %450 = vmatpush1.bf16.msra.mxu0 0
      %451 = vmatprep.subr.bf16.mxu0 0
      %452 = vmatpush1.bf16.msra.mxu0 0
      %453 = vmatprep.subr.bf16.mxu0 0
      %454 = vmatpush1.bf16.msra.mxu0 0
      %455 = vmatprep.subr.bf16.mxu0 0
      %456 = vmatpush1.bf16.msra.mxu0 0
      %457 = vmatprep.subr.bf16.mxu0 0
      %458 = vmatpush1.bf16.msra.mxu0 0
      %459 = vmatprep.subr.bf16.mxu0 0
      %460 = vmatpush1.bf16.msra.mxu0 0
      %461 = vmatprep.subr.bf16.mxu0 0
      %462 = vmatpush1.bf16.msra.mxu0 0
      %463 = vmatprep.subr.bf16.mxu0 0
      %464 = vmatpush1.bf16.msra.mxu0 0
      %465 = vmatprep.subr.bf16.mxu0 0
      %466 = vmatpush1.bf16.msra.mxu0 0
      %467 = vmatprep.subr.bf16.mxu0 0
      %468 = vmatpush1.bf16.msra.mxu0 0
      %469 = vmatprep.subr.bf16.mxu0 0
      %470 = vmatpush1.bf16.msra.mxu0 0
      %471 = vmatprep.mubr.bf16.mxu0 0
      %472 = vmatmul.mubr.bf16.gmra.mrb[0].mxu0 %v434
      %v473 = vpop.f32.mrb[0].mxu0
      %v474 = vadd.f32 0.0, %v473
      %v475 = vpop.f32.mrb[0].mxu0
      %v476 = vpop.f32.mrb[0].mxu0
      %v477 = vpop.f32.mrb[0].mxu0
      %478 = vdwg.mxu0
      %vm479 = vcmask 125952
      %480 = vst.msk [vmem:[%s254] sm:$0xf] %vm479, %v428
      %481 = vst.msk [vmem:[%s254 + $0x4] sm:$0xf] %vm479, %v474
      %p482 = scmp.lt.s32.totalorder %s15, 1
      %s483 = scalar_select %p482, %s15, 1
      %s484 = smul.addr %s483, 2
      %s485 = smul.addr %s484, 4
      %s486 = scalar_lea.vmem %s4, %s485
      // Predicated region
      $region37: #{_lambda_.58} parent=35 // pred_check
        %p487 = pneg %p137
      $region38: #{_lambda_.58} parent=35 // pred_check_branch
        %489 = sbr.rel (%p487) target = $region40
      $region39: #{_lambda_.58} parent=35 // pred_region
        _
      $region40: #{_lambda_.58} parent=35 // pred_fallthru
        _
    $region36: #{_lambda_.58} parent=5 // pred_fallthru
      _
    %p490 = scmp.le.s32.totalorder 2, %s10
    // Predicated region
    $region41: #{_lambda_.58} parent=5 // pred_check
      %p491 = pneg %p490
    $region42: #{_lambda_.58} parent=5 // pred_check_branch
      %493 = sbr.rel (%p491) target = $region44
    $region43: #{_lambda_.58} parent=5 // pred_region
      %s494 = ssub.s32 %s10, 2
      // Predicated region
      $region45: #{_lambda_.58} parent=43 // pred_check
        %p495 = pneg %p143
      $region46: #{_lambda_.58} parent=43 // pred_check_branch
        %497 = sbr.rel (%p495) target = $region48
      $region47: #{_lambda_.58} parent=43 // pred_region
        %p498 = scmp.lt.s32.totalorder %s16, 1
        %s499 = scalar_select %p498, %s16, 1
        %s500 = smul.addr %s499, 2
        %s501 = smul.addr %s500, 4
        %s502 = scalar_lea.vmem %s4, %s501
      $region48: #{_lambda_.58} parent=43 // pred_fallthru
        _
    $region44: #{_lambda_.58} parent=5 // pred_fallthru
      _
  $region6: #{_lambda_.58} parent=0 // loop_footer
    %s14 = sadd.s32 1, %s10
  $region7: #{_lambda_.58} parent=0 // loop_footer_branch
    %9 = sbr.rel target = $region3
  $region8: #{_lambda_.58} parent=0 // loop_exit
    _

// kernel: _lambda_.60
$region0: #{_lambda_.60}
  #allocation0 [shape = 'u32[]', space=smem, size = 0x4, offset = 0x4, fixed_abs, tag = 'smem constant byte address 0x4 - core index']
  #allocation1 [shape = 'u32[144,128]{1,0:T(1,128)}', space=vmem, size = 0x12000, scoped, tag = 'internal scratch']
  %s0 = inlined_call_operand.vmem [shape: bf16[8,32], index: 0, kind: input, shape index: {}]
  %s1 = inlined_call_operand.vmem [shape: bf16[32,64], index: 1, kind: input, shape index: {}]
  %s2 = inlined_call_operand.vmem [shape: f32[1,64], index: 2, kind: input, shape index: {}]
  %s3 = inlined_call_operand.vmem [shape: f32[1,64], index: 3, kind: input, shape index: {}]
  %s4 = inlined_call_operand.vmem [shape: f32[8,64], index: 4, kind: output, shape index: {}]
  %s5 = sld [smem:[#allocation0]]
  $region26: #{_lambda_.60} parent=0
    _
  %s7 = ssub.s32 1, %s5
  %s8 = scalar_select 0, %s7, %s5
  // Predicated region
  $region2: #{_lambda_.60} parent=0 // pred_check
    _
  $region3: #{_lambda_.60} parent=0 // pred_check_branch
    %10 = sbr.rel (0) target = $region5
  $region4: #{_lambda_.60} parent=0 // pred_region
    _
  $region5: #{_lambda_.60} parent=0 // pred_fallthru
    _
  // Predicated region
  $region6: #{_lambda_.60} parent=0 // pred_check
    _
  $region7: #{_lambda_.60} parent=0 // pred_check_branch
    %12 = sbr.rel (0) target = $region9
  $region8: #{_lambda_.60} parent=0 // pred_region
    _
  $region9: #{_lambda_.60} parent=0 // pred_fallthru
    _
  // Predicated region
  $region10: #{_lambda_.60} parent=0 // pred_check
    _
  $region11: #{_lambda_.60} parent=0 // pred_check_branch
    %14 = sbr.rel (0) target = $region13
  $region12: #{_lambda_.60} parent=0 // pred_region
    _
  $region13: #{_lambda_.60} parent=0 // pred_fallthru
    _
  // Predicated region
  $region14: #{_lambda_.60} parent=0 // pred_check
    _
  $region15: #{_lambda_.60} parent=0 // pred_check_branch
    %16 = sbr.rel (0) target = $region17
  $region16: #{_lambda_.60} parent=0 // pred_region
    _
  $region17: #{_lambda_.60} parent=0 // pred_fallthru
    _
  %v18 = vld [vmem:[%s0] sm:$0xf]
  %v19 = vld [vmem:[%s1] sm:$0xf]
  %v20 = vld [vmem:[%s1 + $0x4] sm:$0xf]
  %v21 = vld [vmem:[%s1 + $0x8] sm:$0xf]
  %v22 = vld [vmem:[%s1 + $0xc] sm:$0xf]
  %v27 = vunpack.c.l.b16 %v19
  %v28 = vunpack.c.l.b16 %v20
  %v29 = vunpack.c.l.b16 %v21
  %v30 = vunpack.c.l.b16 %v22
  %v31 = vpack.c.b16 %v28, %v27
  %v32 = vpack.c.b16 %v30, %v29
  %vm35 = vcmask 261120
  %v37 = vsel %vm35, %v18, 0
  %39 = vmatprep.subr.bf16.mxu0 0
  %40 = vmatpush1.bf16.msra.mxu0 %v31
  %41 = vmatprep.subr.bf16.mxu0 0
  %42 = vmatpush1.bf16.msra.mxu0 %v32
  %43 = vmatprep.subr.bf16.mxu0 0
  %44 = vmatpush1.bf16.msra.mxu0 0
  %45 = vmatprep.subr.bf16.mxu0 0
  %46 = vmatpush1.bf16.msra.mxu0 0
  %47 = vmatprep.subr.bf16.mxu0 0
  %48 = vmatpush1.bf16.msra.mxu0 0
  %49 = vmatprep.subr.bf16.mxu0 0
  %50 = vmatpush1.bf16.msra.mxu0 0
  %51 = vmatprep.subr.bf16.mxu0 0
  %52 = vmatpush1.bf16.msra.mxu0 0
  %53 = vmatprep.subr.bf16.mxu0 0
  %54 = vmatpush1.bf16.msra.mxu0 0
  %55 = vmatprep.subr.bf16.mxu0 0
  %56 = vmatpush1.bf16.msra.mxu0 0
  %57 = vmatprep.subr.bf16.mxu0 0
  %58 = vmatpush1.bf16.msra.mxu0 0
  %59 = vmatprep.subr.bf16.mxu0 0
  %60 = vmatpush1.bf16.msra.mxu0 0
  %61 = vmatprep.subr.bf16.mxu0 0
  %62 = vmatpush1.bf16.msra.mxu0 0
  %63 = vmatprep.subr.bf16.mxu0 0
  %64 = vmatpush1.bf16.msra.mxu0 0
  %65 = vmatprep.subr.bf16.mxu0 0
  %66 = vmatpush1.bf16.msra.mxu0 0
  %67 = vmatprep.subr.bf16.mxu0 0
  %68 = vmatpush1.bf16.msra.mxu0 0
  %69 = vmatprep.subr.bf16.mxu0 0
  %70 = vmatpush1.bf16.msra.mxu0 0
  %71 = vmatprep.mubr.bf16.mxu0 0
  %72 = vmatmul.mubr.bf16.gmra.mrb[0].mxu0 %v37
  %v73 = vpop.f32.mrb[0].mxu0
  %v74 = vadd.f32 0.0, %v73
  %v75 = vpop.f32.mrb[0].mxu0
  %v76 = vpop.f32.mrb[0].mxu0
  %v77 = vpop.f32.mrb[0].mxu0
  %78 = vdwg.mxu0
  %v79 = vld [vmem:[%s2] sm:$0x1]
  %v81 = vlaneseq
  %v82 = vshrl.u32 %v81, 7
  %v83 = vsub.s32 0, %v82
  %v84 = vrot.slane %v79, %v83
  %v86 = vmul.f32 %v74, %v84
  %v87 = vld [vmem:[%s3] sm:$0x1]
  %v89 = vlaneseq
  %v90 = vshrl.u32 %v89, 7
  %v91 = vsub.s32 0, %v90
  %v92 = vrot.slane %v87, %v91
  %v94 = vadd.f32 %v86, %v92
  %v95 = vmax.f32 %v94, 0.0
  %vm96 = vcmask 523264
  %97 = vst.msk [vmem:[%s4] sm:$0xff] %vm96, %v95
  // Predicated region
  $region18: #{_lambda_.60} parent=0 // pred_check
    _
  $region19: #{_lambda_.60} parent=0 // pred_check_branch
    %99 = sbr.rel (0) target = $region21
  $region20: #{_lambda_.60} parent=0 // pred_region
    _
  $region21: #{_lambda_.60} parent=0 // pred_fallthru
    _
  // Predicated region
  $region22: #{_lambda_.60} parent=0 // pred_check
    _
  $region23: #{_lambda_.60} parent=0 // pred_check_branch
    %101 = sbr.rel (0) target = $region25
  $region24: #{_lambda_.60} parent=0 // pred_region
    _
  $region25: #{_lambda_.60} parent=0 // pred_fallthru
    _

// kernel: _lambda_.63
$region0: #{_lambda_.63}
  #allocation0 [shape = 'u32[]', space=smem, size = 0x4, offset = 0x4, fixed_abs, tag = 'smem constant byte address 0x4 - core index']
  #allocation1 [shape = 'u32[144,128]{1,0:T(1,128)}', space=vmem, size = 0x12000, scoped, tag = 'internal scratch']
  %s0 = inlined_call_operand.vmem [shape: bf16[16,32], index: 0, kind: input, shape index: {}]
  %s1 = inlined_call_operand.vmem [shape: bf16[32,32], index: 1, kind: input, shape index: {}]
  %s2 = inlined_call_operand.vmem [shape: f32[1,32], index: 2, kind: input, shape index: {}]
  %s3 = inlined_call_operand.vmem [shape: f32[1,32], index: 3, kind: input, shape index: {}]
  %s4 = inlined_call_operand.vmem [shape: f32[16,32], index: 4, kind: output, shape index: {}]
  %s5 = sld [smem:[#allocation0]]
  $region26: #{_lambda_.63} parent=0
    _
  %s7 = ssub.s32 1, %s5
  %s8 = scalar_select 0, %s7, %s5
  // Predicated region
  $region2: #{_lambda_.63} parent=0 // pred_check
    _
  $region3: #{_lambda_.63} parent=0 // pred_check_branch
    %10 = sbr.rel (0) target = $region5
  $region4: #{_lambda_.63} parent=0 // pred_region
    _
  $region5: #{_lambda_.63} parent=0 // pred_fallthru
    _
  // Predicated region
  $region6: #{_lambda_.63} parent=0 // pred_check
    _
  $region7: #{_lambda_.63} parent=0 // pred_check_branch
    %12 = sbr.rel (0) target = $region9
  $region8: #{_lambda_.63} parent=0 // pred_region
    _
  $region9: #{_lambda_.63} parent=0 // pred_fallthru
    _
  // Predicated region
  $region10: #{_lambda_.63} parent=0 // pred_check
    _
  $region11: #{_lambda_.63} parent=0 // pred_check_branch
    %14 = sbr.rel (0) target = $region13
  $region12: #{_lambda_.63} parent=0 // pred_region
    _
  $region13: #{_lambda_.63} parent=0 // pred_fallthru
    _
  // Predicated region
  $region14: #{_lambda_.63} parent=0 // pred_check
    _
  $region15: #{_lambda_.63} parent=0 // pred_check_branch
    %16 = sbr.rel (0) target = $region17
  $region16: #{_lambda_.63} parent=0 // pred_region
    _
  $region17: #{_lambda_.63} parent=0 // pred_fallthru
    _
  %v18 = vld [vmem:[%s0] sm:$0xf]
  %v19 = vld [vmem:[%s0 + $0x4] sm:$0xf]
  %v20 = vld [vmem:[%s1] sm:$0xf]
  %v21 = vld [vmem:[%s1 + $0x4] sm:$0xf]
  %v22 = vld [vmem:[%s1 + $0x8] sm:$0xf]
  %v23 = vld [vmem:[%s1 + $0xc] sm:$0xf]
  %v26 = vunpack.c.l.b16 %v18
  %v27 = vunpack.c.l.b16 %v19
  %v28 = vpack.c.b16 %v27, %v26
  %v33 = vunpack.c.l.b16 %v20
  %v34 = vunpack.c.l.b16 %v21
  %v35 = vunpack.c.l.b16 %v22
  %v36 = vunpack.c.l.b16 %v23
  %v37 = vpack.c.b16 %v34, %v33
  %v38 = vpack.c.b16 %v36, %v35
  %vm41 = vcmask 261120
  %v43 = vsel %vm41, %v28, 0
  %45 = vmatprep.subr.bf16.mxu0 0
  %46 = vmatpush1.bf16.msra.mxu0 %v37
  %47 = vmatprep.subr.bf16.mxu0 0
  %48 = vmatpush1.bf16.msra.mxu0 %v38
  %49 = vmatprep.subr.bf16.mxu0 0
  %50 = vmatpush1.bf16.msra.mxu0 0
  %51 = vmatprep.subr.bf16.mxu0 0
  %52 = vmatpush1.bf16.msra.mxu0 0
  %53 = vmatprep.subr.bf16.mxu0 0
  %54 = vmatpush1.bf16.msra.mxu0 0
  %55 = vmatprep.subr.bf16.mxu0 0
  %56 = vmatpush1.bf16.msra.mxu0 0
  %57 = vmatprep.subr.bf16.mxu0 0
  %58 = vmatpush1.bf16.msra.mxu0 0
  %59 = vmatprep.subr.bf16.mxu0 0
  %60 = vmatpush1.bf16.msra.mxu0 0
  %61 = vmatprep.subr.bf16.mxu0 0
  %62 = vmatpush1.bf16.msra.mxu0 0
  %63 = vmatprep.subr.bf16.mxu0 0
  %64 = vmatpush1.bf16.msra.mxu0 0
  %65 = vmatprep.subr.bf16.mxu0 0
  %66 = vmatpush1.bf16.msra.mxu0 0
  %67 = vmatprep.subr.bf16.mxu0 0
  %68 = vmatpush1.bf16.msra.mxu0 0
  %69 = vmatprep.subr.bf16.mxu0 0
  %70 = vmatpush1.bf16.msra.mxu0 0
  %71 = vmatprep.subr.bf16.mxu0 0
  %72 = vmatpush1.bf16.msra.mxu0 0
  %73 = vmatprep.subr.bf16.mxu0 0
  %74 = vmatpush1.bf16.msra.mxu0 0
  %75 = vmatprep.subr.bf16.mxu0 0
  %76 = vmatpush1.bf16.msra.mxu0 0
  %77 = vmatprep.mubr.bf16.mxu0 0
  %78 = vmatmul.mubr.bf16.gmra.mrb[0].mxu0 %v43
  %v79 = vpop.f32.mrb[0].mxu0
  %v80 = vadd.f32 0.0, %v79
  %v81 = vpop.f32.mrb[0].mxu0
  %v82 = vpop.f32.mrb[0].mxu0
  %v83 = vadd.f32 0.0, %v82
  %v84 = vpop.f32.mrb[0].mxu0
  %85 = vdwg.mxu0
  %v86 = vld [vmem:[%s2] sm:$0x1]
  %v88 = vlaneseq
  %v89 = vshrl.u32 %v88, 7
  %v90 = vsub.s32 0, %v89
  %v91 = vrot.slane %v86, %v90
  %v93 = vmul.f32 %v80, %v91
  %v94 = vmul.f32 %v83, %v91
  %v95 = vld [vmem:[%s3] sm:$0x1]
  %v97 = vlaneseq
  %v98 = vshrl.u32 %v97, 7
  %v99 = vsub.s32 0, %v98
  %v100 = vrot.slane %v95, %v99
  %v102 = vadd.f32 %v93, %v100
  %v103 = vadd.f32 %v94, %v100
  %104 = vst.msk [vmem:[%s4] sm:$0xff] %vm41, %v102
  %105 = vst.msk [vmem:[%s4 + $0x8] sm:$0xff] %vm41, %v103
  // Predicated region
  $region18: #{_lambda_.63} parent=0 // pred_check
    _
  $region19: #{_lambda_.63} parent=0 // pred_check_branch
    %107 = sbr.rel (0) target = $region21
  $region20: #{_lambda_.63} parent=0 // pred_region
    _
  $region21: #{_lambda_.63} parent=0 // pred_fallthru
    _
  // Predicated region
  $region22: #{_lambda_.63} parent=0 // pred_check
    _
  $region23: #{_lambda_.63} parent=0 // pred_check_branch
    %109 = sbr.rel (0) target = $region25
  $region24: #{_lambda_.63} parent=0 // pred_region
    _
  $region25: #{_lambda_.63} parent=0 // pred_fallthru
    _

// kernel: _lambda_.62
$region0: #{_lambda_.62}
  #allocation0 [shape = 'u32[]', space=smem, size = 0x4, offset = 0x4, fixed_abs, tag = 'smem constant byte address 0x4 - core index']
  #allocation1 [shape = 'u32[144,128]{1,0:T(1,128)}', space=vmem, size = 0x12000, scoped, tag = 'internal scratch']
  %s0 = inlined_call_operand.vmem [shape: bf16[16,32], index: 0, kind: input, shape index: {}]
  %s1 = inlined_call_operand.vmem [shape: bf16[32,64], index: 1, kind: input, shape index: {}]
  %s2 = inlined_call_operand.vmem [shape: f32[1,64], index: 2, kind: input, shape index: {}]
  %s3 = inlined_call_operand.vmem [shape: f32[1,64], index: 3, kind: input, shape index: {}]
  %s4 = inlined_call_operand.vmem [shape: f32[16,64], index: 4, kind: output, shape index: {}]
  %s5 = sld [smem:[#allocation0]]
  $region26: #{_lambda_.62} parent=0
    _
  %s7 = ssub.s32 1, %s5
  %s8 = scalar_select 0, %s7, %s5
  // Predicated region
  $region2: #{_lambda_.62} parent=0 // pred_check
    _
  $region3: #{_lambda_.62} parent=0 // pred_check_branch
    %10 = sbr.rel (0) target = $region5
  $region4: #{_lambda_.62} parent=0 // pred_region
    _
  $region5: #{_lambda_.62} parent=0 // pred_fallthru
    _
  // Predicated region
  $region6: #{_lambda_.62} parent=0 // pred_check
    _
  $region7: #{_lambda_.62} parent=0 // pred_check_branch
    %12 = sbr.rel (0) target = $region9
  $region8: #{_lambda_.62} parent=0 // pred_region
    _
  $region9: #{_lambda_.62} parent=0 // pred_fallthru
    _
  // Predicated region
  $region10: #{_lambda_.62} parent=0 // pred_check
    _
  $region11: #{_lambda_.62} parent=0 // pred_check_branch
    %14 = sbr.rel (0) target = $region13
  $region12: #{_lambda_.62} parent=0 // pred_region
    _
  $region13: #{_lambda_.62} parent=0 // pred_fallthru
    _
  // Predicated region
  $region14: #{_lambda_.62} parent=0 // pred_check
    _
  $region15: #{_lambda_.62} parent=0 // pred_check_branch
    %16 = sbr.rel (0) target = $region17
  $region16: #{_lambda_.62} parent=0 // pred_region
    _
  $region17: #{_lambda_.62} parent=0 // pred_fallthru
    _
  %v18 = vld [vmem:[%s0] sm:$0xf]
  %v19 = vld [vmem:[%s0 + $0x4] sm:$0xf]
  %v20 = vld [vmem:[%s1] sm:$0xf]
  %v21 = vld [vmem:[%s1 + $0x4] sm:$0xf]
  %v22 = vld [vmem:[%s1 + $0x8] sm:$0xf]
  %v23 = vld [vmem:[%s1 + $0xc] sm:$0xf]
  %v26 = vunpack.c.l.b16 %v18
  %v27 = vunpack.c.l.b16 %v19
  %v28 = vpack.c.b16 %v27, %v26
  %v33 = vunpack.c.l.b16 %v20
  %v34 = vunpack.c.l.b16 %v21
  %v35 = vunpack.c.l.b16 %v22
  %v36 = vunpack.c.l.b16 %v23
  %v37 = vpack.c.b16 %v34, %v33
  %v38 = vpack.c.b16 %v36, %v35
  %vm41 = vcmask 261120
  %v43 = vsel %vm41, %v28, 0
  %45 = vmatprep.subr.bf16.mxu0 0
  %46 = vmatpush1.bf16.msra.mxu0 %v37
  %47 = vmatprep.subr.bf16.mxu0 0
  %48 = vmatpush1.bf16.msra.mxu0 %v38
  %49 = vmatprep.subr.bf16.mxu0 0
  %50 = vmatpush1.bf16.msra.mxu0 0
  %51 = vmatprep.subr.bf16.mxu0 0
  %52 = vmatpush1.bf16.msra.mxu0 0
  %53 = vmatprep.subr.bf16.mxu0 0
  %54 = vmatpush1.bf16.msra.mxu0 0
  %55 = vmatprep.subr.bf16.mxu0 0
  %56 = vmatpush1.bf16.msra.mxu0 0
  %57 = vmatprep.subr.bf16.mxu0 0
  %58 = vmatpush1.bf16.msra.mxu0 0
  %59 = vmatprep.subr.bf16.mxu0 0
  %60 = vmatpush1.bf16.msra.mxu0 0
  %61 = vmatprep.subr.bf16.mxu0 0
  %62 = vmatpush1.bf16.msra.mxu0 0
  %63 = vmatprep.subr.bf16.mxu0 0
  %64 = vmatpush1.bf16.msra.mxu0 0
  %65 = vmatprep.subr.bf16.mxu0 0
  %66 = vmatpush1.bf16.msra.mxu0 0
  %67 = vmatprep.subr.bf16.mxu0 0
  %68 = vmatpush1.bf16.msra.mxu0 0
  %69 = vmatprep.subr.bf16.mxu0 0
  %70 = vmatpush1.bf16.msra.mxu0 0
  %71 = vmatprep.subr.bf16.mxu0 0
  %72 = vmatpush1.bf16.msra.mxu0 0
  %73 = vmatprep.subr.bf16.mxu0 0
  %74 = vmatpush1.bf16.msra.mxu0 0
  %75 = vmatprep.subr.bf16.mxu0 0
  %76 = vmatpush1.bf16.msra.mxu0 0
  %77 = vmatprep.mubr.bf16.mxu0 0
  %78 = vmatmul.mubr.bf16.gmra.mrb[0].mxu0 %v43
  %v79 = vpop.f32.mrb[0].mxu0
  %v80 = vadd.f32 0.0, %v79
  %v81 = vpop.f32.mrb[0].mxu0
  %v82 = vpop.f32.mrb[0].mxu0
  %v83 = vadd.f32 0.0, %v82
  %v84 = vpop.f32.mrb[0].mxu0
  %85 = vdwg.mxu0
  %v86 = vld [vmem:[%s2] sm:$0x1]
  %v88 = vlaneseq
  %v89 = vshrl.u32 %v88, 7
  %v90 = vsub.s32 0, %v89
  %v91 = vrot.slane %v86, %v90
  %v93 = vmul.f32 %v80, %v91
  %v94 = vmul.f32 %v83, %v91
  %v95 = vld [vmem:[%s3] sm:$0x1]
  %v97 = vlaneseq
  %v98 = vshrl.u32 %v97, 7
  %v99 = vsub.s32 0, %v98
  %v100 = vrot.slane %v95, %v99
  %v102 = vadd.f32 %v93, %v100
  %v103 = vadd.f32 %v94, %v100
  %vm104 = vcmask 523264
  %105 = vst.msk [vmem:[%s4] sm:$0xff] %vm104, %v102
  %106 = vst.msk [vmem:[%s4 + $0x8] sm:$0xff] %vm104, %v103
  // Predicated region
  $region18: #{_lambda_.62} parent=0 // pred_check
    _
  $region19: #{_lambda_.62} parent=0 // pred_check_branch
    %108 = sbr.rel (0) target = $region21
  $region20: #{_lambda_.62} parent=0 // pred_region
    _
  $region21: #{_lambda_.62} parent=0 // pred_fallthru
    _
  // Predicated region
  $region22: #{_lambda_.62} parent=0 // pred_check
    _
  $region23: #{_lambda_.62} parent=0 // pred_check_branch
    %110 = sbr.rel (0) target = $region25
  $region24: #{_lambda_.62} parent=0 // pred_region
    _
  $region25: #{_lambda_.62} parent=0 // pred_fallthru
    _

// kernel: _lambda_.72
$region0: #{_lambda_.72}
  #allocation0 [shape = 'u32[]', space=smem, size = 0x4, offset = 0x4, fixed_abs, tag = 'smem constant byte address 0x4 - core index']
  #allocation1 [shape = 'u32[144,128]{1,0:T(1,128)}', space=vmem, size = 0x12000, scoped, tag = 'internal scratch']
  %s0 = inlined_call_operand.vmem [shape: bf16[16,64], index: 0, kind: input, shape index: {}]
  %s1 = inlined_call_operand.vmem [shape: bf16[64,32], index: 1, kind: input, shape index: {}]
  %s2 = inlined_call_operand.vmem [shape: f32[1,32], index: 2, kind: input, shape index: {}]
  %s3 = inlined_call_operand.vmem [shape: f32[1,32], index: 3, kind: input, shape index: {}]
  %s4 = inlined_call_operand.vmem [shape: f32[16,32], index: 4, kind: output, shape index: {}]
  %s5 = sld [smem:[#allocation0]]
  $region26: #{_lambda_.72} parent=0
    _
  %s7 = ssub.s32 1, %s5
  %s8 = scalar_select 0, %s7, %s5
  // Predicated region
  $region2: #{_lambda_.72} parent=0 // pred_check
    _
  $region3: #{_lambda_.72} parent=0 // pred_check_branch
    %10 = sbr.rel (0) target = $region5
  $region4: #{_lambda_.72} parent=0 // pred_region
    _
  $region5: #{_lambda_.72} parent=0 // pred_fallthru
    _
  // Predicated region
  $region6: #{_lambda_.72} parent=0 // pred_check
    _
  $region7: #{_lambda_.72} parent=0 // pred_check_branch
    %12 = sbr.rel (0) target = $region9
  $region8: #{_lambda_.72} parent=0 // pred_region
    _
  $region9: #{_lambda_.72} parent=0 // pred_fallthru
    _
  // Predicated region
  $region10: #{_lambda_.72} parent=0 // pred_check
    _
  $region11: #{_lambda_.72} parent=0 // pred_check_branch
    %14 = sbr.rel (0) target = $region13
  $region12: #{_lambda_.72} parent=0 // pred_region
    _
  $region13: #{_lambda_.72} parent=0 // pred_fallthru
    _
  // Predicated region
  $region14: #{_lambda_.72} parent=0 // pred_check
    _
  $region15: #{_lambda_.72} parent=0 // pred_check_branch
    %16 = sbr.rel (0) target = $region17
  $region16: #{_lambda_.72} parent=0 // pred_region
    _
  $region17: #{_lambda_.72} parent=0 // pred_fallthru
    _
  %v18 = vld [vmem:[%s0] sm:$0xf]
  %v19 = vld [vmem:[%s0 + $0x4] sm:$0xf]
  %v20 = vld [vmem:[%s1] sm:$0xf]
  %v21 = vld [vmem:[%s1 + $0x4] sm:$0xf]
  %v22 = vld [vmem:[%s1 + $0x8] sm:$0xf]
  %v23 = vld [vmem:[%s1 + $0xc] sm:$0xf]
  %v24 = vld [vmem:[%s1 + $0x10] sm:$0xf]
  %v25 = vld [vmem:[%s1 + $0x14] sm:$0xf]
  %v26 = vld [vmem:[%s1 + $0x18] sm:$0xf]
  %v27 = vld [vmem:[%s1 + $0x1c] sm:$0xf]
  %v30 = vunpack.c.l.b16 %v18
  %v31 = vunpack.c.l.b16 %v19
  %v32 = vpack.c.b16 %v31, %v30
  %v41 = vunpack.c.l.b16 %v20
  %v42 = vunpack.c.l.b16 %v21
  %v43 = vunpack.c.l.b16 %v22
  %v44 = vunpack.c.l.b16 %v23
  %v45 = vunpack.c.l.b16 %v24
  %v46 = vunpack.c.l.b16 %v25
  %v47 = vunpack.c.l.b16 %v26
  %v48 = vunpack.c.l.b16 %v27
  %v49 = vpack.c.b16 %v42, %v41
  %v50 = vpack.c.b16 %v44, %v43
  %v51 = vpack.c.b16 %v46, %v45
  %v52 = vpack.c.b16 %v48, %v47
  %vm57 = vcmask 523264
  %v59 = vsel %vm57, %v32, 0
  %61 = vmatprep.subr.bf16.mxu0 0
  %62 = vmatpush1.bf16.msra.mxu0 %v49
  %63 = vmatprep.subr.bf16.mxu0 0
  %64 = vmatpush1.bf16.msra.mxu0 %v50
  %65 = vmatprep.subr.bf16.mxu0 0
  %66 = vmatpush1.bf16.msra.mxu0 %v51
  %67 = vmatprep.subr.bf16.mxu0 0
  %68 = vmatpush1.bf16.msra.mxu0 %v52
  %69 = vmatprep.subr.bf16.mxu0 0
  %70 = vmatpush1.bf16.msra.mxu0 0
  %71 = vmatprep.subr.bf16.mxu0 0
  %72 = vmatpush1.bf16.msra.mxu0 0
  %73 = vmatprep.subr.bf16.mxu0 0
  %74 = vmatpush1.bf16.msra.mxu0 0
  %75 = vmatprep.subr.bf16.mxu0 0
  %76 = vmatpush1.bf16.msra.mxu0 0
  %77 = vmatprep.subr.bf16.mxu0 0
  %78 = vmatpush1.bf16.msra.mxu0 0
  %79 = vmatprep.subr.bf16.mxu0 0
  %80 = vmatpush1.bf16.msra.mxu0 0
  %81 = vmatprep.subr.bf16.mxu0 0
  %82 = vmatpush1.bf16.msra.mxu0 0
  %83 = vmatprep.subr.bf16.mxu0 0
  %84 = vmatpush1.bf16.msra.mxu0 0
  %85 = vmatprep.subr.bf16.mxu0 0
  %86 = vmatpush1.bf16.msra.mxu0 0
  %87 = vmatprep.subr.bf16.mxu0 0
  %88 = vmatpush1.bf16.msra.mxu0 0
  %89 = vmatprep.subr.bf16.mxu0 0
  %90 = vmatpush1.bf16.msra.mxu0 0
  %91 = vmatprep.subr.bf16.mxu0 0
  %92 = vmatpush1.bf16.msra.mxu0 0
  %93 = vmatprep.mubr.bf16.mxu0 0
  %94 = vmatmul.mubr.bf16.gmra.mrb[0].mxu0 %v59
  %v95 = vpop.f32.mrb[0].mxu0
  %v96 = vadd.f32 0.0, %v95
  %v97 = vpop.f32.mrb[0].mxu0
  %v98 = vpop.f32.mrb[0].mxu0
  %v99 = vadd.f32 0.0, %v98
  %v100 = vpop.f32.mrb[0].mxu0
  %101 = vdwg.mxu0
  %v102 = vld [vmem:[%s2] sm:$0x1]
  %v104 = vlaneseq
  %v105 = vshrl.u32 %v104, 7
  %v106 = vsub.s32 0, %v105
  %v107 = vrot.slane %v102, %v106
  %v109 = vmul.f32 %v96, %v107
  %v110 = vmul.f32 %v99, %v107
  %v111 = vld [vmem:[%s3] sm:$0x1]
  %v113 = vlaneseq
  %v114 = vshrl.u32 %v113, 7
  %v115 = vsub.s32 0, %v114
  %v116 = vrot.slane %v111, %v115
  %v118 = vadd.f32 %v109, %v116
  %v119 = vadd.f32 %v110, %v116
  %vm120 = vcmask 261120
  %121 = vst.msk [vmem:[%s4] sm:$0xff] %vm120, %v118
  %122 = vst.msk [vmem:[%s4 + $0x8] sm:$0xff] %vm120, %v119
  // Predicated region
  $region18: #{_lambda_.72} parent=0 // pred_check
    _
  $region19: #{_lambda_.72} parent=0 // pred_check_branch
    %124 = sbr.rel (0) target = $region21
  $region20: #{_lambda_.72} parent=0 // pred_region
    _
  $region21: #{_lambda_.72} parent=0 // pred_fallthru
    _
  // Predicated region
  $region22: #{_lambda_.72} parent=0 // pred_check
    _
  $region23: #{_lambda_.72} parent=0 // pred_check_branch
    %126 = sbr.rel (0) target = $region25
  $region24: #{_lambda_.72} parent=0 // pred_region
    _
  $region25: #{_lambda_.72} parent=0 // pred_fallthru
    _

// kernel: _lambda_.64
$region0: #{_lambda_.64}
  #allocation0 [shape = 'u32[]', space=smem, size = 0x4, offset = 0x4, fixed_abs, tag = 'smem constant byte address 0x4 - core index']
  #allocation1 [shape = 'u32[144,128]{1,0:T(1,128)}', space=vmem, size = 0x12000, scoped, tag = 'internal scratch']
  %s0 = inlined_call_operand.vmem [shape: bf16[2,2,8,16], index: 0, kind: input, shape index: {}]
  %s1 = inlined_call_operand.vmem [shape: bf16[2,2,8,16], index: 1, kind: input, shape index: {}]
  %s2 = inlined_call_operand.vmem [shape: bf16[2,2,8,16], index: 2, kind: input, shape index: {}]
  %s3 = inlined_call_operand.vmem [shape: f32[2,8,8], index: 3, kind: input, shape index: {}]
  %s4 = inlined_call_operand.vmem [shape: f32[2,2,8,16], index: 4, kind: output, shape index: {}]
  %s5 = sld [smem:[#allocation0]]
  $region49: #{_lambda_.64} parent=0
    _
  %s7 = ssub.s32 1, %s5
  %s8 = scalar_select 0, %s7, %s5
  loop: start=0, step=1, limit=4
  $region2: #{_lambda_.64} parent=0 // loop_pre_header
    _
  $region3: #{_lambda_.64} parent=0 // loop_header
    %s10 = sphi 0, %s14
    %p11 = scmp.ge.s32.totalorder %s10, 4
    %s20 = sphi 0, %s22
    %s23 = sphi 0, %s20
    %s24 = sphi 0, %s23
    %s40 = sphi 0, %s24
    %s46 = sphi 0, %s48
    %s49 = sphi 0, %s46
    %s50 = sphi 0, %s49
    %s66 = sphi 0, %s50
    %s72 = sphi 0, %s74
    %s75 = sphi 0, %s72
    %s76 = sphi 0, %s75
    %s92 = sphi 0, %s76
    %s98 = sphi 0, %s100
    %s101 = sphi 0, %s98
    %s102 = sphi 0, %s101
    %s118 = sphi 0, %s102
    %s124 = sphi 0, %s126
    %s127 = sphi 0, %s124
    %s128 = sphi 0, %s127
    %s144 = sphi 0, %s128
  $region4: #{_lambda_.64} parent=0 // loop_header_branch
    %13 = sbr.rel (%p11) target = $region8
  $region5: #{_lambda_.64} parent=0 // loop_body
    %s15 = ssub.s32 %s10, 1
    %s16 = ssub.s32 %s10, 2
    %s17 = sadd.s32 %s10, 1
    %s18 = ssub.s32 %s10, %s17
    %p19 = scmp.eq.s32.totalorder %s18, 0
    %s21 = sadd.s32 %s20, 1
    %s22 = scalar_select %p19, %s20, %s21
    %p25 = pneg %p19
    %p26 = scmp.eq.s32.totalorder %s10, 1
    %p27 = por %p25, %p26
    %p28 = scmp.ne.s32.totalorder %s20, %s23
    %p29 = scmp.eq.s32.totalorder %s10, 0
    %p30 = por %p28, %p29
    %p31 = scmp.ne.s32.totalorder %s20, %s23
    %p32 = scmp.eq.s32.totalorder %s15, 1
    %p33 = por %p31, %p32
    %p34 = scmp.ne.s32.totalorder %s23, %s24
    %p35 = scmp.eq.s32.totalorder %s15, 0
    %p36 = por %p34, %p35
    %p37 = scmp.ne.s32.totalorder %s23, %s24
    %p38 = scmp.eq.s32.totalorder %s16, 1
    %p39 = por %p37, %p38
    %p41 = scmp.ne.s32.totalorder %s24, %s40
    %p42 = scmp.eq.s32.totalorder %s16, 0
    %p43 = por %p41, %p42
    %s44 = ssub.s32 %s10, %s17
    %p45 = scmp.eq.s32.totalorder %s44, 0
    %s47 = sadd.s32 %s46, 1
    %s48 = scalar_select %p45, %s46, %s47
    %p51 = pneg %p45
    %p52 = scmp.eq.s32.totalorder %s10, 1
    %p53 = por %p51, %p52
    %p54 = scmp.ne.s32.totalorder %s46, %s49
    %p55 = scmp.eq.s32.totalorder %s10, 0
    %p56 = por %p54, %p55
    %p57 = scmp.ne.s32.totalorder %s46, %s49
    %p58 = scmp.eq.s32.totalorder %s15, 1
    %p59 = por %p57, %p58
    %p60 = scmp.ne.s32.totalorder %s49, %s50
    %p61 = scmp.eq.s32.totalorder %s15, 0
    %p62 = por %p60, %p61
    %p63 = scmp.ne.s32.totalorder %s49, %s50
    %p64 = scmp.eq.s32.totalorder %s16, 1
    %p65 = por %p63, %p64
    %p67 = scmp.ne.s32.totalorder %s50, %s66
    %p68 = scmp.eq.s32.totalorder %s16, 0
    %p69 = por %p67, %p68
    %s70 = ssub.s32 %s10, %s17
    %p71 = scmp.eq.s32.totalorder %s70, 0
    %s73 = sadd.s32 %s72, 1
    %s74 = scalar_select %p71, %s72, %s73
    %p77 = pneg %p71
    %p78 = scmp.eq.s32.totalorder %s10, 1
    %p79 = por %p77, %p78
    %p80 = scmp.ne.s32.totalorder %s72, %s75
    %p81 = scmp.eq.s32.totalorder %s10, 0
    %p82 = por %p80, %p81
    %p83 = scmp.ne.s32.totalorder %s72, %s75
    %p84 = scmp.eq.s32.totalorder %s15, 1
    %p85 = por %p83, %p84
    %p86 = scmp.ne.s32.totalorder %s75, %s76
    %p87 = scmp.eq.s32.totalorder %s15, 0
    %p88 = por %p86, %p87
    %p89 = scmp.ne.s32.totalorder %s75, %s76
    %p90 = scmp.eq.s32.totalorder %s16, 1
    %p91 = por %p89, %p90
    %p93 = scmp.ne.s32.totalorder %s76, %s92
    %p94 = scmp.eq.s32.totalorder %s16, 0
    %p95 = por %p93, %p94
    %s96 = ssub.s32 %s10, %s17
    %p97 = scmp.eq.s32.totalorder %s96, 0
    %s99 = sadd.s32 %s98, 1
    %s100 = scalar_select %p97, %s98, %s99
    %p103 = pneg %p97
    %p104 = scmp.eq.s32.totalorder %s10, 1
    %p105 = por %p103, %p104
    %p106 = scmp.ne.s32.totalorder %s98, %s101
    %p107 = scmp.eq.s32.totalorder %s10, 0
    %p108 = por %p106, %p107
    %p109 = scmp.ne.s32.totalorder %s98, %s101
    %p110 = scmp.eq.s32.totalorder %s15, 1
    %p111 = por %p109, %p110
    %p112 = scmp.ne.s32.totalorder %s101, %s102
    %p113 = scmp.eq.s32.totalorder %s15, 0
    %p114 = por %p112, %p113
    %p115 = scmp.ne.s32.totalorder %s101, %s102
    %p116 = scmp.eq.s32.totalorder %s16, 1
    %p117 = por %p115, %p116
    %p119 = scmp.ne.s32.totalorder %s102, %s118
    %p120 = scmp.eq.s32.totalorder %s16, 0
    %p121 = por %p119, %p120
    %s122 = ssub.s32 %s10, %s17
    %p123 = scmp.eq.s32.totalorder %s122, 0
    %s125 = sadd.s32 %s124, 1
    %s126 = scalar_select %p123, %s124, %s125
    %p129 = pneg %p123
    %p130 = scmp.eq.s32.totalorder %s10, 1
    %p131 = por %p129, %p130
    %p132 = scmp.ne.s32.totalorder %s124, %s127
    %p133 = scmp.eq.s32.totalorder %s10, 0
    %p134 = por %p132, %p133
    %p135 = scmp.ne.s32.totalorder %s124, %s127
    %p136 = scmp.eq.s32.totalorder %s15, 1
    %p137 = por %p135, %p136
    %p138 = scmp.ne.s32.totalorder %s127, %s128
    %p139 = scmp.eq.s32.totalorder %s15, 0
    %p140 = por %p138, %p139
    %p141 = scmp.ne.s32.totalorder %s127, %s128
    %p142 = scmp.eq.s32.totalorder %s16, 1
    %p143 = por %p141, %p142
    %p145 = scmp.ne.s32.totalorder %s128, %s144
    %p146 = scmp.eq.s32.totalorder %s16, 0
    %p147 = por %p145, %p146
    %p148 = scmp.le.s32.totalorder 1, %s10
    %p149 = scmp.lt.s32.totalorder %s10, 3
    %p150 = pnand %p148, %p149
    %p151 = pneg %p150
    // Predicated region
    $region9: #{_lambda_.64} parent=5 // pred_check
      _
    $region10: #{_lambda_.64} parent=5 // pred_check_branch
      %153 = sbr.rel (%p150) target = $region12
    $region11: #{_lambda_.64} parent=5 // pred_region
      %s154 = ssub.s32 %s10, 1
    $region12: #{_lambda_.64} parent=5 // pred_fallthru
      _
    %p155 = scmp.lt.s32.totalorder %s10, 2
    // Predicated region
    $region13: #{_lambda_.64} parent=5 // pred_check
      %p156 = pneg %p155
    $region14: #{_lambda_.64} parent=5 // pred_check_branch
      %158 = sbr.rel (%p156) target = $region16
    $region15: #{_lambda_.64} parent=5 // pred_region
      // Predicated region
      $region17: #{_lambda_.64} parent=15 // pred_check
        %p159 = pneg %p30
      $region18: #{_lambda_.64} parent=15 // pred_check_branch
        %161 = sbr.rel (%p159) target = $region20
      $region19: #{_lambda_.64} parent=15 // pred_region
        %p162 = scmp.lt.s32.totalorder %s10, 1
        %s163 = scalar_select %p162, %s10, 1
        %s164 = smul.addr %s163, 2
        %s165 = smul.addr %s164, 4
        %s166 = scalar_lea.vmem %s0, %s165
      $region20: #{_lambda_.64} parent=15 // pred_fallthru
        _
      // Predicated region
      $region21: #{_lambda_.64} parent=15 // pred_check
        %p167 = pneg %p56
      $region22: #{_lambda_.64} parent=15 // pred_check_branch
        %169 = sbr.rel (%p167) target = $region24
      $region23: #{_lambda_.64} parent=15 // pred_region
        %p170 = scmp.lt.s32.totalorder %s10, 1
        %s171 = scalar_select %p170, %s10, 1
        %s172 = smul.addr %s171, 2
        %s173 = smul.addr %s172, 4
        %s174 = scalar_lea.vmem %s1, %s173
      $region24: #{_lambda_.64} parent=15 // pred_fallthru
        _
      // Predicated region
      $region25: #{_lambda_.64} parent=15 // pred_check
        %p175 = pneg %p82
      $region26: #{_lambda_.64} parent=15 // pred_check_branch
        %177 = sbr.rel (%p175) target = $region28
      $region27: #{_lambda_.64} parent=15 // pred_region
        %p178 = scmp.lt.s32.totalorder %s10, 1
        %s179 = scalar_select %p178, %s10, 1
        %s180 = smul.addr %s179, 2
        %s181 = smul.addr %s180, 4
        %s182 = scalar_lea.vmem %s2, %s181
      $region28: #{_lambda_.64} parent=15 // pred_fallthru
        _
      // Predicated region
      $region29: #{_lambda_.64} parent=15 // pred_check
        %p183 = pneg %p108
      $region30: #{_lambda_.64} parent=15 // pred_check_branch
        %185 = sbr.rel (%p183) target = $region32
      $region31: #{_lambda_.64} parent=15 // pred_region
        %p186 = scmp.lt.s32.totalorder %s10, 1
        %s187 = scalar_select %p186, %s10, 1
        %s188 = smul.addr %s187, 8
        %s189 = scalar_lea.vmem %s3, %s188
      $region32: #{_lambda_.64} parent=15 // pred_fallthru
        _
    $region16: #{_lambda_.64} parent=5 // pred_fallthru
      _
    %p190 = scmp.le.s32.totalorder 1, %s10
    %p191 = scmp.lt.s32.totalorder %s10, 3
    %p192 = pnand %p190, %p191
    %p193 = pneg %p192
    // Predicated region
    $region33: #{_lambda_.64} parent=5 // pred_check
      _
    $region34: #{_lambda_.64} parent=5 // pred_check_branch
      %195 = sbr.rel (%p192) target = $region36
    $region35: #{_lambda_.64} parent=5 // pred_region
      %s196 = ssub.s32 %s10, 1
      %p197 = scmp.lt.s32.totalorder %s15, 1
      %s198 = scalar_select %p197, %s15, 1
      %s199 = smul.addr %s198, 2
      %s200 = smul.addr %s199, 4
      %s201 = scalar_lea.vmem %s0, %s200
      %p202 = pneg %p36
      %p203 = pneg %p33
      %p204 = scmp.lt.s32.totalorder %s15, 1
      %s205 = scalar_select %p204, %s15, 1
      %s206 = smul.addr %s205, 2
      %s207 = smul.addr %s206, 4
      %s208 = scalar_lea.vmem %s1, %s207
      %p209 = pneg %p62
      %p210 = pneg %p59
      %p211 = scmp.lt.s32.totalorder %s15, 1
      %s212 = scalar_select %p211, %s15, 1
      %s213 = smul.addr %s212, 2
      %s214 = smul.addr %s213, 4
      %s215 = scalar_lea.vmem %s2, %s214
      %p216 = pneg %p88
      %p217 = pneg %p85
      %p218 = scmp.lt.s32.totalorder %s15, 1
      %s219 = scalar_select %p218, %s15, 1
      %s220 = smul.addr %s219, 8
      %s221 = scalar_lea.vmem %s3, %s220
      %p222 = pneg %p114
      %p223 = pneg %p111
      %p224 = pneg %p140
      %p225 = pneg %p137
      %p226 = scmp.lt.s32.totalorder %s15, 1
      %s227 = scalar_select %p226, %s15, 1
      %s228 = smul.addr %s227, 2
      %s229 = smul.addr %s228, 8
      %s230 = scalar_lea.vmem %s4, %s229
      %p231 = scmp.lt.s32.totalorder %s15, 1
      %s232 = scalar_select %p231, %s15, 1
      %s233 = smul.addr %s232, 2
      %s234 = smul.addr %s233, 4
      %s235 = scalar_lea.vmem %s0, %s234
      %p236 = scmp.lt.s32.totalorder %s15, 1
      %s237 = scalar_select %p236, %s15, 1
      %s238 = smul.addr %s237, 2
      %s239 = smul.addr %s238, 4
      %s240 = scalar_lea.vmem %s1, %s239
      %p241 = scmp.lt.s32.totalorder %s15, 1
      %s242 = scalar_select %p241, %s15, 1
      %s243 = smul.addr %s242, 2
      %s244 = smul.addr %s243, 4
      %s245 = scalar_lea.vmem %s2, %s244
      %p246 = scmp.lt.s32.totalorder %s15, 1
      %s247 = scalar_select %p246, %s15, 1
      %s248 = smul.addr %s247, 8
      %s249 = scalar_lea.vmem %s3, %s248
      %p250 = scmp.lt.s32.totalorder %s15, 1
      %s251 = scalar_select %p250, %s15, 1
      %s252 = smul.addr %s251, 2
      %s253 = smul.addr %s252, 8
      %s254 = scalar_lea.vmem %s4, %s253
      %v256 = vld [vmem:[%s235] sm:$0xf]
      %v257 = vld [vmem:[%s235 + $0x4] sm:$0xf]
      %v258 = vld [vmem:[%s240] sm:$0xf]
      %v259 = vld [vmem:[%s240 + $0x4] sm:$0xf]
      %v260 = vld [vmem:[%s245] sm:$0xf]
      %v261 = vld [vmem:[%s245 + $0x4] sm:$0xf]
      %v262 = vld [vmem:[%s249] sm:$0xff]
      %vm263 = vcmask 130048
      %v265 = vsel %vm263, %v256, 0
      %v268 = vsel %vm263, %v258, 0
      %270 = vmatprep.subr.bf16.mxu0 0
      %271 = vmatpush1.bf16.xpose.msra.mxu0 %v268
      %272 = vmatprep.subr.bf16.mxu0 0
      %273 = vmatpush1.bf16.xpose.msra.mxu0 0
      %274 = vmatprep.subr.bf16.mxu0 0
      %275 = vmatpush1.bf16.xpose.msra.mxu0 0
      %276 = vmatprep.subr.bf16.mxu0 0
      %277 = vmatpush1.bf16.xpose.msra.mxu0 0
      %278 = vmatprep.subr.bf16.mxu0 0
      %279 = vmatpush1.bf16.xpose.msra.mxu0 0
      %280 = vmatprep.subr.bf16.mxu0 0
      %281 = vmatpush1.bf16.xpose.msra.mxu0 0
      %282 = vmatprep.subr.bf16.mxu0 0
      %283 = vmatpush1.bf16.xpose.msra.mxu0 0
      %284 = vmatprep.subr.bf16.mxu0 0
      %285 = vmatpush1.bf16.xpose.msra.mxu0 0
      %286 = vmatprep.subr.bf16.mxu0 0
      %287 = vmatpush1.bf16.xpose.msra.mxu0 0
      %288 = vmatprep.subr.bf16.mxu0 0
      %289 = vmatpush1.bf16.xpose.msra.mxu0 0
      %290 = vmatprep.subr.bf16.mxu0 0
      %291 = vmatpush1.bf16.xpose.msra.mxu0 0
      %292 = vmatprep.subr.bf16.mxu0 0
      %293 = vmatpush1.bf16.xpose.msra.mxu0 0
      %294 = vmatprep.subr.bf16.mxu0 0
      %295 = vmatpush1.bf16.xpose.msra.mxu0 0
      %296 = vmatprep.subr.bf16.mxu0 0
      %297 = vmatpush1.bf16.xpose.msra.mxu0 0
      %298 = vmatprep.subr.bf16.mxu0 0
      %299 = vmatpush1.bf16.xpose.msra.mxu0 0
      %300 = vmatprep.subr.bf16.mxu0 0
      %301 = vmatpush1.bf16.xpose.msra.mxu0 0
      %302 = vmatprep.mubr.bf16.mxu0 0
      %303 = vmatmul.mubr.bf16.gmra.mrb[0].mxu0 %v265
      %v304 = vpop.f32.mrb[0].mxu0
      %v305 = vadd.f32 0.0, %v304
      %v306 = vpop.f32.mrb[0].mxu0
      %v307 = vpop.f32.mrb[0].mxu0
      %v308 = vpop.f32.mrb[0].mxu0
      %309 = vdwg.mxu0
      %v311 = vsel %vm263, %v257, 0
      %v314 = vsel %vm263, %v259, 0
      %316 = vmatprep.subr.bf16.mxu0 0
      %317 = vmatpush1.bf16.xpose.msra.mxu0 %v314
      %318 = vmatprep.subr.bf16.mxu0 0
      %319 = vmatpush1.bf16.xpose.msra.mxu0 0
      %320 = vmatprep.subr.bf16.mxu0 0
      %321 = vmatpush1.bf16.xpose.msra.mxu0 0
      %322 = vmatprep.subr.bf16.mxu0 0
      %323 = vmatpush1.bf16.xpose.msra.mxu0 0
      %324 = vmatprep.subr.bf16.mxu0 0
      %325 = vmatpush1.bf16.xpose.msra.mxu0 0
      %326 = vmatprep.subr.bf16.mxu0 0
      %327 = vmatpush1.bf16.xpose.msra.mxu0 0
      %328 = vmatprep.subr.bf16.mxu0 0
      %329 = vmatpush1.bf16.xpose.msra.mxu0 0
      %330 = vmatprep.subr.bf16.mxu0 0
      %331 = vmatpush1.bf16.xpose.msra.mxu0 0
      %332 = vmatprep.subr.bf16.mxu0 0
      %333 = vmatpush1.bf16.xpose.msra.mxu0 0
      %334 = vmatprep.subr.bf16.mxu0 0
      %335 = vmatpush1.bf16.xpose.msra.mxu0 0
      %336 = vmatprep.subr.bf16.mxu0 0
      %337 = vmatpush1.bf16.xpose.msra.mxu0 0
      %338 = vmatprep.subr.bf16.mxu0 0
      %339 = vmatpush1.bf16.xpose.msra.mxu0 0
      %340 = vmatprep.subr.bf16.mxu0 0
      %341 = vmatpush1.bf16.xpose.msra.mxu0 0
      %342 = vmatprep.subr.bf16.mxu0 0
      %343 = vmatpush1.bf16.xpose.msra.mxu0 0
      %344 = vmatprep.subr.bf16.mxu0 0
      %345 = vmatpush1.bf16.xpose.msra.mxu0 0
      %346 = vmatprep.subr.bf16.mxu0 0
      %347 = vmatpush1.bf16.xpose.msra.mxu0 0
      %348 = vmatprep.mubr.bf16.mxu0 0
      %349 = vmatmul.mubr.bf16.gmra.mrb[0].mxu0 %v311
      %v350 = vpop.f32.mrb[0].mxu0
      %v351 = vadd.f32 0.0, %v350
      %v352 = vpop.f32.mrb[0].mxu0
      %v353 = vpop.f32.mrb[0].mxu0
      %v354 = vpop.f32.mrb[0].mxu0
      %355 = vdwg.mxu0
      %v356 = vmul.f32 %v305, 0.25
      %v357 = vmul.f32 %v351, 0.25
      %v358 = vadd.f32 %v356, %v262
      %v359 = vadd.f32 %v357, %v262
      %vm360 = vcmask 64512
      %v361 = vsel %vm360, %v358, -inf
      %362 = vmax.xlane.f32.xlu0 %v361
      %v363 = vpop.xlane.xlu0 %362
      %v364 = vsel %vm360, %v359, -inf
      %365 = vmax.xlane.f32.xlu0 %v364
      %v366 = vpop.xlane.xlu0 %365
      %v367 = vsub.f32 %v358, %v363
      %v368 = vsub.f32 %v359, %v366
      %v369 = vmul.f32 %v367, 1.442695
      %v370 = vpow.pop %v369
      %v371 = vmul.f32 %v368, 1.442695
      %v372 = vpow.pop %v371
      %v373 = vsel %vm360, %v370, 0.0
      %374 = vadd.xlane.f32.xlu0 %v373
      %v375 = vpop.xlane.xlu0 %374
      %v376 = vsel %vm360, %v372, 0.0
      %377 = vadd.xlane.f32.xlu0 %v376
      %v378 = vpop.xlane.xlu0 %377
      %v379 = vrcp.pop %v375
      %v380 = vrcp.pop %v378
      %v381 = vmul.f32 %v370, %v379
      %v382 = vmul.f32 %v372, %v380
      %v383 = vpack.c.bf16 %v381, %v381
      %v384 = vpack.c.bf16 %v382, %v382
      %v386 = vsel %vm360, %v383, 0
      %vm388 = vcmask 1043456
      %v390 = vsel %vm388, %v260, 0
      %392 = vmatprep.subr.bf16.mxu0 0
      %393 = vmatpush1.bf16.msra.mxu0 %v390
      %394 = vmatprep.subr.bf16.mxu0 0
      %395 = vmatpush1.bf16.msra.mxu0 0
      %396 = vmatprep.subr.bf16.mxu0 0
      %397 = vmatpush1.bf16.msra.mxu0 0
      %398 = vmatprep.subr.bf16.mxu0 0
      %399 = vmatpush1.bf16.msra.mxu0 0
      %400 = vmatprep.subr.bf16.mxu0 0
      %401 = vmatpush1.bf16.msra.mxu0 0
      %402 = vmatprep.subr.bf16.mxu0 0
      %403 = vmatpush1.bf16.msra.mxu0 0
      %404 = vmatprep.subr.bf16.mxu0 0
      %405 = vmatpush1.bf16.msra.mxu0 0
      %406 = vmatprep.subr.bf16.mxu0 0
      %407 = vmatpush1.bf16.msra.mxu0 0
      %408 = vmatprep.subr.bf16.mxu0 0
      %409 = vmatpush1.bf16.msra.mxu0 0
      %410 = vmatprep.subr.bf16.mxu0 0
      %411 = vmatpush1.bf16.msra.mxu0 0
      %412 = vmatprep.subr.bf16.mxu0 0
      %413 = vmatpush1.bf16.msra.mxu0 0
      %414 = vmatprep.subr.bf16.mxu0 0
      %415 = vmatpush1.bf16.msra.mxu0 0
      %416 = vmatprep.subr.bf16.mxu0 0
      %417 = vmatpush1.bf16.msra.mxu0 0
      %418 = vmatprep.subr.bf16.mxu0 0
      %419 = vmatpush1.bf16.msra.mxu0 0
      %420 = vmatprep.subr.bf16.mxu0 0
      %421 = vmatpush1.bf16.msra.mxu0 0
      %422 = vmatprep.subr.bf16.mxu0 0
      %423 = vmatpush1.bf16.msra.mxu0 0
      %424 = vmatprep.mubr.bf16.mxu0 0
      %425 = vmatmul.mubr.bf16.gmra.mrb[0].mxu0 %v386
      %v426 = vpop.f32.mrb[0].mxu0
      %v427 = vadd.f32 0.0, %v426
      %v428 = vpop.f32.mrb[0].mxu0
      %v429 = vpop.f32.mrb[0].mxu0
      %v430 = vpop.f32.mrb[0].mxu0
      %431 = vdwg.mxu0
      %v433 = vsel %vm360, %v384, 0
      %v436 = vsel %vm388, %v261, 0
      %438 = vmatprep.subr.bf16.mxu0 0
      %439 = vmatpush1.bf16.msra.mxu0 %v436
      %440 = vmatprep.subr.bf16.mxu0 0
      %441 = vmatpush1.bf16.msra.mxu0 0
      %442 = vmatprep.subr.bf16.mxu0 0
      %443 = vmatpush1.bf16.msra.mxu0 0
      %444 = vmatprep.subr.bf16.mxu0 0
      %445 = vmatpush1.bf16.msra.mxu0 0
      %446 = vmatprep.subr.bf16.mxu0 0
      %447 = vmatpush1.bf16.msra.mxu0 0
      %448 = vmatprep.subr.bf16.mxu0 0
      %449 = vmatpush1.bf16.msra.mxu0 0
      %450 = vmatprep.subr.bf16.mxu0 0
      %451 = vmatpush1.bf16.msra.mxu0 0
      %452 = vmatprep.subr.bf16.mxu0 0
      %453 = vmatpush1.bf16.msra.mxu0 0
      %454 = vmatprep.subr.bf16.mxu0 0
      %455 = vmatpush1.bf16.msra.mxu0 0
      %456 = vmatprep.subr.bf16.mxu0 0
      %457 = vmatpush1.bf16.msra.mxu0 0
      %458 = vmatprep.subr.bf16.mxu0 0
      %459 = vmatpush1.bf16.msra.mxu0 0
      %460 = vmatprep.subr.bf16.mxu0 0
      %461 = vmatpush1.bf16.msra.mxu0 0
      %462 = vmatprep.subr.bf16.mxu0 0
      %463 = vmatpush1.bf16.msra.mxu0 0
      %464 = vmatprep.subr.bf16.mxu0 0
      %465 = vmatpush1.bf16.msra.mxu0 0
      %466 = vmatprep.subr.bf16.mxu0 0
      %467 = vmatpush1.bf16.msra.mxu0 0
      %468 = vmatprep.subr.bf16.mxu0 0
      %469 = vmatpush1.bf16.msra.mxu0 0
      %470 = vmatprep.mubr.bf16.mxu0 0
      %471 = vmatmul.mubr.bf16.gmra.mrb[0].mxu0 %v433
      %v472 = vpop.f32.mrb[0].mxu0
      %v473 = vadd.f32 0.0, %v472
      %v474 = vpop.f32.mrb[0].mxu0
      %v475 = vpop.f32.mrb[0].mxu0
      %v476 = vpop.f32.mrb[0].mxu0
      %477 = vdwg.mxu0
      %478 = vst.msk [vmem:[%s254] sm:$0xff] %vm263, %v427
      %479 = vst.msk [vmem:[%s254 + $0x8] sm:$0xff] %vm263, %v473
      %p480 = scmp.lt.s32.totalorder %s15, 1
      %s481 = scalar_select %p480, %s15, 1
      %s482 = smul.addr %s481, 2
      %s483 = smul.addr %s482, 8
      %s484 = scalar_lea.vmem %s4, %s483
      // Predicated region
      $region37: #{_lambda_.64} parent=35 // pred_check
        %p485 = pneg %p137
      $region38: #{_lambda_.64} parent=35 // pred_check_branch
        %487 = sbr.rel (%p485) target = $region40
      $region39: #{_lambda_.64} parent=35 // pred_region
        _
      $region40: #{_lambda_.64} parent=35 // pred_fallthru
        _
    $region36: #{_lambda_.64} parent=5 // pred_fallthru
      _
    %p488 = scmp.le.s32.totalorder 2, %s10
    // Predicated region
    $region41: #{_lambda_.64} parent=5 // pred_check
      %p489 = pneg %p488
    $region42: #{_lambda_.64} parent=5 // pred_check_branch
      %491 = sbr.rel (%p489) target = $region44
    $region43: #{_lambda_.64} parent=5 // pred_region
      %s492 = ssub.s32 %s10, 2
      // Predicated region
      $region45: #{_lambda_.64} parent=43 // pred_check
        %p493 = pneg %p143
      $region46: #{_lambda_.64} parent=43 // pred_check_branch
        %495 = sbr.rel (%p493) target = $region48
      $region47: #{_lambda_.64} parent=43 // pred_region
        %p496 = scmp.lt.s32.totalorder %s16, 1
        %s497 = scalar_select %p496, %s16, 1
        %s498 = smul.addr %s497, 2
        %s499 = smul.addr %s498, 8
        %s500 = scalar_lea.vmem %s4, %s499
      $region48: #{_lambda_.64} parent=43 // pred_fallthru
        _
    $region44: #{_lambda_.64} parent=5 // pred_fallthru
      _
  $region6: #{_lambda_.64} parent=0 // loop_footer
    %s14 = sadd.s32 1, %s10
  $region7: #{_lambda_.64} parent=0 // loop_footer_branch
    %9 = sbr.rel target = $region3
  $region8: #{_lambda_.64} parent=0 // loop_exit
    _

// kernel: _lambda_.71
$region0: #{_lambda_.71}
  #allocation0 [shape = 'u32[]', space=smem, size = 0x4, offset = 0x4, fixed_abs, tag = 'smem constant byte address 0x4 - core index']
  #allocation1 [shape = 'u32[144,128]{1,0:T(1,128)}', space=vmem, size = 0x12000, scoped, tag = 'internal scratch']
  %s0 = inlined_call_operand.vmem [shape: bf16[16,32], index: 0, kind: input, shape index: {}]
  %s1 = inlined_call_operand.vmem [shape: bf16[32,64], index: 1, kind: input, shape index: {}]
  %s2 = inlined_call_operand.vmem [shape: f32[1,64], index: 2, kind: input, shape index: {}]
  %s3 = inlined_call_operand.vmem [shape: f32[1,64], index: 3, kind: input, shape index: {}]
  %s4 = inlined_call_operand.vmem [shape: f32[16,64], index: 4, kind: output, shape index: {}]
  %s5 = sld [smem:[#allocation0]]
  $region26: #{_lambda_.71} parent=0
    _
  %s7 = ssub.s32 1, %s5
  %s8 = scalar_select 0, %s7, %s5
  // Predicated region
  $region2: #{_lambda_.71} parent=0 // pred_check
    _
  $region3: #{_lambda_.71} parent=0 // pred_check_branch
    %10 = sbr.rel (0) target = $region5
  $region4: #{_lambda_.71} parent=0 // pred_region
    _
  $region5: #{_lambda_.71} parent=0 // pred_fallthru
    _
  // Predicated region
  $region6: #{_lambda_.71} parent=0 // pred_check
    _
  $region7: #{_lambda_.71} parent=0 // pred_check_branch
    %12 = sbr.rel (0) target = $region9
  $region8: #{_lambda_.71} parent=0 // pred_region
    _
  $region9: #{_lambda_.71} parent=0 // pred_fallthru
    _
  // Predicated region
  $region10: #{_lambda_.71} parent=0 // pred_check
    _
  $region11: #{_lambda_.71} parent=0 // pred_check_branch
    %14 = sbr.rel (0) target = $region13
  $region12: #{_lambda_.71} parent=0 // pred_region
    _
  $region13: #{_lambda_.71} parent=0 // pred_fallthru
    _
  // Predicated region
  $region14: #{_lambda_.71} parent=0 // pred_check
    _
  $region15: #{_lambda_.71} parent=0 // pred_check_branch
    %16 = sbr.rel (0) target = $region17
  $region16: #{_lambda_.71} parent=0 // pred_region
    _
  $region17: #{_lambda_.71} parent=0 // pred_fallthru
    _
  %v18 = vld [vmem:[%s0] sm:$0xf]
  %v19 = vld [vmem:[%s0 + $0x4] sm:$0xf]
  %v20 = vld [vmem:[%s1] sm:$0xf]
  %v21 = vld [vmem:[%s1 + $0x4] sm:$0xf]
  %v22 = vld [vmem:[%s1 + $0x8] sm:$0xf]
  %v23 = vld [vmem:[%s1 + $0xc] sm:$0xf]
  %v26 = vunpack.c.l.b16 %v18
  %v27 = vunpack.c.l.b16 %v19
  %v28 = vpack.c.b16 %v27, %v26
  %v33 = vunpack.c.l.b16 %v20
  %v34 = vunpack.c.l.b16 %v21
  %v35 = vunpack.c.l.b16 %v22
  %v36 = vunpack.c.l.b16 %v23
  %v37 = vpack.c.b16 %v34, %v33
  %v38 = vpack.c.b16 %v36, %v35
  %vm41 = vcmask 261120
  %v43 = vsel %vm41, %v28, 0
  %45 = vmatprep.subr.bf16.mxu0 0
  %46 = vmatpush1.bf16.msra.mxu0 %v37
  %47 = vmatprep.subr.bf16.mxu0 0
  %48 = vmatpush1.bf16.msra.mxu0 %v38
  %49 = vmatprep.subr.bf16.mxu0 0
  %50 = vmatpush1.bf16.msra.mxu0 0
  %51 = vmatprep.subr.bf16.mxu0 0
  %52 = vmatpush1.bf16.msra.mxu0 0
  %53 = vmatprep.subr.bf16.mxu0 0
  %54 = vmatpush1.bf16.msra.mxu0 0
  %55 = vmatprep.subr.bf16.mxu0 0
  %56 = vmatpush1.bf16.msra.mxu0 0
  %57 = vmatprep.subr.bf16.mxu0 0
  %58 = vmatpush1.bf16.msra.mxu0 0
  %59 = vmatprep.subr.bf16.mxu0 0
  %60 = vmatpush1.bf16.msra.mxu0 0
  %61 = vmatprep.subr.bf16.mxu0 0
  %62 = vmatpush1.bf16.msra.mxu0 0
  %63 = vmatprep.subr.bf16.mxu0 0
  %64 = vmatpush1.bf16.msra.mxu0 0
  %65 = vmatprep.subr.bf16.mxu0 0
  %66 = vmatpush1.bf16.msra.mxu0 0
  %67 = vmatprep.subr.bf16.mxu0 0
  %68 = vmatpush1.bf16.msra.mxu0 0
  %69 = vmatprep.subr.bf16.mxu0 0
  %70 = vmatpush1.bf16.msra.mxu0 0
  %71 = vmatprep.subr.bf16.mxu0 0
  %72 = vmatpush1.bf16.msra.mxu0 0
  %73 = vmatprep.subr.bf16.mxu0 0
  %74 = vmatpush1.bf16.msra.mxu0 0
  %75 = vmatprep.subr.bf16.mxu0 0
  %76 = vmatpush1.bf16.msra.mxu0 0
  %77 = vmatprep.mubr.bf16.mxu0 0
  %78 = vmatmul.mubr.bf16.gmra.mrb[0].mxu0 %v43
  %v79 = vpop.f32.mrb[0].mxu0
  %v80 = vadd.f32 0.0, %v79
  %v81 = vpop.f32.mrb[0].mxu0
  %v82 = vpop.f32.mrb[0].mxu0
  %v83 = vadd.f32 0.0, %v82
  %v84 = vpop.f32.mrb[0].mxu0
  %85 = vdwg.mxu0
  %v86 = vld [vmem:[%s2] sm:$0x1]
  %v88 = vlaneseq
  %v89 = vshrl.u32 %v88, 7
  %v90 = vsub.s32 0, %v89
  %v91 = vrot.slane %v86, %v90
  %v93 = vmul.f32 %v80, %v91
  %v94 = vmul.f32 %v83, %v91
  %v95 = vld [vmem:[%s3] sm:$0x1]
  %v97 = vlaneseq
  %v98 = vshrl.u32 %v97, 7
  %v99 = vsub.s32 0, %v98
  %v100 = vrot.slane %v95, %v99
  %v102 = vadd.f32 %v93, %v100
  %v103 = vadd.f32 %v94, %v100
  %v104 = vmax.f32 %v102, 0.0
  %v105 = vmax.f32 %v103, 0.0
  %vm106 = vcmask 523264
  %107 = vst.msk [vmem:[%s4] sm:$0xff] %vm106, %v104
  %108 = vst.msk [vmem:[%s4 + $0x8] sm:$0xff] %vm106, %v105
  // Predicated region
  $region18: #{_lambda_.71} parent=0 // pred_check
    _
  $region19: #{_lambda_.71} parent=0 // pred_check_branch
    %110 = sbr.rel (0) target = $region21
  $region20: #{_lambda_.71} parent=0 // pred_region
    _
  $region21: #{_lambda_.71} parent=0 // pred_fallthru
    _
  // Predicated region
  $region22: #{_lambda_.71} parent=0 // pred_check
    _
  $region23: #{_lambda_.71} parent=0 // pred_check_branch
    %112 = sbr.rel (0) target = $region25
  $region24: #{_lambda_.71} parent=0 // pred_region
    _
  $region25: #{_lambda_.71} parent=0 // pred_fallthru
    _

// kernel: _lambda_.69
$region0: #{_lambda_.69}
  #allocation0 [shape = 'u32[]', space=smem, size = 0x4, offset = 0x4, fixed_abs, tag = 'smem constant byte address 0x4 - core index']
  #allocation1 [shape = 'u32[144,128]{1,0:T(1,128)}', space=vmem, size = 0x12000, scoped, tag = 'internal scratch']
  %s0 = inlined_call_operand.vmem [shape: bf16[2,2,8,16], index: 0, kind: input, shape index: {}]
  %s1 = inlined_call_operand.vmem [shape: bf16[2,2,4,16], index: 1, kind: input, shape index: {}]
  %s2 = inlined_call_operand.vmem [shape: bf16[2,2,4,16], index: 2, kind: input, shape index: {}]
  %s3 = inlined_call_operand.vmem [shape: f32[2,8,4], index: 3, kind: input, shape index: {}]
  %s4 = inlined_call_operand.vmem [shape: f32[2,2,8,16], index: 4, kind: output, shape index: {0}]
  %s5 = inlined_call_operand.hbm [shape: f32[2,2,8,4], index: 5, kind: output, shape index: {1}]
  %6 = xla_tuple %s4, %s5
  %s7 = sld [smem:[#allocation0]]
  $region57: #{_lambda_.69} parent=0
    _
  %s9 = ssub.s32 1, %s7
  %s10 = scalar_select 0, %s9, %s7
  $region1: #{_lambda_.69} parent=0
    #allocation2 [shape = 'u8[16384]{0}', space=vmem, size = 0x4000, scoped, tag = 'output window, operand 1']
    #allocation3 [shape = 's32[2]{0}', space=sflag, size = 0x8, scoped, tag = 'scoped memory for _lambda_.69']
    %11 = vsyncpa [#allocation3], 0
    %s12 = scalar_lea.sflag [#allocation3], 1
    %13 = vsyncpa %s12, 0
    loop: start=0, step=1, limit=4
    $region2: #{_lambda_.69} parent=1 // loop_pre_header
      _
    $region3: #{_lambda_.69} parent=1 // loop_header
      %s15 = sphi 0, %s19
      %p16 = scmp.ge.s32.totalorder %s15, 4
      %s25 = sphi 0, %s27
      %s28 = sphi 0, %s25
      %s29 = sphi 0, %s28
      %s45 = sphi 0, %s29
      %s51 = sphi 0, %s53
      %s54 = sphi 0, %s51
      %s55 = sphi 0, %s54
      %s71 = sphi 0, %s55
      %s77 = sphi 0, %s79
      %s80 = sphi 0, %s77
      %s81 = sphi 0, %s80
      %s97 = sphi 0, %s81
      %s103 = sphi 0, %s105
      %s106 = sphi 0, %s103
      %s107 = sphi 0, %s106
      %s123 = sphi 0, %s107
      %s129 = sphi 0, %s131
      %s132 = sphi 0, %s129
      %s133 = sphi 0, %s132
      %s149 = sphi 0, %s133
      %s155 = sphi 0, %s157
      %s158 = sphi 0, %s155
      %s159 = sphi 0, %s158
      %s175 = sphi 0, %s159
    $region4: #{_lambda_.69} parent=1 // loop_header_branch
      %18 = sbr.rel (%p16) target = $region8
    $region5: #{_lambda_.69} parent=1 // loop_body
      %s20 = ssub.s32 %s15, 1
      %s21 = ssub.s32 %s15, 2
      %s22 = sadd.s32 %s15, 1
      %s23 = ssub.s32 %s15, %s22
      %p24 = scmp.eq.s32.totalorder %s23, 0
      %s26 = sadd.s32 %s25, 1
      %s27 = scalar_select %p24, %s25, %s26
      %p30 = pneg %p24
      %p31 = scmp.eq.s32.totalorder %s15, 1
      %p32 = por %p30, %p31
      %p33 = scmp.ne.s32.totalorder %s25, %s28
      %p34 = scmp.eq.s32.totalorder %s15, 0
      %p35 = por %p33, %p34
      %p36 = scmp.ne.s32.totalorder %s25, %s28
      %p37 = scmp.eq.s32.totalorder %s20, 1
      %p38 = por %p36, %p37
      %p39 = scmp.ne.s32.totalorder %s28, %s29
      %p40 = scmp.eq.s32.totalorder %s20, 0
      %p41 = por %p39, %p40
      %p42 = scmp.ne.s32.totalorder %s28, %s29
      %p43 = scmp.eq.s32.totalorder %s21, 1
      %p44 = por %p42, %p43
      %p46 = scmp.ne.s32.totalorder %s29, %s45
      %p47 = scmp.eq.s32.totalorder %s21, 0
      %p48 = por %p46, %p47
      %s49 = ssub.s32 %s15, %s22
      %p50 = scmp.eq.s32.totalorder %s49, 0
      %s52 = sadd.s32 %s51, 1
      %s53 = scalar_select %p50, %s51, %s52
      %p56 = pneg %p50
      %p57 = scmp.eq.s32.totalorder %s15, 1
      %p58 = por %p56, %p57
      %p59 = scmp.ne.s32.totalorder %s51, %s54
      %p60 = scmp.eq.s32.totalorder %s15, 0
      %p61 = por %p59, %p60
      %p62 = scmp.ne.s32.totalorder %s51, %s54
      %p63 = scmp.eq.s32.totalorder %s20, 1
      %p64 = por %p62, %p63
      %p65 = scmp.ne.s32.totalorder %s54, %s55
      %p66 = scmp.eq.s32.totalorder %s20, 0
      %p67 = por %p65, %p66
      %p68 = scmp.ne.s32.totalorder %s54, %s55
      %p69 = scmp.eq.s32.totalorder %s21, 1
      %p70 = por %p68, %p69
      %p72 = scmp.ne.s32.totalorder %s55, %s71
      %p73 = scmp.eq.s32.totalorder %s21, 0
      %p74 = por %p72, %p73
      %s75 = ssub.s32 %s15, %s22
      %p76 = scmp.eq.s32.totalorder %s75, 0
      %s78 = sadd.s32 %s77, 1
      %s79 = scalar_select %p76, %s77, %s78
      %p82 = pneg %p76
      %p83 = scmp.eq.s32.totalorder %s15, 1
      %p84 = por %p82, %p83
      %p85 = scmp.ne.s32.totalorder %s77, %s80
      %p86 = scmp.eq.s32.totalorder %s15, 0
      %p87 = por %p85, %p86
      %p88 = scmp.ne.s32.totalorder %s77, %s80
      %p89 = scmp.eq.s32.totalorder %s20, 1
      %p90 = por %p88, %p89
      %p91 = scmp.ne.s32.totalorder %s80, %s81
      %p92 = scmp.eq.s32.totalorder %s20, 0
      %p93 = por %p91, %p92
      %p94 = scmp.ne.s32.totalorder %s80, %s81
      %p95 = scmp.eq.s32.totalorder %s21, 1
      %p96 = por %p94, %p95
      %p98 = scmp.ne.s32.totalorder %s81, %s97
      %p99 = scmp.eq.s32.totalorder %s21, 0
      %p100 = por %p98, %p99
      %s101 = ssub.s32 %s15, %s22
      %p102 = scmp.eq.s32.totalorder %s101, 0
      %s104 = sadd.s32 %s103, 1
      %s105 = scalar_select %p102, %s103, %s104
      %p108 = pneg %p102
      %p109 = scmp.eq.s32.totalorder %s15, 1
      %p110 = por %p108, %p109
      %p111 = scmp.ne.s32.totalorder %s103, %s106
      %p112 = scmp.eq.s32.totalorder %s15, 0
      %p113 = por %p111, %p112
      %p114 = scmp.ne.s32.totalorder %s103, %s106
      %p115 = scmp.eq.s32.totalorder %s20, 1
      %p116 = por %p114, %p115
      %p117 = scmp.ne.s32.totalorder %s106, %s107
      %p118 = scmp.eq.s32.totalorder %s20, 0
      %p119 = por %p117, %p118
      %p120 = scmp.ne.s32.totalorder %s106, %s107
      %p121 = scmp.eq.s32.totalorder %s21, 1
      %p122 = por %p120, %p121
      %p124 = scmp.ne.s32.totalorder %s107, %s123
      %p125 = scmp.eq.s32.totalorder %s21, 0
      %p126 = por %p124, %p125
      %s127 = ssub.s32 %s15, %s22
      %p128 = scmp.eq.s32.totalorder %s127, 0
      %s130 = sadd.s32 %s129, 1
      %s131 = scalar_select %p128, %s129, %s130
      %p134 = pneg %p128
      %p135 = scmp.eq.s32.totalorder %s15, 1
      %p136 = por %p134, %p135
      %p137 = scmp.ne.s32.totalorder %s129, %s132
      %p138 = scmp.eq.s32.totalorder %s15, 0
      %p139 = por %p137, %p138
      %p140 = scmp.ne.s32.totalorder %s129, %s132
      %p141 = scmp.eq.s32.totalorder %s20, 1
      %p142 = por %p140, %p141
      %p143 = scmp.ne.s32.totalorder %s132, %s133
      %p144 = scmp.eq.s32.totalorder %s20, 0
      %p145 = por %p143, %p144
      %p146 = scmp.ne.s32.totalorder %s132, %s133
      %p147 = scmp.eq.s32.totalorder %s21, 1
      %p148 = por %p146, %p147
      %p150 = scmp.ne.s32.totalorder %s133, %s149
      %p151 = scmp.eq.s32.totalorder %s21, 0
      %p152 = por %p150, %p151
      %s153 = ssub.s32 %s15, %s22
      %p154 = scmp.eq.s32.totalorder %s153, 0
      %s156 = sadd.s32 %s155, 1
      %s157 = scalar_select %p154, %s155, %s156
      %p160 = pneg %p154
      %p161 = scmp.eq.s32.totalorder %s15, 1
      %p162 = por %p160, %p161
      %p163 = scmp.ne.s32.totalorder %s155, %s158
      %p164 = scmp.eq.s32.totalorder %s15, 0
      %p165 = por %p163, %p164
      %p166 = scmp.ne.s32.totalorder %s155, %s158
      %p167 = scmp.eq.s32.totalorder %s20, 1
      %p168 = por %p166, %p167
      %p169 = scmp.ne.s32.totalorder %s158, %s159
      %p170 = scmp.eq.s32.totalorder %s20, 0
      %p171 = por %p169, %p170
      %p172 = scmp.ne.s32.totalorder %s158, %s159
      %p173 = scmp.eq.s32.totalorder %s21, 1
      %p174 = por %p172, %p173
      %p176 = scmp.ne.s32.totalorder %s159, %s175
      %p177 = scmp.eq.s32.totalorder %s21, 0
      %p178 = por %p176, %p177
      %p179 = scmp.le.s32.totalorder 1, %s15
      %p180 = scmp.lt.s32.totalorder %s15, 3
      %p181 = pnand %p179, %p180
      %p182 = pneg %p181
      // Predicated region
      $region9: #{_lambda_.69} parent=5 // pred_check
        _
      $region10: #{_lambda_.69} parent=5 // pred_check_branch
        %184 = sbr.rel (%p181) target = $region12
      $region11: #{_lambda_.69} parent=5 // pred_region
        %s185 = ssub.s32 %s15, 1
      $region12: #{_lambda_.69} parent=5 // pred_fallthru
        _
      %p186 = scmp.lt.s32.totalorder %s15, 2
      // Predicated region
      $region13: #{_lambda_.69} parent=5 // pred_check
        %p187 = pneg %p186
      $region14: #{_lambda_.69} parent=5 // pred_check_branch
        %189 = sbr.rel (%p187) target = $region16
      $region15: #{_lambda_.69} parent=5 // pred_region
        // Predicated region
        $region17: #{_lambda_.69} parent=15 // pred_check
          %p190 = pneg %p35
        $region18: #{_lambda_.69} parent=15 // pred_check_branch
          %192 = sbr.rel (%p190) target = $region20
        $region19: #{_lambda_.69} parent=15 // pred_region
          %p193 = scmp.lt.s32.totalorder %s15, 1
          %s194 = scalar_select %p193, %s15, 1
          %s195 = smul.addr %s194, 2
          %s196 = smul.addr %s195, 4
          %s197 = scalar_lea.vmem %s0, %s196
        $region20: #{_lambda_.69} parent=15 // pred_fallthru
          _
        // Predicated region
        $region21: #{_lambda_.69} parent=15 // pred_check
          %p198 = pneg %p61
        $region22: #{_lambda_.69} parent=15 // pred_check_branch
          %200 = sbr.rel (%p198) target = $region24
        $region23: #{_lambda_.69} parent=15 // pred_region
          %p201 = scmp.lt.s32.totalorder %s15, 1
          %s202 = scalar_select %p201, %s15, 1
          %s203 = smul.addr %s202, 2
          %s204 = smul.addr %s203, 2
          %s205 = scalar_lea.vmem %s1, %s204
        $region24: #{_lambda_.69} parent=15 // pred_fallthru
          _
        // Predicated region
        $region25: #{_lambda_.69} parent=15 // pred_check
          %p206 = pneg %p87
        $region26: #{_lambda_.69} parent=15 // pred_check_branch
          %208 = sbr.rel (%p206) target = $region28
        $region27: #{_lambda_.69} parent=15 // pred_region
          %p209 = scmp.lt.s32.totalorder %s15, 1
          %s210 = scalar_select %p209, %s15, 1
          %s211 = smul.addr %s210, 2
          %s212 = smul.addr %s211, 2
          %s213 = scalar_lea.vmem %s2, %s212
        $region28: #{_lambda_.69} parent=15 // pred_fallthru
          _
        // Predicated region
        $region29: #{_lambda_.69} parent=15 // pred_check
          %p214 = pneg %p113
        $region30: #{_lambda_.69} parent=15 // pred_check_branch
          %216 = sbr.rel (%p214) target = $region32
        $region31: #{_lambda_.69} parent=15 // pred_region
          %p217 = scmp.lt.s32.totalorder %s15, 1
          %s218 = scalar_select %p217, %s15, 1
          %s219 = smul.addr %s218, 8
          %s220 = scalar_lea.vmem %s3, %s219
        $region32: #{_lambda_.69} parent=15 // pred_fallthru
          _
      $region16: #{_lambda_.69} parent=5 // pred_fallthru
        _
      %p221 = scmp.le.s32.totalorder 1, %s15
      %p222 = scmp.lt.s32.totalorder %s15, 3
      %p223 = pnand %p221, %p222
      %p224 = pneg %p223
      // Predicated region
      $region33: #{_lambda_.69} parent=5 // pred_check
        _
      $region34: #{_lambda_.69} parent=5 // pred_check_branch
        %226 = sbr.rel (%p223) target = $region36
      $region35: #{_lambda_.69} parent=5 // pred_region
        %s227 = ssub.s32 %s15, 1
        %p228 = scmp.lt.s32.totalorder %s20, 1
        %s229 = scalar_select %p228, %s20, 1
        %s230 = smul.addr %s229, 2
        %s231 = smul.addr %s230, 4
        %s232 = scalar_lea.vmem %s0, %s231
        %p233 = pneg %p41
        %p234 = pneg %p38
        %p235 = scmp.lt.s32.totalorder %s20, 1
        %s236 = scalar_select %p235, %s20, 1
        %s237 = smul.addr %s236, 2
        %s238 = smul.addr %s237, 2
        %s239 = scalar_lea.vmem %s1, %s238
        %p240 = pneg %p67
        %p241 = pneg %p64
        %p242 = scmp.lt.s32.totalorder %s20, 1
        %s243 = scalar_select %p242, %s20, 1
        %s244 = smul.addr %s243, 2
        %s245 = smul.addr %s244, 2
        %s246 = scalar_lea.vmem %s2, %s245
        %p247 = pneg %p93
        %p248 = pneg %p90
        %p249 = scmp.lt.s32.totalorder %s20, 1
        %s250 = scalar_select %p249, %s20, 1
        %s251 = smul.addr %s250, 8
        %s252 = scalar_lea.vmem %s3, %s251
        %p253 = pneg %p119
        %p254 = pneg %p116
        %p255 = pneg %p145
        %p256 = pneg %p142
        %p257 = scmp.lt.s32.totalorder %s20, 1
        %s258 = scalar_select %p257, %s20, 1
        %s259 = smul.addr %s258, 2
        %s260 = smul.addr %s259, 8
        %s261 = scalar_lea.vmem %s4, %s260
        %p262 = pneg %p171
        %p263 = pneg %p168
        %s264 = sand.u32 %s158, 1
        %s265 = scalar_lea.sflag [#allocation3], %s264
        %s266 = sand.u32 %s158, 1
        %s267 = smul.addr %s266, 16
        %s268 = scalar_lea.vmem [#allocation2], %s267
        %p269 = scmp.lt.s32.totalorder %s20, 1
        %s270 = scalar_select %p269, %s20, 1
        %s271 = smul.addr %s270, 2
        %s272 = smul.addr %s271, 4
        %s273 = scalar_lea.vmem %s0, %s272
        %p274 = scmp.lt.s32.totalorder %s20, 1
        %s275 = scalar_select %p274, %s20, 1
        %s276 = smul.addr %s275, 2
        %s277 = smul.addr %s276, 2
        %s278 = scalar_lea.vmem %s1, %s277
        %p279 = scmp.lt.s32.totalorder %s20, 1
        %s280 = scalar_select %p279, %s20, 1
        %s281 = smul.addr %s280, 2
        %s282 = smul.addr %s281, 2
        %s283 = scalar_lea.vmem %s2, %s282
        %p284 = scmp.lt.s32.totalorder %s20, 1
        %s285 = scalar_select %p284, %s20, 1
        %s286 = smul.addr %s285, 8
        %s287 = scalar_lea.vmem %s3, %s286
        %p288 = scmp.lt.s32.totalorder %s20, 1
        %s289 = scalar_select %p288, %s20, 1
        %s290 = smul.addr %s289, 2
        %s291 = smul.addr %s290, 8
        %s292 = scalar_lea.vmem %s4, %s291
        %v294 = vld [vmem:[%s273] sm:$0xf]
        %v295 = vld [vmem:[%s273 + $0x4] sm:$0xf]
        %v296 = vld [vmem:[%s278] sm:$0x3]
        %v297 = vld [vmem:[%s278 + $0x2] sm:$0x3]
        %v298 = vld [vmem:[%s283] sm:$0x3]
        %v299 = vld [vmem:[%s283 + $0x2] sm:$0x3]
        %v300 = vld [vmem:[%s287] sm:$0xff]
        %vm301 = vcmask 130048
        %v303 = vsel %vm301, %v294, 0
        %v306 = vsel %vm301, %v296, 0
        %308 = vmatprep.subr.bf16.mxu0 0
        %309 = vmatpush1.bf16.xpose.msra.mxu0 %v306
        %310 = vmatprep.subr.bf16.mxu0 0
        %311 = vmatpush1.bf16.xpose.msra.mxu0 0
        %312 = vmatprep.subr.bf16.mxu0 0
        %313 = vmatpush1.bf16.xpose.msra.mxu0 0
        %314 = vmatprep.subr.bf16.mxu0 0
        %315 = vmatpush1.bf16.xpose.msra.mxu0 0
        %316 = vmatprep.subr.bf16.mxu0 0
        %317 = vmatpush1.bf16.xpose.msra.mxu0 0
        %318 = vmatprep.subr.bf16.mxu0 0
        %319 = vmatpush1.bf16.xpose.msra.mxu0 0
        %320 = vmatprep.subr.bf16.mxu0 0
        %321 = vmatpush1.bf16.xpose.msra.mxu0 0
        %322 = vmatprep.subr.bf16.mxu0 0
        %323 = vmatpush1.bf16.xpose.msra.mxu0 0
        %324 = vmatprep.subr.bf16.mxu0 0
        %325 = vmatpush1.bf16.xpose.msra.mxu0 0
        %326 = vmatprep.subr.bf16.mxu0 0
        %327 = vmatpush1.bf16.xpose.msra.mxu0 0
        %328 = vmatprep.subr.bf16.mxu0 0
        %329 = vmatpush1.bf16.xpose.msra.mxu0 0
        %330 = vmatprep.subr.bf16.mxu0 0
        %331 = vmatpush1.bf16.xpose.msra.mxu0 0
        %332 = vmatprep.subr.bf16.mxu0 0
        %333 = vmatpush1.bf16.xpose.msra.mxu0 0
        %334 = vmatprep.subr.bf16.mxu0 0
        %335 = vmatpush1.bf16.xpose.msra.mxu0 0
        %336 = vmatprep.subr.bf16.mxu0 0
        %337 = vmatpush1.bf16.xpose.msra.mxu0 0
        %338 = vmatprep.subr.bf16.mxu0 0
        %339 = vmatpush1.bf16.xpose.msra.mxu0 0
        %340 = vmatprep.mubr.bf16.mxu0 0
        %341 = vmatmul.mubr.bf16.gmra.mrb[0].mxu0 %v303
        %v342 = vpop.f32.mrb[0].mxu0
        %v343 = vadd.f32 0.0, %v342
        %v344 = vpop.f32.mrb[0].mxu0
        %v345 = vpop.f32.mrb[0].mxu0
        %v346 = vpop.f32.mrb[0].mxu0
        %347 = vdwg.mxu0
        %v349 = vsel %vm301, %v295, 0
        %v352 = vsel %vm301, %v297, 0
        %354 = vmatprep.subr.bf16.mxu0 0
        %355 = vmatpush1.bf16.xpose.msra.mxu0 %v352
        %356 = vmatprep.subr.bf16.mxu0 0
        %357 = vmatpush1.bf16.xpose.msra.mxu0 0
        %358 = vmatprep.subr.bf16.mxu0 0
        %359 = vmatpush1.bf16.xpose.msra.mxu0 0
        %360 = vmatprep.subr.bf16.mxu0 0
        %361 = vmatpush1.bf16.xpose.msra.mxu0 0
        %362 = vmatprep.subr.bf16.mxu0 0
        %363 = vmatpush1.bf16.xpose.msra.mxu0 0
        %364 = vmatprep.subr.bf16.mxu0 0
        %365 = vmatpush1.bf16.xpose.msra.mxu0 0
        %366 = vmatprep.subr.bf16.mxu0 0
        %367 = vmatpush1.bf16.xpose.msra.mxu0 0
        %368 = vmatprep.subr.bf16.mxu0 0
        %369 = vmatpush1.bf16.xpose.msra.mxu0 0
        %370 = vmatprep.subr.bf16.mxu0 0
        %371 = vmatpush1.bf16.xpose.msra.mxu0 0
        %372 = vmatprep.subr.bf16.mxu0 0
        %373 = vmatpush1.bf16.xpose.msra.mxu0 0
        %374 = vmatprep.subr.bf16.mxu0 0
        %375 = vmatpush1.bf16.xpose.msra.mxu0 0
        %376 = vmatprep.subr.bf16.mxu0 0
        %377 = vmatpush1.bf16.xpose.msra.mxu0 0
        %378 = vmatprep.subr.bf16.mxu0 0
        %379 = vmatpush1.bf16.xpose.msra.mxu0 0
        %380 = vmatprep.subr.bf16.mxu0 0
        %381 = vmatpush1.bf16.xpose.msra.mxu0 0
        %382 = vmatprep.subr.bf16.mxu0 0
        %383 = vmatpush1.bf16.xpose.msra.mxu0 0
        %384 = vmatprep.subr.bf16.mxu0 0
        %385 = vmatpush1.bf16.xpose.msra.mxu0 0
        %386 = vmatprep.mubr.bf16.mxu0 0
        %387 = vmatmul.mubr.bf16.gmra.mrb[0].mxu0 %v349
        %v388 = vpop.f32.mrb[0].mxu0
        %v389 = vadd.f32 0.0, %v388
        %v390 = vpop.f32.mrb[0].mxu0
        %v391 = vpop.f32.mrb[0].mxu0
        %v392 = vpop.f32.mrb[0].mxu0
        %393 = vdwg.mxu0
        %v394 = vmul.f32 %v343, 0.25
        %v395 = vmul.f32 %v389, 0.25
        %v396 = vadd.f32 %v394, %v300
        %v397 = vadd.f32 %v395, %v300
        %vm398 = vcmask 31744
        %v399 = vsel %vm398, %v396, -inf
        %400 = vmax.xlane.f32.xlu0 %v399
        %v401 = vpop.xlane.xlu0 %400
        %v402 = vsel %vm398, %v397, -inf
        %403 = vmax.xlane.f32.xlu0 %v402
        %v404 = vpop.xlane.xlu0 %403
        %v405 = vsub.f32 %v396, %v401
        %v406 = vsub.f32 %v397, %v404
        %v407 = vmul.f32 %v405, 1.442695
        %v408 = vpow.pop %v407
        %v409 = vmul.f32 %v406, 1.442695
        %v410 = vpow.pop %v409
        %v411 = vsel %vm398, %v408, 0.0
        %412 = vadd.xlane.f32.xlu0 %v411
        %v413 = vpop.xlane.xlu0 %412
        %v414 = vsel %vm398, %v410, 0.0
        %415 = vadd.xlane.f32.xlu0 %v414
        %v416 = vpop.xlane.xlu0 %415
        %v417 = vrcp.pop %v413
        %v418 = vrcp.pop %v416
        %v419 = vmul.f32 %v408, %v417
        %v420 = vmul.f32 %v410, %v418
        %v421 = vpack.c.bf16 %v419, %v419
        %v422 = vpack.c.bf16 %v420, %v420
        %v424 = vsel %vm398, %v421, 0
        %vm426 = vcmask 1041408
        %v428 = vsel %vm426, %v298, 0
        %430 = vmatprep.subr.bf16.mxu0 0
        %431 = vmatpush1.bf16.msra.mxu0 %v428
        %432 = vmatprep.subr.bf16.mxu0 0
        %433 = vmatpush1.bf16.msra.mxu0 0
        %434 = vmatprep.subr.bf16.mxu0 0
        %435 = vmatpush1.bf16.msra.mxu0 0
        %436 = vmatprep.subr.bf16.mxu0 0
        %437 = vmatpush1.bf16.msra.mxu0 0
        %438 = vmatprep.subr.bf16.mxu0 0
        %439 = vmatpush1.bf16.msra.mxu0 0
        %440 = vmatprep.subr.bf16.mxu0 0
        %441 = vmatpush1.bf16.msra.mxu0 0
        %442 = vmatprep.subr.bf16.mxu0 0
        %443 = vmatpush1.bf16.msra.mxu0 0
        %444 = vmatprep.subr.bf16.mxu0 0
        %445 = vmatpush1.bf16.msra.mxu0 0
        %446 = vmatprep.subr.bf16.mxu0 0
        %447 = vmatpush1.bf16.msra.mxu0 0
        %448 = vmatprep.subr.bf16.mxu0 0
        %449 = vmatpush1.bf16.msra.mxu0 0
        %450 = vmatprep.subr.bf16.mxu0 0
        %451 = vmatpush1.bf16.msra.mxu0 0
        %452 = vmatprep.subr.bf16.mxu0 0
        %453 = vmatpush1.bf16.msra.mxu0 0
        %454 = vmatprep.subr.bf16.mxu0 0
        %455 = vmatpush1.bf16.msra.mxu0 0
        %456 = vmatprep.subr.bf16.mxu0 0
        %457 = vmatpush1.bf16.msra.mxu0 0
        %458 = vmatprep.subr.bf16.mxu0 0
        %459 = vmatpush1.bf16.msra.mxu0 0
        %460 = vmatprep.subr.bf16.mxu0 0
        %461 = vmatpush1.bf16.msra.mxu0 0
        %462 = vmatprep.mubr.bf16.mxu0 0
        %463 = vmatmul.mubr.bf16.gmra.mrb[0].mxu0 %v424
        %v464 = vpop.f32.mrb[0].mxu0
        %v465 = vadd.f32 0.0, %v464
        %v466 = vpop.f32.mrb[0].mxu0
        %v467 = vpop.f32.mrb[0].mxu0
        %v468 = vpop.f32.mrb[0].mxu0
        %469 = vdwg.mxu0
        %v471 = vsel %vm398, %v422, 0
        %v474 = vsel %vm426, %v299, 0
        %476 = vmatprep.subr.bf16.mxu0 0
        %477 = vmatpush1.bf16.msra.mxu0 %v474
        %478 = vmatprep.subr.bf16.mxu0 0
        %479 = vmatpush1.bf16.msra.mxu0 0
        %480 = vmatprep.subr.bf16.mxu0 0
        %481 = vmatpush1.bf16.msra.mxu0 0
        %482 = vmatprep.subr.bf16.mxu0 0
        %483 = vmatpush1.bf16.msra.mxu0 0
        %484 = vmatprep.subr.bf16.mxu0 0
        %485 = vmatpush1.bf16.msra.mxu0 0
        %486 = vmatprep.subr.bf16.mxu0 0
        %487 = vmatpush1.bf16.msra.mxu0 0
        %488 = vmatprep.subr.bf16.mxu0 0
        %489 = vmatpush1.bf16.msra.mxu0 0
        %490 = vmatprep.subr.bf16.mxu0 0
        %491 = vmatpush1.bf16.msra.mxu0 0
        %492 = vmatprep.subr.bf16.mxu0 0
        %493 = vmatpush1.bf16.msra.mxu0 0
        %494 = vmatprep.subr.bf16.mxu0 0
        %495 = vmatpush1.bf16.msra.mxu0 0
        %496 = vmatprep.subr.bf16.mxu0 0
        %497 = vmatpush1.bf16.msra.mxu0 0
        %498 = vmatprep.subr.bf16.mxu0 0
        %499 = vmatpush1.bf16.msra.mxu0 0
        %500 = vmatprep.subr.bf16.mxu0 0
        %501 = vmatpush1.bf16.msra.mxu0 0
        %502 = vmatprep.subr.bf16.mxu0 0
        %503 = vmatpush1.bf16.msra.mxu0 0
        %504 = vmatprep.subr.bf16.mxu0 0
        %505 = vmatpush1.bf16.msra.mxu0 0
        %506 = vmatprep.subr.bf16.mxu0 0
        %507 = vmatpush1.bf16.msra.mxu0 0
        %508 = vmatprep.mubr.bf16.mxu0 0
        %509 = vmatmul.mubr.bf16.gmra.mrb[0].mxu0 %v471
        %v510 = vpop.f32.mrb[0].mxu0
        %v511 = vadd.f32 0.0, %v510
        %v512 = vpop.f32.mrb[0].mxu0
        %v513 = vpop.f32.mrb[0].mxu0
        %v514 = vpop.f32.mrb[0].mxu0
        %515 = vdwg.mxu0
        %516 = vst.msk [vmem:[%s292] sm:$0xff] %vm301, %v465
        %517 = vst.msk [vmem:[%s292 + $0x8] sm:$0xff] %vm301, %v511
        %518 = vst.msk [vmem:[%s268] sm:$0xff] %vm398, %v419
        %519 = vst.msk [vmem:[%s268 + $0x8] sm:$0xff] %vm398, %v420
        %p520 = scmp.lt.s32.totalorder %s20, 1
        %s521 = scalar_select %p520, %s20, 1
        %s522 = smul.addr %s521, 2
        %s523 = smul.addr %s522, 8
        %s524 = scalar_lea.vmem %s4, %s523
        %s525 = sand.u32 %s158, 1
        %s526 = scalar_lea.sflag [#allocation3], %s525
        %s527 = sand.u32 %s158, 1
        %s528 = smul.addr %s527, 16
        %s529 = scalar_lea.vmem [#allocation2], %s528
        // Predicated region
        $region37: #{_lambda_.69} parent=35 // pred_check
          %p530 = pneg %p142
        $region38: #{_lambda_.69} parent=35 // pred_check_branch
          %532 = sbr.rel (%p530) target = $region40
        $region39: #{_lambda_.69} parent=35 // pred_region
          _
        $region40: #{_lambda_.69} parent=35 // pred_fallthru
          _
        // Predicated region
        $region41: #{_lambda_.69} parent=35 // pred_check
          %p533 = pneg %p168
        $region42: #{_lambda_.69} parent=35 // pred_check_branch
          %535 = sbr.rel (%p533) target = $region44
        $region43: #{_lambda_.69} parent=35 // pred_region
          %s537 = ssub.s32 256, 256
          %538 = vsyncadd %s526, %s537
          %s539 = smul.addr %s20, 2
          %s540 = smul.addr %s539, 128
          %s541 = scalar_lea.hbm %s5, %s540
          %s542 = sshll.u32 %s529, 4
          %s543 = int_to_ptr.vmem [resolvable:$true] %s542
          %548 = dma.vmem_to_hbm [thread:$0]  %s543, 256, %s541, %s526, 128, 128, 8
        $region44: #{_lambda_.69} parent=35 // pred_fallthru
          _
      $region36: #{_lambda_.69} parent=5 // pred_fallthru
        _
      %p549 = scmp.le.s32.totalorder 2, %s15
      // Predicated region
      $region45: #{_lambda_.69} parent=5 // pred_check
        %p550 = pneg %p549
      $region46: #{_lambda_.69} parent=5 // pred_check_branch
        %552 = sbr.rel (%p550) target = $region48
      $region47: #{_lambda_.69} parent=5 // pred_region
        %s553 = ssub.s32 %s15, 2
        // Predicated region
        $region49: #{_lambda_.69} parent=47 // pred_check
          %p554 = pneg %p148
        $region50: #{_lambda_.69} parent=47 // pred_check_branch
          %556 = sbr.rel (%p554) target = $region52
        $region51: #{_lambda_.69} parent=47 // pred_region
          %p557 = scmp.lt.s32.totalorder %s21, 1
          %s558 = scalar_select %p557, %s21, 1
          %s559 = smul.addr %s558, 2
          %s560 = smul.addr %s559, 8
          %s561 = scalar_lea.vmem %s4, %s560
        $region52: #{_lambda_.69} parent=47 // pred_fallthru
          _
        // Predicated region
        $region53: #{_lambda_.69} parent=47 // pred_check
          %p562 = pneg %p174
        $region54: #{_lambda_.69} parent=47 // pred_check_branch
          %564 = sbr.rel (%p562) target = $region56
        $region55: #{_lambda_.69} parent=47 // pred_region
          %s565 = sand.u32 %s159, 1
          %s566 = scalar_lea.sflag [#allocation3], %s565
          %s567 = sand.u32 %s159, 1
          %s568 = smul.addr %s567, 16
          %s569 = scalar_lea.vmem [#allocation2], %s568
          %570 = dma.done %s566, 256
        $region56: #{_lambda_.69} parent=47 // pred_fallthru
          _
      $region48: #{_lambda_.69} parent=5 // pred_fallthru
        _
    $region6: #{_lambda_.69} parent=1 // loop_footer
      %s19 = sadd.s32 1, %s15
    $region7: #{_lambda_.69} parent=1 // loop_footer_branch
      %14 = sbr.rel target = $region3
    $region8: #{_lambda_.69} parent=1 // loop_exit
      _
    %571 = vsyncpa [#allocation3], 1
    %s572 = scalar_lea.sflag [#allocation3], 1
    %573 = vsyncpa %s572, 1

// kernel: _lambda_.80
$region0: #{_lambda_.80}
  #allocation0 [shape = 'u32[]', space=smem, size = 0x4, offset = 0x4, fixed_abs, tag = 'smem constant byte address 0x4 - core index']
  #allocation1 [shape = 'u32[144,128]{1,0:T(1,128)}', space=vmem, size = 0x12000, scoped, tag = 'internal scratch']
  %s0 = inlined_call_operand.vmem [shape: bf16[2,2,8,16], index: 0, kind: input, shape index: {}]
  %s1 = inlined_call_operand.vmem [shape: bf16[2,2,4,16], index: 1, kind: input, shape index: {}]
  %s2 = inlined_call_operand.vmem [shape: bf16[2,2,4,16], index: 2, kind: input, shape index: {}]
  %s3 = inlined_call_operand.vmem [shape: f32[2,8,4], index: 3, kind: input, shape index: {}]
  %s4 = inlined_call_operand.vmem [shape: f32[2,2,8,16], index: 4, kind: output, shape index: {0}]
  %s5 = inlined_call_operand.vmem [shape: f32[2,2,8,4], index: 5, kind: output, shape index: {1}]
  %6 = xla_tuple %s4, %s5
  %s7 = sld [smem:[#allocation0]]
  $region57: #{_lambda_.80} parent=0
    _
  %s9 = ssub.s32 1, %s7
  %s10 = scalar_select 0, %s9, %s7
  loop: start=0, step=1, limit=4
  $region2: #{_lambda_.80} parent=0 // loop_pre_header
    _
  $region3: #{_lambda_.80} parent=0 // loop_header
    %s12 = sphi 0, %s16
    %p13 = scmp.ge.s32.totalorder %s12, 4
    %s22 = sphi 0, %s24
    %s25 = sphi 0, %s22
    %s26 = sphi 0, %s25
    %s42 = sphi 0, %s26
    %s48 = sphi 0, %s50
    %s51 = sphi 0, %s48
    %s52 = sphi 0, %s51
    %s68 = sphi 0, %s52
    %s74 = sphi 0, %s76
    %s77 = sphi 0, %s74
    %s78 = sphi 0, %s77
    %s94 = sphi 0, %s78
    %s100 = sphi 0, %s102
    %s103 = sphi 0, %s100
    %s104 = sphi 0, %s103
    %s120 = sphi 0, %s104
    %s126 = sphi 0, %s128
    %s129 = sphi 0, %s126
    %s130 = sphi 0, %s129
    %s146 = sphi 0, %s130
    %s152 = sphi 0, %s154
    %s155 = sphi 0, %s152
    %s156 = sphi 0, %s155
    %s172 = sphi 0, %s156
  $region4: #{_lambda_.80} parent=0 // loop_header_branch
    %15 = sbr.rel (%p13) target = $region8
  $region5: #{_lambda_.80} parent=0 // loop_body
    %s17 = ssub.s32 %s12, 1
    %s18 = ssub.s32 %s12, 2
    %s19 = sadd.s32 %s12, 1
    %s20 = ssub.s32 %s12, %s19
    %p21 = scmp.eq.s32.totalorder %s20, 0
    %s23 = sadd.s32 %s22, 1
    %s24 = scalar_select %p21, %s22, %s23
    %p27 = pneg %p21
    %p28 = scmp.eq.s32.totalorder %s12, 1
    %p29 = por %p27, %p28
    %p30 = scmp.ne.s32.totalorder %s22, %s25
    %p31 = scmp.eq.s32.totalorder %s12, 0
    %p32 = por %p30, %p31
    %p33 = scmp.ne.s32.totalorder %s22, %s25
    %p34 = scmp.eq.s32.totalorder %s17, 1
    %p35 = por %p33, %p34
    %p36 = scmp.ne.s32.totalorder %s25, %s26
    %p37 = scmp.eq.s32.totalorder %s17, 0
    %p38 = por %p36, %p37
    %p39 = scmp.ne.s32.totalorder %s25, %s26
    %p40 = scmp.eq.s32.totalorder %s18, 1
    %p41 = por %p39, %p40
    %p43 = scmp.ne.s32.totalorder %s26, %s42
    %p44 = scmp.eq.s32.totalorder %s18, 0
    %p45 = por %p43, %p44
    %s46 = ssub.s32 %s12, %s19
    %p47 = scmp.eq.s32.totalorder %s46, 0
    %s49 = sadd.s32 %s48, 1
    %s50 = scalar_select %p47, %s48, %s49
    %p53 = pneg %p47
    %p54 = scmp.eq.s32.totalorder %s12, 1
    %p55 = por %p53, %p54
    %p56 = scmp.ne.s32.totalorder %s48, %s51
    %p57 = scmp.eq.s32.totalorder %s12, 0
    %p58 = por %p56, %p57
    %p59 = scmp.ne.s32.totalorder %s48, %s51
    %p60 = scmp.eq.s32.totalorder %s17, 1
    %p61 = por %p59, %p60
    %p62 = scmp.ne.s32.totalorder %s51, %s52
    %p63 = scmp.eq.s32.totalorder %s17, 0
    %p64 = por %p62, %p63
    %p65 = scmp.ne.s32.totalorder %s51, %s52
    %p66 = scmp.eq.s32.totalorder %s18, 1
    %p67 = por %p65, %p66
    %p69 = scmp.ne.s32.totalorder %s52, %s68
    %p70 = scmp.eq.s32.totalorder %s18, 0
    %p71 = por %p69, %p70
    %s72 = ssub.s32 %s12, %s19
    %p73 = scmp.eq.s32.totalorder %s72, 0
    %s75 = sadd.s32 %s74, 1
    %s76 = scalar_select %p73, %s74, %s75
    %p79 = pneg %p73
    %p80 = scmp.eq.s32.totalorder %s12, 1
    %p81 = por %p79, %p80
    %p82 = scmp.ne.s32.totalorder %s74, %s77
    %p83 = scmp.eq.s32.totalorder %s12, 0
    %p84 = por %p82, %p83
    %p85 = scmp.ne.s32.totalorder %s74, %s77
    %p86 = scmp.eq.s32.totalorder %s17, 1
    %p87 = por %p85, %p86
    %p88 = scmp.ne.s32.totalorder %s77, %s78
    %p89 = scmp.eq.s32.totalorder %s17, 0
    %p90 = por %p88, %p89
    %p91 = scmp.ne.s32.totalorder %s77, %s78
    %p92 = scmp.eq.s32.totalorder %s18, 1
    %p93 = por %p91, %p92
    %p95 = scmp.ne.s32.totalorder %s78, %s94
    %p96 = scmp.eq.s32.totalorder %s18, 0
    %p97 = por %p95, %p96
    %s98 = ssub.s32 %s12, %s19
    %p99 = scmp.eq.s32.totalorder %s98, 0
    %s101 = sadd.s32 %s100, 1
    %s102 = scalar_select %p99, %s100, %s101
    %p105 = pneg %p99
    %p106 = scmp.eq.s32.totalorder %s12, 1
    %p107 = por %p105, %p106
    %p108 = scmp.ne.s32.totalorder %s100, %s103
    %p109 = scmp.eq.s32.totalorder %s12, 0
    %p110 = por %p108, %p109
    %p111 = scmp.ne.s32.totalorder %s100, %s103
    %p112 = scmp.eq.s32.totalorder %s17, 1
    %p113 = por %p111, %p112
    %p114 = scmp.ne.s32.totalorder %s103, %s104
    %p115 = scmp.eq.s32.totalorder %s17, 0
    %p116 = por %p114, %p115
    %p117 = scmp.ne.s32.totalorder %s103, %s104
    %p118 = scmp.eq.s32.totalorder %s18, 1
    %p119 = por %p117, %p118
    %p121 = scmp.ne.s32.totalorder %s104, %s120
    %p122 = scmp.eq.s32.totalorder %s18, 0
    %p123 = por %p121, %p122
    %s124 = ssub.s32 %s12, %s19
    %p125 = scmp.eq.s32.totalorder %s124, 0
    %s127 = sadd.s32 %s126, 1
    %s128 = scalar_select %p125, %s126, %s127
    %p131 = pneg %p125
    %p132 = scmp.eq.s32.totalorder %s12, 1
    %p133 = por %p131, %p132
    %p134 = scmp.ne.s32.totalorder %s126, %s129
    %p135 = scmp.eq.s32.totalorder %s12, 0
    %p136 = por %p134, %p135
    %p137 = scmp.ne.s32.totalorder %s126, %s129
    %p138 = scmp.eq.s32.totalorder %s17, 1
    %p139 = por %p137, %p138
    %p140 = scmp.ne.s32.totalorder %s129, %s130
    %p141 = scmp.eq.s32.totalorder %s17, 0
    %p142 = por %p140, %p141
    %p143 = scmp.ne.s32.totalorder %s129, %s130
    %p144 = scmp.eq.s32.totalorder %s18, 1
    %p145 = por %p143, %p144
    %p147 = scmp.ne.s32.totalorder %s130, %s146
    %p148 = scmp.eq.s32.totalorder %s18, 0
    %p149 = por %p147, %p148
    %s150 = ssub.s32 %s12, %s19
    %p151 = scmp.eq.s32.totalorder %s150, 0
    %s153 = sadd.s32 %s152, 1
    %s154 = scalar_select %p151, %s152, %s153
    %p157 = pneg %p151
    %p158 = scmp.eq.s32.totalorder %s12, 1
    %p159 = por %p157, %p158
    %p160 = scmp.ne.s32.totalorder %s152, %s155
    %p161 = scmp.eq.s32.totalorder %s12, 0
    %p162 = por %p160, %p161
    %p163 = scmp.ne.s32.totalorder %s152, %s155
    %p164 = scmp.eq.s32.totalorder %s17, 1
    %p165 = por %p163, %p164
    %p166 = scmp.ne.s32.totalorder %s155, %s156
    %p167 = scmp.eq.s32.totalorder %s17, 0
    %p168 = por %p166, %p167
    %p169 = scmp.ne.s32.totalorder %s155, %s156
    %p170 = scmp.eq.s32.totalorder %s18, 1
    %p171 = por %p169, %p170
    %p173 = scmp.ne.s32.totalorder %s156, %s172
    %p174 = scmp.eq.s32.totalorder %s18, 0
    %p175 = por %p173, %p174
    %p176 = scmp.le.s32.totalorder 1, %s12
    %p177 = scmp.lt.s32.totalorder %s12, 3
    %p178 = pnand %p176, %p177
    %p179 = pneg %p178
    // Predicated region
    $region9: #{_lambda_.80} parent=5 // pred_check
      _
    $region10: #{_lambda_.80} parent=5 // pred_check_branch
      %181 = sbr.rel (%p178) target = $region12
    $region11: #{_lambda_.80} parent=5 // pred_region
      %s182 = ssub.s32 %s12, 1
    $region12: #{_lambda_.80} parent=5 // pred_fallthru
      _
    %p183 = scmp.lt.s32.totalorder %s12, 2
    // Predicated region
    $region13: #{_lambda_.80} parent=5 // pred_check
      %p184 = pneg %p183
    $region14: #{_lambda_.80} parent=5 // pred_check_branch
      %186 = sbr.rel (%p184) target = $region16
    $region15: #{_lambda_.80} parent=5 // pred_region
      // Predicated region
      $region17: #{_lambda_.80} parent=15 // pred_check
        %p187 = pneg %p32
      $region18: #{_lambda_.80} parent=15 // pred_check_branch
        %189 = sbr.rel (%p187) target = $region20
      $region19: #{_lambda_.80} parent=15 // pred_region
        %p190 = scmp.lt.s32.totalorder %s12, 1
        %s191 = scalar_select %p190, %s12, 1
        %s192 = smul.addr %s191, 2
        %s193 = smul.addr %s192, 4
        %s194 = scalar_lea.vmem %s0, %s193
      $region20: #{_lambda_.80} parent=15 // pred_fallthru
        _
      // Predicated region
      $region21: #{_lambda_.80} parent=15 // pred_check
        %p195 = pneg %p58
      $region22: #{_lambda_.80} parent=15 // pred_check_branch
        %197 = sbr.rel (%p195) target = $region24
      $region23: #{_lambda_.80} parent=15 // pred_region
        %p198 = scmp.lt.s32.totalorder %s12, 1
        %s199 = scalar_select %p198, %s12, 1
        %s200 = smul.addr %s199, 2
        %s201 = smul.addr %s200, 2
        %s202 = scalar_lea.vmem %s1, %s201
      $region24: #{_lambda_.80} parent=15 // pred_fallthru
        _
      // Predicated region
      $region25: #{_lambda_.80} parent=15 // pred_check
        %p203 = pneg %p84
      $region26: #{_lambda_.80} parent=15 // pred_check_branch
        %205 = sbr.rel (%p203) target = $region28
      $region27: #{_lambda_.80} parent=15 // pred_region
        %p206 = scmp.lt.s32.totalorder %s12, 1
        %s207 = scalar_select %p206, %s12, 1
        %s208 = smul.addr %s207, 2
        %s209 = smul.addr %s208, 2
        %s210 = scalar_lea.vmem %s2, %s209
      $region28: #{_lambda_.80} parent=15 // pred_fallthru
        _
      // Predicated region
      $region29: #{_lambda_.80} parent=15 // pred_check
        %p211 = pneg %p110
      $region30: #{_lambda_.80} parent=15 // pred_check_branch
        %213 = sbr.rel (%p211) target = $region32
      $region31: #{_lambda_.80} parent=15 // pred_region
        %p214 = scmp.lt.s32.totalorder %s12, 1
        %s215 = scalar_select %p214, %s12, 1
        %s216 = smul.addr %s215, 8
        %s217 = scalar_lea.vmem %s3, %s216
      $region32: #{_lambda_.80} parent=15 // pred_fallthru
        _
    $region16: #{_lambda_.80} parent=5 // pred_fallthru
      _
    %p218 = scmp.le.s32.totalorder 1, %s12
    %p219 = scmp.lt.s32.totalorder %s12, 3
    %p220 = pnand %p218, %p219
    %p221 = pneg %p220
    // Predicated region
    $region33: #{_lambda_.80} parent=5 // pred_check
      _
    $region34: #{_lambda_.80} parent=5 // pred_check_branch
      %223 = sbr.rel (%p220) target = $region36
    $region35: #{_lambda_.80} parent=5 // pred_region
      %s224 = ssub.s32 %s12, 1
      %p225 = scmp.lt.s32.totalorder %s17, 1
      %s226 = scalar_select %p225, %s17, 1
      %s227 = smul.addr %s226, 2
      %s228 = smul.addr %s227, 4
      %s229 = scalar_lea.vmem %s0, %s228
      %p230 = pneg %p38
      %p231 = pneg %p35
      %p232 = scmp.lt.s32.totalorder %s17, 1
      %s233 = scalar_select %p232, %s17, 1
      %s234 = smul.addr %s233, 2
      %s235 = smul.addr %s234, 2
      %s236 = scalar_lea.vmem %s1, %s235
      %p237 = pneg %p64
      %p238 = pneg %p61
      %p239 = scmp.lt.s32.totalorder %s17, 1
      %s240 = scalar_select %p239, %s17, 1
      %s241 = smul.addr %s240, 2
      %s242 = smul.addr %s241, 2
      %s243 = scalar_lea.vmem %s2, %s242
      %p244 = pneg %p90
      %p245 = pneg %p87
      %p246 = scmp.lt.s32.totalorder %s17, 1
      %s247 = scalar_select %p246, %s17, 1
      %s248 = smul.addr %s247, 8
      %s249 = scalar_lea.vmem %s3, %s248
      %p250 = pneg %p116
      %p251 = pneg %p113
      %p252 = pneg %p142
      %p253 = pneg %p139
      %p254 = scmp.lt.s32.totalorder %s17, 1
      %s255 = scalar_select %p254, %s17, 1
      %s256 = smul.addr %s255, 2
      %s257 = smul.addr %s256, 8
      %s258 = scalar_lea.vmem %s4, %s257
      %p259 = pneg %p168
      %p260 = pneg %p165
      %p261 = scmp.lt.s32.totalorder %s17, 1
      %s262 = scalar_select %p261, %s17, 1
      %s263 = smul.addr %s262, 2
      %s264 = smul.addr %s263, 8
      %s265 = scalar_lea.vmem %s5, %s264
      %p266 = scmp.lt.s32.totalorder %s17, 1
      %s267 = scalar_select %p266, %s17, 1
      %s268 = smul.addr %s267, 2
      %s269 = smul.addr %s268, 4
      %s270 = scalar_lea.vmem %s0, %s269
      %p271 = scmp.lt.s32.totalorder %s17, 1
      %s272 = scalar_select %p271, %s17, 1
      %s273 = smul.addr %s272, 2
      %s274 = smul.addr %s273, 2
      %s275 = scalar_lea.vmem %s1, %s274
      %p276 = scmp.lt.s32.totalorder %s17, 1
      %s277 = scalar_select %p276, %s17, 1
      %s278 = smul.addr %s277, 2
      %s279 = smul.addr %s278, 2
      %s280 = scalar_lea.vmem %s2, %s279
      %p281 = scmp.lt.s32.totalorder %s17, 1
      %s282 = scalar_select %p281, %s17, 1
      %s283 = smul.addr %s282, 8
      %s284 = scalar_lea.vmem %s3, %s283
      %p285 = scmp.lt.s32.totalorder %s17, 1
      %s286 = scalar_select %p285, %s17, 1
      %s287 = smul.addr %s286, 2
      %s288 = smul.addr %s287, 8
      %s289 = scalar_lea.vmem %s4, %s288
      %p290 = scmp.lt.s32.totalorder %s17, 1
      %s291 = scalar_select %p290, %s17, 1
      %s292 = smul.addr %s291, 2
      %s293 = smul.addr %s292, 8
      %s294 = scalar_lea.vmem %s5, %s293
      %v296 = vld [vmem:[%s270] sm:$0xf]
      %v297 = vld [vmem:[%s270 + $0x4] sm:$0xf]
      %v298 = vld [vmem:[%s275] sm:$0x3]
      %v299 = vld [vmem:[%s275 + $0x2] sm:$0x3]
      %v300 = vld [vmem:[%s280] sm:$0x3]
      %v301 = vld [vmem:[%s280 + $0x2] sm:$0x3]
      %v302 = vld [vmem:[%s284] sm:$0xff]
      %vm303 = vcmask 130048
      %v305 = vsel %vm303, %v296, 0
      %v308 = vsel %vm303, %v298, 0
      %310 = vmatprep.subr.bf16.mxu0 0
      %311 = vmatpush1.bf16.xpose.msra.mxu0 %v308
      %312 = vmatprep.subr.bf16.mxu0 0
      %313 = vmatpush1.bf16.xpose.msra.mxu0 0
      %314 = vmatprep.subr.bf16.mxu0 0
      %315 = vmatpush1.bf16.xpose.msra.mxu0 0
      %316 = vmatprep.subr.bf16.mxu0 0
      %317 = vmatpush1.bf16.xpose.msra.mxu0 0
      %318 = vmatprep.subr.bf16.mxu0 0
      %319 = vmatpush1.bf16.xpose.msra.mxu0 0
      %320 = vmatprep.subr.bf16.mxu0 0
      %321 = vmatpush1.bf16.xpose.msra.mxu0 0
      %322 = vmatprep.subr.bf16.mxu0 0
      %323 = vmatpush1.bf16.xpose.msra.mxu0 0
      %324 = vmatprep.subr.bf16.mxu0 0
      %325 = vmatpush1.bf16.xpose.msra.mxu0 0
      %326 = vmatprep.subr.bf16.mxu0 0
      %327 = vmatpush1.bf16.xpose.msra.mxu0 0
      %328 = vmatprep.subr.bf16.mxu0 0
      %329 = vmatpush1.bf16.xpose.msra.mxu0 0
      %330 = vmatprep.subr.bf16.mxu0 0
      %331 = vmatpush1.bf16.xpose.msra.mxu0 0
      %332 = vmatprep.subr.bf16.mxu0 0
      %333 = vmatpush1.bf16.xpose.msra.mxu0 0
      %334 = vmatprep.subr.bf16.mxu0 0
      %335 = vmatpush1.bf16.xpose.msra.mxu0 0
      %336 = vmatprep.subr.bf16.mxu0 0
      %337 = vmatpush1.bf16.xpose.msra.mxu0 0
      %338 = vmatprep.subr.bf16.mxu0 0
      %339 = vmatpush1.bf16.xpose.msra.mxu0 0
      %340 = vmatprep.subr.bf16.mxu0 0
      %341 = vmatpush1.bf16.xpose.msra.mxu0 0
      %342 = vmatprep.mubr.bf16.mxu0 0
      %343 = vmatmul.mubr.bf16.gmra.mrb[0].mxu0 %v305
      %v344 = vpop.f32.mrb[0].mxu0
      %v345 = vadd.f32 0.0, %v344
      %v346 = vpop.f32.mrb[0].mxu0
      %v347 = vpop.f32.mrb[0].mxu0
      %v348 = vpop.f32.mrb[0].mxu0
      %349 = vdwg.mxu0
      %v351 = vsel %vm303, %v297, 0
      %v354 = vsel %vm303, %v299, 0
      %356 = vmatprep.subr.bf16.mxu0 0
      %357 = vmatpush1.bf16.xpose.msra.mxu0 %v354
      %358 = vmatprep.subr.bf16.mxu0 0
      %359 = vmatpush1.bf16.xpose.msra.mxu0 0
      %360 = vmatprep.subr.bf16.mxu0 0
      %361 = vmatpush1.bf16.xpose.msra.mxu0 0
      %362 = vmatprep.subr.bf16.mxu0 0
      %363 = vmatpush1.bf16.xpose.msra.mxu0 0
      %364 = vmatprep.subr.bf16.mxu0 0
      %365 = vmatpush1.bf16.xpose.msra.mxu0 0
      %366 = vmatprep.subr.bf16.mxu0 0
      %367 = vmatpush1.bf16.xpose.msra.mxu0 0
      %368 = vmatprep.subr.bf16.mxu0 0
      %369 = vmatpush1.bf16.xpose.msra.mxu0 0
      %370 = vmatprep.subr.bf16.mxu0 0
      %371 = vmatpush1.bf16.xpose.msra.mxu0 0
      %372 = vmatprep.subr.bf16.mxu0 0
      %373 = vmatpush1.bf16.xpose.msra.mxu0 0
      %374 = vmatprep.subr.bf16.mxu0 0
      %375 = vmatpush1.bf16.xpose.msra.mxu0 0
      %376 = vmatprep.subr.bf16.mxu0 0
      %377 = vmatpush1.bf16.xpose.msra.mxu0 0
      %378 = vmatprep.subr.bf16.mxu0 0
      %379 = vmatpush1.bf16.xpose.msra.mxu0 0
      %380 = vmatprep.subr.bf16.mxu0 0
      %381 = vmatpush1.bf16.xpose.msra.mxu0 0
      %382 = vmatprep.subr.bf16.mxu0 0
      %383 = vmatpush1.bf16.xpose.msra.mxu0 0
      %384 = vmatprep.subr.bf16.mxu0 0
      %385 = vmatpush1.bf16.xpose.msra.mxu0 0
      %386 = vmatprep.subr.bf16.mxu0 0
      %387 = vmatpush1.bf16.xpose.msra.mxu0 0
      %388 = vmatprep.mubr.bf16.mxu0 0
      %389 = vmatmul.mubr.bf16.gmra.mrb[0].mxu0 %v351
      %v390 = vpop.f32.mrb[0].mxu0
      %v391 = vadd.f32 0.0, %v390
      %v392 = vpop.f32.mrb[0].mxu0
      %v393 = vpop.f32.mrb[0].mxu0
      %v394 = vpop.f32.mrb[0].mxu0
      %395 = vdwg.mxu0
      %v396 = vmul.f32 %v345, 0.25
      %v397 = vmul.f32 %v391, 0.25
      %v398 = vadd.f32 %v396, %v302
      %v399 = vadd.f32 %v397, %v302
      %vm400 = vcmask 31744
      %v401 = vsel %vm400, %v398, -inf
      %402 = vmax.xlane.f32.xlu0 %v401
      %v403 = vpop.xlane.xlu0 %402
      %v404 = vsel %vm400, %v399, -inf
      %405 = vmax.xlane.f32.xlu0 %v404
      %v406 = vpop.xlane.xlu0 %405
      %v407 = vsub.f32 %v398, %v403
      %v408 = vsub.f32 %v399, %v406
      %v409 = vmul.f32 %v407, 1.442695
      %v410 = vpow.pop %v409
      %v411 = vmul.f32 %v408, 1.442695
      %v412 = vpow.pop %v411
      %v413 = vsel %vm400, %v410, 0.0
      %414 = vadd.xlane.f32.xlu0 %v413
      %v415 = vpop.xlane.xlu0 %414
      %v416 = vsel %vm400, %v412, 0.0
      %417 = vadd.xlane.f32.xlu0 %v416
      %v418 = vpop.xlane.xlu0 %417
      %v419 = vrcp.pop %v415
      %v420 = vrcp.pop %v418
      %v421 = vmul.f32 %v410, %v419
      %v422 = vmul.f32 %v412, %v420
      %v423 = vpack.c.bf16 %v421, %v421
      %v424 = vpack.c.bf16 %v422, %v422
      %v426 = vsel %vm400, %v423, 0
      %vm428 = vcmask 1041408
      %v430 = vsel %vm428, %v300, 0
      %432 = vmatprep.subr.bf16.mxu0 0
      %433 = vmatpush1.bf16.msra.mxu0 %v430
      %434 = vmatprep.subr.bf16.mxu0 0
      %435 = vmatpush1.bf16.msra.mxu0 0
      %436 = vmatprep.subr.bf16.mxu0 0
      %437 = vmatpush1.bf16.msra.mxu0 0
      %438 = vmatprep.subr.bf16.mxu0 0
      %439 = vmatpush1.bf16.msra.mxu0 0
      %440 = vmatprep.subr.bf16.mxu0 0
      %441 = vmatpush1.bf16.msra.mxu0 0
      %442 = vmatprep.subr.bf16.mxu0 0
      %443 = vmatpush1.bf16.msra.mxu0 0
      %444 = vmatprep.subr.bf16.mxu0 0
      %445 = vmatpush1.bf16.msra.mxu0 0
      %446 = vmatprep.subr.bf16.mxu0 0
      %447 = vmatpush1.bf16.msra.mxu0 0
      %448 = vmatprep.subr.bf16.mxu0 0
      %449 = vmatpush1.bf16.msra.mxu0 0
      %450 = vmatprep.subr.bf16.mxu0 0
      %451 = vmatpush1.bf16.msra.mxu0 0
      %452 = vmatprep.subr.bf16.mxu0 0
      %453 = vmatpush1.bf16.msra.mxu0 0
      %454 = vmatprep.subr.bf16.mxu0 0
      %455 = vmatpush1.bf16.msra.mxu0 0
      %456 = vmatprep.subr.bf16.mxu0 0
      %457 = vmatpush1.bf16.msra.mxu0 0
      %458 = vmatprep.subr.bf16.mxu0 0
      %459 = vmatpush1.bf16.msra.mxu0 0
      %460 = vmatprep.subr.bf16.mxu0 0
      %461 = vmatpush1.bf16.msra.mxu0 0
      %462 = vmatprep.subr.bf16.mxu0 0
      %463 = vmatpush1.bf16.msra.mxu0 0
      %464 = vmatprep.mubr.bf16.mxu0 0
      %465 = vmatmul.mubr.bf16.gmra.mrb[0].mxu0 %v426
      %v466 = vpop.f32.mrb[0].mxu0
      %v467 = vadd.f32 0.0, %v466
      %v468 = vpop.f32.mrb[0].mxu0
      %v469 = vpop.f32.mrb[0].mxu0
      %v470 = vpop.f32.mrb[0].mxu0
      %471 = vdwg.mxu0
      %v473 = vsel %vm400, %v424, 0
      %v476 = vsel %vm428, %v301, 0
      %478 = vmatprep.subr.bf16.mxu0 0
      %479 = vmatpush1.bf16.msra.mxu0 %v476
      %480 = vmatprep.subr.bf16.mxu0 0
      %481 = vmatpush1.bf16.msra.mxu0 0
      %482 = vmatprep.subr.bf16.mxu0 0
      %483 = vmatpush1.bf16.msra.mxu0 0
      %484 = vmatprep.subr.bf16.mxu0 0
      %485 = vmatpush1.bf16.msra.mxu0 0
      %486 = vmatprep.subr.bf16.mxu0 0
      %487 = vmatpush1.bf16.msra.mxu0 0
      %488 = vmatprep.subr.bf16.mxu0 0
      %489 = vmatpush1.bf16.msra.mxu0 0
      %490 = vmatprep.subr.bf16.mxu0 0
      %491 = vmatpush1.bf16.msra.mxu0 0
      %492 = vmatprep.subr.bf16.mxu0 0
      %493 = vmatpush1.bf16.msra.mxu0 0
      %494 = vmatprep.subr.bf16.mxu0 0
      %495 = vmatpush1.bf16.msra.mxu0 0
      %496 = vmatprep.subr.bf16.mxu0 0
      %497 = vmatpush1.bf16.msra.mxu0 0
      %498 = vmatprep.subr.bf16.mxu0 0
      %499 = vmatpush1.bf16.msra.mxu0 0
      %500 = vmatprep.subr.bf16.mxu0 0
      %501 = vmatpush1.bf16.msra.mxu0 0
      %502 = vmatprep.subr.bf16.mxu0 0
      %503 = vmatpush1.bf16.msra.mxu0 0
      %504 = vmatprep.subr.bf16.mxu0 0
      %505 = vmatpush1.bf16.msra.mxu0 0
      %506 = vmatprep.subr.bf16.mxu0 0
      %507 = vmatpush1.bf16.msra.mxu0 0
      %508 = vmatprep.subr.bf16.mxu0 0
      %509 = vmatpush1.bf16.msra.mxu0 0
      %510 = vmatprep.mubr.bf16.mxu0 0
      %511 = vmatmul.mubr.bf16.gmra.mrb[0].mxu0 %v473
      %v512 = vpop.f32.mrb[0].mxu0
      %v513 = vadd.f32 0.0, %v512
      %v514 = vpop.f32.mrb[0].mxu0
      %v515 = vpop.f32.mrb[0].mxu0
      %v516 = vpop.f32.mrb[0].mxu0
      %517 = vdwg.mxu0
      %518 = vst.msk [vmem:[%s289] sm:$0xff] %vm303, %v467
      %519 = vst.msk [vmem:[%s289 + $0x8] sm:$0xff] %vm303, %v513
      %520 = vst.msk [vmem:[%s294] sm:$0xff] %vm400, %v421
      %521 = vst.msk [vmem:[%s294 + $0x8] sm:$0xff] %vm400, %v422
      %p522 = scmp.lt.s32.totalorder %s17, 1
      %s523 = scalar_select %p522, %s17, 1
      %s524 = smul.addr %s523, 2
      %s525 = smul.addr %s524, 8
      %s526 = scalar_lea.vmem %s4, %s525
      %p527 = scmp.lt.s32.totalorder %s17, 1
      %s528 = scalar_select %p527, %s17, 1
      %s529 = smul.addr %s528, 2
      %s530 = smul.addr %s529, 8
      %s531 = scalar_lea.vmem %s5, %s530
      // Predicated region
      $region37: #{_lambda_.80} parent=35 // pred_check
        %p532 = pneg %p139
      $region38: #{_lambda_.80} parent=35 // pred_check_branch
        %534 = sbr.rel (%p532) target = $region40
      $region39: #{_lambda_.80} parent=35 // pred_region
        _
      $region40: #{_lambda_.80} parent=35 // pred_fallthru
        _
      // Predicated region
      $region41: #{_lambda_.80} parent=35 // pred_check
        %p535 = pneg %p165
      $region42: #{_lambda_.80} parent=35 // pred_check_branch
        %537 = sbr.rel (%p535) target = $region44
      $region43: #{_lambda_.80} parent=35 // pred_region
        _
      $region44: #{_lambda_.80} parent=35 // pred_fallthru
        _
    $region36: #{_lambda_.80} parent=5 // pred_fallthru
      _
    %p538 = scmp.le.s32.totalorder 2, %s12
    // Predicated region
    $region45: #{_lambda_.80} parent=5 // pred_check
      %p539 = pneg %p538
    $region46: #{_lambda_.80} parent=5 // pred_check_branch
      %541 = sbr.rel (%p539) target = $region48
    $region47: #{_lambda_.80} parent=5 // pred_region
      %s542 = ssub.s32 %s12, 2
      // Predicated region
      $region49: #{_lambda_.80} parent=47 // pred_check
        %p543 = pneg %p145
      $region50: #{_lambda_.80} parent=47 // pred_check_branch
        %545 = sbr.rel (%p543) target = $region52
      $region51: #{_lambda_.80} parent=47 // pred_region
        %p546 = scmp.lt.s32.totalorder %s18, 1
        %s547 = scalar_select %p546, %s18, 1
        %s548 = smul.addr %s547, 2
        %s549 = smul.addr %s548, 8
        %s550 = scalar_lea.vmem %s4, %s549
      $region52: #{_lambda_.80} parent=47 // pred_fallthru
        _
      // Predicated region
      $region53: #{_lambda_.80} parent=47 // pred_check
        %p551 = pneg %p171
      $region54: #{_lambda_.80} parent=47 // pred_check_branch
        %553 = sbr.rel (%p551) target = $region56
      $region55: #{_lambda_.80} parent=47 // pred_region
        %p554 = scmp.lt.s32.totalorder %s18, 1
        %s555 = scalar_select %p554, %s18, 1
        %s556 = smul.addr %s555, 2
        %s557 = smul.addr %s556, 8
        %s558 = scalar_lea.vmem %s5, %s557
      $region56: #{_lambda_.80} parent=47 // pred_fallthru
        _
    $region48: #{_lambda_.80} parent=5 // pred_fallthru
      _
  $region6: #{_lambda_.80} parent=0 // loop_footer
    %s16 = sadd.s32 1, %s12
  $region7: #{_lambda_.80} parent=0 // loop_footer_branch
    %11 = sbr.rel target = $region3
  $region8: #{_lambda_.80} parent=0 // loop_exit
    _

// kernel: _lambda_.84
$region0: #{_lambda_.84}
  #allocation0 [shape = 'u32[]', space=smem, size = 0x4, offset = 0x4, fixed_abs, tag = 'smem constant byte address 0x4 - core index']
  #allocation1 [shape = 'u32[144,128]{1,0:T(1,128)}', space=vmem, size = 0x12000, scoped, tag = 'internal scratch']
  %s0 = inlined_call_operand.vmem [shape: bf16[32,32], index: 0, kind: input, shape index: {}]
  %s1 = inlined_call_operand.vmem [shape: bf16[32,67], index: 1, kind: input, shape index: {}]
  %s2 = inlined_call_operand.vmem [shape: f32[1,67], index: 2, kind: input, shape index: {}]
  %s3 = inlined_call_operand.vmem [shape: f32[1,67], index: 3, kind: input, shape index: {}]
  %s4 = inlined_call_operand.vmem [shape: f32[32,67], index: 4, kind: output, shape index: {}]
  %s5 = sld [smem:[#allocation0]]
  $region26: #{_lambda_.84} parent=0
    _
  %s7 = ssub.s32 1, %s5
  %s8 = scalar_select 0, %s7, %s5
  // Predicated region
  $region2: #{_lambda_.84} parent=0 // pred_check
    _
  $region3: #{_lambda_.84} parent=0 // pred_check_branch
    %10 = sbr.rel (0) target = $region5
  $region4: #{_lambda_.84} parent=0 // pred_region
    _
  $region5: #{_lambda_.84} parent=0 // pred_fallthru
    _
  // Predicated region
  $region6: #{_lambda_.84} parent=0 // pred_check
    _
  $region7: #{_lambda_.84} parent=0 // pred_check_branch
    %12 = sbr.rel (0) target = $region9
  $region8: #{_lambda_.84} parent=0 // pred_region
    _
  $region9: #{_lambda_.84} parent=0 // pred_fallthru
    _
  // Predicated region
  $region10: #{_lambda_.84} parent=0 // pred_check
    _
  $region11: #{_lambda_.84} parent=0 // pred_check_branch
    %14 = sbr.rel (0) target = $region13
  $region12: #{_lambda_.84} parent=0 // pred_region
    _
  $region13: #{_lambda_.84} parent=0 // pred_fallthru
    _
  // Predicated region
  $region14: #{_lambda_.84} parent=0 // pred_check
    _
  $region15: #{_lambda_.84} parent=0 // pred_check_branch
    %16 = sbr.rel (0) target = $region17
  $region16: #{_lambda_.84} parent=0 // pred_region
    _
  $region17: #{_lambda_.84} parent=0 // pred_fallthru
    _
  %v18 = vld [vmem:[%s0] sm:$0xf]
  %v19 = vld [vmem:[%s0 + $0x4] sm:$0xf]
  %v20 = vld [vmem:[%s0 + $0x8] sm:$0xf]
  %v21 = vld [vmem:[%s0 + $0xc] sm:$0xf]
  %v22 = vld [vmem:[%s1] sm:$0xf]
  %v23 = vld [vmem:[%s1 + $0x4] sm:$0xf]
  %v24 = vld [vmem:[%s1 + $0x8] sm:$0xf]
  %v25 = vld [vmem:[%s1 + $0xc] sm:$0xf]
  %v30 = vunpack.c.l.b16 %v18
  %v31 = vunpack.c.l.b16 %v19
  %v32 = vunpack.c.l.b16 %v20
  %v33 = vunpack.c.l.b16 %v21
  %v34 = vpack.c.b16 %v31, %v30
  %v35 = vpack.c.b16 %v33, %v32
  %v40 = vunpack.c.l.b16 %v22
  %v41 = vunpack.c.l.b16 %v23
  %v42 = vunpack.c.l.b16 %v24
  %v43 = vunpack.c.l.b16 %v25
  %v44 = vpack.c.b16 %v41, %v40
  %v45 = vpack.c.b16 %v43, %v42
  %vm48 = vcmask 261120
  %v50 = vsel %vm48, %v34, 0
  %v53 = vsel %vm48, %v35, 0
  %55 = vmatprep.subr.bf16.mxu0 0
  %56 = vmatpush1.bf16.msra.mxu0 %v44
  %57 = vmatprep.subr.bf16.mxu0 0
  %58 = vmatpush1.bf16.msra.mxu0 %v45
  %59 = vmatprep.subr.bf16.mxu0 0
  %60 = vmatpush1.bf16.msra.mxu0 0
  %61 = vmatprep.subr.bf16.mxu0 0
  %62 = vmatpush1.bf16.msra.mxu0 0
  %63 = vmatprep.subr.bf16.mxu0 0
  %64 = vmatpush1.bf16.msra.mxu0 0
  %65 = vmatprep.subr.bf16.mxu0 0
  %66 = vmatpush1.bf16.msra.mxu0 0
  %67 = vmatprep.subr.bf16.mxu0 0
  %68 = vmatpush1.bf16.msra.mxu0 0
  %69 = vmatprep.subr.bf16.mxu0 0
  %70 = vmatpush1.bf16.msra.mxu0 0
  %71 = vmatprep.subr.bf16.mxu0 0
  %72 = vmatpush1.bf16.msra.mxu0 0
  %73 = vmatprep.subr.bf16.mxu0 0
  %74 = vmatpush1.bf16.msra.mxu0 0
  %75 = vmatprep.subr.bf16.mxu0 0
  %76 = vmatpush1.bf16.msra.mxu0 0
  %77 = vmatprep.subr.bf16.mxu0 0
  %78 = vmatpush1.bf16.msra.mxu0 0
  %79 = vmatprep.subr.bf16.mxu0 0
  %80 = vmatpush1.bf16.msra.mxu0 0
  %81 = vmatprep.subr.bf16.mxu0 0
  %82 = vmatpush1.bf16.msra.mxu0 0
  %83 = vmatprep.subr.bf16.mxu0 0
  %84 = vmatpush1.bf16.msra.mxu0 0
  %85 = vmatprep.subr.bf16.mxu0 0
  %86 = vmatpush1.bf16.msra.mxu0 0
  %87 = vmatprep.mubr.bf16.mxu0 0
  %88 = vmatmul.mubr.bf16.gmra.mrb[0].mxu0 %v50
  %v89 = vpop.f32.mrb[0].mxu0
  %v90 = vadd.f32 0.0, %v89
  %v91 = vpop.f32.mrb[0].mxu0
  %v92 = vpop.f32.mrb[0].mxu0
  %v93 = vadd.f32 0.0, %v92
  %v94 = vpop.f32.mrb[0].mxu0
  %95 = vmatprep.mubr.bf16.mxu0 0
  %96 = vmatmul.mubr.bf16.gmra.mrb[0].mxu0 %v53
  %v97 = vpop.f32.mrb[0].mxu0
  %v98 = vadd.f32 0.0, %v97
  %v99 = vpop.f32.mrb[0].mxu0
  %v100 = vpop.f32.mrb[0].mxu0
  %v101 = vadd.f32 0.0, %v100
  %v102 = vpop.f32.mrb[0].mxu0
  %103 = vdwg.mxu0
  %v104 = vld [vmem:[%s2] sm:$0x1]
  %v106 = vlaneseq
  %v107 = vshrl.u32 %v106, 7
  %v108 = vsub.s32 0, %v107
  %v109 = vrot.slane %v104, %v108
  %v111 = vmul.f32 %v90, %v109
  %v112 = vmul.f32 %v93, %v109
  %v113 = vmul.f32 %v98, %v109
  %v114 = vmul.f32 %v101, %v109
  %v115 = vld [vmem:[%s3] sm:$0x1]
  %v117 = vlaneseq
  %v118 = vshrl.u32 %v117, 7
  %v119 = vsub.s32 0, %v118
  %v120 = vrot.slane %v115, %v119
  %v122 = vadd.f32 %v111, %v120
  %v123 = vadd.f32 %v112, %v120
  %v124 = vadd.f32 %v113, %v120
  %v125 = vadd.f32 %v114, %v120
  %vm126 = vcmask 547840
  %127 = vst.msk [vmem:[%s4] sm:$0xff] %vm126, %v122
  %128 = vst.msk [vmem:[%s4 + $0x8] sm:$0xff] %vm126, %v123
  %129 = vst.msk [vmem:[%s4 + $0x10] sm:$0xff] %vm126, %v124
  %130 = vst.msk [vmem:[%s4 + $0x18] sm:$0xff] %vm126, %v125
  // Predicated region
  $region18: #{_lambda_.84} parent=0 // pred_check
    _
  $region19: #{_lambda_.84} parent=0 // pred_check_branch
    %132 = sbr.rel (0) target = $region21
  $region20: #{_lambda_.84} parent=0 // pred_region
    _
  $region21: #{_lambda_.84} parent=0 // pred_fallthru
    _
  // Predicated region
  $region22: #{_lambda_.84} parent=0 // pred_check
    _
  $region23: #{_lambda_.84} parent=0 // pred_check_branch
    %134 = sbr.rel (0) target = $region25
  $region24: #{_lambda_.84} parent=0 // pred_region
    _
  $region25: #{_lambda_.84} parent=0 // pred_fallthru
    _

// kernel: _lambda_.85
$region0: #{_lambda_.85}
  #allocation0 [shape = 'u32[]', space=smem, size = 0x4, offset = 0x4, fixed_abs, tag = 'smem constant byte address 0x4 - core index']
  #allocation1 [shape = 'u32[144,128]{1,0:T(1,128)}', space=vmem, size = 0x12000, scoped, tag = 'internal scratch']
  %s0 = inlined_call_operand.vmem [shape: bf16[32,64], index: 0, kind: input, shape index: {}]
  %s1 = inlined_call_operand.vmem [shape: bf16[64,8], index: 1, kind: input, shape index: {}]
  %s2 = inlined_call_operand.vmem [shape: f32[1,8], index: 2, kind: input, shape index: {}]
  %s3 = inlined_call_operand.vmem [shape: f32[1,8], index: 3, kind: input, shape index: {}]
  %s4 = inlined_call_operand.vmem [shape: f32[32,8], index: 4, kind: output, shape index: {}]
  %s5 = sld [smem:[#allocation0]]
  $region26: #{_lambda_.85} parent=0
    _
  %s7 = ssub.s32 1, %s5
  %s8 = scalar_select 0, %s7, %s5
  // Predicated region
  $region2: #{_lambda_.85} parent=0 // pred_check
    _
  $region3: #{_lambda_.85} parent=0 // pred_check_branch
    %10 = sbr.rel (0) target = $region5
  $region4: #{_lambda_.85} parent=0 // pred_region
    _
  $region5: #{_lambda_.85} parent=0 // pred_fallthru
    _
  // Predicated region
  $region6: #{_lambda_.85} parent=0 // pred_check
    _
  $region7: #{_lambda_.85} parent=0 // pred_check_branch
    %12 = sbr.rel (0) target = $region9
  $region8: #{_lambda_.85} parent=0 // pred_region
    _
  $region9: #{_lambda_.85} parent=0 // pred_fallthru
    _
  // Predicated region
  $region10: #{_lambda_.85} parent=0 // pred_check
    _
  $region11: #{_lambda_.85} parent=0 // pred_check_branch
    %14 = sbr.rel (0) target = $region13
  $region12: #{_lambda_.85} parent=0 // pred_region
    _
  $region13: #{_lambda_.85} parent=0 // pred_fallthru
    _
  // Predicated region
  $region14: #{_lambda_.85} parent=0 // pred_check
    _
  $region15: #{_lambda_.85} parent=0 // pred_check_branch
    %16 = sbr.rel (0) target = $region17
  $region16: #{_lambda_.85} parent=0 // pred_region
    _
  $region17: #{_lambda_.85} parent=0 // pred_fallthru
    _
  %v18 = vld [vmem:[%s0] sm:$0xf]
  %v19 = vld [vmem:[%s0 + $0x4] sm:$0xf]
  %v20 = vld [vmem:[%s0 + $0x8] sm:$0xf]
  %v21 = vld [vmem:[%s0 + $0xc] sm:$0xf]
  %v22 = vld [vmem:[%s1] sm:$0xf]
  %v23 = vld [vmem:[%s1 + $0x4] sm:$0xf]
  %v24 = vld [vmem:[%s1 + $0x8] sm:$0xf]
  %v25 = vld [vmem:[%s1 + $0xc] sm:$0xf]
  %v26 = vld [vmem:[%s1 + $0x10] sm:$0xf]
  %v27 = vld [vmem:[%s1 + $0x14] sm:$0xf]
  %v28 = vld [vmem:[%s1 + $0x18] sm:$0xf]
  %v29 = vld [vmem:[%s1 + $0x1c] sm:$0xf]
  %v34 = vunpack.c.l.b16 %v18
  %v35 = vunpack.c.l.b16 %v19
  %v36 = vunpack.c.l.b16 %v20
  %v37 = vunpack.c.l.b16 %v21
  %v38 = vpack.c.b16 %v35, %v34
  %v39 = vpack.c.b16 %v37, %v36
  %v48 = vunpack.c.l.b16 %v22
  %v49 = vunpack.c.l.b16 %v23
  %v50 = vunpack.c.l.b16 %v24
  %v51 = vunpack.c.l.b16 %v25
  %v52 = vunpack.c.l.b16 %v26
  %v53 = vunpack.c.l.b16 %v27
  %v54 = vunpack.c.l.b16 %v28
  %v55 = vunpack.c.l.b16 %v29
  %v56 = vpack.c.b16 %v49, %v48
  %v57 = vpack.c.b16 %v51, %v50
  %v58 = vpack.c.b16 %v53, %v52
  %v59 = vpack.c.b16 %v55, %v54
  %vm64 = vcmask 523264
  %v66 = vsel %vm64, %v38, 0
  %v69 = vsel %vm64, %v39, 0
  %71 = vmatprep.subr.bf16.mxu0 0
  %72 = vmatpush1.bf16.msra.mxu0 %v56
  %73 = vmatprep.subr.bf16.mxu0 0
  %74 = vmatpush1.bf16.msra.mxu0 %v57
  %75 = vmatprep.subr.bf16.mxu0 0
  %76 = vmatpush1.bf16.msra.mxu0 %v58
  %77 = vmatprep.subr.bf16.mxu0 0
  %78 = vmatpush1.bf16.msra.mxu0 %v59
  %79 = vmatprep.subr.bf16.mxu0 0
  %80 = vmatpush1.bf16.msra.mxu0 0
  %81 = vmatprep.subr.bf16.mxu0 0
  %82 = vmatpush1.bf16.msra.mxu0 0
  %83 = vmatprep.subr.bf16.mxu0 0
  %84 = vmatpush1.bf16.msra.mxu0 0
  %85 = vmatprep.subr.bf16.mxu0 0
  %86 = vmatpush1.bf16.msra.mxu0 0
  %87 = vmatprep.subr.bf16.mxu0 0
  %88 = vmatpush1.bf16.msra.mxu0 0
  %89 = vmatprep.subr.bf16.mxu0 0
  %90 = vmatpush1.bf16.msra.mxu0 0
  %91 = vmatprep.subr.bf16.mxu0 0
  %92 = vmatpush1.bf16.msra.mxu0 0
  %93 = vmatprep.subr.bf16.mxu0 0
  %94 = vmatpush1.bf16.msra.mxu0 0
  %95 = vmatprep.subr.bf16.mxu0 0
  %96 = vmatpush1.bf16.msra.mxu0 0
  %97 = vmatprep.subr.bf16.mxu0 0
  %98 = vmatpush1.bf16.msra.mxu0 0
  %99 = vmatprep.subr.bf16.mxu0 0
  %100 = vmatpush1.bf16.msra.mxu0 0
  %101 = vmatprep.subr.bf16.mxu0 0
  %102 = vmatpush1.bf16.msra.mxu0 0
  %103 = vmatprep.mubr.bf16.mxu0 0
  %104 = vmatmul.mubr.bf16.gmra.mrb[0].mxu0 %v66
  %v105 = vpop.f32.mrb[0].mxu0
  %v106 = vadd.f32 0.0, %v105
  %v107 = vpop.f32.mrb[0].mxu0
  %v108 = vpop.f32.mrb[0].mxu0
  %v109 = vadd.f32 0.0, %v108
  %v110 = vpop.f32.mrb[0].mxu0
  %111 = vmatprep.mubr.bf16.mxu0 0
  %112 = vmatmul.mubr.bf16.gmra.mrb[0].mxu0 %v69
  %v113 = vpop.f32.mrb[0].mxu0
  %v114 = vadd.f32 0.0, %v113
  %v115 = vpop.f32.mrb[0].mxu0
  %v116 = vpop.f32.mrb[0].mxu0
  %v117 = vadd.f32 0.0, %v116
  %v118 = vpop.f32.mrb[0].mxu0
  %119 = vdwg.mxu0
  %v120 = vld [vmem:[%s2] sm:$0x1]
  %v122 = vlaneseq
  %v123 = vshrl.u32 %v122, 7
  %v124 = vsub.s32 0, %v123
  %v125 = vrot.slane %v120, %v124
  %v127 = vmul.f32 %v106, %v125
  %v128 = vmul.f32 %v109, %v125
  %v129 = vmul.f32 %v114, %v125
  %v130 = vmul.f32 %v117, %v125
  %v131 = vld [vmem:[%s3] sm:$0x1]
  %v133 = vlaneseq
  %v134 = vshrl.u32 %v133, 7
  %v135 = vsub.s32 0, %v134
  %v136 = vrot.slane %v131, %v135
  %v138 = vadd.f32 %v127, %v136
  %v139 = vadd.f32 %v128, %v136
  %v140 = vadd.f32 %v129, %v136
  %v141 = vadd.f32 %v130, %v136
  %vm142 = vcmask 64512
  %143 = vst.msk [vmem:[%s4] sm:$0xff] %vm142, %v138
  %144 = vst.msk [vmem:[%s4 + $0x8] sm:$0xff] %vm142, %v139
  %145 = vst.msk [vmem:[%s4 + $0x10] sm:$0xff] %vm142, %v140
  %146 = vst.msk [vmem:[%s4 + $0x18] sm:$0xff] %vm142, %v141
  // Predicated region
  $region18: #{_lambda_.85} parent=0 // pred_check
    _
  $region19: #{_lambda_.85} parent=0 // pred_check_branch
    %148 = sbr.rel (0) target = $region21
  $region20: #{_lambda_.85} parent=0 // pred_region
    _
  $region21: #{_lambda_.85} parent=0 // pred_fallthru
    _
  // Predicated region
  $region22: #{_lambda_.85} parent=0 // pred_check
    _
  $region23: #{_lambda_.85} parent=0 // pred_check_branch
    %150 = sbr.rel (0) target = $region25
  $region24: #{_lambda_.85} parent=0 // pred_region
    _
  $region25: #{_lambda_.85} parent=0 // pred_fallthru
    _

</llo_original>
